<compile_context>
chip_gen: v7x
topology: tpu7x:2x2x1
jax: 0.10.0
libtpu: 0.0.40
codegen_flags: <defaults>
</compile_context>

<pallas_src>
import functools

import jax
import jax.numpy as jnp
from jax.experimental import pallas as pl
from jax.experimental.pallas import tpu as pltpu


def _round_up(x, m):
    return ((x + m - 1) // m) * m


# ----------------------------------------------------------------------------
# Kernel
# ----------------------------------------------------------------------------
def nerf_kernel(*refs, D, skips, n_skips, use_viewdirs, compute_dtype):
    """One (tm, K) row-tile of the full NeRF MLP.

    Ref order (inputs):
      x (tm, K)                       K = raw C (fast path) or Cp (fallback)
      w0 (Cp, Wp)                     layer-0 weight, pts rows only
      pts_w (D-1, Wp, Wp)             stacked trunk weights (if D > 1)
      pts_b (D, 1, Wp)                stacked trunk biases (f32)
      skip_w_k (Cp, Wp)               one per skip, pts rows only, layer order
      if use_viewdirs: wf (Wp,Wp), bf (1,Wp), wvf (Wp,Hp), wvv (Cp,Hp),
                       bv (1,Hp), wr_pad (Hp,OP), wa_row (1,Wp), b_out (1,OP)
      else:            wo_pad (Wp,OP), b_out (1,OP)
    Last ref is the (tm, OP) lane-dense output tile.
    """
    out_ref = refs[-1]
    it = iter(refs[:-1])

    x_ref = next(it)
    w0_ref = next(it)
    ptsw_ref = next(it) if D > 1 else None
    ptsb_ref = next(it)
    skipw_refs = [next(it) for _ in range(n_skips)]

    f32 = jnp.float32
    K = x_ref.shape[1]                      # static block width of x
    x = x_ref[...].astype(compute_dtype)    # (tm, K)

    # Trunk.  Layer 0 consumes the raw x tile directly: the pts rows of w0
    # hold the real weights, the view rows are zero, so no pts/views split
    # (and no in-kernel concatenate) is ever needed.
    acc = jnp.dot(x, w0_ref[:K, :], preferred_element_type=f32) + ptsb_ref[0]
    h = jnp.maximum(acc, 0.0).astype(compute_dtype)

    s_idx = 0
    for i in range(1, D):
        acc = jnp.dot(h, ptsw_ref[i - 1], preferred_element_type=f32)
        if (i - 1) in skips:
            # concat([input_pts, h]) @ W == x @ W_pts_rows + h @ W_h_rows.
            acc = acc + jnp.dot(x, skipw_refs[s_idx][:K, :],
                                preferred_element_type=f32)
            s_idx += 1
        acc = acc + ptsb_ref[i]
        h = jnp.maximum(acc, 0.0).astype(compute_dtype)

    if use_viewdirs:
        wf_ref = next(it)
        bf_ref = next(it)
        wvf_ref = next(it)
        wvv_ref = next(it)
        bv_ref = next(it)
        wr_ref = next(it)
        wa_ref = next(it)
        bo_ref = next(it)

        feature = (jnp.dot(h, wf_ref[...], preferred_element_type=f32)
                   + bf_ref[...]).astype(compute_dtype)
        # views branch: concat([feature, views]) @ Wv
        #   == feature @ Wv_feat_rows + x @ Wv_view_rows (pts rows are zero).
        hv = (jnp.dot(feature, wvf_ref[...], preferred_element_type=f32)
              + jnp.dot(x, wvv_ref[:K, :], preferred_element_type=f32)
              + bv_ref[...])
        hv = jnp.maximum(hv, 0.0).astype(compute_dtype)

        # 1-wide alpha head moved off the MXU: VPU multiply + XLU lane reduce,
        # merged into column 3 of the lane-dense output tile.
        alpha = jnp.sum(h.astype(f32) * wa_ref[...], axis=-1, keepdims=True)
        cols = jax.lax.broadcasted_iota(jnp.int32, out_ref.shape, 1)
        out = (jnp.dot(hv, wr_ref[...], preferred_element_type=f32)
               + jnp.where(cols == 3, alpha, 0.0)
               + bo_ref[...])
    else:
        wo_ref = next(it)
        bo_ref = next(it)
        out = jnp.dot(h, wo_ref[...], preferred_element_type=f32) + bo_ref[...]

    out_ref[...] = out.astype(out_ref.dtype)


# ----------------------------------------------------------------------------
# Parameter init (matches DenseLayer.reset_parameters: xavier_uniform + zeros)
# Raw (unpadded) weights in (in_dim, out_dim) layout == transpose of nn.Linear.
# ----------------------------------------------------------------------------
def _xavier(key, fan_in, fan_out, gain):
    a = gain * (6.0 / (fan_in + fan_out)) ** 0.5
    return jax.random.uniform(key, (fan_in, fan_out), jnp.float32, -a, a)


def init_nerf_params(key, *, D, W, input_ch, input_ch_views, output_ch,
                     skips, use_viewdirs, random_bias=False):
    relu_gain = 2.0 ** 0.5   # torch.nn.init.calculate_gain('relu')
    lin_gain = 1.0           # calculate_gain('linear')

    keys = iter(jax.random.split(key, 4 * D + 32))

    def bias(n):
        if random_bias:   # exercise bias paths in tests; module default is 0.
            return 0.1 * jax.random.normal(next(keys), (n,), jnp.float32)
        return jnp.zeros((n,), jnp.float32)

    in_dims = [input_ch] + [W + input_ch if i in skips else W
                            for i in range(D - 1)]
    params = {
        'pts_w': [_xavier(next(keys), d_in, W, relu_gain) for d_in in in_dims],
        'pts_b': [bias(W) for _ in range(D)],
    }
    if use_viewdirs:
        params['wf'] = _xavier(next(keys), W, W, lin_gain)
        params['bf'] = bias(W)
        params['wa'] = _xavier(next(keys), W, 1, lin_gain)
        params['ba'] = bias(1)
        params['wv'] = _xavier(next(keys), W + input_ch_views, W // 2,
                               relu_gain)
        params['bv'] = bias(W // 2)
        params['wr'] = _xavier(next(keys), W // 2, 3, lin_gain)
        params['br'] = bias(3)
    else:
        params['wo'] = _xavier(next(keys), W, output_ch, lin_gain)
        params['bo'] = bias(output_ch)
    return params


# ----------------------------------------------------------------------------
# Packing: pad + split + stack raw params into the kernel layout.
# Call ONCE per parameter update (hoisted out of the per-call forward path).
# ----------------------------------------------------------------------------
def _pad2(a, rows, cols, dtype):
    out = jnp.zeros((rows, cols), dtype)
    return out.at[:a.shape[0], :a.shape[1]].set(a.astype(dtype))


def _embed_rows(a, rows, cols, row_off, dtype):
    out = jnp.zeros((rows, cols), dtype)
    return out.at[row_off:row_off + a.shape[0], :a.shape[1]].set(a.astype(dtype))


def _pad_bias(b, cols):
    out = jnp.zeros((1, cols), jnp.float32)
    return out.at[0, :b.shape[0]].set(b.astype(jnp.float32))


def pack_nerf_params(params, *, D, W, input_ch, input_ch_views, output_ch,
                     skips, use_viewdirs, compute_dtype=jnp.bfloat16):
    skips = tuple(sorted(int(s) for s in skips))
    assert all(0 <= s < D for s in skips)
    assert (D - 1) not in skips, "skip at the last trunk layer is unsupported"
    C = input_ch + input_ch_views
    Cp = _round_up(C, 128)
    Wp = _round_up(W, 128)
    Hp = _round_up(max(W // 2, 1), 128)
    out_ch = 4 if use_viewdirs else output_ch
    OP = _round_up(out_ch, 128)

    pts_w, pts_b, skip_w = [], [], []
    w0 = None
    for i in range(D):
        w = jnp.asarray(params['pts_w'][i], jnp.float32)      # (in_dim, W)
        if i > 0 and (i - 1) in skips:
            # concat order was [input_pts, h]: rows 0:input_ch are pts part.
            skip_w.append(_embed_rows(w[:input_ch, :], Cp, Wp, 0,
                                      compute_dtype))
            w = w[input_ch:, :]
        if i == 0:
            # Layer-0 weight embedded at the pts rows of x; view rows zero.
            w0 = _embed_rows(w, Cp, Wp, 0, compute_dtype)
        else:
            pts_w.append(_pad2(w, Wp, Wp, compute_dtype))
        pts_b.append(_pad_bias(params['pts_b'][i], Wp))

    arrays = [w0]
    if pts_w:
        arrays.append(jnp.stack(pts_w))                        # (D-1, Wp, Wp)
    arrays.append(jnp.stack(pts_b))                            # (D, 1, Wp)
    arrays.extend(skip_w)                                      # n_skips x (Cp, Wp)

    if use_viewdirs:
        wv = jnp.asarray(params['wv'], jnp.float32)            # (W+views, W//2)
        wr_pad = jnp.zeros((Hp, OP), compute_dtype).at[:W // 2, :3].set(
            jnp.asarray(params['wr']).astype(compute_dtype))
        wa_row = jnp.zeros((1, Wp), jnp.float32).at[0, :W].set(
            jnp.asarray(params['wa'], jnp.float32)[:, 0])
        b_out = jnp.zeros((1, OP), jnp.float32)
        b_out = b_out.at[0, :3].set(jnp.asarray(params['br'], jnp.float32))
        b_out = b_out.at[0, 3].set(jnp.asarray(params['ba'], jnp.float32)[0])
        arrays += [
            _pad2(jnp.asarray(params['wf'], jnp.float32), Wp, Wp, compute_dtype),
            _pad_bias(params['bf'], Wp),
            _pad2(wv[:W, :], Wp, Hp, compute_dtype),                # feature part
            _embed_rows(wv[W:, :], Cp, Hp, input_ch, compute_dtype),  # views part
            _pad_bias(params['bv'], Hp),
            wr_pad, wa_row, b_out,
        ]
    else:
        arrays += [
            _pad2(jnp.asarray(params['wo'], jnp.float32), Wp, OP, compute_dtype),
            _pad_bias(params['bo'], OP),
        ]

    config = dict(D=D, W=W, input_ch=input_ch, input_ch_views=input_ch_views,
                  output_ch=output_ch, skips=skips, use_viewdirs=use_viewdirs,
                  n_skips=len(skips), compute_dtype=compute_dtype,
                  C=C, Cp=Cp, Wp=Wp, Hp=Hp, OP=OP, out_ch=out_ch)
    return {'arrays': tuple(arrays), 'config': config}


# ----------------------------------------------------------------------------
# Wrapper
# ----------------------------------------------------------------------------
def _default_vmem_limit_bytes():
    cap = None
    try:
        cap = int(pltpu.get_tpu_info().vmem_capacity_bytes)
    except Exception:
        cap = None
    if not cap:
        cap = 64 * 1024 * 1024          # conservative (v7x per-core VMEM)
    # Leave ~25% headroom for Mosaic internal scratch / spills.
    return max(32 * 1024 * 1024, min(100 * 1024 * 1024, (cap * 3) // 4))


def _weight_spec(shape, single_buffer):
    zeros = (0,) * len(shape)
    index_map = lambda i: zeros
    if single_buffer and hasattr(pl, "Buffered"):
        try:
            # Grid-invariant input: single-buffer it to halve VMEM residency.
            return pl.BlockSpec(shape, index_map, pipeline_mode=pl.Buffered(1))
        except TypeError:
            pass
    return pl.BlockSpec(shape, index_map)


def nerf_forward(x, packed, *, tm=2048, out_dtype=None, vmem_limit_bytes=None):
    cfg = packed['config']
    arrays = packed['arrays']
    D, skips = cfg['D'], cfg['skips']
    n_skips, use_viewdirs = cfg['n_skips'], cfg['use_viewdirs']
    compute_dtype = cfg['compute_dtype']
    C, Cp, Wp, Hp = cfg['C'], cfg['Cp'], cfg['Wp'], cfg['Hp']
    OP, out_ch = cfg['OP'], cfg['out_ch']

    N, Cx = x.shape
    assert Cx == C, f"expected x with {C} channels, got {Cx}"

    if out_dtype is None:
        out_dtype = (jnp.float32
                     if jnp.dtype(compute_dtype) == jnp.dtype(jnp.float32)
                     else jnp.bfloat16)
    if vmem_limit_bytes is None:
        vmem_limit_bytes = _default_vmem_limit_bytes()

    # Row tile: large enough to amortize the ~0.35us per-grid-step overhead,
    # clamped so small batches don't over-pad.
    tm_eff = max(8, min(_round_up(tm, 8), _round_up(N, 256)))
    Np = _round_up(N, tm_eff)

    kernel = functools.partial(
        nerf_kernel, D=D, skips=skips, n_skips=n_skips,
        use_viewdirs=use_viewdirs, compute_dtype=compute_dtype)

    # Cost estimate so XLA can schedule producers/consumers around the call.
    per_row = 2 * C * Wp + 2 * Wp * Wp * max(D - 1, 0) + 2 * C * Wp * n_skips
    if use_viewdirs:
        per_row += 2 * Wp * Wp + 2 * Wp * Hp + 2 * C * Hp + 2 * Hp * OP + 2 * Wp
    else:
        per_row += 2 * Wp * OP
    bytes_accessed = int(sum(int(a.size) * a.dtype.itemsize for a in arrays)
                         + N * C * x.dtype.itemsize
                         + Np * OP * jnp.dtype(out_dtype).itemsize)
    cost = pl.CostEstimate(flops=int(per_row) * int(Np), transcendentals=0,
                           bytes_accessed=bytes_accessed)

    def run(raw_x, single_buffer):
        if raw_x:
            # Fast path: raw (N, C) input, no lane-padded materialization of x.
            x_in = x if Np == N else jnp.pad(x, ((0, Np - N), (0, 0)))
        else:
            # Conservative fallback: lane-padded x tile (still only one pad).
            x_in = jnp.zeros((Np, Cp), compute_dtype).at[:N, :C].set(
                x.astype(compute_dtype))
        xw = x_in.shape[1]
        in_specs = [pl.BlockSpec((tm_eff, xw), lambda i: (i, 0))]
        for a in arrays:
            in_specs.append(_weight_spec(a.shape, single_buffer))
        return pl.pallas_call(
            kernel,
            out_shape=jax.ShapeDtypeStruct((Np, OP), out_dtype),
            grid=(Np // tm_eff,),
            in_specs=in_specs,
            out_specs=pl.BlockSpec((tm_eff, OP), lambda i: (i, 0)),
            compiler_params=pltpu.CompilerParams(
                dimension_semantics=("parallel",),
                vmem_limit_bytes=int(vmem_limit_bytes)),
            cost_estimate=cost,
        )(x_in, *arrays)

    try:
        out = run(raw_x=True, single_buffer=True)
    except Exception:
        out = run(raw_x=False, single_buffer=False)

    # Lane-dense (Np, OP) kernel output -> user-facing (N, out_ch) slice.
    return out[:N, :out_ch]


# ----------------------------------------------------------------------------
# Pure-JAX reference (same math as the PyTorch module, unpadded params)
# ----------------------------------------------------------------------------
def nerf_reference(x, params, *, D, input_ch, input_ch_views, skips,
                   use_viewdirs):
    input_pts = x[:, :input_ch]
    input_views = x[:, input_ch:input_ch + input_ch_views]
    h = input_pts
    for i in range(D):
        h = jnp.maximum(h @ params['pts_w'][i] + params['pts_b'][i], 0.0)
        if i in skips:
            h = jnp.concatenate([input_pts, h], axis=-1)
    if use_viewdirs:
        alpha = h @ params['wa'] + params['ba']
        feature = h @ params['wf'] + params['bf']
        hv = jnp.concatenate([feature, input_views], axis=-1)
        hv = jnp.maximum(hv @ params['wv'] + params['bv'], 0.0)
        rgb = hv @ params['wr'] + params['br']
        return jnp.concatenate([rgb, alpha], axis=-1)
    return h @ params['wo'] + params['bo']


# ----------------------------------------------------------------------------
if __name__ == "__main__":
    key = jax.random.PRNGKey(0)
    kx, kp1, kp2 = jax.random.split(key, 3)

    # Small config consistent with the module (hidden W=32 instead of 256).
    D, W = 8, 32
    input_ch, input_ch_views, output_ch = 3, 3, 4
    skips = [4]
    N = 256

    x = jax.random.normal(kx, (N, input_ch + input_ch_views), jnp.float32)

    ok = True
    for use_viewdirs, kp in ((True, kp1), (False, kp2)):
        params = init_nerf_params(
            kp, D=D, W=W, input_ch=input_ch, input_ch_views=input_ch_views,
            output_ch=output_ch, skips=skips, use_viewdirs=use_viewdirs,
            random_bias=True)   # non-zero biases so bias packing is exercised

        ref = nerf_reference(
            x, params, D=D, input_ch=input_ch,
            input_ch_views=input_ch_views, skips=skips,
            use_viewdirs=use_viewdirs)

        for dtype, tol in ((jnp.float32, 2e-2), (jnp.bfloat16, 8e-2)):
            packed = pack_nerf_params(
                params, D=D, W=W, input_ch=input_ch,
                input_ch_views=input_ch_views, output_ch=output_ch,
                skips=skips, use_viewdirs=use_viewdirs, compute_dtype=dtype)
            out = nerf_forward(x, packed)
            out = jax.block_until_ready(out)
            if out.shape != ref.shape:
                ok = False
            elif not jnp.allclose(out.astype(jnp.float32), ref,
                                  atol=tol, rtol=tol):
                ok = False

    if ok:
        print("KERNEL_OK")
</pallas_src>

<mosaic_0001>
module attributes {stable_mosaic.version = 11 : i64} {
  func.func @nerf_kernel(%arg0: i32, %arg1: memref<256x6xf32, #tpu.memory_space<vmem>>, %arg2: memref<128x128xf32, #tpu.memory_space<vmem>>, %arg3: memref<7x128x128xf32, #tpu.memory_space<vmem>>, %arg4: memref<8x1x128xf32, #tpu.memory_space<vmem>>, %arg5: memref<128x128xf32, #tpu.memory_space<vmem>>, %arg6: memref<128x128xf32, #tpu.memory_space<vmem>>, %arg7: memref<1x128xf32, #tpu.memory_space<vmem>>, %arg8: memref<128x128xf32, #tpu.memory_space<vmem>>, %arg9: memref<128x128xf32, #tpu.memory_space<vmem>>, %arg10: memref<1x128xf32, #tpu.memory_space<vmem>>, %arg11: memref<128x128xf32, #tpu.memory_space<vmem>>, %arg12: memref<1x128xf32, #tpu.memory_space<vmem>>, %arg13: memref<1x128xf32, #tpu.memory_space<vmem>>, %arg14: memref<256x128xf32, #tpu.memory_space<vmem>>) attributes {dimension_semantics = [#tpu.dimension_semantics<parallel>], iteration_bounds = array<i64: 1>, scalar_prefetch = 0 : i64, scratch_operands = 0 : i64, tpu.core_type = #tpu.core_type<tc>, window_params = [{transform_indices = @transform_0, window_bounds = array<i64: 256, 6>}, {pipeline_mode = #tpu.pipeline_mode<synchronous>, transform_indices = @transform_1, window_bounds = array<i64: 128, 128>}, {pipeline_mode = #tpu.pipeline_mode<synchronous>, transform_indices = @transform_2, window_bounds = array<i64: 7, 128, 128>}, {pipeline_mode = #tpu.pipeline_mode<synchronous>, transform_indices = @transform_3, window_bounds = array<i64: 8, 1, 128>}, {pipeline_mode = #tpu.pipeline_mode<synchronous>, transform_indices = @transform_4, window_bounds = array<i64: 128, 128>}, {pipeline_mode = #tpu.pipeline_mode<synchronous>, transform_indices = @transform_5, window_bounds = array<i64: 128, 128>}, {pipeline_mode = #tpu.pipeline_mode<synchronous>, transform_indices = @transform_6, window_bounds = array<i64: 1, 128>}, {pipeline_mode = #tpu.pipeline_mode<synchronous>, transform_indices = @transform_7, window_bounds = array<i64: 128, 128>}, {pipeline_mode = #tpu.pipeline_mode<synchronous>, transform_indices = @transform_8, window_bounds = array<i64: 128, 128>}, {pipeline_mode = #tpu.pipeline_mode<synchronous>, transform_indices = @transform_9, window_bounds = array<i64: 1, 128>}, {pipeline_mode = #tpu.pipeline_mode<synchronous>, transform_indices = @transform_10, window_bounds = array<i64: 128, 128>}, {pipeline_mode = #tpu.pipeline_mode<synchronous>, transform_indices = @transform_11, window_bounds = array<i64: 1, 128>}, {pipeline_mode = #tpu.pipeline_mode<synchronous>, transform_indices = @transform_12, window_bounds = array<i64: 1, 128>}, {transform_indices = @transform_13, window_bounds = array<i64: 256, 128>}]} {
    %c0 = arith.constant 0 : index
    %c0_0 = arith.constant 0 : index
    %0 = vector.load %arg1[%c0, %c0_0] : memref<256x6xf32, #tpu.memory_space<vmem>>, vector<256x6xf32>
    %c0_1 = arith.constant 0 : index
    %c0_2 = arith.constant 0 : index
    %1 = vector.load %arg2[%c0_1, %c0_2] : memref<128x128xf32, #tpu.memory_space<vmem>>, vector<6x128xf32>
    %cst = arith.constant dense<0.000000e+00> : vector<256x128xf32>
    %2 = tpu.matmul %0, %1, %cst {dimension_numbers = #tpu.dot_dimension_numbers<[1], [0], [0], [1], [0, 0, 1, 1], [], []>} : vector<256x6xf32>, vector<6x128xf32>, vector<256x128xf32> -> vector<256x128xf32>
    %c0_3 = arith.constant 0 : index
    %c0_4 = arith.constant 0 : index
    %c0_5 = arith.constant 0 : index
    %3 = vector.load %arg4[%c0_3, %c0_4, %c0_5] : memref<8x1x128xf32, #tpu.memory_space<vmem>>, vector<1x1x128xf32>
    %4 = vector.shape_cast %3 : vector<1x1x128xf32> to vector<1x128xf32>
    %5 = vector.broadcast %4 : vector<1x128xf32> to vector<256x128xf32>
    %6 = arith.addf %2, %5 : vector<256x128xf32>
    %cst_6 = arith.constant 0.000000e+00 : f32
    %7 = vector.broadcast %cst_6 : f32 to vector<256x128xf32>
    %8 = arith.maximumf %6, %7 : vector<256x128xf32>
    %c0_7 = arith.constant 0 : index
    %c0_8 = arith.constant 0 : index
    %c0_9 = arith.constant 0 : index
    %9 = vector.load %arg3[%c0_7, %c0_8, %c0_9] : memref<7x128x128xf32, #tpu.memory_space<vmem>>, vector<1x128x128xf32>
    %10 = vector.shape_cast %9 : vector<1x128x128xf32> to vector<128x128xf32>
    %cst_10 = arith.constant dense<0.000000e+00> : vector<256x128xf32>
    %11 = tpu.matmul %8, %10, %cst_10 {dimension_numbers = #tpu.dot_dimension_numbers<[1], [0], [0], [1], [0, 0, 1, 1], [], []>} : vector<256x128xf32>, vector<128x128xf32>, vector<256x128xf32> -> vector<256x128xf32>
    %c1 = arith.constant 1 : index
    %c0_11 = arith.constant 0 : index
    %c0_12 = arith.constant 0 : index
    %12 = vector.load %arg4[%c1, %c0_11, %c0_12] : memref<8x1x128xf32, #tpu.memory_space<vmem>>, vector<1x1x128xf32>
    %13 = vector.shape_cast %12 : vector<1x1x128xf32> to vector<1x128xf32>
    %14 = vector.broadcast %13 : vector<1x128xf32> to vector<256x128xf32>
    %15 = arith.addf %11, %14 : vector<256x128xf32>
    %cst_13 = arith.constant 0.000000e+00 : f32
    %16 = vector.broadcast %cst_13 : f32 to vector<256x128xf32>
    %17 = arith.maximumf %15, %16 : vector<256x128xf32>
    %c1_14 = arith.constant 1 : index
    %c0_15 = arith.constant 0 : index
    %c0_16 = arith.constant 0 : index
    %18 = vector.load %arg3[%c1_14, %c0_15, %c0_16] : memref<7x128x128xf32, #tpu.memory_space<vmem>>, vector<1x128x128xf32>
    %19 = vector.shape_cast %18 : vector<1x128x128xf32> to vector<128x128xf32>
    %cst_17 = arith.constant dense<0.000000e+00> : vector<256x128xf32>
    %20 = tpu.matmul %17, %19, %cst_17 {dimension_numbers = #tpu.dot_dimension_numbers<[1], [0], [0], [1], [0, 0, 1, 1], [], []>} : vector<256x128xf32>, vector<128x128xf32>, vector<256x128xf32> -> vector<256x128xf32>
    %c2 = arith.constant 2 : index
    %c0_18 = arith.constant 0 : index
    %c0_19 = arith.constant 0 : index
    %21 = vector.load %arg4[%c2, %c0_18, %c0_19] : memref<8x1x128xf32, #tpu.memory_space<vmem>>, vector<1x1x128xf32>
    %22 = vector.shape_cast %21 : vector<1x1x128xf32> to vector<1x128xf32>
    %23 = vector.broadcast %22 : vector<1x128xf32> to vector<256x128xf32>
    %24 = arith.addf %20, %23 : vector<256x128xf32>
    %cst_20 = arith.constant 0.000000e+00 : f32
    %25 = vector.broadcast %cst_20 : f32 to vector<256x128xf32>
    %26 = arith.maximumf %24, %25 : vector<256x128xf32>
    %c2_21 = arith.constant 2 : index
    %c0_22 = arith.constant 0 : index
    %c0_23 = arith.constant 0 : index
    %27 = vector.load %arg3[%c2_21, %c0_22, %c0_23] : memref<7x128x128xf32, #tpu.memory_space<vmem>>, vector<1x128x128xf32>
    %28 = vector.shape_cast %27 : vector<1x128x128xf32> to vector<128x128xf32>
    %cst_24 = arith.constant dense<0.000000e+00> : vector<256x128xf32>
    %29 = tpu.matmul %26, %28, %cst_24 {dimension_numbers = #tpu.dot_dimension_numbers<[1], [0], [0], [1], [0, 0, 1, 1], [], []>} : vector<256x128xf32>, vector<128x128xf32>, vector<256x128xf32> -> vector<256x128xf32>
    %c3 = arith.constant 3 : index
    %c0_25 = arith.constant 0 : index
    %c0_26 = arith.constant 0 : index
    %30 = vector.load %arg4[%c3, %c0_25, %c0_26] : memref<8x1x128xf32, #tpu.memory_space<vmem>>, vector<1x1x128xf32>
    %31 = vector.shape_cast %30 : vector<1x1x128xf32> to vector<1x128xf32>
    %32 = vector.broadcast %31 : vector<1x128xf32> to vector<256x128xf32>
    %33 = arith.addf %29, %32 : vector<256x128xf32>
    %cst_27 = arith.constant 0.000000e+00 : f32
    %34 = vector.broadcast %cst_27 : f32 to vector<256x128xf32>
    %35 = arith.maximumf %33, %34 : vector<256x128xf32>
    %c3_28 = arith.constant 3 : index
    %c0_29 = arith.constant 0 : index
    %c0_30 = arith.constant 0 : index
    %36 = vector.load %arg3[%c3_28, %c0_29, %c0_30] : memref<7x128x128xf32, #tpu.memory_space<vmem>>, vector<1x128x128xf32>
    %37 = vector.shape_cast %36 : vector<1x128x128xf32> to vector<128x128xf32>
    %cst_31 = arith.constant dense<0.000000e+00> : vector<256x128xf32>
    %38 = tpu.matmul %35, %37, %cst_31 {dimension_numbers = #tpu.dot_dimension_numbers<[1], [0], [0], [1], [0, 0, 1, 1], [], []>} : vector<256x128xf32>, vector<128x128xf32>, vector<256x128xf32> -> vector<256x128xf32>
    %c4 = arith.constant 4 : index
    %c0_32 = arith.constant 0 : index
    %c0_33 = arith.constant 0 : index
    %39 = vector.load %arg4[%c4, %c0_32, %c0_33] : memref<8x1x128xf32, #tpu.memory_space<vmem>>, vector<1x1x128xf32>
    %40 = vector.shape_cast %39 : vector<1x1x128xf32> to vector<1x128xf32>
    %41 = vector.broadcast %40 : vector<1x128xf32> to vector<256x128xf32>
    %42 = arith.addf %38, %41 : vector<256x128xf32>
    %cst_34 = arith.constant 0.000000e+00 : f32
    %43 = vector.broadcast %cst_34 : f32 to vector<256x128xf32>
    %44 = arith.maximumf %42, %43 : vector<256x128xf32>
    %c4_35 = arith.constant 4 : index
    %c0_36 = arith.constant 0 : index
    %c0_37 = arith.constant 0 : index
    %45 = vector.load %arg3[%c4_35, %c0_36, %c0_37] : memref<7x128x128xf32, #tpu.memory_space<vmem>>, vector<1x128x128xf32>
    %46 = vector.shape_cast %45 : vector<1x128x128xf32> to vector<128x128xf32>
    %cst_38 = arith.constant dense<0.000000e+00> : vector<256x128xf32>
    %47 = tpu.matmul %44, %46, %cst_38 {dimension_numbers = #tpu.dot_dimension_numbers<[1], [0], [0], [1], [0, 0, 1, 1], [], []>} : vector<256x128xf32>, vector<128x128xf32>, vector<256x128xf32> -> vector<256x128xf32>
    %c0_39 = arith.constant 0 : index
    %c0_40 = arith.constant 0 : index
    %48 = vector.load %arg5[%c0_39, %c0_40] : memref<128x128xf32, #tpu.memory_space<vmem>>, vector<6x128xf32>
    %cst_41 = arith.constant dense<0.000000e+00> : vector<256x128xf32>
    %49 = tpu.matmul %0, %48, %cst_41 {dimension_numbers = #tpu.dot_dimension_numbers<[1], [0], [0], [1], [0, 0, 1, 1], [], []>} : vector<256x6xf32>, vector<6x128xf32>, vector<256x128xf32> -> vector<256x128xf32>
    %50 = arith.addf %47, %49 : vector<256x128xf32>
    %c5 = arith.constant 5 : index
    %c0_42 = arith.constant 0 : index
    %c0_43 = arith.constant 0 : index
    %51 = vector.load %arg4[%c5, %c0_42, %c0_43] : memref<8x1x128xf32, #tpu.memory_space<vmem>>, vector<1x1x128xf32>
    %52 = vector.shape_cast %51 : vector<1x1x128xf32> to vector<1x128xf32>
    %53 = vector.broadcast %52 : vector<1x128xf32> to vector<256x128xf32>
    %54 = arith.addf %50, %53 : vector<256x128xf32>
    %cst_44 = arith.constant 0.000000e+00 : f32
    %55 = vector.broadcast %cst_44 : f32 to vector<256x128xf32>
    %56 = arith.maximumf %54, %55 : vector<256x128xf32>
    %c5_45 = arith.constant 5 : index
    %c0_46 = arith.constant 0 : index
    %c0_47 = arith.constant 0 : index
    %57 = vector.load %arg3[%c5_45, %c0_46, %c0_47] : memref<7x128x128xf32, #tpu.memory_space<vmem>>, vector<1x128x128xf32>
    %58 = vector.shape_cast %57 : vector<1x128x128xf32> to vector<128x128xf32>
    %cst_48 = arith.constant dense<0.000000e+00> : vector<256x128xf32>
    %59 = tpu.matmul %56, %58, %cst_48 {dimension_numbers = #tpu.dot_dimension_numbers<[1], [0], [0], [1], [0, 0, 1, 1], [], []>} : vector<256x128xf32>, vector<128x128xf32>, vector<256x128xf32> -> vector<256x128xf32>
    %c6 = arith.constant 6 : index
    %c0_49 = arith.constant 0 : index
    %c0_50 = arith.constant 0 : index
    %60 = vector.load %arg4[%c6, %c0_49, %c0_50] : memref<8x1x128xf32, #tpu.memory_space<vmem>>, vector<1x1x128xf32>
    %61 = vector.shape_cast %60 : vector<1x1x128xf32> to vector<1x128xf32>
    %62 = vector.broadcast %61 : vector<1x128xf32> to vector<256x128xf32>
    %63 = arith.addf %59, %62 : vector<256x128xf32>
    %cst_51 = arith.constant 0.000000e+00 : f32
    %64 = vector.broadcast %cst_51 : f32 to vector<256x128xf32>
    %65 = arith.maximumf %63, %64 : vector<256x128xf32>
    %c6_52 = arith.constant 6 : index
    %c0_53 = arith.constant 0 : index
    %c0_54 = arith.constant 0 : index
    %66 = vector.load %arg3[%c6_52, %c0_53, %c0_54] : memref<7x128x128xf32, #tpu.memory_space<vmem>>, vector<1x128x128xf32>
    %67 = vector.shape_cast %66 : vector<1x128x128xf32> to vector<128x128xf32>
    %cst_55 = arith.constant dense<0.000000e+00> : vector<256x128xf32>
    %68 = tpu.matmul %65, %67, %cst_55 {dimension_numbers = #tpu.dot_dimension_numbers<[1], [0], [0], [1], [0, 0, 1, 1], [], []>} : vector<256x128xf32>, vector<128x128xf32>, vector<256x128xf32> -> vector<256x128xf32>
    %c7 = arith.constant 7 : index
    %c0_56 = arith.constant 0 : index
    %c0_57 = arith.constant 0 : index
    %69 = vector.load %arg4[%c7, %c0_56, %c0_57] : memref<8x1x128xf32, #tpu.memory_space<vmem>>, vector<1x1x128xf32>
    %70 = vector.shape_cast %69 : vector<1x1x128xf32> to vector<1x128xf32>
    %71 = vector.broadcast %70 : vector<1x128xf32> to vector<256x128xf32>
    %72 = arith.addf %68, %71 : vector<256x128xf32>
    %cst_58 = arith.constant 0.000000e+00 : f32
    %73 = vector.broadcast %cst_58 : f32 to vector<256x128xf32>
    %74 = arith.maximumf %72, %73 : vector<256x128xf32>
    %c0_59 = arith.constant 0 : index
    %c0_60 = arith.constant 0 : index
    %75 = vector.load %arg6[%c0_59, %c0_60] : memref<128x128xf32, #tpu.memory_space<vmem>>, vector<128x128xf32>
    %cst_61 = arith.constant dense<0.000000e+00> : vector<256x128xf32>
    %76 = tpu.matmul %74, %75, %cst_61 {dimension_numbers = #tpu.dot_dimension_numbers<[1], [0], [0], [1], [0, 0, 1, 1], [], []>} : vector<256x128xf32>, vector<128x128xf32>, vector<256x128xf32> -> vector<256x128xf32>
    %c0_62 = arith.constant 0 : index
    %c0_63 = arith.constant 0 : index
    %77 = vector.load %arg7[%c0_62, %c0_63] : memref<1x128xf32, #tpu.memory_space<vmem>>, vector<1x128xf32>
    %78 = vector.broadcast %77 : vector<1x128xf32> to vector<256x128xf32>
    %79 = arith.addf %76, %78 : vector<256x128xf32>
    %c0_64 = arith.constant 0 : index
    %c0_65 = arith.constant 0 : index
    %80 = vector.load %arg8[%c0_64, %c0_65] : memref<128x128xf32, #tpu.memory_space<vmem>>, vector<128x128xf32>
    %cst_66 = arith.constant dense<0.000000e+00> : vector<256x128xf32>
    %81 = tpu.matmul %79, %80, %cst_66 {dimension_numbers = #tpu.dot_dimension_numbers<[1], [0], [0], [1], [0, 0, 1, 1], [], []>} : vector<256x128xf32>, vector<128x128xf32>, vector<256x128xf32> -> vector<256x128xf32>
    %c0_67 = arith.constant 0 : index
    %c0_68 = arith.constant 0 : index
    %82 = vector.load %arg9[%c0_67, %c0_68] : memref<128x128xf32, #tpu.memory_space<vmem>>, vector<6x128xf32>
    %cst_69 = arith.constant dense<0.000000e+00> : vector<256x128xf32>
    %83 = tpu.matmul %0, %82, %cst_69 {dimension_numbers = #tpu.dot_dimension_numbers<[1], [0], [0], [1], [0, 0, 1, 1], [], []>} : vector<256x6xf32>, vector<6x128xf32>, vector<256x128xf32> -> vector<256x128xf32>
    %84 = arith.addf %81, %83 : vector<256x128xf32>
    %c0_70 = arith.constant 0 : index
    %c0_71 = arith.constant 0 : index
    %85 = vector.load %arg10[%c0_70, %c0_71] : memref<1x128xf32, #tpu.memory_space<vmem>>, vector<1x128xf32>
    %86 = vector.broadcast %85 : vector<1x128xf32> to vector<256x128xf32>
    %87 = arith.addf %84, %86 : vector<256x128xf32>
    %cst_72 = arith.constant 0.000000e+00 : f32
    %88 = vector.broadcast %cst_72 : f32 to vector<256x128xf32>
    %89 = arith.maximumf %87, %88 : vector<256x128xf32>
    %c0_73 = arith.constant 0 : index
    %c0_74 = arith.constant 0 : index
    %90 = vector.load %arg12[%c0_73, %c0_74] : memref<1x128xf32, #tpu.memory_space<vmem>>, vector<1x128xf32>
    %91 = vector.broadcast %90 : vector<1x128xf32> to vector<256x128xf32>
    %92 = arith.mulf %74, %91 : vector<256x128xf32>
    %cst_75 = arith.constant dense<0.000000e+00> : vector<256xf32>
    %93 = vector.multi_reduction <add>, %92, %cst_75 [1] : vector<256x128xf32> to vector<256xf32>
    %94 = vector.shape_cast %93 : vector<256xf32> to vector<256x1xf32>
    %95 = tpu.iota {dimensions = array<i32: 1>} : vector<256x128xi32>
    %c0_76 = arith.constant 0 : index
    %c0_77 = arith.constant 0 : index
    %96 = vector.load %arg11[%c0_76, %c0_77] : memref<128x128xf32, #tpu.memory_space<vmem>>, vector<128x128xf32>
    %cst_78 = arith.constant dense<0.000000e+00> : vector<256x128xf32>
    %97 = tpu.matmul %89, %96, %cst_78 {dimension_numbers = #tpu.dot_dimension_numbers<[1], [0], [0], [1], [0, 0, 1, 1], [], []>} : vector<256x128xf32>, vector<128x128xf32>, vector<256x128xf32> -> vector<256x128xf32>
    %c3_i32 = arith.constant 3 : i32
    %98 = vector.broadcast %c3_i32 : i32 to vector<256x128xi32>
    %99 = arith.cmpi eq, %95, %98 : vector<256x128xi32>
    %cst_79 = arith.constant 0.000000e+00 : f32
    %100 = vector.shape_cast %94 : vector<256x1xf32> to vector<256x1xf32>
    %101 = vector.broadcast %100 : vector<256x1xf32> to vector<256x128xf32>
    %102 = vector.broadcast %cst_79 : f32 to vector<256x128xf32>
    %103 = arith.select %99, %101, %102 : vector<256x128xi1>, vector<256x128xf32>
    %104 = arith.addf %97, %103 : vector<256x128xf32>
    %c0_80 = arith.constant 0 : index
    %c0_81 = arith.constant 0 : index
    %105 = vector.load %arg13[%c0_80, %c0_81] : memref<1x128xf32, #tpu.memory_space<vmem>>, vector<1x128xf32>
    %106 = vector.broadcast %105 : vector<1x128xf32> to vector<256x128xf32>
    %107 = arith.addf %104, %106 : vector<256x128xf32>
    %c0_82 = arith.constant 0 : index
    %c0_83 = arith.constant 0 : index
    %108 = vector.load %arg14[%c0_82, %c0_83] : memref<256x128xf32, #tpu.memory_space<vmem>>, vector<256x128xf32>
    tpu.vector_store %arg14[%c0_82, %c0_83], %107 {strides = array<i32>} : memref<256x128xf32, #tpu.memory_space<vmem>>, vector<256x128xf32>,
    return
  }
  func.func @transform_0(%arg0: i32) -> (i32, i32) {
    %c0_i32 = arith.constant 0 : i32
    %c0_i32_0 = arith.constant 0 : i32
    return %arg0, %c0_i32 : i32, i32
  }
  func.func @transform_1(%arg0: i32) -> (i32, i32) {
    %c0_i32 = arith.constant 0 : i32
    %c0_i32_0 = arith.constant 0 : i32
    %c0_i32_1 = arith.constant 0 : i32
    return %c0_i32, %c0_i32_0 : i32, i32
  }
  func.func @transform_2(%arg0: i32) -> (i32, i32, i32) {
    %c0_i32 = arith.constant 0 : i32
    %c0_i32_0 = arith.constant 0 : i32
    %c0_i32_1 = arith.constant 0 : i32
    %c0_i32_2 = arith.constant 0 : i32
    return %c0_i32, %c0_i32_0, %c0_i32_1 : i32, i32, i32
  }
  func.func @transform_3(%arg0: i32) -> (i32, i32, i32) {
    %c0_i32 = arith.constant 0 : i32
    %c0_i32_0 = arith.constant 0 : i32
    %c0_i32_1 = arith.constant 0 : i32
    %c0_i32_2 = arith.constant 0 : i32
    return %c0_i32, %c0_i32_0, %c0_i32_1 : i32, i32, i32
  }
  func.func @transform_4(%arg0: i32) -> (i32, i32) {
    %c0_i32 = arith.constant 0 : i32
    %c0_i32_0 = arith.constant 0 : i32
    %c0_i32_1 = arith.constant 0 : i32
    return %c0_i32, %c0_i32_0 : i32, i32
  }
  func.func @transform_5(%arg0: i32) -> (i32, i32) {
    %c0_i32 = arith.constant 0 : i32
    %c0_i32_0 = arith.constant 0 : i32
    %c0_i32_1 = arith.constant 0 : i32
    return %c0_i32, %c0_i32_0 : i32, i32
  }
  func.func @transform_6(%arg0: i32) -> (i32, i32) {
    %c0_i32 = arith.constant 0 : i32
    %c0_i32_0 = arith.constant 0 : i32
    %c0_i32_1 = arith.constant 0 : i32
    return %c0_i32, %c0_i32_0 : i32, i32
  }
  func.func @transform_7(%arg0: i32) -> (i32, i32) {
    %c0_i32 = arith.constant 0 : i32
    %c0_i32_0 = arith.constant 0 : i32
    %c0_i32_1 = arith.constant 0 : i32
    return %c0_i32, %c0_i32_0 : i32, i32
  }
  func.func @transform_8(%arg0: i32) -> (i32, i32) {
    %c0_i32 = arith.constant 0 : i32
    %c0_i32_0 = arith.constant 0 : i32
    %c0_i32_1 = arith.constant 0 : i32
    return %c0_i32, %c0_i32_0 : i32, i32
  }
  func.func @transform_9(%arg0: i32) -> (i32, i32) {
    %c0_i32 = arith.constant 0 : i32
    %c0_i32_0 = arith.constant 0 : i32
    %c0_i32_1 = arith.constant 0 : i32
    return %c0_i32, %c0_i32_0 : i32, i32
  }
  func.func @transform_10(%arg0: i32) -> (i32, i32) {
    %c0_i32 = arith.constant 0 : i32
    %c0_i32_0 = arith.constant 0 : i32
    %c0_i32_1 = arith.constant 0 : i32
    return %c0_i32, %c0_i32_0 : i32, i32
  }
  func.func @transform_11(%arg0: i32) -> (i32, i32) {
    %c0_i32 = arith.constant 0 : i32
    %c0_i32_0 = arith.constant 0 : i32
    %c0_i32_1 = arith.constant 0 : i32
    return %c0_i32, %c0_i32_0 : i32, i32
  }
  func.func @transform_12(%arg0: i32) -> (i32, i32) {
    %c0_i32 = arith.constant 0 : i32
    %c0_i32_0 = arith.constant 0 : i32
    %c0_i32_1 = arith.constant 0 : i32
    return %c0_i32, %c0_i32_0 : i32, i32
  }
  func.func @transform_13(%arg0: i32) -> (i32, i32) {
    %c0_i32 = arith.constant 0 : i32
    %c0_i32_0 = arith.constant 0 : i32
    return %arg0, %c0_i32 : i32, i32
  }
}

module attributes {stable_mosaic.version = 11 : i64} {
  func.func @nerf_kernel(%arg0: i32, %arg1: memref<256x128xf32, #tpu.memory_space<vmem>>, %arg2: memref<128x128xf32, #tpu.memory_space<vmem>>, %arg3: memref<7x128x128xf32, #tpu.memory_space<vmem>>, %arg4: memref<8x1x128xf32, #tpu.memory_space<vmem>>, %arg5: memref<128x128xf32, #tpu.memory_space<vmem>>, %arg6: memref<128x128xf32, #tpu.memory_space<vmem>>, %arg7: memref<1x128xf32, #tpu.memory_space<vmem>>, %arg8: memref<128x128xf32, #tpu.memory_space<vmem>>, %arg9: memref<128x128xf32, #tpu.memory_space<vmem>>, %arg10: memref<1x128xf32, #tpu.memory_space<vmem>>, %arg11: memref<128x128xf32, #tpu.memory_space<vmem>>, %arg12: memref<1x128xf32, #tpu.memory_space<vmem>>, %arg13: memref<1x128xf32, #tpu.memory_space<vmem>>, %arg14: memref<256x128xf32, #tpu.memory_space<vmem>>) attributes {dimension_semantics = [#tpu.dimension_semantics<parallel>], iteration_bounds = array<i64: 1>, scalar_prefetch = 0 : i64, scratch_operands = 0 : i64, tpu.core_type = #tpu.core_type<tc>, window_params = [{transform_indices = @transform_0, window_bounds = array<i64: 256, 128>}, {pipeline_mode = #tpu.pipeline_mode<synchronous>, transform_indices = @transform_1, window_bounds = array<i64: 128, 128>}, {pipeline_mode = #tpu.pipeline_mode<synchronous>, transform_indices = @transform_2, window_bounds = array<i64: 7, 128, 128>}, {pipeline_mode = #tpu.pipeline_mode<synchronous>, transform_indices = @transform_3, window_bounds = array<i64: 8, 1, 128>}, {pipeline_mode = #tpu.pipeline_mode<synchronous>, transform_indices = @transform_4, window_bounds = array<i64: 128, 128>}, {pipeline_mode = #tpu.pipeline_mode<synchronous>, transform_indices = @transform_5, window_bounds = array<i64: 128, 128>}, {pipeline_mode = #tpu.pipeline_mode<synchronous>, transform_indices = @transform_6, window_bounds = array<i64: 1, 128>}, {pipeline_mode = #tpu.pipeline_mode<synchronous>, transform_indices = @transform_7, window_bounds = array<i64: 128, 128>}, {pipeline_mode = #tpu.pipeline_mode<synchronous>, transform_indices = @transform_8, window_bounds = array<i64: 128, 128>}, {pipeline_mode = #tpu.pipeline_mode<synchronous>, transform_indices = @transform_9, window_bounds = array<i64: 1, 128>}, {pipeline_mode = #tpu.pipeline_mode<synchronous>, transform_indices = @transform_10, window_bounds = array<i64: 128, 128>}, {pipeline_mode = #tpu.pipeline_mode<synchronous>, transform_indices = @transform_11, window_bounds = array<i64: 1, 128>}, {pipeline_mode = #tpu.pipeline_mode<synchronous>, transform_indices = @transform_12, window_bounds = array<i64: 1, 128>}, {transform_indices = @transform_13, window_bounds = array<i64: 256, 128>}]} {
    %c0 = arith.constant 0 : index
    %c0_0 = arith.constant 0 : index
    %0 = vector.load %arg1[%c0, %c0_0] : memref<256x128xf32, #tpu.memory_space<vmem>>, vector<256x128xf32>
    %c0_1 = arith.constant 0 : index
    %c0_2 = arith.constant 0 : index
    %1 = vector.load %arg2[%c0_1, %c0_2] : memref<128x128xf32, #tpu.memory_space<vmem>>, vector<128x128xf32>
    %cst = arith.constant dense<0.000000e+00> : vector<256x128xf32>
    %2 = tpu.matmul %0, %1, %cst {dimension_numbers = #tpu.dot_dimension_numbers<[1], [0], [0], [1], [0, 0, 1, 1], [], []>} : vector<256x128xf32>, vector<128x128xf32>, vector<256x128xf32> -> vector<256x128xf32>
    %c0_3 = arith.constant 0 : index
    %c0_4 = arith.constant 0 : index
    %c0_5 = arith.constant 0 : index
    %3 = vector.load %arg4[%c0_3, %c0_4, %c0_5] : memref<8x1x128xf32, #tpu.memory_space<vmem>>, vector<1x1x128xf32>
    %4 = vector.shape_cast %3 : vector<1x1x128xf32> to vector<1x128xf32>
    %5 = vector.broadcast %4 : vector<1x128xf32> to vector<256x128xf32>
    %6 = arith.addf %2, %5 : vector<256x128xf32>
    %cst_6 = arith.constant 0.000000e+00 : f32
    %7 = vector.broadcast %cst_6 : f32 to vector<256x128xf32>
    %8 = arith.maximumf %6, %7 : vector<256x128xf32>
    %c0_7 = arith.constant 0 : index
    %c0_8 = arith.constant 0 : index
    %c0_9 = arith.constant 0 : index
    %9 = vector.load %arg3[%c0_7, %c0_8, %c0_9] : memref<7x128x128xf32, #tpu.memory_space<vmem>>, vector<1x128x128xf32>
    %10 = vector.shape_cast %9 : vector<1x128x128xf32> to vector<128x128xf32>
    %cst_10 = arith.constant dense<0.000000e+00> : vector<256x128xf32>
    %11 = tpu.matmul %8, %10, %cst_10 {dimension_numbers = #tpu.dot_dimension_numbers<[1], [0], [0], [1], [0, 0, 1, 1], [], []>} : vector<256x128xf32>, vector<128x128xf32>, vector<256x128xf32> -> vector<256x128xf32>
    %c1 = arith.constant 1 : index
    %c0_11 = arith.constant 0 : index
    %c0_12 = arith.constant 0 : index
    %12 = vector.load %arg4[%c1, %c0_11, %c0_12] : memref<8x1x128xf32, #tpu.memory_space<vmem>>, vector<1x1x128xf32>
    %13 = vector.shape_cast %12 : vector<1x1x128xf32> to vector<1x128xf32>
    %14 = vector.broadcast %13 : vector<1x128xf32> to vector<256x128xf32>
    %15 = arith.addf %11, %14 : vector<256x128xf32>
    %cst_13 = arith.constant 0.000000e+00 : f32
    %16 = vector.broadcast %cst_13 : f32 to vector<256x128xf32>
    %17 = arith.maximumf %15, %16 : vector<256x128xf32>
    %c1_14 = arith.constant 1 : index
    %c0_15 = arith.constant 0 : index
    %c0_16 = arith.constant 0 : index
    %18 = vector.load %arg3[%c1_14, %c0_15, %c0_16] : memref<7x128x128xf32, #tpu.memory_space<vmem>>, vector<1x128x128xf32>
    %19 = vector.shape_cast %18 : vector<1x128x128xf32> to vector<128x128xf32>
    %cst_17 = arith.constant dense<0.000000e+00> : vector<256x128xf32>
    %20 = tpu.matmul %17, %19, %cst_17 {dimension_numbers = #tpu.dot_dimension_numbers<[1], [0], [0], [1], [0, 0, 1, 1], [], []>} : vector<256x128xf32>, vector<128x128xf32>, vector<256x128xf32> -> vector<256x128xf32>
    %c2 = arith.constant 2 : index
    %c0_18 = arith.constant 0 : index
    %c0_19 = arith.constant 0 : index
    %21 = vector.load %arg4[%c2, %c0_18, %c0_19] : memref<8x1x128xf32, #tpu.memory_space<vmem>>, vector<1x1x128xf32>
    %22 = vector.shape_cast %21 : vector<1x1x128xf32> to vector<1x128xf32>
    %23 = vector.broadcast %22 : vector<1x128xf32> to vector<256x128xf32>
    %24 = arith.addf %20, %23 : vector<256x128xf32>
    %cst_20 = arith.constant 0.000000e+00 : f32
    %25 = vector.broadcast %cst_20 : f32 to vector<256x128xf32>
    %26 = arith.maximumf %24, %25 : vector<256x128xf32>
    %c2_21 = arith.constant 2 : index
    %c0_22 = arith.constant 0 : index
    %c0_23 = arith.constant 0 : index
    %27 = vector.load %arg3[%c2_21, %c0_22, %c0_23] : memref<7x128x128xf32, #tpu.memory_space<vmem>>, vector<1x128x128xf32>
    %28 = vector.shape_cast %27 : vector<1x128x128xf32> to vector<128x128xf32>
    %cst_24 = arith.constant dense<0.000000e+00> : vector<256x128xf32>
    %29 = tpu.matmul %26, %28, %cst_24 {dimension_numbers = #tpu.dot_dimension_numbers<[1], [0], [0], [1], [0, 0, 1, 1], [], []>} : vector<256x128xf32>, vector<128x128xf32>, vector<256x128xf32> -> vector<256x128xf32>
    %c3 = arith.constant 3 : index
    %c0_25 = arith.constant 0 : index
    %c0_26 = arith.constant 0 : index
    %30 = vector.load %arg4[%c3, %c0_25, %c0_26] : memref<8x1x128xf32, #tpu.memory_space<vmem>>, vector<1x1x128xf32>
    %31 = vector.shape_cast %30 : vector<1x1x128xf32> to vector<1x128xf32>
    %32 = vector.broadcast %31 : vector<1x128xf32> to vector<256x128xf32>
    %33 = arith.addf %29, %32 : vector<256x128xf32>
    %cst_27 = arith.constant 0.000000e+00 : f32
    %34 = vector.broadcast %cst_27 : f32 to vector<256x128xf32>
    %35 = arith.maximumf %33, %34 : vector<256x128xf32>
    %c3_28 = arith.constant 3 : index
    %c0_29 = arith.constant 0 : index
    %c0_30 = arith.constant 0 : index
    %36 = vector.load %arg3[%c3_28, %c0_29, %c0_30] : memref<7x128x128xf32, #tpu.memory_space<vmem>>, vector<1x128x128xf32>
    %37 = vector.shape_cast %36 : vector<1x128x128xf32> to vector<128x128xf32>
    %cst_31 = arith.constant dense<0.000000e+00> : vector<256x128xf32>
    %38 = tpu.matmul %35, %37, %cst_31 {dimension_numbers = #tpu.dot_dimension_numbers<[1], [0], [0], [1], [0, 0, 1, 1], [], []>} : vector<256x128xf32>, vector<128x128xf32>, vector<256x128xf32> -> vector<256x128xf32>
    %c4 = arith.constant 4 : index
    %c0_32 = arith.constant 0 : index
    %c0_33 = arith.constant 0 : index
    %39 = vector.load %arg4[%c4, %c0_32, %c0_33] : memref<8x1x128xf32, #tpu.memory_space<vmem>>, vector<1x1x128xf32>
    %40 = vector.shape_cast %39 : vector<1x1x128xf32> to vector<1x128xf32>
    %41 = vector.broadcast %40 : vector<1x128xf32> to vector<256x128xf32>
    %42 = arith.addf %38, %41 : vector<256x128xf32>
    %cst_34 = arith.constant 0.000000e+00 : f32
    %43 = vector.broadcast %cst_34 : f32 to vector<256x128xf32>
    %44 = arith.maximumf %42, %43 : vector<256x128xf32>
    %c4_35 = arith.constant 4 : index
    %c0_36 = arith.constant 0 : index
    %c0_37 = arith.constant 0 : index
    %45 = vector.load %arg3[%c4_35, %c0_36, %c0_37] : memref<7x128x128xf32, #tpu.memory_space<vmem>>, vector<1x128x128xf32>
    %46 = vector.shape_cast %45 : vector<1x128x128xf32> to vector<128x128xf32>
    %cst_38 = arith.constant dense<0.000000e+00> : vector<256x128xf32>
    %47 = tpu.matmul %44, %46, %cst_38 {dimension_numbers = #tpu.dot_dimension_numbers<[1], [0], [0], [1], [0, 0, 1, 1], [], []>} : vector<256x128xf32>, vector<128x128xf32>, vector<256x128xf32> -> vector<256x128xf32>
    %c0_39 = arith.constant 0 : index
    %c0_40 = arith.constant 0 : index
    %48 = vector.load %arg5[%c0_39, %c0_40] : memref<128x128xf32, #tpu.memory_space<vmem>>, vector<128x128xf32>
    %cst_41 = arith.constant dense<0.000000e+00> : vector<256x128xf32>
    %49 = tpu.matmul %0, %48, %cst_41 {dimension_numbers = #tpu.dot_dimension_numbers<[1], [0], [0], [1], [0, 0, 1, 1], [], []>} : vector<256x128xf32>, vector<128x128xf32>, vector<256x128xf32> -> vector<256x128xf32>
    %50 = arith.addf %47, %49 : vector<256x128xf32>
    %c5 = arith.constant 5 : index
    %c0_42 = arith.constant 0 : index
    %c0_43 = arith.constant 0 : index
    %51 = vector.load %arg4[%c5, %c0_42, %c0_43] : memref<8x1x128xf32, #tpu.memory_space<vmem>>, vector<1x1x128xf32>
    %52 = vector.shape_cast %51 : vector<1x1x128xf32> to vector<1x128xf32>
    %53 = vector.broadcast %52 : vector<1x128xf32> to vector<256x128xf32>
    %54 = arith.addf %50, %53 : vector<256x128xf32>
    %cst_44 = arith.constant 0.000000e+00 : f32
    %55 = vector.broadcast %cst_44 : f32 to vector<256x128xf32>
    %56 = arith.maximumf %54, %55 : vector<256x128xf32>
    %c5_45 = arith.constant 5 : index
    %c0_46 = arith.constant 0 : index
    %c0_47 = arith.constant 0 : index
    %57 = vector.load %arg3[%c5_45, %c0_46, %c0_47] : memref<7x128x128xf32, #tpu.memory_space<vmem>>, vector<1x128x128xf32>
    %58 = vector.shape_cast %57 : vector<1x128x128xf32> to vector<128x128xf32>
    %cst_48 = arith.constant dense<0.000000e+00> : vector<256x128xf32>
    %59 = tpu.matmul %56, %58, %cst_48 {dimension_numbers = #tpu.dot_dimension_numbers<[1], [0], [0], [1], [0, 0, 1, 1], [], []>} : vector<256x128xf32>, vector<128x128xf32>, vector<256x128xf32> -> vector<256x128xf32>
    %c6 = arith.constant 6 : index
    %c0_49 = arith.constant 0 : index
    %c0_50 = arith.constant 0 : index
    %60 = vector.load %arg4[%c6, %c0_49, %c0_50] : memref<8x1x128xf32, #tpu.memory_space<vmem>>, vector<1x1x128xf32>
    %61 = vector.shape_cast %60 : vector<1x1x128xf32> to vector<1x128xf32>
    %62 = vector.broadcast %61 : vector<1x128xf32> to vector<256x128xf32>
    %63 = arith.addf %59, %62 : vector<256x128xf32>
    %cst_51 = arith.constant 0.000000e+00 : f32
    %64 = vector.broadcast %cst_51 : f32 to vector<256x128xf32>
    %65 = arith.maximumf %63, %64 : vector<256x128xf32>
    %c6_52 = arith.constant 6 : index
    %c0_53 = arith.constant 0 : index
    %c0_54 = arith.constant 0 : index
    %66 = vector.load %arg3[%c6_52, %c0_53, %c0_54] : memref<7x128x128xf32, #tpu.memory_space<vmem>>, vector<1x128x128xf32>
    %67 = vector.shape_cast %66 : vector<1x128x128xf32> to vector<128x128xf32>
    %cst_55 = arith.constant dense<0.000000e+00> : vector<256x128xf32>
    %68 = tpu.matmul %65, %67, %cst_55 {dimension_numbers = #tpu.dot_dimension_numbers<[1], [0], [0], [1], [0, 0, 1, 1], [], []>} : vector<256x128xf32>, vector<128x128xf32>, vector<256x128xf32> -> vector<256x128xf32>
    %c7 = arith.constant 7 : index
    %c0_56 = arith.constant 0 : index
    %c0_57 = arith.constant 0 : index
    %69 = vector.load %arg4[%c7, %c0_56, %c0_57] : memref<8x1x128xf32, #tpu.memory_space<vmem>>, vector<1x1x128xf32>
    %70 = vector.shape_cast %69 : vector<1x1x128xf32> to vector<1x128xf32>
    %71 = vector.broadcast %70 : vector<1x128xf32> to vector<256x128xf32>
    %72 = arith.addf %68, %71 : vector<256x128xf32>
    %cst_58 = arith.constant 0.000000e+00 : f32
    %73 = vector.broadcast %cst_58 : f32 to vector<256x128xf32>
    %74 = arith.maximumf %72, %73 : vector<256x128xf32>
    %c0_59 = arith.constant 0 : index
    %c0_60 = arith.constant 0 : index
    %75 = vector.load %arg6[%c0_59, %c0_60] : memref<128x128xf32, #tpu.memory_space<vmem>>, vector<128x128xf32>
    %cst_61 = arith.constant dense<0.000000e+00> : vector<256x128xf32>
    %76 = tpu.matmul %74, %75, %cst_61 {dimension_numbers = #tpu.dot_dimension_numbers<[1], [0], [0], [1], [0, 0, 1, 1], [], []>} : vector<256x128xf32>, vector<128x128xf32>, vector<256x128xf32> -> vector<256x128xf32>
    %c0_62 = arith.constant 0 : index
    %c0_63 = arith.constant 0 : index
    %77 = vector.load %arg7[%c0_62, %c0_63] : memref<1x128xf32, #tpu.memory_space<vmem>>, vector<1x128xf32>
    %78 = vector.broadcast %77 : vector<1x128xf32> to vector<256x128xf32>
    %79 = arith.addf %76, %78 : vector<256x128xf32>
    %c0_64 = arith.constant 0 : index
    %c0_65 = arith.constant 0 : index
    %80 = vector.load %arg8[%c0_64, %c0_65] : memref<128x128xf32, #tpu.memory_space<vmem>>, vector<128x128xf32>
    %cst_66 = arith.constant dense<0.000000e+00> : vector<256x128xf32>
    %81 = tpu.matmul %79, %80, %cst_66 {dimension_numbers = #tpu.dot_dimension_numbers<[1], [0], [0], [1], [0, 0, 1, 1], [], []>} : vector<256x128xf32>, vector<128x128xf32>, vector<256x128xf32> -> vector<256x128xf32>
    %c0_67 = arith.constant 0 : index
    %c0_68 = arith.constant 0 : index
    %82 = vector.load %arg9[%c0_67, %c0_68] : memref<128x128xf32, #tpu.memory_space<vmem>>, vector<128x128xf32>
    %cst_69 = arith.constant dense<0.000000e+00> : vector<256x128xf32>
    %83 = tpu.matmul %0, %82, %cst_69 {dimension_numbers = #tpu.dot_dimension_numbers<[1], [0], [0], [1], [0, 0, 1, 1], [], []>} : vector<256x128xf32>, vector<128x128xf32>, vector<256x128xf32> -> vector<256x128xf32>
    %84 = arith.addf %81, %83 : vector<256x128xf32>
    %c0_70 = arith.constant 0 : index
    %c0_71 = arith.constant 0 : index
    %85 = vector.load %arg10[%c0_70, %c0_71] : memref<1x128xf32, #tpu.memory_space<vmem>>, vector<1x128xf32>
    %86 = vector.broadcast %85 : vector<1x128xf32> to vector<256x128xf32>
    %87 = arith.addf %84, %86 : vector<256x128xf32>
    %cst_72 = arith.constant 0.000000e+00 : f32
    %88 = vector.broadcast %cst_72 : f32 to vector<256x128xf32>
    %89 = arith.maximumf %87, %88 : vector<256x128xf32>
    %c0_73 = arith.constant 0 : index
    %c0_74 = arith.constant 0 : index
    %90 = vector.load %arg12[%c0_73, %c0_74] : memref<1x128xf32, #tpu.memory_space<vmem>>, vector<1x128xf32>
    %91 = vector.broadcast %90 : vector<1x128xf32> to vector<256x128xf32>
    %92 = arith.mulf %74, %91 : vector<256x128xf32>
    %cst_75 = arith.constant dense<0.000000e+00> : vector<256xf32>
    %93 = vector.multi_reduction <add>, %92, %cst_75 [1] : vector<256x128xf32> to vector<256xf32>
    %94 = vector.shape_cast %93 : vector<256xf32> to vector<256x1xf32>
    %95 = tpu.iota {dimensions = array<i32: 1>} : vector<256x128xi32>
    %c0_76 = arith.constant 0 : index
    %c0_77 = arith.constant 0 : index
    %96 = vector.load %arg11[%c0_76, %c0_77] : memref<128x128xf32, #tpu.memory_space<vmem>>, vector<128x128xf32>
    %cst_78 = arith.constant dense<0.000000e+00> : vector<256x128xf32>
    %97 = tpu.matmul %89, %96, %cst_78 {dimension_numbers = #tpu.dot_dimension_numbers<[1], [0], [0], [1], [0, 0, 1, 1], [], []>} : vector<256x128xf32>, vector<128x128xf32>, vector<256x128xf32> -> vector<256x128xf32>
    %c3_i32 = arith.constant 3 : i32
    %98 = vector.broadcast %c3_i32 : i32 to vector<256x128xi32>
    %99 = arith.cmpi eq, %95, %98 : vector<256x128xi32>
    %cst_79 = arith.constant 0.000000e+00 : f32
    %100 = vector.shape_cast %94 : vector<256x1xf32> to vector<256x1xf32>
    %101 = vector.broadcast %100 : vector<256x1xf32> to vector<256x128xf32>
    %102 = vector.broadcast %cst_79 : f32 to vector<256x128xf32>
    %103 = arith.select %99, %101, %102 : vector<256x128xi1>, vector<256x128xf32>
    %104 = arith.addf %97, %103 : vector<256x128xf32>
    %c0_80 = arith.constant 0 : index
    %c0_81 = arith.constant 0 : index
    %105 = vector.load %arg13[%c0_80, %c0_81] : memref<1x128xf32, #tpu.memory_space<vmem>>, vector<1x128xf32>
    %106 = vector.broadcast %105 : vector<1x128xf32> to vector<256x128xf32>
    %107 = arith.addf %104, %106 : vector<256x128xf32>
    %c0_82 = arith.constant 0 : index
    %c0_83 = arith.constant 0 : index
    %108 = vector.load %arg14[%c0_82, %c0_83] : memref<256x128xf32, #tpu.memory_space<vmem>>, vector<256x128xf32>
    tpu.vector_store %arg14[%c0_82, %c0_83], %107 {strides = array<i32>} : memref<256x128xf32, #tpu.memory_space<vmem>>, vector<256x128xf32>,
    return
  }
  func.func @transform_0(%arg0: i32) -> (i32, i32) {
    %c0_i32 = arith.constant 0 : i32
    %c0_i32_0 = arith.constant 0 : i32
    return %arg0, %c0_i32 : i32, i32
  }
  func.func @transform_1(%arg0: i32) -> (i32, i32) {
    %c0_i32 = arith.constant 0 : i32
    %c0_i32_0 = arith.constant 0 : i32
    %c0_i32_1 = arith.constant 0 : i32
    return %c0_i32, %c0_i32_0 : i32, i32
  }
  func.func @transform_2(%arg0: i32) -> (i32, i32, i32) {
    %c0_i32 = arith.constant 0 : i32
    %c0_i32_0 = arith.constant 0 : i32
    %c0_i32_1 = arith.constant 0 : i32
    %c0_i32_2 = arith.constant 0 : i32
    return %c0_i32, %c0_i32_0, %c0_i32_1 : i32, i32, i32
  }
  func.func @transform_3(%arg0: i32) -> (i32, i32, i32) {
    %c0_i32 = arith.constant 0 : i32
    %c0_i32_0 = arith.constant 0 : i32
    %c0_i32_1 = arith.constant 0 : i32
    %c0_i32_2 = arith.constant 0 : i32
    return %c0_i32, %c0_i32_0, %c0_i32_1 : i32, i32, i32
  }
  func.func @transform_4(%arg0: i32) -> (i32, i32) {
    %c0_i32 = arith.constant 0 : i32
    %c0_i32_0 = arith.constant 0 : i32
    %c0_i32_1 = arith.constant 0 : i32
    return %c0_i32, %c0_i32_0 : i32, i32
  }
  func.func @transform_5(%arg0: i32) -> (i32, i32) {
    %c0_i32 = arith.constant 0 : i32
    %c0_i32_0 = arith.constant 0 : i32
    %c0_i32_1 = arith.constant 0 : i32
    return %c0_i32, %c0_i32_0 : i32, i32
  }
  func.func @transform_6(%arg0: i32) -> (i32, i32) {
    %c0_i32 = arith.constant 0 : i32
    %c0_i32_0 = arith.constant 0 : i32
    %c0_i32_1 = arith.constant 0 : i32
    return %c0_i32, %c0_i32_0 : i32, i32
  }
  func.func @transform_7(%arg0: i32) -> (i32, i32) {
    %c0_i32 = arith.constant 0 : i32
    %c0_i32_0 = arith.constant 0 : i32
    %c0_i32_1 = arith.constant 0 : i32
    return %c0_i32, %c0_i32_0 : i32, i32
  }
  func.func @transform_8(%arg0: i32) -> (i32, i32) {
    %c0_i32 = arith.constant 0 : i32
    %c0_i32_0 = arith.constant 0 : i32
    %c0_i32_1 = arith.constant 0 : i32
    return %c0_i32, %c0_i32_0 : i32, i32
  }
  func.func @transform_9(%arg0: i32) -> (i32, i32) {
    %c0_i32 = arith.constant 0 : i32
    %c0_i32_0 = arith.constant 0 : i32
    %c0_i32_1 = arith.constant 0 : i32
    return %c0_i32, %c0_i32_0 : i32, i32
  }
  func.func @transform_10(%arg0: i32) -> (i32, i32) {
    %c0_i32 = arith.constant 0 : i32
    %c0_i32_0 = arith.constant 0 : i32
    %c0_i32_1 = arith.constant 0 : i32
    return %c0_i32, %c0_i32_0 : i32, i32
  }
  func.func @transform_11(%arg0: i32) -> (i32, i32) {
    %c0_i32 = arith.constant 0 : i32
    %c0_i32_0 = arith.constant 0 : i32
    %c0_i32_1 = arith.constant 0 : i32
    return %c0_i32, %c0_i32_0 : i32, i32
  }
  func.func @transform_12(%arg0: i32) -> (i32, i32) {
    %c0_i32 = arith.constant 0 : i32
    %c0_i32_0 = arith.constant 0 : i32
    %c0_i32_1 = arith.constant 0 : i32
    return %c0_i32, %c0_i32_0 : i32, i32
  }
  func.func @transform_13(%arg0: i32) -> (i32, i32) {
    %c0_i32 = arith.constant 0 : i32
    %c0_i32_0 = arith.constant 0 : i32
    return %arg0, %c0_i32 : i32, i32
  }
}

</mosaic_0001>

<llo_original>
// kernel: tpu_custom_call.1
$region0: #{tpu_custom_call.1}
  #allocation0 [shape = 'u32[]', space=smem, size = 0x4, offset = 0x4, fixed_abs, tag = 'smem constant byte address 0x4 - core index']
  #allocation1 [shape = 'u32[144,128]{1,0:T(1,128)}', space=vmem, size = 0x12000, scoped, tag = 'internal scratch']
  %s0 = inlined_call_operand.vmem [shape: f32[256,6], index: 0, kind: input, shape index: {}]
  %s1 = inlined_call_operand.vmem [shape: f32[128,128], index: 1, kind: input, shape index: {}]
  %s2 = inlined_call_operand.hbm [shape: f32[7,128,128], index: 2, kind: input, shape index: {}]
  %s3 = inlined_call_operand.vmem [shape: f32[8,1,128], index: 3, kind: input, shape index: {}]
  %s4 = inlined_call_operand.vmem [shape: f32[128,128], index: 4, kind: input, shape index: {}]
  %s5 = inlined_call_operand.hbm [shape: f32[128,128], index: 5, kind: input, shape index: {}]
  %s6 = inlined_call_operand.vmem [shape: f32[1,128], index: 6, kind: input, shape index: {}]
  %s7 = inlined_call_operand.hbm [shape: f32[128,128], index: 7, kind: input, shape index: {}]
  %s8 = inlined_call_operand.hbm [shape: f32[128,128], index: 8, kind: input, shape index: {}]
  %s9 = inlined_call_operand.vmem [shape: f32[1,128], index: 9, kind: input, shape index: {}]
  %s10 = inlined_call_operand.hbm [shape: f32[128,128], index: 10, kind: input, shape index: {}]
  %s11 = inlined_call_operand.vmem [shape: f32[1,128], index: 11, kind: input, shape index: {}]
  %s12 = inlined_call_operand.vmem [shape: f32[1,128], index: 12, kind: input, shape index: {}]
  %s13 = inlined_call_operand.hbm [shape: f32[256,128], index: 13, kind: output, shape index: {}]
  %s14 = sld [smem:[#allocation0]]
  $region82: #{tpu_custom_call.1} parent=0
    _
  %s16 = ssub.s32 1, %s14
  %s17 = scalar_select 0, %s16, %s14
  $region1: #{tpu_custom_call.1} parent=0
    #allocation2 [shape = 'u8[458752]{0}', space=vmem, size = 0x70000, scoped, tag = 'input window, operand 2, single buffered']
    #allocation3 [shape = 's32[1]{0}', space=sflag, size = 0x4, scoped, tag = 'scoped memory for tpu_custom_call.1']
    #allocation4 [shape = 's32[1]{0}', space=sflag, size = 0x4, scoped, tag = 'scoped memory for tpu_custom_call.1']
    #allocation5 [shape = 'u8[65536]{0}', space=vmem, size = 0x10000, scoped, tag = 'input window, operand 5, single buffered']
    #allocation6 [shape = 's32[1]{0}', space=sflag, size = 0x4, scoped, tag = 'scoped memory for tpu_custom_call.1']
    #allocation7 [shape = 'u8[65536]{0}', space=vmem, size = 0x10000, scoped, tag = 'input window, operand 7, single buffered']
    #allocation8 [shape = 'u8[65536]{0}', space=vmem, size = 0x10000, scoped, tag = 'input window, operand 8, single buffered']
    #allocation9 [shape = 's32[1]{0}', space=sflag, size = 0x4, scoped, tag = 'scoped memory for tpu_custom_call.1']
    #allocation10 [shape = 'u8[65536]{0}', space=vmem, size = 0x10000, scoped, tag = 'input window, operand 10, single buffered']
    #allocation11 [shape = 'u8[131072]{0}', space=vmem, size = 0x20000, scoped, tag = 'output window, operand 0, single buffered']
    %18 = vsyncpa [#allocation3], 0
    %19 = vsyncpa [#allocation6], 0
    %20 = vsyncpa [#allocation9], 0
    %21 = vsyncpa [#allocation4], 0
    // Predicated region
    $region2: #{tpu_custom_call.1} parent=1 // pred_check
      _
    $region3: #{tpu_custom_call.1} parent=1 // pred_check_branch
      %23 = sbr.rel (0) target = $region5
    $region4: #{tpu_custom_call.1} parent=1 // pred_region
      _
    $region5: #{tpu_custom_call.1} parent=1 // pred_fallthru
      _
    // Predicated region
    $region6: #{tpu_custom_call.1} parent=1 // pred_check
      _
    $region7: #{tpu_custom_call.1} parent=1 // pred_check_branch
      %25 = sbr.rel (0) target = $region9
    $region8: #{tpu_custom_call.1} parent=1 // pred_region
      _
    $region9: #{tpu_custom_call.1} parent=1 // pred_fallthru
      _
    // Predicated region
    $region10: #{tpu_custom_call.1} parent=1 // pred_check
      _
    $region11: #{tpu_custom_call.1} parent=1 // pred_check_branch
      %27 = sbr.rel (0) target = $region13
    $region12: #{tpu_custom_call.1} parent=1 // pred_region
      %s29 = ssub.s32 14336, 14336
      %30 = vsyncadd [#allocation3], %s29
      %s31 = sshll.u32 [#allocation2], 4
      %s32 = int_to_ptr.vmem [resolvable:$true] %s31
      %37 = dma.hbm_to_vmem [thread:$0]  %s2, 14336, %s32, [#allocation3], 128, 128, 8
    $region13: #{tpu_custom_call.1} parent=1 // pred_fallthru
      _
    // Predicated region
    $region14: #{tpu_custom_call.1} parent=1 // pred_check
      _
    $region15: #{tpu_custom_call.1} parent=1 // pred_check_branch
      %39 = sbr.rel (0) target = $region17
    $region16: #{tpu_custom_call.1} parent=1 // pred_region
      _
    $region17: #{tpu_custom_call.1} parent=1 // pred_fallthru
      _
    // Predicated region
    $region18: #{tpu_custom_call.1} parent=1 // pred_check
      _
    $region19: #{tpu_custom_call.1} parent=1 // pred_check_branch
      %41 = sbr.rel (0) target = $region21
    $region20: #{tpu_custom_call.1} parent=1 // pred_region
      _
    $region21: #{tpu_custom_call.1} parent=1 // pred_fallthru
      _
    // Predicated region
    $region22: #{tpu_custom_call.1} parent=1 // pred_check
      _
    $region23: #{tpu_custom_call.1} parent=1 // pred_check_branch
      %43 = sbr.rel (0) target = $region25
    $region24: #{tpu_custom_call.1} parent=1 // pred_region
      %s45 = ssub.s32 2048, 2048
      %46 = vsyncadd [#allocation6], %s45
      %s47 = sshll.u32 [#allocation5], 4
      %s48 = int_to_ptr.vmem [resolvable:$true] %s47
      %53 = dma.hbm_to_vmem [thread:$0]  %s5, 2048, %s48, [#allocation6], 128, 128, 8
    $region25: #{tpu_custom_call.1} parent=1 // pred_fallthru
      _
    // Predicated region
    $region26: #{tpu_custom_call.1} parent=1 // pred_check
      _
    $region27: #{tpu_custom_call.1} parent=1 // pred_check_branch
      %55 = sbr.rel (0) target = $region29
    $region28: #{tpu_custom_call.1} parent=1 // pred_region
      _
    $region29: #{tpu_custom_call.1} parent=1 // pred_fallthru
      _
    // Predicated region
    $region30: #{tpu_custom_call.1} parent=1 // pred_check
      _
    $region31: #{tpu_custom_call.1} parent=1 // pred_check_branch
      %57 = sbr.rel (0) target = $region33
    $region32: #{tpu_custom_call.1} parent=1 // pred_region
      %s59 = ssub.s32 2048, 2048
      %60 = vsyncadd [#allocation6], %s59
      %s61 = sshll.u32 [#allocation7], 4
      %s62 = int_to_ptr.vmem [resolvable:$true] %s61
      %67 = dma.hbm_to_vmem [thread:$0]  %s7, 2048, %s62, [#allocation6], 128, 128, 8
    $region33: #{tpu_custom_call.1} parent=1 // pred_fallthru
      _
    // Predicated region
    $region34: #{tpu_custom_call.1} parent=1 // pred_check
      _
    $region35: #{tpu_custom_call.1} parent=1 // pred_check_branch
      %69 = sbr.rel (0) target = $region37
    $region36: #{tpu_custom_call.1} parent=1 // pred_region
      %s71 = ssub.s32 2048, 2048
      %72 = vsyncadd [#allocation9], %s71
      %s73 = sshll.u32 [#allocation8], 4
      %s74 = int_to_ptr.vmem [resolvable:$true] %s73
      %79 = dma.hbm_to_vmem [thread:$0]  %s8, 2048, %s74, [#allocation9], 128, 128, 8
    $region37: #{tpu_custom_call.1} parent=1 // pred_fallthru
      _
    // Predicated region
    $region38: #{tpu_custom_call.1} parent=1 // pred_check
      _
    $region39: #{tpu_custom_call.1} parent=1 // pred_check_branch
      %81 = sbr.rel (0) target = $region41
    $region40: #{tpu_custom_call.1} parent=1 // pred_region
      _
    $region41: #{tpu_custom_call.1} parent=1 // pred_fallthru
      _
    // Predicated region
    $region42: #{tpu_custom_call.1} parent=1 // pred_check
      _
    $region43: #{tpu_custom_call.1} parent=1 // pred_check_branch
      %83 = sbr.rel (0) target = $region45
    $region44: #{tpu_custom_call.1} parent=1 // pred_region
      %s85 = ssub.s32 2048, 2048
      %86 = vsyncadd [#allocation9], %s85
      %s87 = sshll.u32 [#allocation10], 4
      %s88 = int_to_ptr.vmem [resolvable:$true] %s87
      %93 = dma.hbm_to_vmem [thread:$0]  %s10, 2048, %s88, [#allocation9], 128, 128, 8
    $region45: #{tpu_custom_call.1} parent=1 // pred_fallthru
      _
    // Predicated region
    $region46: #{tpu_custom_call.1} parent=1 // pred_check
      _
    $region47: #{tpu_custom_call.1} parent=1 // pred_check_branch
      %95 = sbr.rel (0) target = $region49
    $region48: #{tpu_custom_call.1} parent=1 // pred_region
      _
    $region49: #{tpu_custom_call.1} parent=1 // pred_fallthru
      _
    // Predicated region
    $region50: #{tpu_custom_call.1} parent=1 // pred_check
      _
    $region51: #{tpu_custom_call.1} parent=1 // pred_check_branch
      %97 = sbr.rel (0) target = $region53
    $region52: #{tpu_custom_call.1} parent=1 // pred_region
      _
    $region53: #{tpu_custom_call.1} parent=1 // pred_fallthru
      _
    // Predicated region
    $region54: #{tpu_custom_call.1} parent=1 // pred_check
      _
    $region55: #{tpu_custom_call.1} parent=1 // pred_check_branch
      %99 = sbr.rel (0) target = $region57
    $region56: #{tpu_custom_call.1} parent=1 // pred_region
      %100 = dma.done [#allocation3], 14336
    $region57: #{tpu_custom_call.1} parent=1 // pred_fallthru
      _
    // Predicated region
    $region58: #{tpu_custom_call.1} parent=1 // pred_check
      _
    $region59: #{tpu_custom_call.1} parent=1 // pred_check_branch
      %102 = sbr.rel (0) target = $region61
    $region60: #{tpu_custom_call.1} parent=1 // pred_region
      %103 = dma.done [#allocation6], 2048
    $region61: #{tpu_custom_call.1} parent=1 // pred_fallthru
      _
    // Predicated region
    $region62: #{tpu_custom_call.1} parent=1 // pred_check
      _
    $region63: #{tpu_custom_call.1} parent=1 // pred_check_branch
      %105 = sbr.rel (0) target = $region65
    $region64: #{tpu_custom_call.1} parent=1 // pred_region
      %106 = dma.done [#allocation6], 2048
    $region65: #{tpu_custom_call.1} parent=1 // pred_fallthru
      _
    // Predicated region
    $region66: #{tpu_custom_call.1} parent=1 // pred_check
      _
    $region67: #{tpu_custom_call.1} parent=1 // pred_check_branch
      %108 = sbr.rel (0) target = $region69
    $region68: #{tpu_custom_call.1} parent=1 // pred_region
      %109 = dma.done [#allocation9], 2048
    $region69: #{tpu_custom_call.1} parent=1 // pred_fallthru
      _
    // Predicated region
    $region70: #{tpu_custom_call.1} parent=1 // pred_check
      _
    $region71: #{tpu_custom_call.1} parent=1 // pred_check_branch
      %111 = sbr.rel (0) target = $region73
    $region72: #{tpu_custom_call.1} parent=1 // pred_region
      %112 = dma.done [#allocation9], 2048
    $region73: #{tpu_custom_call.1} parent=1 // pred_fallthru
      _
    %v113 = vld [vmem:[%s0] sm:$0xff]
    %v114 = vld [vmem:[%s0 + $0x8] sm:$0xff]
    %v115 = vld [vmem:[%s0 + $0x10] sm:$0xff]
    %v116 = vld [vmem:[%s0 + $0x18] sm:$0xff]
    %v117 = vld [vmem:[%s0 + $0x20] sm:$0xff]
    %v118 = vld [vmem:[%s0 + $0x28] sm:$0xff]
    %v119 = vld [vmem:[%s0 + $0x30] sm:$0xff]
    %v120 = vld [vmem:[%s0 + $0x38] sm:$0xff]
    %v121 = vld [vmem:[%s0 + $0x40] sm:$0xff]
    %v122 = vld [vmem:[%s0 + $0x48] sm:$0xff]
    %v123 = vld [vmem:[%s0 + $0x50] sm:$0xff]
    %v124 = vld [vmem:[%s0 + $0x58] sm:$0xff]
    %v125 = vld [vmem:[%s0 + $0x60] sm:$0xff]
    %v126 = vld [vmem:[%s0 + $0x68] sm:$0xff]
    %v127 = vld [vmem:[%s0 + $0x70] sm:$0xff]
    %v128 = vld [vmem:[%s0 + $0x78] sm:$0xff]
    %v129 = vld [vmem:[%s0 + $0x80] sm:$0xff]
    %v130 = vld [vmem:[%s0 + $0x88] sm:$0xff]
    %v131 = vld [vmem:[%s0 + $0x90] sm:$0xff]
    %v132 = vld [vmem:[%s0 + $0x98] sm:$0xff]
    %v133 = vld [vmem:[%s0 + $0xa0] sm:$0xff]
    %v134 = vld [vmem:[%s0 + $0xa8] sm:$0xff]
    %v135 = vld [vmem:[%s0 + $0xb0] sm:$0xff]
    %v136 = vld [vmem:[%s0 + $0xb8] sm:$0xff]
    %v137 = vld [vmem:[%s0 + $0xc0] sm:$0xff]
    %v138 = vld [vmem:[%s0 + $0xc8] sm:$0xff]
    %v139 = vld [vmem:[%s0 + $0xd0] sm:$0xff]
    %v140 = vld [vmem:[%s0 + $0xd8] sm:$0xff]
    %v141 = vld [vmem:[%s0 + $0xe0] sm:$0xff]
    %v142 = vld [vmem:[%s0 + $0xe8] sm:$0xff]
    %v143 = vld [vmem:[%s0 + $0xf0] sm:$0xff]
    %v144 = vld [vmem:[%s0 + $0xf8] sm:$0xff]
    %v145 = vld [vmem:[%s1] sm:$0x3f]
    %v146 = vld [vmem:[%s3] sm:$0x1]
    %v148 = vlaneseq
    %v149 = vshrl.u32 %v148, 7
    %v150 = vsub.s32 0, %v149
    %v151 = vrot.slane %v146, %v150
    %vm153 = vcmask 48128
    %v155 = vsel %vm153, %v113, 0
    %v158 = vsel %vm153, %v114, 0
    %v161 = vsel %vm153, %v115, 0
    %v164 = vsel %vm153, %v116, 0
    %v167 = vsel %vm153, %v117, 0
    %v170 = vsel %vm153, %v118, 0
    %v173 = vsel %vm153, %v119, 0
    %v176 = vsel %vm153, %v120, 0
    %v179 = vsel %vm153, %v121, 0
    %v182 = vsel %vm153, %v122, 0
    %v185 = vsel %vm153, %v123, 0
    %v188 = vsel %vm153, %v124, 0
    %v191 = vsel %vm153, %v125, 0
    %v194 = vsel %vm153, %v126, 0
    %v197 = vsel %vm153, %v127, 0
    %v200 = vsel %vm153, %v128, 0
    %v203 = vsel %vm153, %v129, 0
    %v206 = vsel %vm153, %v130, 0
    %v209 = vsel %vm153, %v131, 0
    %v212 = vsel %vm153, %v132, 0
    %v215 = vsel %vm153, %v133, 0
    %v218 = vsel %vm153, %v134, 0
    %v221 = vsel %vm153, %v135, 0
    %v224 = vsel %vm153, %v136, 0
    %v227 = vsel %vm153, %v137, 0
    %v230 = vsel %vm153, %v138, 0
    %v233 = vsel %vm153, %v139, 0
    %v236 = vsel %vm153, %v140, 0
    %v239 = vsel %vm153, %v141, 0
    %v242 = vsel %vm153, %v142, 0
    %v245 = vsel %vm153, %v143, 0
    %v248 = vsel %vm153, %v144, 0
    %vm250 = vcmask 1045504
    %v252 = vsel %vm250, %v145, 0
    %254 = vmatprep.subr.mxu0 0.0
    %255 = vmatpush1.msra.mxu0 %v252
    %256 = vmatprep.subr.mxu0 0.0
    %257 = vmatpush1.msra.mxu0 0.0
    %258 = vmatprep.subr.mxu0 0.0
    %259 = vmatpush1.msra.mxu0 0.0
    %260 = vmatprep.subr.mxu0 0.0
    %261 = vmatpush1.msra.mxu0 0.0
    %262 = vmatprep.subr.mxu0 0.0
    %263 = vmatpush1.msra.mxu0 0.0
    %264 = vmatprep.subr.mxu0 0.0
    %265 = vmatpush1.msra.mxu0 0.0
    %266 = vmatprep.subr.mxu0 0.0
    %267 = vmatpush1.msra.mxu0 0.0
    %268 = vmatprep.subr.mxu0 0.0
    %269 = vmatpush1.msra.mxu0 0.0
    %270 = vmatprep.subr.mxu0 0.0
    %271 = vmatpush1.msra.mxu0 0.0
    %272 = vmatprep.subr.mxu0 0.0
    %273 = vmatpush1.msra.mxu0 0.0
    %274 = vmatprep.subr.mxu0 0.0
    %275 = vmatpush1.msra.mxu0 0.0
    %276 = vmatprep.subr.mxu0 0.0
    %277 = vmatpush1.msra.mxu0 0.0
    %278 = vmatprep.subr.mxu0 0.0
    %279 = vmatpush1.msra.mxu0 0.0
    %280 = vmatprep.subr.mxu0 0.0
    %281 = vmatpush1.msra.mxu0 0.0
    %282 = vmatprep.subr.mxu0 0.0
    %283 = vmatpush1.msra.mxu0 0.0
    %284 = vmatprep.subr.mxu0 0.0
    %285 = vmatpush1.msra.mxu0 0.0
    %286 = vmatprep.subr.mxu0 0.0
    %287 = vmatpush1.msra.mxu0 0.0
    %288 = vmatprep.subr.mxu0 0.0
    %289 = vmatpush1.msra.mxu0 0.0
    %290 = vmatprep.subr.mxu0 0.0
    %291 = vmatpush1.msra.mxu0 0.0
    %292 = vmatprep.subr.mxu0 0.0
    %293 = vmatpush1.msra.mxu0 0.0
    %294 = vmatprep.subr.mxu0 0.0
    %295 = vmatpush1.msra.mxu0 0.0
    %296 = vmatprep.subr.mxu0 0.0
    %297 = vmatpush1.msra.mxu0 0.0
    %298 = vmatprep.subr.mxu0 0.0
    %299 = vmatpush1.msra.mxu0 0.0
    %300 = vmatprep.subr.mxu0 0.0
    %301 = vmatpush1.msra.mxu0 0.0
    %302 = vmatprep.subr.mxu0 0.0
    %303 = vmatpush1.msra.mxu0 0.0
    %304 = vmatprep.subr.mxu0 0.0
    %305 = vmatpush1.msra.mxu0 0.0
    %306 = vmatprep.subr.mxu0 0.0
    %307 = vmatpush1.msra.mxu0 0.0
    %308 = vmatprep.subr.mxu0 0.0
    %309 = vmatpush1.msra.mxu0 0.0
    %310 = vmatprep.subr.mxu0 0.0
    %311 = vmatpush1.msra.mxu0 0.0
    %312 = vmatprep.subr.mxu0 0.0
    %313 = vmatpush1.msra.mxu0 0.0
    %314 = vmatprep.subr.mxu0 0.0
    %315 = vmatpush1.msra.mxu0 0.0
    %316 = vmatprep.subr.mxu0 0.0
    %317 = vmatpush1.msra.mxu0 0.0
    %318 = vmatprep.mubr.f32.mxu0 0.0
    %319 = vmatmul.mubr.f32.gmra.mrb[0].mxu0 %v155
    %v320 = vpop.f32.mrb[0].mxu0
    %v321 = vadd.f32 %v151, %v320
    %v322 = vpop.f32.mrb[0].mxu0
    %323 = vmatprep.mubr.f32.mxu0 0.0
    %324 = vmatmul.mubr.f32.gmra.mrb[0].mxu0 %v158
    %v325 = vpop.f32.mrb[0].mxu0
    %v326 = vadd.f32 %v151, %v325
    %v327 = vpop.f32.mrb[0].mxu0
    %328 = vmatprep.mubr.f32.mxu0 0.0
    %329 = vmatmul.mubr.f32.gmra.mrb[0].mxu0 %v161
    %v330 = vpop.f32.mrb[0].mxu0
    %v331 = vadd.f32 %v151, %v330
    %v332 = vpop.f32.mrb[0].mxu0
    %333 = vmatprep.mubr.f32.mxu0 0.0
    %334 = vmatmul.mubr.f32.gmra.mrb[0].mxu0 %v164
    %v335 = vpop.f32.mrb[0].mxu0
    %v336 = vadd.f32 %v151, %v335
    %v337 = vpop.f32.mrb[0].mxu0
    %338 = vmatprep.mubr.f32.mxu0 0.0
    %339 = vmatmul.mubr.f32.gmra.mrb[0].mxu0 %v167
    %v340 = vpop.f32.mrb[0].mxu0
    %v341 = vadd.f32 %v151, %v340
    %v342 = vpop.f32.mrb[0].mxu0
    %343 = vmatprep.mubr.f32.mxu0 0.0
    %344 = vmatmul.mubr.f32.gmra.mrb[0].mxu0 %v170
    %v345 = vpop.f32.mrb[0].mxu0
    %v346 = vadd.f32 %v151, %v345
    %v347 = vpop.f32.mrb[0].mxu0
    %348 = vmatprep.mubr.f32.mxu0 0.0
    %349 = vmatmul.mubr.f32.gmra.mrb[0].mxu0 %v173
    %v350 = vpop.f32.mrb[0].mxu0
    %v351 = vadd.f32 %v151, %v350
    %v352 = vpop.f32.mrb[0].mxu0
    %353 = vmatprep.mubr.f32.mxu0 0.0
    %354 = vmatmul.mubr.f32.gmra.mrb[0].mxu0 %v176
    %v355 = vpop.f32.mrb[0].mxu0
    %v356 = vadd.f32 %v151, %v355
    %v357 = vpop.f32.mrb[0].mxu0
    %358 = vmatprep.mubr.f32.mxu0 0.0
    %359 = vmatmul.mubr.f32.gmra.mrb[0].mxu0 %v179
    %v360 = vpop.f32.mrb[0].mxu0
    %v361 = vadd.f32 %v151, %v360
    %v362 = vpop.f32.mrb[0].mxu0
    %363 = vmatprep.mubr.f32.mxu0 0.0
    %364 = vmatmul.mubr.f32.gmra.mrb[0].mxu0 %v182
    %v365 = vpop.f32.mrb[0].mxu0
    %v366 = vadd.f32 %v151, %v365
    %v367 = vpop.f32.mrb[0].mxu0
    %368 = vmatprep.mubr.f32.mxu0 0.0
    %369 = vmatmul.mubr.f32.gmra.mrb[0].mxu0 %v185
    %v370 = vpop.f32.mrb[0].mxu0
    %v371 = vadd.f32 %v151, %v370
    %v372 = vpop.f32.mrb[0].mxu0
    %373 = vmatprep.mubr.f32.mxu0 0.0
    %374 = vmatmul.mubr.f32.gmra.mrb[0].mxu0 %v188
    %v375 = vpop.f32.mrb[0].mxu0
    %v376 = vadd.f32 %v151, %v375
    %v377 = vpop.f32.mrb[0].mxu0
    %378 = vmatprep.mubr.f32.mxu0 0.0
    %379 = vmatmul.mubr.f32.gmra.mrb[0].mxu0 %v191
    %v380 = vpop.f32.mrb[0].mxu0
    %v381 = vadd.f32 %v151, %v380
    %v382 = vpop.f32.mrb[0].mxu0
    %383 = vmatprep.mubr.f32.mxu0 0.0
    %384 = vmatmul.mubr.f32.gmra.mrb[0].mxu0 %v194
    %v385 = vpop.f32.mrb[0].mxu0
    %v386 = vadd.f32 %v151, %v385
    %v387 = vpop.f32.mrb[0].mxu0
    %388 = vmatprep.mubr.f32.mxu0 0.0
    %389 = vmatmul.mubr.f32.gmra.mrb[0].mxu0 %v197
    %v390 = vpop.f32.mrb[0].mxu0
    %v391 = vadd.f32 %v151, %v390
    %v392 = vpop.f32.mrb[0].mxu0
    %393 = vmatprep.mubr.f32.mxu0 0.0
    %394 = vmatmul.mubr.f32.gmra.mrb[0].mxu0 %v200
    %v395 = vpop.f32.mrb[0].mxu0
    %v396 = vadd.f32 %v151, %v395
    %v397 = vpop.f32.mrb[0].mxu0
    %398 = vmatprep.mubr.f32.mxu0 0.0
    %399 = vmatmul.mubr.f32.gmra.mrb[0].mxu0 %v203
    %v400 = vpop.f32.mrb[0].mxu0
    %v401 = vadd.f32 %v151, %v400
    %v402 = vpop.f32.mrb[0].mxu0
    %403 = vmatprep.mubr.f32.mxu0 0.0
    %404 = vmatmul.mubr.f32.gmra.mrb[0].mxu0 %v206
    %v405 = vpop.f32.mrb[0].mxu0
    %v406 = vadd.f32 %v151, %v405
    %v407 = vpop.f32.mrb[0].mxu0
    %408 = vmatprep.mubr.f32.mxu0 0.0
    %409 = vmatmul.mubr.f32.gmra.mrb[0].mxu0 %v209
    %v410 = vpop.f32.mrb[0].mxu0
    %v411 = vadd.f32 %v151, %v410
    %v412 = vpop.f32.mrb[0].mxu0
    %413 = vmatprep.mubr.f32.mxu0 0.0
    %414 = vmatmul.mubr.f32.gmra.mrb[0].mxu0 %v212
    %v415 = vpop.f32.mrb[0].mxu0
    %v416 = vadd.f32 %v151, %v415
    %v417 = vpop.f32.mrb[0].mxu0
    %418 = vmatprep.mubr.f32.mxu0 0.0
    %419 = vmatmul.mubr.f32.gmra.mrb[0].mxu0 %v215
    %v420 = vpop.f32.mrb[0].mxu0
    %v421 = vadd.f32 %v151, %v420
    %v422 = vpop.f32.mrb[0].mxu0
    %423 = vmatprep.mubr.f32.mxu0 0.0
    %424 = vmatmul.mubr.f32.gmra.mrb[0].mxu0 %v218
    %v425 = vpop.f32.mrb[0].mxu0
    %v426 = vadd.f32 %v151, %v425
    %v427 = vpop.f32.mrb[0].mxu0
    %428 = vmatprep.mubr.f32.mxu0 0.0
    %429 = vmatmul.mubr.f32.gmra.mrb[0].mxu0 %v221
    %v430 = vpop.f32.mrb[0].mxu0
    %v431 = vadd.f32 %v151, %v430
    %v432 = vpop.f32.mrb[0].mxu0
    %433 = vmatprep.mubr.f32.mxu0 0.0
    %434 = vmatmul.mubr.f32.gmra.mrb[0].mxu0 %v224
    %v435 = vpop.f32.mrb[0].mxu0
    %v436 = vadd.f32 %v151, %v435
    %v437 = vpop.f32.mrb[0].mxu0
    %438 = vmatprep.mubr.f32.mxu0 0.0
    %439 = vmatmul.mubr.f32.gmra.mrb[0].mxu0 %v227
    %v440 = vpop.f32.mrb[0].mxu0
    %v441 = vadd.f32 %v151, %v440
    %v442 = vpop.f32.mrb[0].mxu0
    %443 = vmatprep.mubr.f32.mxu0 0.0
    %444 = vmatmul.mubr.f32.gmra.mrb[0].mxu0 %v230
    %v445 = vpop.f32.mrb[0].mxu0
    %v446 = vadd.f32 %v151, %v445
    %v447 = vpop.f32.mrb[0].mxu0
    %448 = vmatprep.mubr.f32.mxu0 0.0
    %449 = vmatmul.mubr.f32.gmra.mrb[0].mxu0 %v233
    %v450 = vpop.f32.mrb[0].mxu0
    %v451 = vadd.f32 %v151, %v450
    %v452 = vpop.f32.mrb[0].mxu0
    %453 = vmatprep.mubr.f32.mxu0 0.0
    %454 = vmatmul.mubr.f32.gmra.mrb[0].mxu0 %v236
    %v455 = vpop.f32.mrb[0].mxu0
    %v456 = vadd.f32 %v151, %v455
    %v457 = vpop.f32.mrb[0].mxu0
    %458 = vmatprep.mubr.f32.mxu0 0.0
    %459 = vmatmul.mubr.f32.gmra.mrb[0].mxu0 %v239
    %v460 = vpop.f32.mrb[0].mxu0
    %v461 = vadd.f32 %v151, %v460
    %v462 = vpop.f32.mrb[0].mxu0
    %463 = vmatprep.mubr.f32.mxu0 0.0
    %464 = vmatmul.mubr.f32.gmra.mrb[0].mxu0 %v242
    %v465 = vpop.f32.mrb[0].mxu0
    %v466 = vadd.f32 %v151, %v465
    %v467 = vpop.f32.mrb[0].mxu0
    %468 = vmatprep.mubr.f32.mxu0 0.0
    %469 = vmatmul.mubr.f32.gmra.mrb[0].mxu0 %v245
    %v470 = vpop.f32.mrb[0].mxu0
    %v471 = vadd.f32 %v151, %v470
    %v472 = vpop.f32.mrb[0].mxu0
    %473 = vmatprep.mubr.f32.mxu0 0.0
    %474 = vmatmul.mubr.f32.gmra.mrb[0].mxu0 %v248
    %v475 = vpop.f32.mrb[0].mxu0
    %v476 = vadd.f32 %v151, %v475
    %v477 = vpop.f32.mrb[0].mxu0
    %478 = vdwg.mxu0
    %v479 = vmax.f32 %v321, 0.0
    %v480 = vmax.f32 %v326, 0.0
    %v481 = vmax.f32 %v331, 0.0
    %v482 = vmax.f32 %v336, 0.0
    %v483 = vmax.f32 %v341, 0.0
    %v484 = vmax.f32 %v346, 0.0
    %v485 = vmax.f32 %v351, 0.0
    %v486 = vmax.f32 %v356, 0.0
    %v487 = vmax.f32 %v361, 0.0
    %v488 = vmax.f32 %v366, 0.0
    %v489 = vmax.f32 %v371, 0.0
    %v490 = vmax.f32 %v376, 0.0
    %v491 = vmax.f32 %v381, 0.0
    %v492 = vmax.f32 %v386, 0.0
    %v493 = vmax.f32 %v391, 0.0
    %v494 = vmax.f32 %v396, 0.0
    %v495 = vmax.f32 %v401, 0.0
    %v496 = vmax.f32 %v406, 0.0
    %v497 = vmax.f32 %v411, 0.0
    %v498 = vmax.f32 %v416, 0.0
    %v499 = vmax.f32 %v421, 0.0
    %v500 = vmax.f32 %v426, 0.0
    %v501 = vmax.f32 %v431, 0.0
    %v502 = vmax.f32 %v436, 0.0
    %v503 = vmax.f32 %v441, 0.0
    %v504 = vmax.f32 %v446, 0.0
    %v505 = vmax.f32 %v451, 0.0
    %v506 = vmax.f32 %v456, 0.0
    %v507 = vmax.f32 %v461, 0.0
    %v508 = vmax.f32 %v466, 0.0
    %v509 = vmax.f32 %v471, 0.0
    %v510 = vmax.f32 %v476, 0.0
    %v511 = vld [vmem:[#allocation2] sm:$0xff]
    %v512 = vld [vmem:[#allocation2 + $0x8] sm:$0xff]
    %v513 = vld [vmem:[#allocation2 + $0x10] sm:$0xff]
    %v514 = vld [vmem:[#allocation2 + $0x18] sm:$0xff]
    %v515 = vld [vmem:[#allocation2 + $0x20] sm:$0xff]
    %v516 = vld [vmem:[#allocation2 + $0x28] sm:$0xff]
    %v517 = vld [vmem:[#allocation2 + $0x30] sm:$0xff]
    %v518 = vld [vmem:[#allocation2 + $0x38] sm:$0xff]
    %v519 = vld [vmem:[#allocation2 + $0x40] sm:$0xff]
    %v520 = vld [vmem:[#allocation2 + $0x48] sm:$0xff]
    %v521 = vld [vmem:[#allocation2 + $0x50] sm:$0xff]
    %v522 = vld [vmem:[#allocation2 + $0x58] sm:$0xff]
    %v523 = vld [vmem:[#allocation2 + $0x60] sm:$0xff]
    %v524 = vld [vmem:[#allocation2 + $0x68] sm:$0xff]
    %v525 = vld [vmem:[#allocation2 + $0x70] sm:$0xff]
    %v526 = vld [vmem:[#allocation2 + $0x78] sm:$0xff]
    %s527 = scalar_lea.vmem %s3, 1
    %v528 = vld [vmem:[%s527] sm:$0x1]
    %v530 = vlaneseq
    %v531 = vshrl.u32 %v530, 7
    %v532 = vsub.s32 0, %v531
    %v533 = vrot.slane %v528, %v532
    %535 = vmatprep.subr.mxu0 0.0
    %536 = vmatpush1.msra.mxu0 %v511
    %537 = vmatprep.subr.mxu0 0.0
    %538 = vmatpush1.msra.mxu0 %v512
    %539 = vmatprep.subr.mxu0 0.0
    %540 = vmatpush1.msra.mxu0 %v513
    %541 = vmatprep.subr.mxu0 0.0
    %542 = vmatpush1.msra.mxu0 %v514
    %543 = vmatprep.subr.mxu0 0.0
    %544 = vmatpush1.msra.mxu0 %v515
    %545 = vmatprep.subr.mxu0 0.0
    %546 = vmatpush1.msra.mxu0 %v516
    %547 = vmatprep.subr.mxu0 0.0
    %548 = vmatpush1.msra.mxu0 %v517
    %549 = vmatprep.subr.mxu0 0.0
    %550 = vmatpush1.msra.mxu0 %v518
    %551 = vmatprep.subr.mxu0 0.0
    %552 = vmatpush1.msra.mxu0 %v519
    %553 = vmatprep.subr.mxu0 0.0
    %554 = vmatpush1.msra.mxu0 %v520
    %555 = vmatprep.subr.mxu0 0.0
    %556 = vmatpush1.msra.mxu0 %v521
    %557 = vmatprep.subr.mxu0 0.0
    %558 = vmatpush1.msra.mxu0 %v522
    %559 = vmatprep.subr.mxu0 0.0
    %560 = vmatpush1.msra.mxu0 %v523
    %561 = vmatprep.subr.mxu0 0.0
    %562 = vmatpush1.msra.mxu0 %v524
    %563 = vmatprep.subr.mxu0 0.0
    %564 = vmatpush1.msra.mxu0 %v525
    %565 = vmatprep.subr.mxu0 0.0
    %566 = vmatpush1.msra.mxu0 %v526
    %567 = vmatprep.subr.mxu0 0.0
    %568 = vmatpush1.msra.mxu0 0.0
    %569 = vmatprep.subr.mxu0 0.0
    %570 = vmatpush1.msra.mxu0 0.0
    %571 = vmatprep.subr.mxu0 0.0
    %572 = vmatpush1.msra.mxu0 0.0
    %573 = vmatprep.subr.mxu0 0.0
    %574 = vmatpush1.msra.mxu0 0.0
    %575 = vmatprep.subr.mxu0 0.0
    %576 = vmatpush1.msra.mxu0 0.0
    %577 = vmatprep.subr.mxu0 0.0
    %578 = vmatpush1.msra.mxu0 0.0
    %579 = vmatprep.subr.mxu0 0.0
    %580 = vmatpush1.msra.mxu0 0.0
    %581 = vmatprep.subr.mxu0 0.0
    %582 = vmatpush1.msra.mxu0 0.0
    %583 = vmatprep.subr.mxu0 0.0
    %584 = vmatpush1.msra.mxu0 0.0
    %585 = vmatprep.subr.mxu0 0.0
    %586 = vmatpush1.msra.mxu0 0.0
    %587 = vmatprep.subr.mxu0 0.0
    %588 = vmatpush1.msra.mxu0 0.0
    %589 = vmatprep.subr.mxu0 0.0
    %590 = vmatpush1.msra.mxu0 0.0
    %591 = vmatprep.subr.mxu0 0.0
    %592 = vmatpush1.msra.mxu0 0.0
    %593 = vmatprep.subr.mxu0 0.0
    %594 = vmatpush1.msra.mxu0 0.0
    %595 = vmatprep.subr.mxu0 0.0
    %596 = vmatpush1.msra.mxu0 0.0
    %597 = vmatprep.subr.mxu0 0.0
    %598 = vmatpush1.msra.mxu0 0.0
    %599 = vmatprep.mubr.f32.mxu0 0.0
    %600 = vmatmul.mubr.f32.gmra.mrb[0].mxu0 %v479
    %v601 = vpop.f32.mrb[0].mxu0
    %v602 = vadd.f32 %v533, %v601
    %v603 = vpop.f32.mrb[0].mxu0
    %604 = vmatprep.mubr.f32.mxu0 0.0
    %605 = vmatmul.mubr.f32.gmra.mrb[0].mxu0 %v480
    %v606 = vpop.f32.mrb[0].mxu0
    %v607 = vadd.f32 %v533, %v606
    %v608 = vpop.f32.mrb[0].mxu0
    %609 = vmatprep.mubr.f32.mxu0 0.0
    %610 = vmatmul.mubr.f32.gmra.mrb[0].mxu0 %v481
    %v611 = vpop.f32.mrb[0].mxu0
    %v612 = vadd.f32 %v533, %v611
    %v613 = vpop.f32.mrb[0].mxu0
    %614 = vmatprep.mubr.f32.mxu0 0.0
    %615 = vmatmul.mubr.f32.gmra.mrb[0].mxu0 %v482
    %v616 = vpop.f32.mrb[0].mxu0
    %v617 = vadd.f32 %v533, %v616
    %v618 = vpop.f32.mrb[0].mxu0
    %619 = vmatprep.mubr.f32.mxu0 0.0
    %620 = vmatmul.mubr.f32.gmra.mrb[0].mxu0 %v483
    %v621 = vpop.f32.mrb[0].mxu0
    %v622 = vadd.f32 %v533, %v621
    %v623 = vpop.f32.mrb[0].mxu0
    %624 = vmatprep.mubr.f32.mxu0 0.0
    %625 = vmatmul.mubr.f32.gmra.mrb[0].mxu0 %v484
    %v626 = vpop.f32.mrb[0].mxu0
    %v627 = vadd.f32 %v533, %v626
    %v628 = vpop.f32.mrb[0].mxu0
    %629 = vmatprep.mubr.f32.mxu0 0.0
    %630 = vmatmul.mubr.f32.gmra.mrb[0].mxu0 %v485
    %v631 = vpop.f32.mrb[0].mxu0
    %v632 = vadd.f32 %v533, %v631
    %v633 = vpop.f32.mrb[0].mxu0
    %634 = vmatprep.mubr.f32.mxu0 0.0
    %635 = vmatmul.mubr.f32.gmra.mrb[0].mxu0 %v486
    %v636 = vpop.f32.mrb[0].mxu0
    %v637 = vadd.f32 %v533, %v636
    %v638 = vpop.f32.mrb[0].mxu0
    %639 = vmatprep.mubr.f32.mxu0 0.0
    %640 = vmatmul.mubr.f32.gmra.mrb[0].mxu0 %v487
    %v641 = vpop.f32.mrb[0].mxu0
    %v642 = vadd.f32 %v533, %v641
    %v643 = vpop.f32.mrb[0].mxu0
    %644 = vmatprep.mubr.f32.mxu0 0.0
    %645 = vmatmul.mubr.f32.gmra.mrb[0].mxu0 %v488
    %v646 = vpop.f32.mrb[0].mxu0
    %v647 = vadd.f32 %v533, %v646
    %v648 = vpop.f32.mrb[0].mxu0
    %649 = vmatprep.mubr.f32.mxu0 0.0
    %650 = vmatmul.mubr.f32.gmra.mrb[0].mxu0 %v489
    %v651 = vpop.f32.mrb[0].mxu0
    %v652 = vadd.f32 %v533, %v651
    %v653 = vpop.f32.mrb[0].mxu0
    %654 = vmatprep.mubr.f32.mxu0 0.0
    %655 = vmatmul.mubr.f32.gmra.mrb[0].mxu0 %v490
    %v656 = vpop.f32.mrb[0].mxu0
    %v657 = vadd.f32 %v533, %v656
    %v658 = vpop.f32.mrb[0].mxu0
    %659 = vmatprep.mubr.f32.mxu0 0.0
    %660 = vmatmul.mubr.f32.gmra.mrb[0].mxu0 %v491
    %v661 = vpop.f32.mrb[0].mxu0
    %v662 = vadd.f32 %v533, %v661
    %v663 = vpop.f32.mrb[0].mxu0
    %664 = vmatprep.mubr.f32.mxu0 0.0
    %665 = vmatmul.mubr.f32.gmra.mrb[0].mxu0 %v492
    %v666 = vpop.f32.mrb[0].mxu0
    %v667 = vadd.f32 %v533, %v666
    %v668 = vpop.f32.mrb[0].mxu0
    %669 = vmatprep.mubr.f32.mxu0 0.0
    %670 = vmatmul.mubr.f32.gmra.mrb[0].mxu0 %v493
    %v671 = vpop.f32.mrb[0].mxu0
    %v672 = vadd.f32 %v533, %v671
    %v673 = vpop.f32.mrb[0].mxu0
    %674 = vmatprep.mubr.f32.mxu0 0.0
    %675 = vmatmul.mubr.f32.gmra.mrb[0].mxu0 %v494
    %v676 = vpop.f32.mrb[0].mxu0
    %v677 = vadd.f32 %v533, %v676
    %v678 = vpop.f32.mrb[0].mxu0
    %679 = vmatprep.mubr.f32.mxu0 0.0
    %680 = vmatmul.mubr.f32.gmra.mrb[0].mxu0 %v495
    %v681 = vpop.f32.mrb[0].mxu0
    %v682 = vadd.f32 %v533, %v681
    %v683 = vpop.f32.mrb[0].mxu0
    %684 = vmatprep.mubr.f32.mxu0 0.0
    %685 = vmatmul.mubr.f32.gmra.mrb[0].mxu0 %v496
    %v686 = vpop.f32.mrb[0].mxu0
    %v687 = vadd.f32 %v533, %v686
    %v688 = vpop.f32.mrb[0].mxu0
    %689 = vmatprep.mubr.f32.mxu0 0.0
    %690 = vmatmul.mubr.f32.gmra.mrb[0].mxu0 %v497
    %v691 = vpop.f32.mrb[0].mxu0
    %v692 = vadd.f32 %v533, %v691
    %v693 = vpop.f32.mrb[0].mxu0
    %694 = vmatprep.mubr.f32.mxu0 0.0
    %695 = vmatmul.mubr.f32.gmra.mrb[0].mxu0 %v498
    %v696 = vpop.f32.mrb[0].mxu0
    %v697 = vadd.f32 %v533, %v696
    %v698 = vpop.f32.mrb[0].mxu0
    %699 = vmatprep.mubr.f32.mxu0 0.0
    %700 = vmatmul.mubr.f32.gmra.mrb[0].mxu0 %v499
    %v701 = vpop.f32.mrb[0].mxu0
    %v702 = vadd.f32 %v533, %v701
    %v703 = vpop.f32.mrb[0].mxu0
    %704 = vmatprep.mubr.f32.mxu0 0.0
    %705 = vmatmul.mubr.f32.gmra.mrb[0].mxu0 %v500
    %v706 = vpop.f32.mrb[0].mxu0
    %v707 = vadd.f32 %v533, %v706
    %v708 = vpop.f32.mrb[0].mxu0
    %709 = vmatprep.mubr.f32.mxu0 0.0
    %710 = vmatmul.mubr.f32.gmra.mrb[0].mxu0 %v501
    %v711 = vpop.f32.mrb[0].mxu0
    %v712 = vadd.f32 %v533, %v711
    %v713 = vpop.f32.mrb[0].mxu0
    %714 = vmatprep.mubr.f32.mxu0 0.0
    %715 = vmatmul.mubr.f32.gmra.mrb[0].mxu0 %v502
    %v716 = vpop.f32.mrb[0].mxu0
    %v717 = vadd.f32 %v533, %v716
    %v718 = vpop.f32.mrb[0].mxu0
    %719 = vmatprep.mubr.f32.mxu0 0.0
    %720 = vmatmul.mubr.f32.gmra.mrb[0].mxu0 %v503
    %v721 = vpop.f32.mrb[0].mxu0
    %v722 = vadd.f32 %v533, %v721
    %v723 = vpop.f32.mrb[0].mxu0
    %724 = vmatprep.mubr.f32.mxu0 0.0
    %725 = vmatmul.mubr.f32.gmra.mrb[0].mxu0 %v504
    %v726 = vpop.f32.mrb[0].mxu0
    %v727 = vadd.f32 %v533, %v726
    %v728 = vpop.f32.mrb[0].mxu0
    %729 = vmatprep.mubr.f32.mxu0 0.0
    %730 = vmatmul.mubr.f32.gmra.mrb[0].mxu0 %v505
    %v731 = vpop.f32.mrb[0].mxu0
    %v732 = vadd.f32 %v533, %v731
    %v733 = vpop.f32.mrb[0].mxu0
    %734 = vmatprep.mubr.f32.mxu0 0.0
    %735 = vmatmul.mubr.f32.gmra.mrb[0].mxu0 %v506
    %v736 = vpop.f32.mrb[0].mxu0
    %v737 = vadd.f32 %v533, %v736
    %v738 = vpop.f32.mrb[0].mxu0
    %739 = vmatprep.mubr.f32.mxu0 0.0
    %740 = vmatmul.mubr.f32.gmra.mrb[0].mxu0 %v507
    %v741 = vpop.f32.mrb[0].mxu0
    %v742 = vadd.f32 %v533, %v741
    %v743 = vpop.f32.mrb[0].mxu0
    %744 = vmatprep.mubr.f32.mxu0 0.0
    %745 = vmatmul.mubr.f32.gmra.mrb[0].mxu0 %v508
    %v746 = vpop.f32.mrb[0].mxu0
    %v747 = vadd.f32 %v533, %v746
    %v748 = vpop.f32.mrb[0].mxu0
    %749 = vmatprep.mubr.f32.mxu0 0.0
    %750 = vmatmul.mubr.f32.gmra.mrb[0].mxu0 %v509
    %v751 = vpop.f32.mrb[0].mxu0
    %v752 = vadd.f32 %v533, %v751
    %v753 = vpop.f32.mrb[0].mxu0
    %754 = vmatprep.mubr.f32.mxu0 0.0
    %755 = vmatmul.mubr.f32.gmra.mrb[0].mxu0 %v510
    %v756 = vpop.f32.mrb[0].mxu0
    %v757 = vadd.f32 %v533, %v756
    %v758 = vpop.f32.mrb[0].mxu0
    %759 = vdwg.mxu0
    %v760 = vmax.f32 %v602, 0.0
    %v761 = vmax.f32 %v607, 0.0
    %v762 = vmax.f32 %v612, 0.0
    %v763 = vmax.f32 %v617, 0.0
    %v764 = vmax.f32 %v622, 0.0
    %v765 = vmax.f32 %v627, 0.0
    %v766 = vmax.f32 %v632, 0.0
    %v767 = vmax.f32 %v637, 0.0
    %v768 = vmax.f32 %v642, 0.0
    %v769 = vmax.f32 %v647, 0.0
    %v770 = vmax.f32 %v652, 0.0
    %v771 = vmax.f32 %v657, 0.0
    %v772 = vmax.f32 %v662, 0.0
    %v773 = vmax.f32 %v667, 0.0
    %v774 = vmax.f32 %v672, 0.0
    %v775 = vmax.f32 %v677, 0.0
    %v776 = vmax.f32 %v682, 0.0
    %v777 = vmax.f32 %v687, 0.0
    %v778 = vmax.f32 %v692, 0.0
    %v779 = vmax.f32 %v697, 0.0
    %v780 = vmax.f32 %v702, 0.0
    %v781 = vmax.f32 %v707, 0.0
    %v782 = vmax.f32 %v712, 0.0
    %v783 = vmax.f32 %v717, 0.0
    %v784 = vmax.f32 %v722, 0.0
    %v785 = vmax.f32 %v727, 0.0
    %v786 = vmax.f32 %v732, 0.0
    %v787 = vmax.f32 %v737, 0.0
    %v788 = vmax.f32 %v742, 0.0
    %v789 = vmax.f32 %v747, 0.0
    %v790 = vmax.f32 %v752, 0.0
    %v791 = vmax.f32 %v757, 0.0
    %s792 = scalar_lea.vmem [#allocation2], 128
    %v793 = vld [vmem:[%s792] sm:$0xff]
    %v794 = vld [vmem:[%s792 + $0x8] sm:$0xff]
    %v795 = vld [vmem:[%s792 + $0x10] sm:$0xff]
    %v796 = vld [vmem:[%s792 + $0x18] sm:$0xff]
    %v797 = vld [vmem:[%s792 + $0x20] sm:$0xff]
    %v798 = vld [vmem:[%s792 + $0x28] sm:$0xff]
    %v799 = vld [vmem:[%s792 + $0x30] sm:$0xff]
    %v800 = vld [vmem:[%s792 + $0x38] sm:$0xff]
    %v801 = vld [vmem:[%s792 + $0x40] sm:$0xff]
    %v802 = vld [vmem:[%s792 + $0x48] sm:$0xff]
    %v803 = vld [vmem:[%s792 + $0x50] sm:$0xff]
    %v804 = vld [vmem:[%s792 + $0x58] sm:$0xff]
    %v805 = vld [vmem:[%s792 + $0x60] sm:$0xff]
    %v806 = vld [vmem:[%s792 + $0x68] sm:$0xff]
    %v807 = vld [vmem:[%s792 + $0x70] sm:$0xff]
    %v808 = vld [vmem:[%s792 + $0x78] sm:$0xff]
    %s809 = scalar_lea.vmem %s3, 2
    %v810 = vld [vmem:[%s809] sm:$0x1]
    %v812 = vlaneseq
    %v813 = vshrl.u32 %v812, 7
    %v814 = vsub.s32 0, %v813
    %v815 = vrot.slane %v810, %v814
    %817 = vmatprep.subr.mxu0 0.0
    %818 = vmatpush1.msra.mxu0 %v793
    %819 = vmatprep.subr.mxu0 0.0
    %820 = vmatpush1.msra.mxu0 %v794
    %821 = vmatprep.subr.mxu0 0.0
    %822 = vmatpush1.msra.mxu0 %v795
    %823 = vmatprep.subr.mxu0 0.0
    %824 = vmatpush1.msra.mxu0 %v796
    %825 = vmatprep.subr.mxu0 0.0
    %826 = vmatpush1.msra.mxu0 %v797
    %827 = vmatprep.subr.mxu0 0.0
    %828 = vmatpush1.msra.mxu0 %v798
    %829 = vmatprep.subr.mxu0 0.0
    %830 = vmatpush1.msra.mxu0 %v799
    %831 = vmatprep.subr.mxu0 0.0
    %832 = vmatpush1.msra.mxu0 %v800
    %833 = vmatprep.subr.mxu0 0.0
    %834 = vmatpush1.msra.mxu0 %v801
    %835 = vmatprep.subr.mxu0 0.0
    %836 = vmatpush1.msra.mxu0 %v802
    %837 = vmatprep.subr.mxu0 0.0
    %838 = vmatpush1.msra.mxu0 %v803
    %839 = vmatprep.subr.mxu0 0.0
    %840 = vmatpush1.msra.mxu0 %v804
    %841 = vmatprep.subr.mxu0 0.0
    %842 = vmatpush1.msra.mxu0 %v805
    %843 = vmatprep.subr.mxu0 0.0
    %844 = vmatpush1.msra.mxu0 %v806
    %845 = vmatprep.subr.mxu0 0.0
    %846 = vmatpush1.msra.mxu0 %v807
    %847 = vmatprep.subr.mxu0 0.0
    %848 = vmatpush1.msra.mxu0 %v808
    %849 = vmatprep.subr.mxu0 0.0
    %850 = vmatpush1.msra.mxu0 0.0
    %851 = vmatprep.subr.mxu0 0.0
    %852 = vmatpush1.msra.mxu0 0.0
    %853 = vmatprep.subr.mxu0 0.0
    %854 = vmatpush1.msra.mxu0 0.0
    %855 = vmatprep.subr.mxu0 0.0
    %856 = vmatpush1.msra.mxu0 0.0
    %857 = vmatprep.subr.mxu0 0.0
    %858 = vmatpush1.msra.mxu0 0.0
    %859 = vmatprep.subr.mxu0 0.0
    %860 = vmatpush1.msra.mxu0 0.0
    %861 = vmatprep.subr.mxu0 0.0
    %862 = vmatpush1.msra.mxu0 0.0
    %863 = vmatprep.subr.mxu0 0.0
    %864 = vmatpush1.msra.mxu0 0.0
    %865 = vmatprep.subr.mxu0 0.0
    %866 = vmatpush1.msra.mxu0 0.0
    %867 = vmatprep.subr.mxu0 0.0
    %868 = vmatpush1.msra.mxu0 0.0
    %869 = vmatprep.subr.mxu0 0.0
    %870 = vmatpush1.msra.mxu0 0.0
    %871 = vmatprep.subr.mxu0 0.0
    %872 = vmatpush1.msra.mxu0 0.0
    %873 = vmatprep.subr.mxu0 0.0
    %874 = vmatpush1.msra.mxu0 0.0
    %875 = vmatprep.subr.mxu0 0.0
    %876 = vmatpush1.msra.mxu0 0.0
    %877 = vmatprep.subr.mxu0 0.0
    %878 = vmatpush1.msra.mxu0 0.0
    %879 = vmatprep.subr.mxu0 0.0
    %880 = vmatpush1.msra.mxu0 0.0
    %881 = vmatprep.mubr.f32.mxu0 0.0
    %882 = vmatmul.mubr.f32.gmra.mrb[0].mxu0 %v760
    %v883 = vpop.f32.mrb[0].mxu0
    %v884 = vadd.f32 %v815, %v883
    %v885 = vpop.f32.mrb[0].mxu0
    %886 = vmatprep.mubr.f32.mxu0 0.0
    %887 = vmatmul.mubr.f32.gmra.mrb[0].mxu0 %v761
    %v888 = vpop.f32.mrb[0].mxu0
    %v889 = vadd.f32 %v815, %v888
    %v890 = vpop.f32.mrb[0].mxu0
    %891 = vmatprep.mubr.f32.mxu0 0.0
    %892 = vmatmul.mubr.f32.gmra.mrb[0].mxu0 %v762
    %v893 = vpop.f32.mrb[0].mxu0
    %v894 = vadd.f32 %v815, %v893
    %v895 = vpop.f32.mrb[0].mxu0
    %896 = vmatprep.mubr.f32.mxu0 0.0
    %897 = vmatmul.mubr.f32.gmra.mrb[0].mxu0 %v763
    %v898 = vpop.f32.mrb[0].mxu0
    %v899 = vadd.f32 %v815, %v898
    %v900 = vpop.f32.mrb[0].mxu0
    %901 = vmatprep.mubr.f32.mxu0 0.0
    %902 = vmatmul.mubr.f32.gmra.mrb[0].mxu0 %v764
    %v903 = vpop.f32.mrb[0].mxu0
    %v904 = vadd.f32 %v815, %v903
    %v905 = vpop.f32.mrb[0].mxu0
    %906 = vmatprep.mubr.f32.mxu0 0.0
    %907 = vmatmul.mubr.f32.gmra.mrb[0].mxu0 %v765
    %v908 = vpop.f32.mrb[0].mxu0
    %v909 = vadd.f32 %v815, %v908
    %v910 = vpop.f32.mrb[0].mxu0
    %911 = vmatprep.mubr.f32.mxu0 0.0
    %912 = vmatmul.mubr.f32.gmra.mrb[0].mxu0 %v766
    %v913 = vpop.f32.mrb[0].mxu0
    %v914 = vadd.f32 %v815, %v913
    %v915 = vpop.f32.mrb[0].mxu0
    %916 = vmatprep.mubr.f32.mxu0 0.0
    %917 = vmatmul.mubr.f32.gmra.mrb[0].mxu0 %v767
    %v918 = vpop.f32.mrb[0].mxu0
    %v919 = vadd.f32 %v815, %v918
    %v920 = vpop.f32.mrb[0].mxu0
    %921 = vmatprep.mubr.f32.mxu0 0.0
    %922 = vmatmul.mubr.f32.gmra.mrb[0].mxu0 %v768
    %v923 = vpop.f32.mrb[0].mxu0
    %v924 = vadd.f32 %v815, %v923
    %v925 = vpop.f32.mrb[0].mxu0
    %926 = vmatprep.mubr.f32.mxu0 0.0
    %927 = vmatmul.mubr.f32.gmra.mrb[0].mxu0 %v769
    %v928 = vpop.f32.mrb[0].mxu0
    %v929 = vadd.f32 %v815, %v928
    %v930 = vpop.f32.mrb[0].mxu0
    %931 = vmatprep.mubr.f32.mxu0 0.0
    %932 = vmatmul.mubr.f32.gmra.mrb[0].mxu0 %v770
    %v933 = vpop.f32.mrb[0].mxu0
    %v934 = vadd.f32 %v815, %v933
    %v935 = vpop.f32.mrb[0].mxu0
    %936 = vmatprep.mubr.f32.mxu0 0.0
    %937 = vmatmul.mubr.f32.gmra.mrb[0].mxu0 %v771
    %v938 = vpop.f32.mrb[0].mxu0
    %v939 = vadd.f32 %v815, %v938
    %v940 = vpop.f32.mrb[0].mxu0
    %941 = vmatprep.mubr.f32.mxu0 0.0
    %942 = vmatmul.mubr.f32.gmra.mrb[0].mxu0 %v772
    %v943 = vpop.f32.mrb[0].mxu0
    %v944 = vadd.f32 %v815, %v943
    %v945 = vpop.f32.mrb[0].mxu0
    %946 = vmatprep.mubr.f32.mxu0 0.0
    %947 = vmatmul.mubr.f32.gmra.mrb[0].mxu0 %v773
    %v948 = vpop.f32.mrb[0].mxu0
    %v949 = vadd.f32 %v815, %v948
    %v950 = vpop.f32.mrb[0].mxu0
    %951 = vmatprep.mubr.f32.mxu0 0.0
    %952 = vmatmul.mubr.f32.gmra.mrb[0].mxu0 %v774
    %v953 = vpop.f32.mrb[0].mxu0
    %v954 = vadd.f32 %v815, %v953
    %v955 = vpop.f32.mrb[0].mxu0
    %956 = vmatprep.mubr.f32.mxu0 0.0
    %957 = vmatmul.mubr.f32.gmra.mrb[0].mxu0 %v775
    %v958 = vpop.f32.mrb[0].mxu0
    %v959 = vadd.f32 %v815, %v958
    %v960 = vpop.f32.mrb[0].mxu0
    %961 = vmatprep.mubr.f32.mxu0 0.0
    %962 = vmatmul.mubr.f32.gmra.mrb[0].mxu0 %v776
    %v963 = vpop.f32.mrb[0].mxu0
    %v964 = vadd.f32 %v815, %v963
    %v965 = vpop.f32.mrb[0].mxu0
    %966 = vmatprep.mubr.f32.mxu0 0.0
    %967 = vmatmul.mubr.f32.gmra.mrb[0].mxu0 %v777
    %v968 = vpop.f32.mrb[0].mxu0
    %v969 = vadd.f32 %v815, %v968
    %v970 = vpop.f32.mrb[0].mxu0
    %971 = vmatprep.mubr.f32.mxu0 0.0
    %972 = vmatmul.mubr.f32.gmra.mrb[0].mxu0 %v778
    %v973 = vpop.f32.mrb[0].mxu0
    %v974 = vadd.f32 %v815, %v973
    %v975 = vpop.f32.mrb[0].mxu0
    %976 = vmatprep.mubr.f32.mxu0 0.0
    %977 = vmatmul.mubr.f32.gmra.mrb[0].mxu0 %v779
    %v978 = vpop.f32.mrb[0].mxu0
    %v979 = vadd.f32 %v815, %v978
    %v980 = vpop.f32.mrb[0].mxu0
    %981 = vmatprep.mubr.f32.mxu0 0.0
    %982 = vmatmul.mubr.f32.gmra.mrb[0].mxu0 %v780
    %v983 = vpop.f32.mrb[0].mxu0
    %v984 = vadd.f32 %v815, %v983
    %v985 = vpop.f32.mrb[0].mxu0
    %986 = vmatprep.mubr.f32.mxu0 0.0
    %987 = vmatmul.mubr.f32.gmra.mrb[0].mxu0 %v781
    %v988 = vpop.f32.mrb[0].mxu0
    %v989 = vadd.f32 %v815, %v988
    %v990 = vpop.f32.mrb[0].mxu0
    %991 = vmatprep.mubr.f32.mxu0 0.0
    %992 = vmatmul.mubr.f32.gmra.mrb[0].mxu0 %v782
    %v993 = vpop.f32.mrb[0].mxu0
    %v994 = vadd.f32 %v815, %v993
    %v995 = vpop.f32.mrb[0].mxu0
    %996 = vmatprep.mubr.f32.mxu0 0.0
    %997 = vmatmul.mubr.f32.gmra.mrb[0].mxu0 %v783
    %v998 = vpop.f32.mrb[0].mxu0
    %v999 = vadd.f32 %v815, %v998
    %v1000 = vpop.f32.mrb[0].mxu0
    %1001 = vmatprep.mubr.f32.mxu0 0.0
    %1002 = vmatmul.mubr.f32.gmra.mrb[0].mxu0 %v784
    %v1003 = vpop.f32.mrb[0].mxu0
    %v1004 = vadd.f32 %v815, %v1003
    %v1005 = vpop.f32.mrb[0].mxu0
    %1006 = vmatprep.mubr.f32.mxu0 0.0
    %1007 = vmatmul.mubr.f32.gmra.mrb[0].mxu0 %v785
    %v1008 = vpop.f32.mrb[0].mxu0
    %v1009 = vadd.f32 %v815, %v1008
    %v1010 = vpop.f32.mrb[0].mxu0
    %1011 = vmatprep.mubr.f32.mxu0 0.0
    %1012 = vmatmul.mubr.f32.gmra.mrb[0].mxu0 %v786
    %v1013 = vpop.f32.mrb[0].mxu0
    %v1014 = vadd.f32 %v815, %v1013
    %v1015 = vpop.f32.mrb[0].mxu0
    %1016 = vmatprep.mubr.f32.mxu0 0.0
    %1017 = vmatmul.mubr.f32.gmra.mrb[0].mxu0 %v787
    %v1018 = vpop.f32.mrb[0].mxu0
    %v1019 = vadd.f32 %v815, %v1018
    %v1020 = vpop.f32.mrb[0].mxu0
    %1021 = vmatprep.mubr.f32.mxu0 0.0
    %1022 = vmatmul.mubr.f32.gmra.mrb[0].mxu0 %v788
    %v1023 = vpop.f32.mrb[0].mxu0
    %v1024 = vadd.f32 %v815, %v1023
    %v1025 = vpop.f32.mrb[0].mxu0
    %1026 = vmatprep.mubr.f32.mxu0 0.0
    %1027 = vmatmul.mubr.f32.gmra.mrb[0].mxu0 %v789
    %v1028 = vpop.f32.mrb[0].mxu0
    %v1029 = vadd.f32 %v815, %v1028
    %v1030 = vpop.f32.mrb[0].mxu0
    %1031 = vmatprep.mubr.f32.mxu0 0.0
    %1032 = vmatmul.mubr.f32.gmra.mrb[0].mxu0 %v790
    %v1033 = vpop.f32.mrb[0].mxu0
    %v1034 = vadd.f32 %v815, %v1033
    %v1035 = vpop.f32.mrb[0].mxu0
    %1036 = vmatprep.mubr.f32.mxu0 0.0
    %1037 = vmatmul.mubr.f32.gmra.mrb[0].mxu0 %v791
    %v1038 = vpop.f32.mrb[0].mxu0
    %v1039 = vadd.f32 %v815, %v1038
    %v1040 = vpop.f32.mrb[0].mxu0
    %1041 = vdwg.mxu0
    %v1042 = vmax.f32 %v884, 0.0
    %v1043 = vmax.f32 %v889, 0.0
    %v1044 = vmax.f32 %v894, 0.0
    %v1045 = vmax.f32 %v899, 0.0
    %v1046 = vmax.f32 %v904, 0.0
    %v1047 = vmax.f32 %v909, 0.0
    %v1048 = vmax.f32 %v914, 0.0
    %v1049 = vmax.f32 %v919, 0.0
    %v1050 = vmax.f32 %v924, 0.0
    %v1051 = vmax.f32 %v929, 0.0
    %v1052 = vmax.f32 %v934, 0.0
    %v1053 = vmax.f32 %v939, 0.0
    %v1054 = vmax.f32 %v944, 0.0
    %v1055 = vmax.f32 %v949, 0.0
    %v1056 = vmax.f32 %v954, 0.0
    %v1057 = vmax.f32 %v959, 0.0
    %v1058 = vmax.f32 %v964, 0.0
    %v1059 = vmax.f32 %v969, 0.0
    %v1060 = vmax.f32 %v974, 0.0
    %v1061 = vmax.f32 %v979, 0.0
    %v1062 = vmax.f32 %v984, 0.0
    %v1063 = vmax.f32 %v989, 0.0
    %v1064 = vmax.f32 %v994, 0.0
    %v1065 = vmax.f32 %v999, 0.0
    %v1066 = vmax.f32 %v1004, 0.0
    %v1067 = vmax.f32 %v1009, 0.0
    %v1068 = vmax.f32 %v1014, 0.0
    %v1069 = vmax.f32 %v1019, 0.0
    %v1070 = vmax.f32 %v1024, 0.0
    %v1071 = vmax.f32 %v1029, 0.0
    %v1072 = vmax.f32 %v1034, 0.0
    %v1073 = vmax.f32 %v1039, 0.0
    %s1074 = scalar_lea.vmem [#allocation2], 256
    %v1075 = vld [vmem:[%s1074] sm:$0xff]
    %v1076 = vld [vmem:[%s1074 + $0x8] sm:$0xff]
    %v1077 = vld [vmem:[%s1074 + $0x10] sm:$0xff]
    %v1078 = vld [vmem:[%s1074 + $0x18] sm:$0xff]
    %v1079 = vld [vmem:[%s1074 + $0x20] sm:$0xff]
    %v1080 = vld [vmem:[%s1074 + $0x28] sm:$0xff]
    %v1081 = vld [vmem:[%s1074 + $0x30] sm:$0xff]
    %v1082 = vld [vmem:[%s1074 + $0x38] sm:$0xff]
    %v1083 = vld [vmem:[%s1074 + $0x40] sm:$0xff]
    %v1084 = vld [vmem:[%s1074 + $0x48] sm:$0xff]
    %v1085 = vld [vmem:[%s1074 + $0x50] sm:$0xff]
    %v1086 = vld [vmem:[%s1074 + $0x58] sm:$0xff]
    %v1087 = vld [vmem:[%s1074 + $0x60] sm:$0xff]
    %v1088 = vld [vmem:[%s1074 + $0x68] sm:$0xff]
    %v1089 = vld [vmem:[%s1074 + $0x70] sm:$0xff]
    %v1090 = vld [vmem:[%s1074 + $0x78] sm:$0xff]
    %s1091 = scalar_lea.vmem %s3, 3
    %v1092 = vld [vmem:[%s1091] sm:$0x1]
    %v1094 = vlaneseq
    %v1095 = vshrl.u32 %v1094, 7
    %v1096 = vsub.s32 0, %v1095
    %v1097 = vrot.slane %v1092, %v1096
    %1099 = vmatprep.subr.mxu0 0.0
    %1100 = vmatpush1.msra.mxu0 %v1075
    %1101 = vmatprep.subr.mxu0 0.0
    %1102 = vmatpush1.msra.mxu0 %v1076
    %1103 = vmatprep.subr.mxu0 0.0
    %1104 = vmatpush1.msra.mxu0 %v1077
    %1105 = vmatprep.subr.mxu0 0.0
    %1106 = vmatpush1.msra.mxu0 %v1078
    %1107 = vmatprep.subr.mxu0 0.0
    %1108 = vmatpush1.msra.mxu0 %v1079
    %1109 = vmatprep.subr.mxu0 0.0
    %1110 = vmatpush1.msra.mxu0 %v1080
    %1111 = vmatprep.subr.mxu0 0.0
    %1112 = vmatpush1.msra.mxu0 %v1081
    %1113 = vmatprep.subr.mxu0 0.0
    %1114 = vmatpush1.msra.mxu0 %v1082
    %1115 = vmatprep.subr.mxu0 0.0
    %1116 = vmatpush1.msra.mxu0 %v1083
    %1117 = vmatprep.subr.mxu0 0.0
    %1118 = vmatpush1.msra.mxu0 %v1084
    %1119 = vmatprep.subr.mxu0 0.0
    %1120 = vmatpush1.msra.mxu0 %v1085
    %1121 = vmatprep.subr.mxu0 0.0
    %1122 = vmatpush1.msra.mxu0 %v1086
    %1123 = vmatprep.subr.mxu0 0.0
    %1124 = vmatpush1.msra.mxu0 %v1087
    %1125 = vmatprep.subr.mxu0 0.0
    %1126 = vmatpush1.msra.mxu0 %v1088
    %1127 = vmatprep.subr.mxu0 0.0
    %1128 = vmatpush1.msra.mxu0 %v1089
    %1129 = vmatprep.subr.mxu0 0.0
    %1130 = vmatpush1.msra.mxu0 %v1090
    %1131 = vmatprep.subr.mxu0 0.0
    %1132 = vmatpush1.msra.mxu0 0.0
    %1133 = vmatprep.subr.mxu0 0.0
    %1134 = vmatpush1.msra.mxu0 0.0
    %1135 = vmatprep.subr.mxu0 0.0
    %1136 = vmatpush1.msra.mxu0 0.0
    %1137 = vmatprep.subr.mxu0 0.0
    %1138 = vmatpush1.msra.mxu0 0.0
    %1139 = vmatprep.subr.mxu0 0.0
    %1140 = vmatpush1.msra.mxu0 0.0
    %1141 = vmatprep.subr.mxu0 0.0
    %1142 = vmatpush1.msra.mxu0 0.0
    %1143 = vmatprep.subr.mxu0 0.0
    %1144 = vmatpush1.msra.mxu0 0.0
    %1145 = vmatprep.subr.mxu0 0.0
    %1146 = vmatpush1.msra.mxu0 0.0
    %1147 = vmatprep.subr.mxu0 0.0
    %1148 = vmatpush1.msra.mxu0 0.0
    %1149 = vmatprep.subr.mxu0 0.0
    %1150 = vmatpush1.msra.mxu0 0.0
    %1151 = vmatprep.subr.mxu0 0.0
    %1152 = vmatpush1.msra.mxu0 0.0
    %1153 = vmatprep.subr.mxu0 0.0
    %1154 = vmatpush1.msra.mxu0 0.0
    %1155 = vmatprep.subr.mxu0 0.0
    %1156 = vmatpush1.msra.mxu0 0.0
    %1157 = vmatprep.subr.mxu0 0.0
    %1158 = vmatpush1.msra.mxu0 0.0
    %1159 = vmatprep.subr.mxu0 0.0
    %1160 = vmatpush1.msra.mxu0 0.0
    %1161 = vmatprep.subr.mxu0 0.0
    %1162 = vmatpush1.msra.mxu0 0.0
    %1163 = vmatprep.mubr.f32.mxu0 0.0
    %1164 = vmatmul.mubr.f32.gmra.mrb[0].mxu0 %v1042
    %v1165 = vpop.f32.mrb[0].mxu0
    %v1166 = vadd.f32 %v1097, %v1165
    %v1167 = vpop.f32.mrb[0].mxu0
    %1168 = vmatprep.mubr.f32.mxu0 0.0
    %1169 = vmatmul.mubr.f32.gmra.mrb[0].mxu0 %v1043
    %v1170 = vpop.f32.mrb[0].mxu0
    %v1171 = vadd.f32 %v1097, %v1170
    %v1172 = vpop.f32.mrb[0].mxu0
    %1173 = vmatprep.mubr.f32.mxu0 0.0
    %1174 = vmatmul.mubr.f32.gmra.mrb[0].mxu0 %v1044
    %v1175 = vpop.f32.mrb[0].mxu0
    %v1176 = vadd.f32 %v1097, %v1175
    %v1177 = vpop.f32.mrb[0].mxu0
    %1178 = vmatprep.mubr.f32.mxu0 0.0
    %1179 = vmatmul.mubr.f32.gmra.mrb[0].mxu0 %v1045
    %v1180 = vpop.f32.mrb[0].mxu0
    %v1181 = vadd.f32 %v1097, %v1180
    %v1182 = vpop.f32.mrb[0].mxu0
    %1183 = vmatprep.mubr.f32.mxu0 0.0
    %1184 = vmatmul.mubr.f32.gmra.mrb[0].mxu0 %v1046
    %v1185 = vpop.f32.mrb[0].mxu0
    %v1186 = vadd.f32 %v1097, %v1185
    %v1187 = vpop.f32.mrb[0].mxu0
    %1188 = vmatprep.mubr.f32.mxu0 0.0
    %1189 = vmatmul.mubr.f32.gmra.mrb[0].mxu0 %v1047
    %v1190 = vpop.f32.mrb[0].mxu0
    %v1191 = vadd.f32 %v1097, %v1190
    %v1192 = vpop.f32.mrb[0].mxu0
    %1193 = vmatprep.mubr.f32.mxu0 0.0
    %1194 = vmatmul.mubr.f32.gmra.mrb[0].mxu0 %v1048
    %v1195 = vpop.f32.mrb[0].mxu0
    %v1196 = vadd.f32 %v1097, %v1195
    %v1197 = vpop.f32.mrb[0].mxu0
    %1198 = vmatprep.mubr.f32.mxu0 0.0
    %1199 = vmatmul.mubr.f32.gmra.mrb[0].mxu0 %v1049
    %v1200 = vpop.f32.mrb[0].mxu0
    %v1201 = vadd.f32 %v1097, %v1200
    %v1202 = vpop.f32.mrb[0].mxu0
    %1203 = vmatprep.mubr.f32.mxu0 0.0
    %1204 = vmatmul.mubr.f32.gmra.mrb[0].mxu0 %v1050
    %v1205 = vpop.f32.mrb[0].mxu0
    %v1206 = vadd.f32 %v1097, %v1205
    %v1207 = vpop.f32.mrb[0].mxu0
    %1208 = vmatprep.mubr.f32.mxu0 0.0
    %1209 = vmatmul.mubr.f32.gmra.mrb[0].mxu0 %v1051
    %v1210 = vpop.f32.mrb[0].mxu0
    %v1211 = vadd.f32 %v1097, %v1210
    %v1212 = vpop.f32.mrb[0].mxu0
    %1213 = vmatprep.mubr.f32.mxu0 0.0
    %1214 = vmatmul.mubr.f32.gmra.mrb[0].mxu0 %v1052
    %v1215 = vpop.f32.mrb[0].mxu0
    %v1216 = vadd.f32 %v1097, %v1215
    %v1217 = vpop.f32.mrb[0].mxu0
    %1218 = vmatprep.mubr.f32.mxu0 0.0
    %1219 = vmatmul.mubr.f32.gmra.mrb[0].mxu0 %v1053
    %v1220 = vpop.f32.mrb[0].mxu0
    %v1221 = vadd.f32 %v1097, %v1220
    %v1222 = vpop.f32.mrb[0].mxu0
    %1223 = vmatprep.mubr.f32.mxu0 0.0
    %1224 = vmatmul.mubr.f32.gmra.mrb[0].mxu0 %v1054
    %v1225 = vpop.f32.mrb[0].mxu0
    %v1226 = vadd.f32 %v1097, %v1225
    %v1227 = vpop.f32.mrb[0].mxu0
    %1228 = vmatprep.mubr.f32.mxu0 0.0
    %1229 = vmatmul.mubr.f32.gmra.mrb[0].mxu0 %v1055
    %v1230 = vpop.f32.mrb[0].mxu0
    %v1231 = vadd.f32 %v1097, %v1230
    %v1232 = vpop.f32.mrb[0].mxu0
    %1233 = vmatprep.mubr.f32.mxu0 0.0
    %1234 = vmatmul.mubr.f32.gmra.mrb[0].mxu0 %v1056
    %v1235 = vpop.f32.mrb[0].mxu0
    %v1236 = vadd.f32 %v1097, %v1235
    %v1237 = vpop.f32.mrb[0].mxu0
    %1238 = vmatprep.mubr.f32.mxu0 0.0
    %1239 = vmatmul.mubr.f32.gmra.mrb[0].mxu0 %v1057
    %v1240 = vpop.f32.mrb[0].mxu0
    %v1241 = vadd.f32 %v1097, %v1240
    %v1242 = vpop.f32.mrb[0].mxu0
    %1243 = vmatprep.mubr.f32.mxu0 0.0
    %1244 = vmatmul.mubr.f32.gmra.mrb[0].mxu0 %v1058
    %v1245 = vpop.f32.mrb[0].mxu0
    %v1246 = vadd.f32 %v1097, %v1245
    %v1247 = vpop.f32.mrb[0].mxu0
    %1248 = vmatprep.mubr.f32.mxu0 0.0
    %1249 = vmatmul.mubr.f32.gmra.mrb[0].mxu0 %v1059
    %v1250 = vpop.f32.mrb[0].mxu0
    %v1251 = vadd.f32 %v1097, %v1250
    %v1252 = vpop.f32.mrb[0].mxu0
    %1253 = vmatprep.mubr.f32.mxu0 0.0
    %1254 = vmatmul.mubr.f32.gmra.mrb[0].mxu0 %v1060
    %v1255 = vpop.f32.mrb[0].mxu0
    %v1256 = vadd.f32 %v1097, %v1255
    %v1257 = vpop.f32.mrb[0].mxu0
    %1258 = vmatprep.mubr.f32.mxu0 0.0
    %1259 = vmatmul.mubr.f32.gmra.mrb[0].mxu0 %v1061
    %v1260 = vpop.f32.mrb[0].mxu0
    %v1261 = vadd.f32 %v1097, %v1260
    %v1262 = vpop.f32.mrb[0].mxu0
    %1263 = vmatprep.mubr.f32.mxu0 0.0
    %1264 = vmatmul.mubr.f32.gmra.mrb[0].mxu0 %v1062
    %v1265 = vpop.f32.mrb[0].mxu0
    %v1266 = vadd.f32 %v1097, %v1265
    %v1267 = vpop.f32.mrb[0].mxu0
    %1268 = vmatprep.mubr.f32.mxu0 0.0
    %1269 = vmatmul.mubr.f32.gmra.mrb[0].mxu0 %v1063
    %v1270 = vpop.f32.mrb[0].mxu0
    %v1271 = vadd.f32 %v1097, %v1270
    %v1272 = vpop.f32.mrb[0].mxu0
    %1273 = vmatprep.mubr.f32.mxu0 0.0
    %1274 = vmatmul.mubr.f32.gmra.mrb[0].mxu0 %v1064
    %v1275 = vpop.f32.mrb[0].mxu0
    %v1276 = vadd.f32 %v1097, %v1275
    %v1277 = vpop.f32.mrb[0].mxu0
    %1278 = vmatprep.mubr.f32.mxu0 0.0
    %1279 = vmatmul.mubr.f32.gmra.mrb[0].mxu0 %v1065
    %v1280 = vpop.f32.mrb[0].mxu0
    %v1281 = vadd.f32 %v1097, %v1280
    %v1282 = vpop.f32.mrb[0].mxu0
    %1283 = vmatprep.mubr.f32.mxu0 0.0
    %1284 = vmatmul.mubr.f32.gmra.mrb[0].mxu0 %v1066
    %v1285 = vpop.f32.mrb[0].mxu0
    %v1286 = vadd.f32 %v1097, %v1285
    %v1287 = vpop.f32.mrb[0].mxu0
    %1288 = vmatprep.mubr.f32.mxu0 0.0
    %1289 = vmatmul.mubr.f32.gmra.mrb[0].mxu0 %v1067
    %v1290 = vpop.f32.mrb[0].mxu0
    %v1291 = vadd.f32 %v1097, %v1290
    %v1292 = vpop.f32.mrb[0].mxu0
    %1293 = vmatprep.mubr.f32.mxu0 0.0
    %1294 = vmatmul.mubr.f32.gmra.mrb[0].mxu0 %v1068
    %v1295 = vpop.f32.mrb[0].mxu0
    %v1296 = vadd.f32 %v1097, %v1295
    %v1297 = vpop.f32.mrb[0].mxu0
    %1298 = vmatprep.mubr.f32.mxu0 0.0
    %1299 = vmatmul.mubr.f32.gmra.mrb[0].mxu0 %v1069
    %v1300 = vpop.f32.mrb[0].mxu0
    %v1301 = vadd.f32 %v1097, %v1300
    %v1302 = vpop.f32.mrb[0].mxu0
    %1303 = vmatprep.mubr.f32.mxu0 0.0
    %1304 = vmatmul.mubr.f32.gmra.mrb[0].mxu0 %v1070
    %v1305 = vpop.f32.mrb[0].mxu0
    %v1306 = vadd.f32 %v1097, %v1305
    %v1307 = vpop.f32.mrb[0].mxu0
    %1308 = vmatprep.mubr.f32.mxu0 0.0
    %1309 = vmatmul.mubr.f32.gmra.mrb[0].mxu0 %v1071
    %v1310 = vpop.f32.mrb[0].mxu0
    %v1311 = vadd.f32 %v1097, %v1310
    %v1312 = vpop.f32.mrb[0].mxu0
    %1313 = vmatprep.mubr.f32.mxu0 0.0
    %1314 = vmatmul.mubr.f32.gmra.mrb[0].mxu0 %v1072
    %v1315 = vpop.f32.mrb[0].mxu0
    %v1316 = vadd.f32 %v1097, %v1315
    %v1317 = vpop.f32.mrb[0].mxu0
    %1318 = vmatprep.mubr.f32.mxu0 0.0
    %1319 = vmatmul.mubr.f32.gmra.mrb[0].mxu0 %v1073
    %v1320 = vpop.f32.mrb[0].mxu0
    %v1321 = vadd.f32 %v1097, %v1320
    %v1322 = vpop.f32.mrb[0].mxu0
    %1323 = vdwg.mxu0
    %v1324 = vmax.f32 %v1166, 0.0
    %v1325 = vmax.f32 %v1171, 0.0
    %v1326 = vmax.f32 %v1176, 0.0
    %v1327 = vmax.f32 %v1181, 0.0
    %v1328 = vmax.f32 %v1186, 0.0
    %v1329 = vmax.f32 %v1191, 0.0
    %v1330 = vmax.f32 %v1196, 0.0
    %v1331 = vmax.f32 %v1201, 0.0
    %v1332 = vmax.f32 %v1206, 0.0
    %v1333 = vmax.f32 %v1211, 0.0
    %v1334 = vmax.f32 %v1216, 0.0
    %v1335 = vmax.f32 %v1221, 0.0
    %v1336 = vmax.f32 %v1226, 0.0
    %v1337 = vmax.f32 %v1231, 0.0
    %v1338 = vmax.f32 %v1236, 0.0
    %v1339 = vmax.f32 %v1241, 0.0
    %v1340 = vmax.f32 %v1246, 0.0
    %v1341 = vmax.f32 %v1251, 0.0
    %v1342 = vmax.f32 %v1256, 0.0
    %v1343 = vmax.f32 %v1261, 0.0
    %v1344 = vmax.f32 %v1266, 0.0
    %v1345 = vmax.f32 %v1271, 0.0
    %v1346 = vmax.f32 %v1276, 0.0
    %v1347 = vmax.f32 %v1281, 0.0
    %v1348 = vmax.f32 %v1286, 0.0
    %v1349 = vmax.f32 %v1291, 0.0
    %v1350 = vmax.f32 %v1296, 0.0
    %v1351 = vmax.f32 %v1301, 0.0
    %v1352 = vmax.f32 %v1306, 0.0
    %v1353 = vmax.f32 %v1311, 0.0
    %v1354 = vmax.f32 %v1316, 0.0
    %v1355 = vmax.f32 %v1321, 0.0
    %s1356 = scalar_lea.vmem [#allocation2], 384
    %v1357 = vld [vmem:[%s1356] sm:$0xff]
    %v1358 = vld [vmem:[%s1356 + $0x8] sm:$0xff]
    %v1359 = vld [vmem:[%s1356 + $0x10] sm:$0xff]
    %v1360 = vld [vmem:[%s1356 + $0x18] sm:$0xff]
    %v1361 = vld [vmem:[%s1356 + $0x20] sm:$0xff]
    %v1362 = vld [vmem:[%s1356 + $0x28] sm:$0xff]
    %v1363 = vld [vmem:[%s1356 + $0x30] sm:$0xff]
    %v1364 = vld [vmem:[%s1356 + $0x38] sm:$0xff]
    %v1365 = vld [vmem:[%s1356 + $0x40] sm:$0xff]
    %v1366 = vld [vmem:[%s1356 + $0x48] sm:$0xff]
    %v1367 = vld [vmem:[%s1356 + $0x50] sm:$0xff]
    %v1368 = vld [vmem:[%s1356 + $0x58] sm:$0xff]
    %v1369 = vld [vmem:[%s1356 + $0x60] sm:$0xff]
    %v1370 = vld [vmem:[%s1356 + $0x68] sm:$0xff]
    %v1371 = vld [vmem:[%s1356 + $0x70] sm:$0xff]
    %v1372 = vld [vmem:[%s1356 + $0x78] sm:$0xff]
    %s1373 = scalar_lea.vmem %s3, 4
    %v1374 = vld [vmem:[%s1373] sm:$0x1]
    %v1376 = vlaneseq
    %v1377 = vshrl.u32 %v1376, 7
    %v1378 = vsub.s32 0, %v1377
    %v1379 = vrot.slane %v1374, %v1378
    %1381 = vmatprep.subr.mxu0 0.0
    %1382 = vmatpush1.msra.mxu0 %v1357
    %1383 = vmatprep.subr.mxu0 0.0
    %1384 = vmatpush1.msra.mxu0 %v1358
    %1385 = vmatprep.subr.mxu0 0.0
    %1386 = vmatpush1.msra.mxu0 %v1359
    %1387 = vmatprep.subr.mxu0 0.0
    %1388 = vmatpush1.msra.mxu0 %v1360
    %1389 = vmatprep.subr.mxu0 0.0
    %1390 = vmatpush1.msra.mxu0 %v1361
    %1391 = vmatprep.subr.mxu0 0.0
    %1392 = vmatpush1.msra.mxu0 %v1362
    %1393 = vmatprep.subr.mxu0 0.0
    %1394 = vmatpush1.msra.mxu0 %v1363
    %1395 = vmatprep.subr.mxu0 0.0
    %1396 = vmatpush1.msra.mxu0 %v1364
    %1397 = vmatprep.subr.mxu0 0.0
    %1398 = vmatpush1.msra.mxu0 %v1365
    %1399 = vmatprep.subr.mxu0 0.0
    %1400 = vmatpush1.msra.mxu0 %v1366
    %1401 = vmatprep.subr.mxu0 0.0
    %1402 = vmatpush1.msra.mxu0 %v1367
    %1403 = vmatprep.subr.mxu0 0.0
    %1404 = vmatpush1.msra.mxu0 %v1368
    %1405 = vmatprep.subr.mxu0 0.0
    %1406 = vmatpush1.msra.mxu0 %v1369
    %1407 = vmatprep.subr.mxu0 0.0
    %1408 = vmatpush1.msra.mxu0 %v1370
    %1409 = vmatprep.subr.mxu0 0.0
    %1410 = vmatpush1.msra.mxu0 %v1371
    %1411 = vmatprep.subr.mxu0 0.0
    %1412 = vmatpush1.msra.mxu0 %v1372
    %1413 = vmatprep.subr.mxu0 0.0
    %1414 = vmatpush1.msra.mxu0 0.0
    %1415 = vmatprep.subr.mxu0 0.0
    %1416 = vmatpush1.msra.mxu0 0.0
    %1417 = vmatprep.subr.mxu0 0.0
    %1418 = vmatpush1.msra.mxu0 0.0
    %1419 = vmatprep.subr.mxu0 0.0
    %1420 = vmatpush1.msra.mxu0 0.0
    %1421 = vmatprep.subr.mxu0 0.0
    %1422 = vmatpush1.msra.mxu0 0.0
    %1423 = vmatprep.subr.mxu0 0.0
    %1424 = vmatpush1.msra.mxu0 0.0
    %1425 = vmatprep.subr.mxu0 0.0
    %1426 = vmatpush1.msra.mxu0 0.0
    %1427 = vmatprep.subr.mxu0 0.0
    %1428 = vmatpush1.msra.mxu0 0.0
    %1429 = vmatprep.subr.mxu0 0.0
    %1430 = vmatpush1.msra.mxu0 0.0
    %1431 = vmatprep.subr.mxu0 0.0
    %1432 = vmatpush1.msra.mxu0 0.0
    %1433 = vmatprep.subr.mxu0 0.0
    %1434 = vmatpush1.msra.mxu0 0.0
    %1435 = vmatprep.subr.mxu0 0.0
    %1436 = vmatpush1.msra.mxu0 0.0
    %1437 = vmatprep.subr.mxu0 0.0
    %1438 = vmatpush1.msra.mxu0 0.0
    %1439 = vmatprep.subr.mxu0 0.0
    %1440 = vmatpush1.msra.mxu0 0.0
    %1441 = vmatprep.subr.mxu0 0.0
    %1442 = vmatpush1.msra.mxu0 0.0
    %1443 = vmatprep.subr.mxu0 0.0
    %1444 = vmatpush1.msra.mxu0 0.0
    %1445 = vmatprep.mubr.f32.mxu0 0.0
    %1446 = vmatmul.mubr.f32.gmra.mrb[0].mxu0 %v1324
    %v1447 = vpop.f32.mrb[0].mxu0
    %v1448 = vadd.f32 %v1379, %v1447
    %v1449 = vpop.f32.mrb[0].mxu0
    %1450 = vmatprep.mubr.f32.mxu0 0.0
    %1451 = vmatmul.mubr.f32.gmra.mrb[0].mxu0 %v1325
    %v1452 = vpop.f32.mrb[0].mxu0
    %v1453 = vadd.f32 %v1379, %v1452
    %v1454 = vpop.f32.mrb[0].mxu0
    %1455 = vmatprep.mubr.f32.mxu0 0.0
    %1456 = vmatmul.mubr.f32.gmra.mrb[0].mxu0 %v1326
    %v1457 = vpop.f32.mrb[0].mxu0
    %v1458 = vadd.f32 %v1379, %v1457
    %v1459 = vpop.f32.mrb[0].mxu0
    %1460 = vmatprep.mubr.f32.mxu0 0.0
    %1461 = vmatmul.mubr.f32.gmra.mrb[0].mxu0 %v1327
    %v1462 = vpop.f32.mrb[0].mxu0
    %v1463 = vadd.f32 %v1379, %v1462
    %v1464 = vpop.f32.mrb[0].mxu0
    %1465 = vmatprep.mubr.f32.mxu0 0.0
    %1466 = vmatmul.mubr.f32.gmra.mrb[0].mxu0 %v1328
    %v1467 = vpop.f32.mrb[0].mxu0
    %v1468 = vadd.f32 %v1379, %v1467
    %v1469 = vpop.f32.mrb[0].mxu0
    %1470 = vmatprep.mubr.f32.mxu0 0.0
    %1471 = vmatmul.mubr.f32.gmra.mrb[0].mxu0 %v1329
    %v1472 = vpop.f32.mrb[0].mxu0
    %v1473 = vadd.f32 %v1379, %v1472
    %v1474 = vpop.f32.mrb[0].mxu0
    %1475 = vmatprep.mubr.f32.mxu0 0.0
    %1476 = vmatmul.mubr.f32.gmra.mrb[0].mxu0 %v1330
    %v1477 = vpop.f32.mrb[0].mxu0
    %v1478 = vadd.f32 %v1379, %v1477
    %v1479 = vpop.f32.mrb[0].mxu0
    %1480 = vmatprep.mubr.f32.mxu0 0.0
    %1481 = vmatmul.mubr.f32.gmra.mrb[0].mxu0 %v1331
    %v1482 = vpop.f32.mrb[0].mxu0
    %v1483 = vadd.f32 %v1379, %v1482
    %v1484 = vpop.f32.mrb[0].mxu0
    %1485 = vmatprep.mubr.f32.mxu0 0.0
    %1486 = vmatmul.mubr.f32.gmra.mrb[0].mxu0 %v1332
    %v1487 = vpop.f32.mrb[0].mxu0
    %v1488 = vadd.f32 %v1379, %v1487
    %v1489 = vpop.f32.mrb[0].mxu0
    %1490 = vmatprep.mubr.f32.mxu0 0.0
    %1491 = vmatmul.mubr.f32.gmra.mrb[0].mxu0 %v1333
    %v1492 = vpop.f32.mrb[0].mxu0
    %v1493 = vadd.f32 %v1379, %v1492
    %v1494 = vpop.f32.mrb[0].mxu0
    %1495 = vmatprep.mubr.f32.mxu0 0.0
    %1496 = vmatmul.mubr.f32.gmra.mrb[0].mxu0 %v1334
    %v1497 = vpop.f32.mrb[0].mxu0
    %v1498 = vadd.f32 %v1379, %v1497
    %v1499 = vpop.f32.mrb[0].mxu0
    %1500 = vmatprep.mubr.f32.mxu0 0.0
    %1501 = vmatmul.mubr.f32.gmra.mrb[0].mxu0 %v1335
    %v1502 = vpop.f32.mrb[0].mxu0
    %v1503 = vadd.f32 %v1379, %v1502
    %v1504 = vpop.f32.mrb[0].mxu0
    %1505 = vmatprep.mubr.f32.mxu0 0.0
    %1506 = vmatmul.mubr.f32.gmra.mrb[0].mxu0 %v1336
    %v1507 = vpop.f32.mrb[0].mxu0
    %v1508 = vadd.f32 %v1379, %v1507
    %v1509 = vpop.f32.mrb[0].mxu0
    %1510 = vmatprep.mubr.f32.mxu0 0.0
    %1511 = vmatmul.mubr.f32.gmra.mrb[0].mxu0 %v1337
    %v1512 = vpop.f32.mrb[0].mxu0
    %v1513 = vadd.f32 %v1379, %v1512
    %v1514 = vpop.f32.mrb[0].mxu0
    %1515 = vmatprep.mubr.f32.mxu0 0.0
    %1516 = vmatmul.mubr.f32.gmra.mrb[0].mxu0 %v1338
    %v1517 = vpop.f32.mrb[0].mxu0
    %v1518 = vadd.f32 %v1379, %v1517
    %v1519 = vpop.f32.mrb[0].mxu0
    %1520 = vmatprep.mubr.f32.mxu0 0.0
    %1521 = vmatmul.mubr.f32.gmra.mrb[0].mxu0 %v1339
    %v1522 = vpop.f32.mrb[0].mxu0
    %v1523 = vadd.f32 %v1379, %v1522
    %v1524 = vpop.f32.mrb[0].mxu0
    %1525 = vmatprep.mubr.f32.mxu0 0.0
    %1526 = vmatmul.mubr.f32.gmra.mrb[0].mxu0 %v1340
    %v1527 = vpop.f32.mrb[0].mxu0
    %v1528 = vadd.f32 %v1379, %v1527
    %v1529 = vpop.f32.mrb[0].mxu0
    %1530 = vmatprep.mubr.f32.mxu0 0.0
    %1531 = vmatmul.mubr.f32.gmra.mrb[0].mxu0 %v1341
    %v1532 = vpop.f32.mrb[0].mxu0
    %v1533 = vadd.f32 %v1379, %v1532
    %v1534 = vpop.f32.mrb[0].mxu0
    %1535 = vmatprep.mubr.f32.mxu0 0.0
    %1536 = vmatmul.mubr.f32.gmra.mrb[0].mxu0 %v1342
    %v1537 = vpop.f32.mrb[0].mxu0
    %v1538 = vadd.f32 %v1379, %v1537
    %v1539 = vpop.f32.mrb[0].mxu0
    %1540 = vmatprep.mubr.f32.mxu0 0.0
    %1541 = vmatmul.mubr.f32.gmra.mrb[0].mxu0 %v1343
    %v1542 = vpop.f32.mrb[0].mxu0
    %v1543 = vadd.f32 %v1379, %v1542
    %v1544 = vpop.f32.mrb[0].mxu0
    %1545 = vmatprep.mubr.f32.mxu0 0.0
    %1546 = vmatmul.mubr.f32.gmra.mrb[0].mxu0 %v1344
    %v1547 = vpop.f32.mrb[0].mxu0
    %v1548 = vadd.f32 %v1379, %v1547
    %v1549 = vpop.f32.mrb[0].mxu0
    %1550 = vmatprep.mubr.f32.mxu0 0.0
    %1551 = vmatmul.mubr.f32.gmra.mrb[0].mxu0 %v1345
    %v1552 = vpop.f32.mrb[0].mxu0
    %v1553 = vadd.f32 %v1379, %v1552
    %v1554 = vpop.f32.mrb[0].mxu0
    %1555 = vmatprep.mubr.f32.mxu0 0.0
    %1556 = vmatmul.mubr.f32.gmra.mrb[0].mxu0 %v1346
    %v1557 = vpop.f32.mrb[0].mxu0
    %v1558 = vadd.f32 %v1379, %v1557
    %v1559 = vpop.f32.mrb[0].mxu0
    %1560 = vmatprep.mubr.f32.mxu0 0.0
    %1561 = vmatmul.mubr.f32.gmra.mrb[0].mxu0 %v1347
    %v1562 = vpop.f32.mrb[0].mxu0
    %v1563 = vadd.f32 %v1379, %v1562
    %v1564 = vpop.f32.mrb[0].mxu0
    %1565 = vmatprep.mubr.f32.mxu0 0.0
    %1566 = vmatmul.mubr.f32.gmra.mrb[0].mxu0 %v1348
    %v1567 = vpop.f32.mrb[0].mxu0
    %v1568 = vadd.f32 %v1379, %v1567
    %v1569 = vpop.f32.mrb[0].mxu0
    %1570 = vmatprep.mubr.f32.mxu0 0.0
    %1571 = vmatmul.mubr.f32.gmra.mrb[0].mxu0 %v1349
    %v1572 = vpop.f32.mrb[0].mxu0
    %v1573 = vadd.f32 %v1379, %v1572
    %v1574 = vpop.f32.mrb[0].mxu0
    %1575 = vmatprep.mubr.f32.mxu0 0.0
    %1576 = vmatmul.mubr.f32.gmra.mrb[0].mxu0 %v1350
    %v1577 = vpop.f32.mrb[0].mxu0
    %v1578 = vadd.f32 %v1379, %v1577
    %v1579 = vpop.f32.mrb[0].mxu0
    %1580 = vmatprep.mubr.f32.mxu0 0.0
    %1581 = vmatmul.mubr.f32.gmra.mrb[0].mxu0 %v1351
    %v1582 = vpop.f32.mrb[0].mxu0
    %v1583 = vadd.f32 %v1379, %v1582
    %v1584 = vpop.f32.mrb[0].mxu0
    %1585 = vmatprep.mubr.f32.mxu0 0.0
    %1586 = vmatmul.mubr.f32.gmra.mrb[0].mxu0 %v1352
    %v1587 = vpop.f32.mrb[0].mxu0
    %v1588 = vadd.f32 %v1379, %v1587
    %v1589 = vpop.f32.mrb[0].mxu0
    %1590 = vmatprep.mubr.f32.mxu0 0.0
    %1591 = vmatmul.mubr.f32.gmra.mrb[0].mxu0 %v1353
    %v1592 = vpop.f32.mrb[0].mxu0
    %v1593 = vadd.f32 %v1379, %v1592
    %v1594 = vpop.f32.mrb[0].mxu0
    %1595 = vmatprep.mubr.f32.mxu0 0.0
    %1596 = vmatmul.mubr.f32.gmra.mrb[0].mxu0 %v1354
    %v1597 = vpop.f32.mrb[0].mxu0
    %v1598 = vadd.f32 %v1379, %v1597
    %v1599 = vpop.f32.mrb[0].mxu0
    %1600 = vmatprep.mubr.f32.mxu0 0.0
    %1601 = vmatmul.mubr.f32.gmra.mrb[0].mxu0 %v1355
    %v1602 = vpop.f32.mrb[0].mxu0
    %v1603 = vadd.f32 %v1379, %v1602
    %v1604 = vpop.f32.mrb[0].mxu0
    %1605 = vdwg.mxu0
    %v1606 = vmax.f32 %v1448, 0.0
    %v1607 = vmax.f32 %v1453, 0.0
    %v1608 = vmax.f32 %v1458, 0.0
    %v1609 = vmax.f32 %v1463, 0.0
    %v1610 = vmax.f32 %v1468, 0.0
    %v1611 = vmax.f32 %v1473, 0.0
    %v1612 = vmax.f32 %v1478, 0.0
    %v1613 = vmax.f32 %v1483, 0.0
    %v1614 = vmax.f32 %v1488, 0.0
    %v1615 = vmax.f32 %v1493, 0.0
    %v1616 = vmax.f32 %v1498, 0.0
    %v1617 = vmax.f32 %v1503, 0.0
    %v1618 = vmax.f32 %v1508, 0.0
    %v1619 = vmax.f32 %v1513, 0.0
    %v1620 = vmax.f32 %v1518, 0.0
    %v1621 = vmax.f32 %v1523, 0.0
    %v1622 = vmax.f32 %v1528, 0.0
    %v1623 = vmax.f32 %v1533, 0.0
    %v1624 = vmax.f32 %v1538, 0.0
    %v1625 = vmax.f32 %v1543, 0.0
    %v1626 = vmax.f32 %v1548, 0.0
    %v1627 = vmax.f32 %v1553, 0.0
    %v1628 = vmax.f32 %v1558, 0.0
    %v1629 = vmax.f32 %v1563, 0.0
    %v1630 = vmax.f32 %v1568, 0.0
    %v1631 = vmax.f32 %v1573, 0.0
    %v1632 = vmax.f32 %v1578, 0.0
    %v1633 = vmax.f32 %v1583, 0.0
    %v1634 = vmax.f32 %v1588, 0.0
    %v1635 = vmax.f32 %v1593, 0.0
    %v1636 = vmax.f32 %v1598, 0.0
    %v1637 = vmax.f32 %v1603, 0.0
    %s1638 = scalar_lea.vmem [#allocation2], 512
    %v1639 = vld [vmem:[%s1638] sm:$0xff]
    %v1640 = vld [vmem:[%s1638 + $0x8] sm:$0xff]
    %v1641 = vld [vmem:[%s1638 + $0x10] sm:$0xff]
    %v1642 = vld [vmem:[%s1638 + $0x18] sm:$0xff]
    %v1643 = vld [vmem:[%s1638 + $0x20] sm:$0xff]
    %v1644 = vld [vmem:[%s1638 + $0x28] sm:$0xff]
    %v1645 = vld [vmem:[%s1638 + $0x30] sm:$0xff]
    %v1646 = vld [vmem:[%s1638 + $0x38] sm:$0xff]
    %v1647 = vld [vmem:[%s1638 + $0x40] sm:$0xff]
    %v1648 = vld [vmem:[%s1638 + $0x48] sm:$0xff]
    %v1649 = vld [vmem:[%s1638 + $0x50] sm:$0xff]
    %v1650 = vld [vmem:[%s1638 + $0x58] sm:$0xff]
    %v1651 = vld [vmem:[%s1638 + $0x60] sm:$0xff]
    %v1652 = vld [vmem:[%s1638 + $0x68] sm:$0xff]
    %v1653 = vld [vmem:[%s1638 + $0x70] sm:$0xff]
    %v1654 = vld [vmem:[%s1638 + $0x78] sm:$0xff]
    %v1655 = vld [vmem:[%s4] sm:$0x3f]
    %v1657 = vsel %vm250, %v1655, 0
    %1659 = vmatprep.subr.mxu0 0.0
    %1660 = vmatpush1.msra.mxu0 %v1657
    %1661 = vmatprep.subr.mxu0 0.0
    %1662 = vmatpush1.msra.mxu0 0.0
    %1663 = vmatprep.subr.mxu0 0.0
    %1664 = vmatpush1.msra.mxu0 0.0
    %1665 = vmatprep.subr.mxu0 0.0
    %1666 = vmatpush1.msra.mxu0 0.0
    %1667 = vmatprep.subr.mxu0 0.0
    %1668 = vmatpush1.msra.mxu0 0.0
    %1669 = vmatprep.subr.mxu0 0.0
    %1670 = vmatpush1.msra.mxu0 0.0
    %1671 = vmatprep.subr.mxu0 0.0
    %1672 = vmatpush1.msra.mxu0 0.0
    %1673 = vmatprep.subr.mxu0 0.0
    %1674 = vmatpush1.msra.mxu0 0.0
    %1675 = vmatprep.subr.mxu0 0.0
    %1676 = vmatpush1.msra.mxu0 0.0
    %1677 = vmatprep.subr.mxu0 0.0
    %1678 = vmatpush1.msra.mxu0 0.0
    %1679 = vmatprep.subr.mxu0 0.0
    %1680 = vmatpush1.msra.mxu0 0.0
    %1681 = vmatprep.subr.mxu0 0.0
    %1682 = vmatpush1.msra.mxu0 0.0
    %1683 = vmatprep.subr.mxu0 0.0
    %1684 = vmatpush1.msra.mxu0 0.0
    %1685 = vmatprep.subr.mxu0 0.0
    %1686 = vmatpush1.msra.mxu0 0.0
    %1687 = vmatprep.subr.mxu0 0.0
    %1688 = vmatpush1.msra.mxu0 0.0
    %1689 = vmatprep.subr.mxu0 0.0
    %1690 = vmatpush1.msra.mxu0 0.0
    %1691 = vmatprep.subr.mxu0 0.0
    %1692 = vmatpush1.msra.mxu0 0.0
    %1693 = vmatprep.subr.mxu0 0.0
    %1694 = vmatpush1.msra.mxu0 0.0
    %1695 = vmatprep.subr.mxu0 0.0
    %1696 = vmatpush1.msra.mxu0 0.0
    %1697 = vmatprep.subr.mxu0 0.0
    %1698 = vmatpush1.msra.mxu0 0.0
    %1699 = vmatprep.subr.mxu0 0.0
    %1700 = vmatpush1.msra.mxu0 0.0
    %1701 = vmatprep.subr.mxu0 0.0
    %1702 = vmatpush1.msra.mxu0 0.0
    %1703 = vmatprep.subr.mxu0 0.0
    %1704 = vmatpush1.msra.mxu0 0.0
    %1705 = vmatprep.subr.mxu0 0.0
    %1706 = vmatpush1.msra.mxu0 0.0
    %1707 = vmatprep.subr.mxu0 0.0
    %1708 = vmatpush1.msra.mxu0 0.0
    %1709 = vmatprep.subr.mxu0 0.0
    %1710 = vmatpush1.msra.mxu0 0.0
    %1711 = vmatprep.subr.mxu0 0.0
    %1712 = vmatpush1.msra.mxu0 0.0
    %1713 = vmatprep.subr.mxu0 0.0
    %1714 = vmatpush1.msra.mxu0 0.0
    %1715 = vmatprep.subr.mxu0 0.0
    %1716 = vmatpush1.msra.mxu0 0.0
    %1717 = vmatprep.subr.mxu0 0.0
    %1718 = vmatpush1.msra.mxu0 0.0
    %1719 = vmatprep.subr.mxu0 0.0
    %1720 = vmatpush1.msra.mxu0 0.0
    %1721 = vmatprep.subr.mxu0 0.0
    %1722 = vmatpush1.msra.mxu0 0.0
    %1723 = vmatprep.mubr.f32.mxu0 0.0
    %1724 = vmatmul.mubr.f32.gmra.mrb[0].mxu0 %v155
    %v1725 = vpop.f32.mrb[0].mxu0
    %v1726 = vadd.f32 0.0, %v1725
    %v1727 = vpop.f32.mrb[0].mxu0
    %1728 = vmatprep.mubr.f32.mxu0 0.0
    %1729 = vmatmul.mubr.f32.gmra.mrb[0].mxu0 %v158
    %v1730 = vpop.f32.mrb[0].mxu0
    %v1731 = vadd.f32 0.0, %v1730
    %v1732 = vpop.f32.mrb[0].mxu0
    %1733 = vmatprep.mubr.f32.mxu0 0.0
    %1734 = vmatmul.mubr.f32.gmra.mrb[0].mxu0 %v161
    %v1735 = vpop.f32.mrb[0].mxu0
    %v1736 = vadd.f32 0.0, %v1735
    %v1737 = vpop.f32.mrb[0].mxu0
    %1738 = vmatprep.mubr.f32.mxu0 0.0
    %1739 = vmatmul.mubr.f32.gmra.mrb[0].mxu0 %v164
    %v1740 = vpop.f32.mrb[0].mxu0
    %v1741 = vadd.f32 0.0, %v1740
    %v1742 = vpop.f32.mrb[0].mxu0
    %1743 = vmatprep.mubr.f32.mxu0 0.0
    %1744 = vmatmul.mubr.f32.gmra.mrb[0].mxu0 %v167
    %v1745 = vpop.f32.mrb[0].mxu0
    %v1746 = vadd.f32 0.0, %v1745
    %v1747 = vpop.f32.mrb[0].mxu0
    %1748 = vmatprep.mubr.f32.mxu0 0.0
    %1749 = vmatmul.mubr.f32.gmra.mrb[0].mxu0 %v170
    %v1750 = vpop.f32.mrb[0].mxu0
    %v1751 = vadd.f32 0.0, %v1750
    %v1752 = vpop.f32.mrb[0].mxu0
    %1753 = vmatprep.mubr.f32.mxu0 0.0
    %1754 = vmatmul.mubr.f32.gmra.mrb[0].mxu0 %v173
    %v1755 = vpop.f32.mrb[0].mxu0
    %v1756 = vadd.f32 0.0, %v1755
    %v1757 = vpop.f32.mrb[0].mxu0
    %1758 = vmatprep.mubr.f32.mxu0 0.0
    %1759 = vmatmul.mubr.f32.gmra.mrb[0].mxu0 %v176
    %v1760 = vpop.f32.mrb[0].mxu0
    %v1761 = vadd.f32 0.0, %v1760
    %v1762 = vpop.f32.mrb[0].mxu0
    %1763 = vmatprep.mubr.f32.mxu0 0.0
    %1764 = vmatmul.mubr.f32.gmra.mrb[0].mxu0 %v179
    %v1765 = vpop.f32.mrb[0].mxu0
    %v1766 = vadd.f32 0.0, %v1765
    %v1767 = vpop.f32.mrb[0].mxu0
    %1768 = vmatprep.mubr.f32.mxu0 0.0
    %1769 = vmatmul.mubr.f32.gmra.mrb[0].mxu0 %v182
    %v1770 = vpop.f32.mrb[0].mxu0
    %v1771 = vadd.f32 0.0, %v1770
    %v1772 = vpop.f32.mrb[0].mxu0
    %1773 = vmatprep.mubr.f32.mxu0 0.0
    %1774 = vmatmul.mubr.f32.gmra.mrb[0].mxu0 %v185
    %v1775 = vpop.f32.mrb[0].mxu0
    %v1776 = vadd.f32 0.0, %v1775
    %v1777 = vpop.f32.mrb[0].mxu0
    %1778 = vmatprep.mubr.f32.mxu0 0.0
    %1779 = vmatmul.mubr.f32.gmra.mrb[0].mxu0 %v188
    %v1780 = vpop.f32.mrb[0].mxu0
    %v1781 = vadd.f32 0.0, %v1780
    %v1782 = vpop.f32.mrb[0].mxu0
    %1783 = vmatprep.mubr.f32.mxu0 0.0
    %1784 = vmatmul.mubr.f32.gmra.mrb[0].mxu0 %v191
    %v1785 = vpop.f32.mrb[0].mxu0
    %v1786 = vadd.f32 0.0, %v1785
    %v1787 = vpop.f32.mrb[0].mxu0
    %1788 = vmatprep.mubr.f32.mxu0 0.0
    %1789 = vmatmul.mubr.f32.gmra.mrb[0].mxu0 %v194
    %v1790 = vpop.f32.mrb[0].mxu0
    %v1791 = vadd.f32 0.0, %v1790
    %v1792 = vpop.f32.mrb[0].mxu0
    %1793 = vmatprep.mubr.f32.mxu0 0.0
    %1794 = vmatmul.mubr.f32.gmra.mrb[0].mxu0 %v197
    %v1795 = vpop.f32.mrb[0].mxu0
    %v1796 = vadd.f32 0.0, %v1795
    %v1797 = vpop.f32.mrb[0].mxu0
    %1798 = vmatprep.mubr.f32.mxu0 0.0
    %1799 = vmatmul.mubr.f32.gmra.mrb[0].mxu0 %v200
    %v1800 = vpop.f32.mrb[0].mxu0
    %v1801 = vadd.f32 0.0, %v1800
    %v1802 = vpop.f32.mrb[0].mxu0
    %1803 = vmatprep.mubr.f32.mxu0 0.0
    %1804 = vmatmul.mubr.f32.gmra.mrb[0].mxu0 %v203
    %v1805 = vpop.f32.mrb[0].mxu0
    %v1806 = vadd.f32 0.0, %v1805
    %v1807 = vpop.f32.mrb[0].mxu0
    %1808 = vmatprep.mubr.f32.mxu0 0.0
    %1809 = vmatmul.mubr.f32.gmra.mrb[0].mxu0 %v206
    %v1810 = vpop.f32.mrb[0].mxu0
    %v1811 = vadd.f32 0.0, %v1810
    %v1812 = vpop.f32.mrb[0].mxu0
    %1813 = vmatprep.mubr.f32.mxu0 0.0
    %1814 = vmatmul.mubr.f32.gmra.mrb[0].mxu0 %v209
    %v1815 = vpop.f32.mrb[0].mxu0
    %v1816 = vadd.f32 0.0, %v1815
    %v1817 = vpop.f32.mrb[0].mxu0
    %1818 = vmatprep.mubr.f32.mxu0 0.0
    %1819 = vmatmul.mubr.f32.gmra.mrb[0].mxu0 %v212
    %v1820 = vpop.f32.mrb[0].mxu0
    %v1821 = vadd.f32 0.0, %v1820
    %v1822 = vpop.f32.mrb[0].mxu0
    %1823 = vmatprep.mubr.f32.mxu0 0.0
    %1824 = vmatmul.mubr.f32.gmra.mrb[0].mxu0 %v215
    %v1825 = vpop.f32.mrb[0].mxu0
    %v1826 = vadd.f32 0.0, %v1825
    %v1827 = vpop.f32.mrb[0].mxu0
    %1828 = vmatprep.mubr.f32.mxu0 0.0
    %1829 = vmatmul.mubr.f32.gmra.mrb[0].mxu0 %v218
    %v1830 = vpop.f32.mrb[0].mxu0
    %v1831 = vadd.f32 0.0, %v1830
    %v1832 = vpop.f32.mrb[0].mxu0
    %1833 = vmatprep.mubr.f32.mxu0 0.0
    %1834 = vmatmul.mubr.f32.gmra.mrb[0].mxu0 %v221
    %v1835 = vpop.f32.mrb[0].mxu0
    %v1836 = vadd.f32 0.0, %v1835
    %v1837 = vpop.f32.mrb[0].mxu0
    %1838 = vmatprep.mubr.f32.mxu0 0.0
    %1839 = vmatmul.mubr.f32.gmra.mrb[0].mxu0 %v224
    %v1840 = vpop.f32.mrb[0].mxu0
    %v1841 = vadd.f32 0.0, %v1840
    %v1842 = vpop.f32.mrb[0].mxu0
    %1843 = vmatprep.mubr.f32.mxu0 0.0
    %1844 = vmatmul.mubr.f32.gmra.mrb[0].mxu0 %v227
    %v1845 = vpop.f32.mrb[0].mxu0
    %v1846 = vadd.f32 0.0, %v1845
    %v1847 = vpop.f32.mrb[0].mxu0
    %1848 = vmatprep.mubr.f32.mxu0 0.0
    %1849 = vmatmul.mubr.f32.gmra.mrb[0].mxu0 %v230
    %v1850 = vpop.f32.mrb[0].mxu0
    %v1851 = vadd.f32 0.0, %v1850
    %v1852 = vpop.f32.mrb[0].mxu0
    %1853 = vmatprep.mubr.f32.mxu0 0.0
    %1854 = vmatmul.mubr.f32.gmra.mrb[0].mxu0 %v233
    %v1855 = vpop.f32.mrb[0].mxu0
    %v1856 = vadd.f32 0.0, %v1855
    %v1857 = vpop.f32.mrb[0].mxu0
    %1858 = vmatprep.mubr.f32.mxu0 0.0
    %1859 = vmatmul.mubr.f32.gmra.mrb[0].mxu0 %v236
    %v1860 = vpop.f32.mrb[0].mxu0
    %v1861 = vadd.f32 0.0, %v1860
    %v1862 = vpop.f32.mrb[0].mxu0
    %1863 = vmatprep.mubr.f32.mxu0 0.0
    %1864 = vmatmul.mubr.f32.gmra.mrb[0].mxu0 %v239
    %v1865 = vpop.f32.mrb[0].mxu0
    %v1866 = vadd.f32 0.0, %v1865
    %v1867 = vpop.f32.mrb[0].mxu0
    %1868 = vmatprep.mubr.f32.mxu0 0.0
    %1869 = vmatmul.mubr.f32.gmra.mrb[0].mxu0 %v242
    %v1870 = vpop.f32.mrb[0].mxu0
    %v1871 = vadd.f32 0.0, %v1870
    %v1872 = vpop.f32.mrb[0].mxu0
    %1873 = vmatprep.mubr.f32.mxu0 0.0
    %1874 = vmatmul.mubr.f32.gmra.mrb[0].mxu0 %v245
    %v1875 = vpop.f32.mrb[0].mxu0
    %v1876 = vadd.f32 0.0, %v1875
    %v1877 = vpop.f32.mrb[0].mxu0
    %1878 = vmatprep.mubr.f32.mxu0 0.0
    %1879 = vmatmul.mubr.f32.gmra.mrb[0].mxu0 %v248
    %v1880 = vpop.f32.mrb[0].mxu0
    %v1881 = vadd.f32 0.0, %v1880
    %v1882 = vpop.f32.mrb[0].mxu0
    %1883 = vdwg.mxu0
    %1884 = vmatprep.subr.mxu0 0.0
    %1885 = vmatpush1.msra.mxu0 %v1639
    %1886 = vmatprep.subr.mxu0 0.0
    %1887 = vmatpush1.msra.mxu0 %v1640
    %1888 = vmatprep.subr.mxu0 0.0
    %1889 = vmatpush1.msra.mxu0 %v1641
    %1890 = vmatprep.subr.mxu0 0.0
    %1891 = vmatpush1.msra.mxu0 %v1642
    %1892 = vmatprep.subr.mxu0 0.0
    %1893 = vmatpush1.msra.mxu0 %v1643
    %1894 = vmatprep.subr.mxu0 0.0
    %1895 = vmatpush1.msra.mxu0 %v1644
    %1896 = vmatprep.subr.mxu0 0.0
    %1897 = vmatpush1.msra.mxu0 %v1645
    %1898 = vmatprep.subr.mxu0 0.0
    %1899 = vmatpush1.msra.mxu0 %v1646
    %1900 = vmatprep.subr.mxu0 0.0
    %1901 = vmatpush1.msra.mxu0 %v1647
    %1902 = vmatprep.subr.mxu0 0.0
    %1903 = vmatpush1.msra.mxu0 %v1648
    %1904 = vmatprep.subr.mxu0 0.0
    %1905 = vmatpush1.msra.mxu0 %v1649
    %1906 = vmatprep.subr.mxu0 0.0
    %1907 = vmatpush1.msra.mxu0 %v1650
    %1908 = vmatprep.subr.mxu0 0.0
    %1909 = vmatpush1.msra.mxu0 %v1651
    %1910 = vmatprep.subr.mxu0 0.0
    %1911 = vmatpush1.msra.mxu0 %v1652
    %1912 = vmatprep.subr.mxu0 0.0
    %1913 = vmatpush1.msra.mxu0 %v1653
    %1914 = vmatprep.subr.mxu0 0.0
    %1915 = vmatpush1.msra.mxu0 %v1654
    %1916 = vmatprep.subr.mxu0 0.0
    %1917 = vmatpush1.msra.mxu0 0.0
    %1918 = vmatprep.subr.mxu0 0.0
    %1919 = vmatpush1.msra.mxu0 0.0
    %1920 = vmatprep.subr.mxu0 0.0
    %1921 = vmatpush1.msra.mxu0 0.0
    %1922 = vmatprep.subr.mxu0 0.0
    %1923 = vmatpush1.msra.mxu0 0.0
    %1924 = vmatprep.subr.mxu0 0.0
    %1925 = vmatpush1.msra.mxu0 0.0
    %1926 = vmatprep.subr.mxu0 0.0
    %1927 = vmatpush1.msra.mxu0 0.0
    %1928 = vmatprep.subr.mxu0 0.0
    %1929 = vmatpush1.msra.mxu0 0.0
    %1930 = vmatprep.subr.mxu0 0.0
    %1931 = vmatpush1.msra.mxu0 0.0
    %1932 = vmatprep.subr.mxu0 0.0
    %1933 = vmatpush1.msra.mxu0 0.0
    %1934 = vmatprep.subr.mxu0 0.0
    %1935 = vmatpush1.msra.mxu0 0.0
    %1936 = vmatprep.subr.mxu0 0.0
    %1937 = vmatpush1.msra.mxu0 0.0
    %1938 = vmatprep.subr.mxu0 0.0
    %1939 = vmatpush1.msra.mxu0 0.0
    %1940 = vmatprep.subr.mxu0 0.0
    %1941 = vmatpush1.msra.mxu0 0.0
    %1942 = vmatprep.subr.mxu0 0.0
    %1943 = vmatpush1.msra.mxu0 0.0
    %1944 = vmatprep.subr.mxu0 0.0
    %1945 = vmatpush1.msra.mxu0 0.0
    %1946 = vmatprep.subr.mxu0 0.0
    %1947 = vmatpush1.msra.mxu0 0.0
    %1948 = vmatprep.mubr.f32.mxu0 0.0
    %1949 = vmatmul.mubr.f32.gmra.mrb[0].mxu0 %v1606
    %v1950 = vpop.f32.mrb[0].mxu0
    %v1951 = vadd.f32 %v1726, %v1950
    %v1952 = vpop.f32.mrb[0].mxu0
    %1953 = vmatprep.mubr.f32.mxu0 0.0
    %1954 = vmatmul.mubr.f32.gmra.mrb[0].mxu0 %v1607
    %v1955 = vpop.f32.mrb[0].mxu0
    %v1956 = vadd.f32 %v1731, %v1955
    %v1957 = vpop.f32.mrb[0].mxu0
    %1958 = vmatprep.mubr.f32.mxu0 0.0
    %1959 = vmatmul.mubr.f32.gmra.mrb[0].mxu0 %v1608
    %v1960 = vpop.f32.mrb[0].mxu0
    %v1961 = vadd.f32 %v1736, %v1960
    %v1962 = vpop.f32.mrb[0].mxu0
    %1963 = vmatprep.mubr.f32.mxu0 0.0
    %1964 = vmatmul.mubr.f32.gmra.mrb[0].mxu0 %v1609
    %v1965 = vpop.f32.mrb[0].mxu0
    %v1966 = vadd.f32 %v1741, %v1965
    %v1967 = vpop.f32.mrb[0].mxu0
    %1968 = vmatprep.mubr.f32.mxu0 0.0
    %1969 = vmatmul.mubr.f32.gmra.mrb[0].mxu0 %v1610
    %v1970 = vpop.f32.mrb[0].mxu0
    %v1971 = vadd.f32 %v1746, %v1970
    %v1972 = vpop.f32.mrb[0].mxu0
    %1973 = vmatprep.mubr.f32.mxu0 0.0
    %1974 = vmatmul.mubr.f32.gmra.mrb[0].mxu0 %v1611
    %v1975 = vpop.f32.mrb[0].mxu0
    %v1976 = vadd.f32 %v1751, %v1975
    %v1977 = vpop.f32.mrb[0].mxu0
    %1978 = vmatprep.mubr.f32.mxu0 0.0
    %1979 = vmatmul.mubr.f32.gmra.mrb[0].mxu0 %v1612
    %v1980 = vpop.f32.mrb[0].mxu0
    %v1981 = vadd.f32 %v1756, %v1980
    %v1982 = vpop.f32.mrb[0].mxu0
    %1983 = vmatprep.mubr.f32.mxu0 0.0
    %1984 = vmatmul.mubr.f32.gmra.mrb[0].mxu0 %v1613
    %v1985 = vpop.f32.mrb[0].mxu0
    %v1986 = vadd.f32 %v1761, %v1985
    %v1987 = vpop.f32.mrb[0].mxu0
    %1988 = vmatprep.mubr.f32.mxu0 0.0
    %1989 = vmatmul.mubr.f32.gmra.mrb[0].mxu0 %v1614
    %v1990 = vpop.f32.mrb[0].mxu0
    %v1991 = vadd.f32 %v1766, %v1990
    %v1992 = vpop.f32.mrb[0].mxu0
    %1993 = vmatprep.mubr.f32.mxu0 0.0
    %1994 = vmatmul.mubr.f32.gmra.mrb[0].mxu0 %v1615
    %v1995 = vpop.f32.mrb[0].mxu0
    %v1996 = vadd.f32 %v1771, %v1995
    %v1997 = vpop.f32.mrb[0].mxu0
    %1998 = vmatprep.mubr.f32.mxu0 0.0
    %1999 = vmatmul.mubr.f32.gmra.mrb[0].mxu0 %v1616
    %v2000 = vpop.f32.mrb[0].mxu0
    %v2001 = vadd.f32 %v1776, %v2000
    %v2002 = vpop.f32.mrb[0].mxu0
    %2003 = vmatprep.mubr.f32.mxu0 0.0
    %2004 = vmatmul.mubr.f32.gmra.mrb[0].mxu0 %v1617
    %v2005 = vpop.f32.mrb[0].mxu0
    %v2006 = vadd.f32 %v1781, %v2005
    %v2007 = vpop.f32.mrb[0].mxu0
    %2008 = vmatprep.mubr.f32.mxu0 0.0
    %2009 = vmatmul.mubr.f32.gmra.mrb[0].mxu0 %v1618
    %v2010 = vpop.f32.mrb[0].mxu0
    %v2011 = vadd.f32 %v1786, %v2010
    %v2012 = vpop.f32.mrb[0].mxu0
    %2013 = vmatprep.mubr.f32.mxu0 0.0
    %2014 = vmatmul.mubr.f32.gmra.mrb[0].mxu0 %v1619
    %v2015 = vpop.f32.mrb[0].mxu0
    %v2016 = vadd.f32 %v1791, %v2015
    %v2017 = vpop.f32.mrb[0].mxu0
    %2018 = vmatprep.mubr.f32.mxu0 0.0
    %2019 = vmatmul.mubr.f32.gmra.mrb[0].mxu0 %v1620
    %v2020 = vpop.f32.mrb[0].mxu0
    %v2021 = vadd.f32 %v1796, %v2020
    %v2022 = vpop.f32.mrb[0].mxu0
    %2023 = vmatprep.mubr.f32.mxu0 0.0
    %2024 = vmatmul.mubr.f32.gmra.mrb[0].mxu0 %v1621
    %v2025 = vpop.f32.mrb[0].mxu0
    %v2026 = vadd.f32 %v1801, %v2025
    %v2027 = vpop.f32.mrb[0].mxu0
    %2028 = vmatprep.mubr.f32.mxu0 0.0
    %2029 = vmatmul.mubr.f32.gmra.mrb[0].mxu0 %v1622
    %v2030 = vpop.f32.mrb[0].mxu0
    %v2031 = vadd.f32 %v1806, %v2030
    %v2032 = vpop.f32.mrb[0].mxu0
    %2033 = vmatprep.mubr.f32.mxu0 0.0
    %2034 = vmatmul.mubr.f32.gmra.mrb[0].mxu0 %v1623
    %v2035 = vpop.f32.mrb[0].mxu0
    %v2036 = vadd.f32 %v1811, %v2035
    %v2037 = vpop.f32.mrb[0].mxu0
    %2038 = vmatprep.mubr.f32.mxu0 0.0
    %2039 = vmatmul.mubr.f32.gmra.mrb[0].mxu0 %v1624
    %v2040 = vpop.f32.mrb[0].mxu0
    %v2041 = vadd.f32 %v1816, %v2040
    %v2042 = vpop.f32.mrb[0].mxu0
    %2043 = vmatprep.mubr.f32.mxu0 0.0
    %2044 = vmatmul.mubr.f32.gmra.mrb[0].mxu0 %v1625
    %v2045 = vpop.f32.mrb[0].mxu0
    %v2046 = vadd.f32 %v1821, %v2045
    %v2047 = vpop.f32.mrb[0].mxu0
    %2048 = vmatprep.mubr.f32.mxu0 0.0
    %2049 = vmatmul.mubr.f32.gmra.mrb[0].mxu0 %v1626
    %v2050 = vpop.f32.mrb[0].mxu0
    %v2051 = vadd.f32 %v1826, %v2050
    %v2052 = vpop.f32.mrb[0].mxu0
    %2053 = vmatprep.mubr.f32.mxu0 0.0
    %2054 = vmatmul.mubr.f32.gmra.mrb[0].mxu0 %v1627
    %v2055 = vpop.f32.mrb[0].mxu0
    %v2056 = vadd.f32 %v1831, %v2055
    %v2057 = vpop.f32.mrb[0].mxu0
    %2058 = vmatprep.mubr.f32.mxu0 0.0
    %2059 = vmatmul.mubr.f32.gmra.mrb[0].mxu0 %v1628
    %v2060 = vpop.f32.mrb[0].mxu0
    %v2061 = vadd.f32 %v1836, %v2060
    %v2062 = vpop.f32.mrb[0].mxu0
    %2063 = vmatprep.mubr.f32.mxu0 0.0
    %2064 = vmatmul.mubr.f32.gmra.mrb[0].mxu0 %v1629
    %v2065 = vpop.f32.mrb[0].mxu0
    %v2066 = vadd.f32 %v1841, %v2065
    %v2067 = vpop.f32.mrb[0].mxu0
    %2068 = vmatprep.mubr.f32.mxu0 0.0
    %2069 = vmatmul.mubr.f32.gmra.mrb[0].mxu0 %v1630
    %v2070 = vpop.f32.mrb[0].mxu0
    %v2071 = vadd.f32 %v1846, %v2070
    %v2072 = vpop.f32.mrb[0].mxu0
    %2073 = vmatprep.mubr.f32.mxu0 0.0
    %2074 = vmatmul.mubr.f32.gmra.mrb[0].mxu0 %v1631
    %v2075 = vpop.f32.mrb[0].mxu0
    %v2076 = vadd.f32 %v1851, %v2075
    %v2077 = vpop.f32.mrb[0].mxu0
    %2078 = vmatprep.mubr.f32.mxu0 0.0
    %2079 = vmatmul.mubr.f32.gmra.mrb[0].mxu0 %v1632
    %v2080 = vpop.f32.mrb[0].mxu0
    %v2081 = vadd.f32 %v1856, %v2080
    %v2082 = vpop.f32.mrb[0].mxu0
    %2083 = vmatprep.mubr.f32.mxu0 0.0
    %2084 = vmatmul.mubr.f32.gmra.mrb[0].mxu0 %v1633
    %v2085 = vpop.f32.mrb[0].mxu0
    %v2086 = vadd.f32 %v1861, %v2085
    %v2087 = vpop.f32.mrb[0].mxu0
    %2088 = vmatprep.mubr.f32.mxu0 0.0
    %2089 = vmatmul.mubr.f32.gmra.mrb[0].mxu0 %v1634
    %v2090 = vpop.f32.mrb[0].mxu0
    %v2091 = vadd.f32 %v1866, %v2090
    %v2092 = vpop.f32.mrb[0].mxu0
    %2093 = vmatprep.mubr.f32.mxu0 0.0
    %2094 = vmatmul.mubr.f32.gmra.mrb[0].mxu0 %v1635
    %v2095 = vpop.f32.mrb[0].mxu0
    %v2096 = vadd.f32 %v1871, %v2095
    %v2097 = vpop.f32.mrb[0].mxu0
    %2098 = vmatprep.mubr.f32.mxu0 0.0
    %2099 = vmatmul.mubr.f32.gmra.mrb[0].mxu0 %v1636
    %v2100 = vpop.f32.mrb[0].mxu0
    %v2101 = vadd.f32 %v1876, %v2100
    %v2102 = vpop.f32.mrb[0].mxu0
    %2103 = vmatprep.mubr.f32.mxu0 0.0
    %2104 = vmatmul.mubr.f32.gmra.mrb[0].mxu0 %v1637
    %v2105 = vpop.f32.mrb[0].mxu0
    %v2106 = vadd.f32 %v1881, %v2105
    %v2107 = vpop.f32.mrb[0].mxu0
    %2108 = vdwg.mxu0
    %s2109 = scalar_lea.vmem %s3, 5
    %v2110 = vld [vmem:[%s2109] sm:$0x1]
    %v2112 = vlaneseq
    %v2113 = vshrl.u32 %v2112, 7
    %v2114 = vsub.s32 0, %v2113
    %v2115 = vrot.slane %v2110, %v2114
    %v2117 = vadd.f32 %v1951, %v2115
    %v2118 = vadd.f32 %v1956, %v2115
    %v2119 = vadd.f32 %v1961, %v2115
    %v2120 = vadd.f32 %v1966, %v2115
    %v2121 = vadd.f32 %v1971, %v2115
    %v2122 = vadd.f32 %v1976, %v2115
    %v2123 = vadd.f32 %v1981, %v2115
    %v2124 = vadd.f32 %v1986, %v2115
    %v2125 = vadd.f32 %v1991, %v2115
    %v2126 = vadd.f32 %v1996, %v2115
    %v2127 = vadd.f32 %v2001, %v2115
    %v2128 = vadd.f32 %v2006, %v2115
    %v2129 = vadd.f32 %v2011, %v2115
    %v2130 = vadd.f32 %v2016, %v2115
    %v2131 = vadd.f32 %v2021, %v2115
    %v2132 = vadd.f32 %v2026, %v2115
    %v2133 = vadd.f32 %v2031, %v2115
    %v2134 = vadd.f32 %v2036, %v2115
    %v2135 = vadd.f32 %v2041, %v2115
    %v2136 = vadd.f32 %v2046, %v2115
    %v2137 = vadd.f32 %v2051, %v2115
    %v2138 = vadd.f32 %v2056, %v2115
    %v2139 = vadd.f32 %v2061, %v2115
    %v2140 = vadd.f32 %v2066, %v2115
    %v2141 = vadd.f32 %v2071, %v2115
    %v2142 = vadd.f32 %v2076, %v2115
    %v2143 = vadd.f32 %v2081, %v2115
    %v2144 = vadd.f32 %v2086, %v2115
    %v2145 = vadd.f32 %v2091, %v2115
    %v2146 = vadd.f32 %v2096, %v2115
    %v2147 = vadd.f32 %v2101, %v2115
    %v2148 = vadd.f32 %v2106, %v2115
    %v2149 = vmax.f32 %v2117, 0.0
    %v2150 = vmax.f32 %v2118, 0.0
    %v2151 = vmax.f32 %v2119, 0.0
    %v2152 = vmax.f32 %v2120, 0.0
    %v2153 = vmax.f32 %v2121, 0.0
    %v2154 = vmax.f32 %v2122, 0.0
    %v2155 = vmax.f32 %v2123, 0.0
    %v2156 = vmax.f32 %v2124, 0.0
    %v2157 = vmax.f32 %v2125, 0.0
    %v2158 = vmax.f32 %v2126, 0.0
    %v2159 = vmax.f32 %v2127, 0.0
    %v2160 = vmax.f32 %v2128, 0.0
    %v2161 = vmax.f32 %v2129, 0.0
    %v2162 = vmax.f32 %v2130, 0.0
    %v2163 = vmax.f32 %v2131, 0.0
    %v2164 = vmax.f32 %v2132, 0.0
    %v2165 = vmax.f32 %v2133, 0.0
    %v2166 = vmax.f32 %v2134, 0.0
    %v2167 = vmax.f32 %v2135, 0.0
    %v2168 = vmax.f32 %v2136, 0.0
    %v2169 = vmax.f32 %v2137, 0.0
    %v2170 = vmax.f32 %v2138, 0.0
    %v2171 = vmax.f32 %v2139, 0.0
    %v2172 = vmax.f32 %v2140, 0.0
    %v2173 = vmax.f32 %v2141, 0.0
    %v2174 = vmax.f32 %v2142, 0.0
    %v2175 = vmax.f32 %v2143, 0.0
    %v2176 = vmax.f32 %v2144, 0.0
    %v2177 = vmax.f32 %v2145, 0.0
    %v2178 = vmax.f32 %v2146, 0.0
    %v2179 = vmax.f32 %v2147, 0.0
    %v2180 = vmax.f32 %v2148, 0.0
    %s2181 = scalar_lea.vmem [#allocation2], 640
    %v2182 = vld [vmem:[%s2181] sm:$0xff]
    %v2183 = vld [vmem:[%s2181 + $0x8] sm:$0xff]
    %v2184 = vld [vmem:[%s2181 + $0x10] sm:$0xff]
    %v2185 = vld [vmem:[%s2181 + $0x18] sm:$0xff]
    %v2186 = vld [vmem:[%s2181 + $0x20] sm:$0xff]
    %v2187 = vld [vmem:[%s2181 + $0x28] sm:$0xff]
    %v2188 = vld [vmem:[%s2181 + $0x30] sm:$0xff]
    %v2189 = vld [vmem:[%s2181 + $0x38] sm:$0xff]
    %v2190 = vld [vmem:[%s2181 + $0x40] sm:$0xff]
    %v2191 = vld [vmem:[%s2181 + $0x48] sm:$0xff]
    %v2192 = vld [vmem:[%s2181 + $0x50] sm:$0xff]
    %v2193 = vld [vmem:[%s2181 + $0x58] sm:$0xff]
    %v2194 = vld [vmem:[%s2181 + $0x60] sm:$0xff]
    %v2195 = vld [vmem:[%s2181 + $0x68] sm:$0xff]
    %v2196 = vld [vmem:[%s2181 + $0x70] sm:$0xff]
    %v2197 = vld [vmem:[%s2181 + $0x78] sm:$0xff]
    %s2198 = scalar_lea.vmem %s3, 6
    %v2199 = vld [vmem:[%s2198] sm:$0x1]
    %v2201 = vlaneseq
    %v2202 = vshrl.u32 %v2201, 7
    %v2203 = vsub.s32 0, %v2202
    %v2204 = vrot.slane %v2199, %v2203
    %2206 = vmatprep.subr.mxu0 0.0
    %2207 = vmatpush1.msra.mxu0 %v2182
    %2208 = vmatprep.subr.mxu0 0.0
    %2209 = vmatpush1.msra.mxu0 %v2183
    %2210 = vmatprep.subr.mxu0 0.0
    %2211 = vmatpush1.msra.mxu0 %v2184
    %2212 = vmatprep.subr.mxu0 0.0
    %2213 = vmatpush1.msra.mxu0 %v2185
    %2214 = vmatprep.subr.mxu0 0.0
    %2215 = vmatpush1.msra.mxu0 %v2186
    %2216 = vmatprep.subr.mxu0 0.0
    %2217 = vmatpush1.msra.mxu0 %v2187
    %2218 = vmatprep.subr.mxu0 0.0
    %2219 = vmatpush1.msra.mxu0 %v2188
    %2220 = vmatprep.subr.mxu0 0.0
    %2221 = vmatpush1.msra.mxu0 %v2189
    %2222 = vmatprep.subr.mxu0 0.0
    %2223 = vmatpush1.msra.mxu0 %v2190
    %2224 = vmatprep.subr.mxu0 0.0
    %2225 = vmatpush1.msra.mxu0 %v2191
    %2226 = vmatprep.subr.mxu0 0.0
    %2227 = vmatpush1.msra.mxu0 %v2192
    %2228 = vmatprep.subr.mxu0 0.0
    %2229 = vmatpush1.msra.mxu0 %v2193
    %2230 = vmatprep.subr.mxu0 0.0
    %2231 = vmatpush1.msra.mxu0 %v2194
    %2232 = vmatprep.subr.mxu0 0.0
    %2233 = vmatpush1.msra.mxu0 %v2195
    %2234 = vmatprep.subr.mxu0 0.0
    %2235 = vmatpush1.msra.mxu0 %v2196
    %2236 = vmatprep.subr.mxu0 0.0
    %2237 = vmatpush1.msra.mxu0 %v2197
    %2238 = vmatprep.subr.mxu0 0.0
    %2239 = vmatpush1.msra.mxu0 0.0
    %2240 = vmatprep.subr.mxu0 0.0
    %2241 = vmatpush1.msra.mxu0 0.0
    %2242 = vmatprep.subr.mxu0 0.0
    %2243 = vmatpush1.msra.mxu0 0.0
    %2244 = vmatprep.subr.mxu0 0.0
    %2245 = vmatpush1.msra.mxu0 0.0
    %2246 = vmatprep.subr.mxu0 0.0
    %2247 = vmatpush1.msra.mxu0 0.0
    %2248 = vmatprep.subr.mxu0 0.0
    %2249 = vmatpush1.msra.mxu0 0.0
    %2250 = vmatprep.subr.mxu0 0.0
    %2251 = vmatpush1.msra.mxu0 0.0
    %2252 = vmatprep.subr.mxu0 0.0
    %2253 = vmatpush1.msra.mxu0 0.0
    %2254 = vmatprep.subr.mxu0 0.0
    %2255 = vmatpush1.msra.mxu0 0.0
    %2256 = vmatprep.subr.mxu0 0.0
    %2257 = vmatpush1.msra.mxu0 0.0
    %2258 = vmatprep.subr.mxu0 0.0
    %2259 = vmatpush1.msra.mxu0 0.0
    %2260 = vmatprep.subr.mxu0 0.0
    %2261 = vmatpush1.msra.mxu0 0.0
    %2262 = vmatprep.subr.mxu0 0.0
    %2263 = vmatpush1.msra.mxu0 0.0
    %2264 = vmatprep.subr.mxu0 0.0
    %2265 = vmatpush1.msra.mxu0 0.0
    %2266 = vmatprep.subr.mxu0 0.0
    %2267 = vmatpush1.msra.mxu0 0.0
    %2268 = vmatprep.subr.mxu0 0.0
    %2269 = vmatpush1.msra.mxu0 0.0
    %2270 = vmatprep.mubr.f32.mxu0 0.0
    %2271 = vmatmul.mubr.f32.gmra.mrb[0].mxu0 %v2149
    %v2272 = vpop.f32.mrb[0].mxu0
    %v2273 = vadd.f32 %v2204, %v2272
    %v2274 = vpop.f32.mrb[0].mxu0
    %2275 = vmatprep.mubr.f32.mxu0 0.0
    %2276 = vmatmul.mubr.f32.gmra.mrb[0].mxu0 %v2150
    %v2277 = vpop.f32.mrb[0].mxu0
    %v2278 = vadd.f32 %v2204, %v2277
    %v2279 = vpop.f32.mrb[0].mxu0
    %2280 = vmatprep.mubr.f32.mxu0 0.0
    %2281 = vmatmul.mubr.f32.gmra.mrb[0].mxu0 %v2151
    %v2282 = vpop.f32.mrb[0].mxu0
    %v2283 = vadd.f32 %v2204, %v2282
    %v2284 = vpop.f32.mrb[0].mxu0
    %2285 = vmatprep.mubr.f32.mxu0 0.0
    %2286 = vmatmul.mubr.f32.gmra.mrb[0].mxu0 %v2152
    %v2287 = vpop.f32.mrb[0].mxu0
    %v2288 = vadd.f32 %v2204, %v2287
    %v2289 = vpop.f32.mrb[0].mxu0
    %2290 = vmatprep.mubr.f32.mxu0 0.0
    %2291 = vmatmul.mubr.f32.gmra.mrb[0].mxu0 %v2153
    %v2292 = vpop.f32.mrb[0].mxu0
    %v2293 = vadd.f32 %v2204, %v2292
    %v2294 = vpop.f32.mrb[0].mxu0
    %2295 = vmatprep.mubr.f32.mxu0 0.0
    %2296 = vmatmul.mubr.f32.gmra.mrb[0].mxu0 %v2154
    %v2297 = vpop.f32.mrb[0].mxu0
    %v2298 = vadd.f32 %v2204, %v2297
    %v2299 = vpop.f32.mrb[0].mxu0
    %2300 = vmatprep.mubr.f32.mxu0 0.0
    %2301 = vmatmul.mubr.f32.gmra.mrb[0].mxu0 %v2155
    %v2302 = vpop.f32.mrb[0].mxu0
    %v2303 = vadd.f32 %v2204, %v2302
    %v2304 = vpop.f32.mrb[0].mxu0
    %2305 = vmatprep.mubr.f32.mxu0 0.0
    %2306 = vmatmul.mubr.f32.gmra.mrb[0].mxu0 %v2156
    %v2307 = vpop.f32.mrb[0].mxu0
    %v2308 = vadd.f32 %v2204, %v2307
    %v2309 = vpop.f32.mrb[0].mxu0
    %2310 = vmatprep.mubr.f32.mxu0 0.0
    %2311 = vmatmul.mubr.f32.gmra.mrb[0].mxu0 %v2157
    %v2312 = vpop.f32.mrb[0].mxu0
    %v2313 = vadd.f32 %v2204, %v2312
    %v2314 = vpop.f32.mrb[0].mxu0
    %2315 = vmatprep.mubr.f32.mxu0 0.0
    %2316 = vmatmul.mubr.f32.gmra.mrb[0].mxu0 %v2158
    %v2317 = vpop.f32.mrb[0].mxu0
    %v2318 = vadd.f32 %v2204, %v2317
    %v2319 = vpop.f32.mrb[0].mxu0
    %2320 = vmatprep.mubr.f32.mxu0 0.0
    %2321 = vmatmul.mubr.f32.gmra.mrb[0].mxu0 %v2159
    %v2322 = vpop.f32.mrb[0].mxu0
    %v2323 = vadd.f32 %v2204, %v2322
    %v2324 = vpop.f32.mrb[0].mxu0
    %2325 = vmatprep.mubr.f32.mxu0 0.0
    %2326 = vmatmul.mubr.f32.gmra.mrb[0].mxu0 %v2160
    %v2327 = vpop.f32.mrb[0].mxu0
    %v2328 = vadd.f32 %v2204, %v2327
    %v2329 = vpop.f32.mrb[0].mxu0
    %2330 = vmatprep.mubr.f32.mxu0 0.0
    %2331 = vmatmul.mubr.f32.gmra.mrb[0].mxu0 %v2161
    %v2332 = vpop.f32.mrb[0].mxu0
    %v2333 = vadd.f32 %v2204, %v2332
    %v2334 = vpop.f32.mrb[0].mxu0
    %2335 = vmatprep.mubr.f32.mxu0 0.0
    %2336 = vmatmul.mubr.f32.gmra.mrb[0].mxu0 %v2162
    %v2337 = vpop.f32.mrb[0].mxu0
    %v2338 = vadd.f32 %v2204, %v2337
    %v2339 = vpop.f32.mrb[0].mxu0
    %2340 = vmatprep.mubr.f32.mxu0 0.0
    %2341 = vmatmul.mubr.f32.gmra.mrb[0].mxu0 %v2163
    %v2342 = vpop.f32.mrb[0].mxu0
    %v2343 = vadd.f32 %v2204, %v2342
    %v2344 = vpop.f32.mrb[0].mxu0
    %2345 = vmatprep.mubr.f32.mxu0 0.0
    %2346 = vmatmul.mubr.f32.gmra.mrb[0].mxu0 %v2164
    %v2347 = vpop.f32.mrb[0].mxu0
    %v2348 = vadd.f32 %v2204, %v2347
    %v2349 = vpop.f32.mrb[0].mxu0
    %2350 = vmatprep.mubr.f32.mxu0 0.0
    %2351 = vmatmul.mubr.f32.gmra.mrb[0].mxu0 %v2165
    %v2352 = vpop.f32.mrb[0].mxu0
    %v2353 = vadd.f32 %v2204, %v2352
    %v2354 = vpop.f32.mrb[0].mxu0
    %2355 = vmatprep.mubr.f32.mxu0 0.0
    %2356 = vmatmul.mubr.f32.gmra.mrb[0].mxu0 %v2166
    %v2357 = vpop.f32.mrb[0].mxu0
    %v2358 = vadd.f32 %v2204, %v2357
    %v2359 = vpop.f32.mrb[0].mxu0
    %2360 = vmatprep.mubr.f32.mxu0 0.0
    %2361 = vmatmul.mubr.f32.gmra.mrb[0].mxu0 %v2167
    %v2362 = vpop.f32.mrb[0].mxu0
    %v2363 = vadd.f32 %v2204, %v2362
    %v2364 = vpop.f32.mrb[0].mxu0
    %2365 = vmatprep.mubr.f32.mxu0 0.0
    %2366 = vmatmul.mubr.f32.gmra.mrb[0].mxu0 %v2168
    %v2367 = vpop.f32.mrb[0].mxu0
    %v2368 = vadd.f32 %v2204, %v2367
    %v2369 = vpop.f32.mrb[0].mxu0
    %2370 = vmatprep.mubr.f32.mxu0 0.0
    %2371 = vmatmul.mubr.f32.gmra.mrb[0].mxu0 %v2169
    %v2372 = vpop.f32.mrb[0].mxu0
    %v2373 = vadd.f32 %v2204, %v2372
    %v2374 = vpop.f32.mrb[0].mxu0
    %2375 = vmatprep.mubr.f32.mxu0 0.0
    %2376 = vmatmul.mubr.f32.gmra.mrb[0].mxu0 %v2170
    %v2377 = vpop.f32.mrb[0].mxu0
    %v2378 = vadd.f32 %v2204, %v2377
    %v2379 = vpop.f32.mrb[0].mxu0
    %2380 = vmatprep.mubr.f32.mxu0 0.0
    %2381 = vmatmul.mubr.f32.gmra.mrb[0].mxu0 %v2171
    %v2382 = vpop.f32.mrb[0].mxu0
    %v2383 = vadd.f32 %v2204, %v2382
    %v2384 = vpop.f32.mrb[0].mxu0
    %2385 = vmatprep.mubr.f32.mxu0 0.0
    %2386 = vmatmul.mubr.f32.gmra.mrb[0].mxu0 %v2172
    %v2387 = vpop.f32.mrb[0].mxu0
    %v2388 = vadd.f32 %v2204, %v2387
    %v2389 = vpop.f32.mrb[0].mxu0
    %2390 = vmatprep.mubr.f32.mxu0 0.0
    %2391 = vmatmul.mubr.f32.gmra.mrb[0].mxu0 %v2173
    %v2392 = vpop.f32.mrb[0].mxu0
    %v2393 = vadd.f32 %v2204, %v2392
    %v2394 = vpop.f32.mrb[0].mxu0
    %2395 = vmatprep.mubr.f32.mxu0 0.0
    %2396 = vmatmul.mubr.f32.gmra.mrb[0].mxu0 %v2174
    %v2397 = vpop.f32.mrb[0].mxu0
    %v2398 = vadd.f32 %v2204, %v2397
    %v2399 = vpop.f32.mrb[0].mxu0
    %2400 = vmatprep.mubr.f32.mxu0 0.0
    %2401 = vmatmul.mubr.f32.gmra.mrb[0].mxu0 %v2175
    %v2402 = vpop.f32.mrb[0].mxu0
    %v2403 = vadd.f32 %v2204, %v2402
    %v2404 = vpop.f32.mrb[0].mxu0
    %2405 = vmatprep.mubr.f32.mxu0 0.0
    %2406 = vmatmul.mubr.f32.gmra.mrb[0].mxu0 %v2176
    %v2407 = vpop.f32.mrb[0].mxu0
    %v2408 = vadd.f32 %v2204, %v2407
    %v2409 = vpop.f32.mrb[0].mxu0
    %2410 = vmatprep.mubr.f32.mxu0 0.0
    %2411 = vmatmul.mubr.f32.gmra.mrb[0].mxu0 %v2177
    %v2412 = vpop.f32.mrb[0].mxu0
    %v2413 = vadd.f32 %v2204, %v2412
    %v2414 = vpop.f32.mrb[0].mxu0
    %2415 = vmatprep.mubr.f32.mxu0 0.0
    %2416 = vmatmul.mubr.f32.gmra.mrb[0].mxu0 %v2178
    %v2417 = vpop.f32.mrb[0].mxu0
    %v2418 = vadd.f32 %v2204, %v2417
    %v2419 = vpop.f32.mrb[0].mxu0
    %2420 = vmatprep.mubr.f32.mxu0 0.0
    %2421 = vmatmul.mubr.f32.gmra.mrb[0].mxu0 %v2179
    %v2422 = vpop.f32.mrb[0].mxu0
    %v2423 = vadd.f32 %v2204, %v2422
    %v2424 = vpop.f32.mrb[0].mxu0
    %2425 = vmatprep.mubr.f32.mxu0 0.0
    %2426 = vmatmul.mubr.f32.gmra.mrb[0].mxu0 %v2180
    %v2427 = vpop.f32.mrb[0].mxu0
    %v2428 = vadd.f32 %v2204, %v2427
    %v2429 = vpop.f32.mrb[0].mxu0
    %2430 = vdwg.mxu0
    %v2431 = vmax.f32 %v2273, 0.0
    %v2432 = vmax.f32 %v2278, 0.0
    %v2433 = vmax.f32 %v2283, 0.0
    %v2434 = vmax.f32 %v2288, 0.0
    %v2435 = vmax.f32 %v2293, 0.0
    %v2436 = vmax.f32 %v2298, 0.0
    %v2437 = vmax.f32 %v2303, 0.0
    %v2438 = vmax.f32 %v2308, 0.0
    %v2439 = vmax.f32 %v2313, 0.0
    %v2440 = vmax.f32 %v2318, 0.0
    %v2441 = vmax.f32 %v2323, 0.0
    %v2442 = vmax.f32 %v2328, 0.0
    %v2443 = vmax.f32 %v2333, 0.0
    %v2444 = vmax.f32 %v2338, 0.0
    %v2445 = vmax.f32 %v2343, 0.0
    %v2446 = vmax.f32 %v2348, 0.0
    %v2447 = vmax.f32 %v2353, 0.0
    %v2448 = vmax.f32 %v2358, 0.0
    %v2449 = vmax.f32 %v2363, 0.0
    %v2450 = vmax.f32 %v2368, 0.0
    %v2451 = vmax.f32 %v2373, 0.0
    %v2452 = vmax.f32 %v2378, 0.0
    %v2453 = vmax.f32 %v2383, 0.0
    %v2454 = vmax.f32 %v2388, 0.0
    %v2455 = vmax.f32 %v2393, 0.0
    %v2456 = vmax.f32 %v2398, 0.0
    %v2457 = vmax.f32 %v2403, 0.0
    %v2458 = vmax.f32 %v2408, 0.0
    %v2459 = vmax.f32 %v2413, 0.0
    %v2460 = vmax.f32 %v2418, 0.0
    %v2461 = vmax.f32 %v2423, 0.0
    %v2462 = vmax.f32 %v2428, 0.0
    %s2463 = scalar_lea.vmem [#allocation2], 768
    %v2464 = vld [vmem:[%s2463] sm:$0xff]
    %v2465 = vld [vmem:[%s2463 + $0x8] sm:$0xff]
    %v2466 = vld [vmem:[%s2463 + $0x10] sm:$0xff]
    %v2467 = vld [vmem:[%s2463 + $0x18] sm:$0xff]
    %v2468 = vld [vmem:[%s2463 + $0x20] sm:$0xff]
    %v2469 = vld [vmem:[%s2463 + $0x28] sm:$0xff]
    %v2470 = vld [vmem:[%s2463 + $0x30] sm:$0xff]
    %v2471 = vld [vmem:[%s2463 + $0x38] sm:$0xff]
    %v2472 = vld [vmem:[%s2463 + $0x40] sm:$0xff]
    %v2473 = vld [vmem:[%s2463 + $0x48] sm:$0xff]
    %v2474 = vld [vmem:[%s2463 + $0x50] sm:$0xff]
    %v2475 = vld [vmem:[%s2463 + $0x58] sm:$0xff]
    %v2476 = vld [vmem:[%s2463 + $0x60] sm:$0xff]
    %v2477 = vld [vmem:[%s2463 + $0x68] sm:$0xff]
    %v2478 = vld [vmem:[%s2463 + $0x70] sm:$0xff]
    %v2479 = vld [vmem:[%s2463 + $0x78] sm:$0xff]
    %s2480 = scalar_lea.vmem %s3, 7
    %v2481 = vld [vmem:[%s2480] sm:$0x1]
    %v2483 = vlaneseq
    %v2484 = vshrl.u32 %v2483, 7
    %v2485 = vsub.s32 0, %v2484
    %v2486 = vrot.slane %v2481, %v2485
    %2488 = vmatprep.subr.mxu0 0.0
    %2489 = vmatpush1.msra.mxu0 %v2464
    %2490 = vmatprep.subr.mxu0 0.0
    %2491 = vmatpush1.msra.mxu0 %v2465
    %2492 = vmatprep.subr.mxu0 0.0
    %2493 = vmatpush1.msra.mxu0 %v2466
    %2494 = vmatprep.subr.mxu0 0.0
    %2495 = vmatpush1.msra.mxu0 %v2467
    %2496 = vmatprep.subr.mxu0 0.0
    %2497 = vmatpush1.msra.mxu0 %v2468
    %2498 = vmatprep.subr.mxu0 0.0
    %2499 = vmatpush1.msra.mxu0 %v2469
    %2500 = vmatprep.subr.mxu0 0.0
    %2501 = vmatpush1.msra.mxu0 %v2470
    %2502 = vmatprep.subr.mxu0 0.0
    %2503 = vmatpush1.msra.mxu0 %v2471
    %2504 = vmatprep.subr.mxu0 0.0
    %2505 = vmatpush1.msra.mxu0 %v2472
    %2506 = vmatprep.subr.mxu0 0.0
    %2507 = vmatpush1.msra.mxu0 %v2473
    %2508 = vmatprep.subr.mxu0 0.0
    %2509 = vmatpush1.msra.mxu0 %v2474
    %2510 = vmatprep.subr.mxu0 0.0
    %2511 = vmatpush1.msra.mxu0 %v2475
    %2512 = vmatprep.subr.mxu0 0.0
    %2513 = vmatpush1.msra.mxu0 %v2476
    %2514 = vmatprep.subr.mxu0 0.0
    %2515 = vmatpush1.msra.mxu0 %v2477
    %2516 = vmatprep.subr.mxu0 0.0
    %2517 = vmatpush1.msra.mxu0 %v2478
    %2518 = vmatprep.subr.mxu0 0.0
    %2519 = vmatpush1.msra.mxu0 %v2479
    %2520 = vmatprep.subr.mxu0 0.0
    %2521 = vmatpush1.msra.mxu0 0.0
    %2522 = vmatprep.subr.mxu0 0.0
    %2523 = vmatpush1.msra.mxu0 0.0
    %2524 = vmatprep.subr.mxu0 0.0
    %2525 = vmatpush1.msra.mxu0 0.0
    %2526 = vmatprep.subr.mxu0 0.0
    %2527 = vmatpush1.msra.mxu0 0.0
    %2528 = vmatprep.subr.mxu0 0.0
    %2529 = vmatpush1.msra.mxu0 0.0
    %2530 = vmatprep.subr.mxu0 0.0
    %2531 = vmatpush1.msra.mxu0 0.0
    %2532 = vmatprep.subr.mxu0 0.0
    %2533 = vmatpush1.msra.mxu0 0.0
    %2534 = vmatprep.subr.mxu0 0.0
    %2535 = vmatpush1.msra.mxu0 0.0
    %2536 = vmatprep.subr.mxu0 0.0
    %2537 = vmatpush1.msra.mxu0 0.0
    %2538 = vmatprep.subr.mxu0 0.0
    %2539 = vmatpush1.msra.mxu0 0.0
    %2540 = vmatprep.subr.mxu0 0.0
    %2541 = vmatpush1.msra.mxu0 0.0
    %2542 = vmatprep.subr.mxu0 0.0
    %2543 = vmatpush1.msra.mxu0 0.0
    %2544 = vmatprep.subr.mxu0 0.0
    %2545 = vmatpush1.msra.mxu0 0.0
    %2546 = vmatprep.subr.mxu0 0.0
    %2547 = vmatpush1.msra.mxu0 0.0
    %2548 = vmatprep.subr.mxu0 0.0
    %2549 = vmatpush1.msra.mxu0 0.0
    %2550 = vmatprep.subr.mxu0 0.0
    %2551 = vmatpush1.msra.mxu0 0.0
    %2552 = vmatprep.mubr.f32.mxu0 0.0
    %2553 = vmatmul.mubr.f32.gmra.mrb[0].mxu0 %v2431
    %v2554 = vpop.f32.mrb[0].mxu0
    %v2555 = vadd.f32 %v2486, %v2554
    %v2556 = vpop.f32.mrb[0].mxu0
    %2557 = vmatprep.mubr.f32.mxu0 0.0
    %2558 = vmatmul.mubr.f32.gmra.mrb[0].mxu0 %v2432
    %v2559 = vpop.f32.mrb[0].mxu0
    %v2560 = vadd.f32 %v2486, %v2559
    %v2561 = vpop.f32.mrb[0].mxu0
    %2562 = vmatprep.mubr.f32.mxu0 0.0
    %2563 = vmatmul.mubr.f32.gmra.mrb[0].mxu0 %v2433
    %v2564 = vpop.f32.mrb[0].mxu0
    %v2565 = vadd.f32 %v2486, %v2564
    %v2566 = vpop.f32.mrb[0].mxu0
    %2567 = vmatprep.mubr.f32.mxu0 0.0
    %2568 = vmatmul.mubr.f32.gmra.mrb[0].mxu0 %v2434
    %v2569 = vpop.f32.mrb[0].mxu0
    %v2570 = vadd.f32 %v2486, %v2569
    %v2571 = vpop.f32.mrb[0].mxu0
    %2572 = vmatprep.mubr.f32.mxu0 0.0
    %2573 = vmatmul.mubr.f32.gmra.mrb[0].mxu0 %v2435
    %v2574 = vpop.f32.mrb[0].mxu0
    %v2575 = vadd.f32 %v2486, %v2574
    %v2576 = vpop.f32.mrb[0].mxu0
    %2577 = vmatprep.mubr.f32.mxu0 0.0
    %2578 = vmatmul.mubr.f32.gmra.mrb[0].mxu0 %v2436
    %v2579 = vpop.f32.mrb[0].mxu0
    %v2580 = vadd.f32 %v2486, %v2579
    %v2581 = vpop.f32.mrb[0].mxu0
    %2582 = vmatprep.mubr.f32.mxu0 0.0
    %2583 = vmatmul.mubr.f32.gmra.mrb[0].mxu0 %v2437
    %v2584 = vpop.f32.mrb[0].mxu0
    %v2585 = vadd.f32 %v2486, %v2584
    %v2586 = vpop.f32.mrb[0].mxu0
    %2587 = vmatprep.mubr.f32.mxu0 0.0
    %2588 = vmatmul.mubr.f32.gmra.mrb[0].mxu0 %v2438
    %v2589 = vpop.f32.mrb[0].mxu0
    %v2590 = vadd.f32 %v2486, %v2589
    %v2591 = vpop.f32.mrb[0].mxu0
    %2592 = vmatprep.mubr.f32.mxu0 0.0
    %2593 = vmatmul.mubr.f32.gmra.mrb[0].mxu0 %v2439
    %v2594 = vpop.f32.mrb[0].mxu0
    %v2595 = vadd.f32 %v2486, %v2594
    %v2596 = vpop.f32.mrb[0].mxu0
    %2597 = vmatprep.mubr.f32.mxu0 0.0
    %2598 = vmatmul.mubr.f32.gmra.mrb[0].mxu0 %v2440
    %v2599 = vpop.f32.mrb[0].mxu0
    %v2600 = vadd.f32 %v2486, %v2599
    %v2601 = vpop.f32.mrb[0].mxu0
    %2602 = vmatprep.mubr.f32.mxu0 0.0
    %2603 = vmatmul.mubr.f32.gmra.mrb[0].mxu0 %v2441
    %v2604 = vpop.f32.mrb[0].mxu0
    %v2605 = vadd.f32 %v2486, %v2604
    %v2606 = vpop.f32.mrb[0].mxu0
    %2607 = vmatprep.mubr.f32.mxu0 0.0
    %2608 = vmatmul.mubr.f32.gmra.mrb[0].mxu0 %v2442
    %v2609 = vpop.f32.mrb[0].mxu0
    %v2610 = vadd.f32 %v2486, %v2609
    %v2611 = vpop.f32.mrb[0].mxu0
    %2612 = vmatprep.mubr.f32.mxu0 0.0
    %2613 = vmatmul.mubr.f32.gmra.mrb[0].mxu0 %v2443
    %v2614 = vpop.f32.mrb[0].mxu0
    %v2615 = vadd.f32 %v2486, %v2614
    %v2616 = vpop.f32.mrb[0].mxu0
    %2617 = vmatprep.mubr.f32.mxu0 0.0
    %2618 = vmatmul.mubr.f32.gmra.mrb[0].mxu0 %v2444
    %v2619 = vpop.f32.mrb[0].mxu0
    %v2620 = vadd.f32 %v2486, %v2619
    %v2621 = vpop.f32.mrb[0].mxu0
    %2622 = vmatprep.mubr.f32.mxu0 0.0
    %2623 = vmatmul.mubr.f32.gmra.mrb[0].mxu0 %v2445
    %v2624 = vpop.f32.mrb[0].mxu0
    %v2625 = vadd.f32 %v2486, %v2624
    %v2626 = vpop.f32.mrb[0].mxu0
    %2627 = vmatprep.mubr.f32.mxu0 0.0
    %2628 = vmatmul.mubr.f32.gmra.mrb[0].mxu0 %v2446
    %v2629 = vpop.f32.mrb[0].mxu0
    %v2630 = vadd.f32 %v2486, %v2629
    %v2631 = vpop.f32.mrb[0].mxu0
    %2632 = vmatprep.mubr.f32.mxu0 0.0
    %2633 = vmatmul.mubr.f32.gmra.mrb[0].mxu0 %v2447
    %v2634 = vpop.f32.mrb[0].mxu0
    %v2635 = vadd.f32 %v2486, %v2634
    %v2636 = vpop.f32.mrb[0].mxu0
    %2637 = vmatprep.mubr.f32.mxu0 0.0
    %2638 = vmatmul.mubr.f32.gmra.mrb[0].mxu0 %v2448
    %v2639 = vpop.f32.mrb[0].mxu0
    %v2640 = vadd.f32 %v2486, %v2639
    %v2641 = vpop.f32.mrb[0].mxu0
    %2642 = vmatprep.mubr.f32.mxu0 0.0
    %2643 = vmatmul.mubr.f32.gmra.mrb[0].mxu0 %v2449
    %v2644 = vpop.f32.mrb[0].mxu0
    %v2645 = vadd.f32 %v2486, %v2644
    %v2646 = vpop.f32.mrb[0].mxu0
    %2647 = vmatprep.mubr.f32.mxu0 0.0
    %2648 = vmatmul.mubr.f32.gmra.mrb[0].mxu0 %v2450
    %v2649 = vpop.f32.mrb[0].mxu0
    %v2650 = vadd.f32 %v2486, %v2649
    %v2651 = vpop.f32.mrb[0].mxu0
    %2652 = vmatprep.mubr.f32.mxu0 0.0
    %2653 = vmatmul.mubr.f32.gmra.mrb[0].mxu0 %v2451
    %v2654 = vpop.f32.mrb[0].mxu0
    %v2655 = vadd.f32 %v2486, %v2654
    %v2656 = vpop.f32.mrb[0].mxu0
    %2657 = vmatprep.mubr.f32.mxu0 0.0
    %2658 = vmatmul.mubr.f32.gmra.mrb[0].mxu0 %v2452
    %v2659 = vpop.f32.mrb[0].mxu0
    %v2660 = vadd.f32 %v2486, %v2659
    %v2661 = vpop.f32.mrb[0].mxu0
    %2662 = vmatprep.mubr.f32.mxu0 0.0
    %2663 = vmatmul.mubr.f32.gmra.mrb[0].mxu0 %v2453
    %v2664 = vpop.f32.mrb[0].mxu0
    %v2665 = vadd.f32 %v2486, %v2664
    %v2666 = vpop.f32.mrb[0].mxu0
    %2667 = vmatprep.mubr.f32.mxu0 0.0
    %2668 = vmatmul.mubr.f32.gmra.mrb[0].mxu0 %v2454
    %v2669 = vpop.f32.mrb[0].mxu0
    %v2670 = vadd.f32 %v2486, %v2669
    %v2671 = vpop.f32.mrb[0].mxu0
    %2672 = vmatprep.mubr.f32.mxu0 0.0
    %2673 = vmatmul.mubr.f32.gmra.mrb[0].mxu0 %v2455
    %v2674 = vpop.f32.mrb[0].mxu0
    %v2675 = vadd.f32 %v2486, %v2674
    %v2676 = vpop.f32.mrb[0].mxu0
    %2677 = vmatprep.mubr.f32.mxu0 0.0
    %2678 = vmatmul.mubr.f32.gmra.mrb[0].mxu0 %v2456
    %v2679 = vpop.f32.mrb[0].mxu0
    %v2680 = vadd.f32 %v2486, %v2679
    %v2681 = vpop.f32.mrb[0].mxu0
    %2682 = vmatprep.mubr.f32.mxu0 0.0
    %2683 = vmatmul.mubr.f32.gmra.mrb[0].mxu0 %v2457
    %v2684 = vpop.f32.mrb[0].mxu0
    %v2685 = vadd.f32 %v2486, %v2684
    %v2686 = vpop.f32.mrb[0].mxu0
    %2687 = vmatprep.mubr.f32.mxu0 0.0
    %2688 = vmatmul.mubr.f32.gmra.mrb[0].mxu0 %v2458
    %v2689 = vpop.f32.mrb[0].mxu0
    %v2690 = vadd.f32 %v2486, %v2689
    %v2691 = vpop.f32.mrb[0].mxu0
    %2692 = vmatprep.mubr.f32.mxu0 0.0
    %2693 = vmatmul.mubr.f32.gmra.mrb[0].mxu0 %v2459
    %v2694 = vpop.f32.mrb[0].mxu0
    %v2695 = vadd.f32 %v2486, %v2694
    %v2696 = vpop.f32.mrb[0].mxu0
    %2697 = vmatprep.mubr.f32.mxu0 0.0
    %2698 = vmatmul.mubr.f32.gmra.mrb[0].mxu0 %v2460
    %v2699 = vpop.f32.mrb[0].mxu0
    %v2700 = vadd.f32 %v2486, %v2699
    %v2701 = vpop.f32.mrb[0].mxu0
    %2702 = vmatprep.mubr.f32.mxu0 0.0
    %2703 = vmatmul.mubr.f32.gmra.mrb[0].mxu0 %v2461
    %v2704 = vpop.f32.mrb[0].mxu0
    %v2705 = vadd.f32 %v2486, %v2704
    %v2706 = vpop.f32.mrb[0].mxu0
    %2707 = vmatprep.mubr.f32.mxu0 0.0
    %2708 = vmatmul.mubr.f32.gmra.mrb[0].mxu0 %v2462
    %v2709 = vpop.f32.mrb[0].mxu0
    %v2710 = vadd.f32 %v2486, %v2709
    %v2711 = vpop.f32.mrb[0].mxu0
    %2712 = vdwg.mxu0
    %v2713 = vmax.f32 %v2555, 0.0
    %v2714 = vmax.f32 %v2560, 0.0
    %v2715 = vmax.f32 %v2565, 0.0
    %v2716 = vmax.f32 %v2570, 0.0
    %v2717 = vmax.f32 %v2575, 0.0
    %v2718 = vmax.f32 %v2580, 0.0
    %v2719 = vmax.f32 %v2585, 0.0
    %v2720 = vmax.f32 %v2590, 0.0
    %v2721 = vmax.f32 %v2595, 0.0
    %v2722 = vmax.f32 %v2600, 0.0
    %v2723 = vmax.f32 %v2605, 0.0
    %v2724 = vmax.f32 %v2610, 0.0
    %v2725 = vmax.f32 %v2615, 0.0
    %v2726 = vmax.f32 %v2620, 0.0
    %v2727 = vmax.f32 %v2625, 0.0
    %v2728 = vmax.f32 %v2630, 0.0
    %v2729 = vmax.f32 %v2635, 0.0
    %v2730 = vmax.f32 %v2640, 0.0
    %v2731 = vmax.f32 %v2645, 0.0
    %v2732 = vmax.f32 %v2650, 0.0
    %v2733 = vmax.f32 %v2655, 0.0
    %v2734 = vmax.f32 %v2660, 0.0
    %v2735 = vmax.f32 %v2665, 0.0
    %v2736 = vmax.f32 %v2670, 0.0
    %v2737 = vmax.f32 %v2675, 0.0
    %v2738 = vmax.f32 %v2680, 0.0
    %v2739 = vmax.f32 %v2685, 0.0
    %v2740 = vmax.f32 %v2690, 0.0
    %v2741 = vmax.f32 %v2695, 0.0
    %v2742 = vmax.f32 %v2700, 0.0
    %v2743 = vmax.f32 %v2705, 0.0
    %v2744 = vmax.f32 %v2710, 0.0
    %v2745 = vld [vmem:[#allocation5] sm:$0xff]
    %v2746 = vld [vmem:[#allocation5 + $0x8] sm:$0xff]
    %v2747 = vld [vmem:[#allocation5 + $0x10] sm:$0xff]
    %v2748 = vld [vmem:[#allocation5 + $0x18] sm:$0xff]
    %v2749 = vld [vmem:[#allocation5 + $0x20] sm:$0xff]
    %v2750 = vld [vmem:[#allocation5 + $0x28] sm:$0xff]
    %v2751 = vld [vmem:[#allocation5 + $0x30] sm:$0xff]
    %v2752 = vld [vmem:[#allocation5 + $0x38] sm:$0xff]
    %v2753 = vld [vmem:[#allocation5 + $0x40] sm:$0xff]
    %v2754 = vld [vmem:[#allocation5 + $0x48] sm:$0xff]
    %v2755 = vld [vmem:[#allocation5 + $0x50] sm:$0xff]
    %v2756 = vld [vmem:[#allocation5 + $0x58] sm:$0xff]
    %v2757 = vld [vmem:[#allocation5 + $0x60] sm:$0xff]
    %v2758 = vld [vmem:[#allocation5 + $0x68] sm:$0xff]
    %v2759 = vld [vmem:[#allocation5 + $0x70] sm:$0xff]
    %v2760 = vld [vmem:[#allocation5 + $0x78] sm:$0xff]
    %v2761 = vld [vmem:[%s6] sm:$0x1]
    %v2763 = vlaneseq
    %v2764 = vshrl.u32 %v2763, 7
    %v2765 = vsub.s32 0, %v2764
    %v2766 = vrot.slane %v2761, %v2765
    %2768 = vmatprep.subr.mxu0 0.0
    %2769 = vmatpush1.msra.mxu0 %v2745
    %2770 = vmatprep.subr.mxu0 0.0
    %2771 = vmatpush1.msra.mxu0 %v2746
    %2772 = vmatprep.subr.mxu0 0.0
    %2773 = vmatpush1.msra.mxu0 %v2747
    %2774 = vmatprep.subr.mxu0 0.0
    %2775 = vmatpush1.msra.mxu0 %v2748
    %2776 = vmatprep.subr.mxu0 0.0
    %2777 = vmatpush1.msra.mxu0 %v2749
    %2778 = vmatprep.subr.mxu0 0.0
    %2779 = vmatpush1.msra.mxu0 %v2750
    %2780 = vmatprep.subr.mxu0 0.0
    %2781 = vmatpush1.msra.mxu0 %v2751
    %2782 = vmatprep.subr.mxu0 0.0
    %2783 = vmatpush1.msra.mxu0 %v2752
    %2784 = vmatprep.subr.mxu0 0.0
    %2785 = vmatpush1.msra.mxu0 %v2753
    %2786 = vmatprep.subr.mxu0 0.0
    %2787 = vmatpush1.msra.mxu0 %v2754
    %2788 = vmatprep.subr.mxu0 0.0
    %2789 = vmatpush1.msra.mxu0 %v2755
    %2790 = vmatprep.subr.mxu0 0.0
    %2791 = vmatpush1.msra.mxu0 %v2756
    %2792 = vmatprep.subr.mxu0 0.0
    %2793 = vmatpush1.msra.mxu0 %v2757
    %2794 = vmatprep.subr.mxu0 0.0
    %2795 = vmatpush1.msra.mxu0 %v2758
    %2796 = vmatprep.subr.mxu0 0.0
    %2797 = vmatpush1.msra.mxu0 %v2759
    %2798 = vmatprep.subr.mxu0 0.0
    %2799 = vmatpush1.msra.mxu0 %v2760
    %2800 = vmatprep.subr.mxu0 0.0
    %2801 = vmatpush1.msra.mxu0 0.0
    %2802 = vmatprep.subr.mxu0 0.0
    %2803 = vmatpush1.msra.mxu0 0.0
    %2804 = vmatprep.subr.mxu0 0.0
    %2805 = vmatpush1.msra.mxu0 0.0
    %2806 = vmatprep.subr.mxu0 0.0
    %2807 = vmatpush1.msra.mxu0 0.0
    %2808 = vmatprep.subr.mxu0 0.0
    %2809 = vmatpush1.msra.mxu0 0.0
    %2810 = vmatprep.subr.mxu0 0.0
    %2811 = vmatpush1.msra.mxu0 0.0
    %2812 = vmatprep.subr.mxu0 0.0
    %2813 = vmatpush1.msra.mxu0 0.0
    %2814 = vmatprep.subr.mxu0 0.0
    %2815 = vmatpush1.msra.mxu0 0.0
    %2816 = vmatprep.subr.mxu0 0.0
    %2817 = vmatpush1.msra.mxu0 0.0
    %2818 = vmatprep.subr.mxu0 0.0
    %2819 = vmatpush1.msra.mxu0 0.0
    %2820 = vmatprep.subr.mxu0 0.0
    %2821 = vmatpush1.msra.mxu0 0.0
    %2822 = vmatprep.subr.mxu0 0.0
    %2823 = vmatpush1.msra.mxu0 0.0
    %2824 = vmatprep.subr.mxu0 0.0
    %2825 = vmatpush1.msra.mxu0 0.0
    %2826 = vmatprep.subr.mxu0 0.0
    %2827 = vmatpush1.msra.mxu0 0.0
    %2828 = vmatprep.subr.mxu0 0.0
    %2829 = vmatpush1.msra.mxu0 0.0
    %2830 = vmatprep.subr.mxu0 0.0
    %2831 = vmatpush1.msra.mxu0 0.0
    %2832 = vmatprep.mubr.f32.mxu0 0.0
    %2833 = vmatmul.mubr.f32.gmra.mrb[0].mxu0 %v2713
    %v2834 = vpop.f32.mrb[0].mxu0
    %v2835 = vadd.f32 %v2766, %v2834
    %v2836 = vpop.f32.mrb[0].mxu0
    %2837 = vmatprep.mubr.f32.mxu0 0.0
    %2838 = vmatmul.mubr.f32.gmra.mrb[0].mxu0 %v2714
    %v2839 = vpop.f32.mrb[0].mxu0
    %v2840 = vadd.f32 %v2766, %v2839
    %v2841 = vpop.f32.mrb[0].mxu0
    %2842 = vmatprep.mubr.f32.mxu0 0.0
    %2843 = vmatmul.mubr.f32.gmra.mrb[0].mxu0 %v2715
    %v2844 = vpop.f32.mrb[0].mxu0
    %v2845 = vadd.f32 %v2766, %v2844
    %v2846 = vpop.f32.mrb[0].mxu0
    %2847 = vmatprep.mubr.f32.mxu0 0.0
    %2848 = vmatmul.mubr.f32.gmra.mrb[0].mxu0 %v2716
    %v2849 = vpop.f32.mrb[0].mxu0
    %v2850 = vadd.f32 %v2766, %v2849
    %v2851 = vpop.f32.mrb[0].mxu0
    %2852 = vmatprep.mubr.f32.mxu0 0.0
    %2853 = vmatmul.mubr.f32.gmra.mrb[0].mxu0 %v2717
    %v2854 = vpop.f32.mrb[0].mxu0
    %v2855 = vadd.f32 %v2766, %v2854
    %v2856 = vpop.f32.mrb[0].mxu0
    %2857 = vmatprep.mubr.f32.mxu0 0.0
    %2858 = vmatmul.mubr.f32.gmra.mrb[0].mxu0 %v2718
    %v2859 = vpop.f32.mrb[0].mxu0
    %v2860 = vadd.f32 %v2766, %v2859
    %v2861 = vpop.f32.mrb[0].mxu0
    %2862 = vmatprep.mubr.f32.mxu0 0.0
    %2863 = vmatmul.mubr.f32.gmra.mrb[0].mxu0 %v2719
    %v2864 = vpop.f32.mrb[0].mxu0
    %v2865 = vadd.f32 %v2766, %v2864
    %v2866 = vpop.f32.mrb[0].mxu0
    %2867 = vmatprep.mubr.f32.mxu0 0.0
    %2868 = vmatmul.mubr.f32.gmra.mrb[0].mxu0 %v2720
    %v2869 = vpop.f32.mrb[0].mxu0
    %v2870 = vadd.f32 %v2766, %v2869
    %v2871 = vpop.f32.mrb[0].mxu0
    %2872 = vmatprep.mubr.f32.mxu0 0.0
    %2873 = vmatmul.mubr.f32.gmra.mrb[0].mxu0 %v2721
    %v2874 = vpop.f32.mrb[0].mxu0
    %v2875 = vadd.f32 %v2766, %v2874
    %v2876 = vpop.f32.mrb[0].mxu0
    %2877 = vmatprep.mubr.f32.mxu0 0.0
    %2878 = vmatmul.mubr.f32.gmra.mrb[0].mxu0 %v2722
    %v2879 = vpop.f32.mrb[0].mxu0
    %v2880 = vadd.f32 %v2766, %v2879
    %v2881 = vpop.f32.mrb[0].mxu0
    %2882 = vmatprep.mubr.f32.mxu0 0.0
    %2883 = vmatmul.mubr.f32.gmra.mrb[0].mxu0 %v2723
    %v2884 = vpop.f32.mrb[0].mxu0
    %v2885 = vadd.f32 %v2766, %v2884
    %v2886 = vpop.f32.mrb[0].mxu0
    %2887 = vmatprep.mubr.f32.mxu0 0.0
    %2888 = vmatmul.mubr.f32.gmra.mrb[0].mxu0 %v2724
    %v2889 = vpop.f32.mrb[0].mxu0
    %v2890 = vadd.f32 %v2766, %v2889
    %v2891 = vpop.f32.mrb[0].mxu0
    %2892 = vmatprep.mubr.f32.mxu0 0.0
    %2893 = vmatmul.mubr.f32.gmra.mrb[0].mxu0 %v2725
    %v2894 = vpop.f32.mrb[0].mxu0
    %v2895 = vadd.f32 %v2766, %v2894
    %v2896 = vpop.f32.mrb[0].mxu0
    %2897 = vmatprep.mubr.f32.mxu0 0.0
    %2898 = vmatmul.mubr.f32.gmra.mrb[0].mxu0 %v2726
    %v2899 = vpop.f32.mrb[0].mxu0
    %v2900 = vadd.f32 %v2766, %v2899
    %v2901 = vpop.f32.mrb[0].mxu0
    %2902 = vmatprep.mubr.f32.mxu0 0.0
    %2903 = vmatmul.mubr.f32.gmra.mrb[0].mxu0 %v2727
    %v2904 = vpop.f32.mrb[0].mxu0
    %v2905 = vadd.f32 %v2766, %v2904
    %v2906 = vpop.f32.mrb[0].mxu0
    %2907 = vmatprep.mubr.f32.mxu0 0.0
    %2908 = vmatmul.mubr.f32.gmra.mrb[0].mxu0 %v2728
    %v2909 = vpop.f32.mrb[0].mxu0
    %v2910 = vadd.f32 %v2766, %v2909
    %v2911 = vpop.f32.mrb[0].mxu0
    %2912 = vmatprep.mubr.f32.mxu0 0.0
    %2913 = vmatmul.mubr.f32.gmra.mrb[0].mxu0 %v2729
    %v2914 = vpop.f32.mrb[0].mxu0
    %v2915 = vadd.f32 %v2766, %v2914
    %v2916 = vpop.f32.mrb[0].mxu0
    %2917 = vmatprep.mubr.f32.mxu0 0.0
    %2918 = vmatmul.mubr.f32.gmra.mrb[0].mxu0 %v2730
    %v2919 = vpop.f32.mrb[0].mxu0
    %v2920 = vadd.f32 %v2766, %v2919
    %v2921 = vpop.f32.mrb[0].mxu0
    %2922 = vmatprep.mubr.f32.mxu0 0.0
    %2923 = vmatmul.mubr.f32.gmra.mrb[0].mxu0 %v2731
    %v2924 = vpop.f32.mrb[0].mxu0
    %v2925 = vadd.f32 %v2766, %v2924
    %v2926 = vpop.f32.mrb[0].mxu0
    %2927 = vmatprep.mubr.f32.mxu0 0.0
    %2928 = vmatmul.mubr.f32.gmra.mrb[0].mxu0 %v2732
    %v2929 = vpop.f32.mrb[0].mxu0
    %v2930 = vadd.f32 %v2766, %v2929
    %v2931 = vpop.f32.mrb[0].mxu0
    %2932 = vmatprep.mubr.f32.mxu0 0.0
    %2933 = vmatmul.mubr.f32.gmra.mrb[0].mxu0 %v2733
    %v2934 = vpop.f32.mrb[0].mxu0
    %v2935 = vadd.f32 %v2766, %v2934
    %v2936 = vpop.f32.mrb[0].mxu0
    %2937 = vmatprep.mubr.f32.mxu0 0.0
    %2938 = vmatmul.mubr.f32.gmra.mrb[0].mxu0 %v2734
    %v2939 = vpop.f32.mrb[0].mxu0
    %v2940 = vadd.f32 %v2766, %v2939
    %v2941 = vpop.f32.mrb[0].mxu0
    %2942 = vmatprep.mubr.f32.mxu0 0.0
    %2943 = vmatmul.mubr.f32.gmra.mrb[0].mxu0 %v2735
    %v2944 = vpop.f32.mrb[0].mxu0
    %v2945 = vadd.f32 %v2766, %v2944
    %v2946 = vpop.f32.mrb[0].mxu0
    %2947 = vmatprep.mubr.f32.mxu0 0.0
    %2948 = vmatmul.mubr.f32.gmra.mrb[0].mxu0 %v2736
    %v2949 = vpop.f32.mrb[0].mxu0
    %v2950 = vadd.f32 %v2766, %v2949
    %v2951 = vpop.f32.mrb[0].mxu0
    %2952 = vmatprep.mubr.f32.mxu0 0.0
    %2953 = vmatmul.mubr.f32.gmra.mrb[0].mxu0 %v2737
    %v2954 = vpop.f32.mrb[0].mxu0
    %v2955 = vadd.f32 %v2766, %v2954
    %v2956 = vpop.f32.mrb[0].mxu0
    %2957 = vmatprep.mubr.f32.mxu0 0.0
    %2958 = vmatmul.mubr.f32.gmra.mrb[0].mxu0 %v2738
    %v2959 = vpop.f32.mrb[0].mxu0
    %v2960 = vadd.f32 %v2766, %v2959
    %v2961 = vpop.f32.mrb[0].mxu0
    %2962 = vmatprep.mubr.f32.mxu0 0.0
    %2963 = vmatmul.mubr.f32.gmra.mrb[0].mxu0 %v2739
    %v2964 = vpop.f32.mrb[0].mxu0
    %v2965 = vadd.f32 %v2766, %v2964
    %v2966 = vpop.f32.mrb[0].mxu0
    %2967 = vmatprep.mubr.f32.mxu0 0.0
    %2968 = vmatmul.mubr.f32.gmra.mrb[0].mxu0 %v2740
    %v2969 = vpop.f32.mrb[0].mxu0
    %v2970 = vadd.f32 %v2766, %v2969
    %v2971 = vpop.f32.mrb[0].mxu0
    %2972 = vmatprep.mubr.f32.mxu0 0.0
    %2973 = vmatmul.mubr.f32.gmra.mrb[0].mxu0 %v2741
    %v2974 = vpop.f32.mrb[0].mxu0
    %v2975 = vadd.f32 %v2766, %v2974
    %v2976 = vpop.f32.mrb[0].mxu0
    %2977 = vmatprep.mubr.f32.mxu0 0.0
    %2978 = vmatmul.mubr.f32.gmra.mrb[0].mxu0 %v2742
    %v2979 = vpop.f32.mrb[0].mxu0
    %v2980 = vadd.f32 %v2766, %v2979
    %v2981 = vpop.f32.mrb[0].mxu0
    %2982 = vmatprep.mubr.f32.mxu0 0.0
    %2983 = vmatmul.mubr.f32.gmra.mrb[0].mxu0 %v2743
    %v2984 = vpop.f32.mrb[0].mxu0
    %v2985 = vadd.f32 %v2766, %v2984
    %v2986 = vpop.f32.mrb[0].mxu0
    %2987 = vmatprep.mubr.f32.mxu0 0.0
    %2988 = vmatmul.mubr.f32.gmra.mrb[0].mxu0 %v2744
    %v2989 = vpop.f32.mrb[0].mxu0
    %v2990 = vadd.f32 %v2766, %v2989
    %v2991 = vpop.f32.mrb[0].mxu0
    %2992 = vdwg.mxu0
    %v2993 = vld [vmem:[#allocation7] sm:$0xff]
    %v2994 = vld [vmem:[#allocation7 + $0x8] sm:$0xff]
    %v2995 = vld [vmem:[#allocation7 + $0x10] sm:$0xff]
    %v2996 = vld [vmem:[#allocation7 + $0x18] sm:$0xff]
    %v2997 = vld [vmem:[#allocation7 + $0x20] sm:$0xff]
    %v2998 = vld [vmem:[#allocation7 + $0x28] sm:$0xff]
    %v2999 = vld [vmem:[#allocation7 + $0x30] sm:$0xff]
    %v3000 = vld [vmem:[#allocation7 + $0x38] sm:$0xff]
    %v3001 = vld [vmem:[#allocation7 + $0x40] sm:$0xff]
    %v3002 = vld [vmem:[#allocation7 + $0x48] sm:$0xff]
    %v3003 = vld [vmem:[#allocation7 + $0x50] sm:$0xff]
    %v3004 = vld [vmem:[#allocation7 + $0x58] sm:$0xff]
    %v3005 = vld [vmem:[#allocation7 + $0x60] sm:$0xff]
    %v3006 = vld [vmem:[#allocation7 + $0x68] sm:$0xff]
    %v3007 = vld [vmem:[#allocation7 + $0x70] sm:$0xff]
    %v3008 = vld [vmem:[#allocation7 + $0x78] sm:$0xff]
    %v3009 = vld [vmem:[#allocation8] sm:$0x3f]
    %v3011 = vsel %vm250, %v3009, 0
    %3013 = vmatprep.subr.mxu0 0.0
    %3014 = vmatpush1.msra.mxu0 %v3011
    %3015 = vmatprep.subr.mxu0 0.0
    %3016 = vmatpush1.msra.mxu0 0.0
    %3017 = vmatprep.subr.mxu0 0.0
    %3018 = vmatpush1.msra.mxu0 0.0
    %3019 = vmatprep.subr.mxu0 0.0
    %3020 = vmatpush1.msra.mxu0 0.0
    %3021 = vmatprep.subr.mxu0 0.0
    %3022 = vmatpush1.msra.mxu0 0.0
    %3023 = vmatprep.subr.mxu0 0.0
    %3024 = vmatpush1.msra.mxu0 0.0
    %3025 = vmatprep.subr.mxu0 0.0
    %3026 = vmatpush1.msra.mxu0 0.0
    %3027 = vmatprep.subr.mxu0 0.0
    %3028 = vmatpush1.msra.mxu0 0.0
    %3029 = vmatprep.subr.mxu0 0.0
    %3030 = vmatpush1.msra.mxu0 0.0
    %3031 = vmatprep.subr.mxu0 0.0
    %3032 = vmatpush1.msra.mxu0 0.0
    %3033 = vmatprep.subr.mxu0 0.0
    %3034 = vmatpush1.msra.mxu0 0.0
    %3035 = vmatprep.subr.mxu0 0.0
    %3036 = vmatpush1.msra.mxu0 0.0
    %3037 = vmatprep.subr.mxu0 0.0
    %3038 = vmatpush1.msra.mxu0 0.0
    %3039 = vmatprep.subr.mxu0 0.0
    %3040 = vmatpush1.msra.mxu0 0.0
    %3041 = vmatprep.subr.mxu0 0.0
    %3042 = vmatpush1.msra.mxu0 0.0
    %3043 = vmatprep.subr.mxu0 0.0
    %3044 = vmatpush1.msra.mxu0 0.0
    %3045 = vmatprep.subr.mxu0 0.0
    %3046 = vmatpush1.msra.mxu0 0.0
    %3047 = vmatprep.subr.mxu0 0.0
    %3048 = vmatpush1.msra.mxu0 0.0
    %3049 = vmatprep.subr.mxu0 0.0
    %3050 = vmatpush1.msra.mxu0 0.0
    %3051 = vmatprep.subr.mxu0 0.0
    %3052 = vmatpush1.msra.mxu0 0.0
    %3053 = vmatprep.subr.mxu0 0.0
    %3054 = vmatpush1.msra.mxu0 0.0
    %3055 = vmatprep.subr.mxu0 0.0
    %3056 = vmatpush1.msra.mxu0 0.0
    %3057 = vmatprep.subr.mxu0 0.0
    %3058 = vmatpush1.msra.mxu0 0.0
    %3059 = vmatprep.subr.mxu0 0.0
    %3060 = vmatpush1.msra.mxu0 0.0
    %3061 = vmatprep.subr.mxu0 0.0
    %3062 = vmatpush1.msra.mxu0 0.0
    %3063 = vmatprep.subr.mxu0 0.0
    %3064 = vmatpush1.msra.mxu0 0.0
    %3065 = vmatprep.subr.mxu0 0.0
    %3066 = vmatpush1.msra.mxu0 0.0
    %3067 = vmatprep.subr.mxu0 0.0
    %3068 = vmatpush1.msra.mxu0 0.0
    %3069 = vmatprep.subr.mxu0 0.0
    %3070 = vmatpush1.msra.mxu0 0.0
    %3071 = vmatprep.subr.mxu0 0.0
    %3072 = vmatpush1.msra.mxu0 0.0
    %3073 = vmatprep.subr.mxu0 0.0
    %3074 = vmatpush1.msra.mxu0 0.0
    %3075 = vmatprep.subr.mxu0 0.0
    %3076 = vmatpush1.msra.mxu0 0.0
    %3077 = vmatprep.mubr.f32.mxu0 0.0
    %3078 = vmatmul.mubr.f32.gmra.mrb[0].mxu0 %v155
    %v3079 = vpop.f32.mrb[0].mxu0
    %v3080 = vadd.f32 0.0, %v3079
    %v3081 = vpop.f32.mrb[0].mxu0
    %3082 = vmatprep.mubr.f32.mxu0 0.0
    %3083 = vmatmul.mubr.f32.gmra.mrb[0].mxu0 %v158
    %v3084 = vpop.f32.mrb[0].mxu0
    %v3085 = vadd.f32 0.0, %v3084
    %v3086 = vpop.f32.mrb[0].mxu0
    %3087 = vmatprep.mubr.f32.mxu0 0.0
    %3088 = vmatmul.mubr.f32.gmra.mrb[0].mxu0 %v161
    %v3089 = vpop.f32.mrb[0].mxu0
    %v3090 = vadd.f32 0.0, %v3089
    %v3091 = vpop.f32.mrb[0].mxu0
    %3092 = vmatprep.mubr.f32.mxu0 0.0
    %3093 = vmatmul.mubr.f32.gmra.mrb[0].mxu0 %v164
    %v3094 = vpop.f32.mrb[0].mxu0
    %v3095 = vadd.f32 0.0, %v3094
    %v3096 = vpop.f32.mrb[0].mxu0
    %3097 = vmatprep.mubr.f32.mxu0 0.0
    %3098 = vmatmul.mubr.f32.gmra.mrb[0].mxu0 %v167
    %v3099 = vpop.f32.mrb[0].mxu0
    %v3100 = vadd.f32 0.0, %v3099
    %v3101 = vpop.f32.mrb[0].mxu0
    %3102 = vmatprep.mubr.f32.mxu0 0.0
    %3103 = vmatmul.mubr.f32.gmra.mrb[0].mxu0 %v170
    %v3104 = vpop.f32.mrb[0].mxu0
    %v3105 = vadd.f32 0.0, %v3104
    %v3106 = vpop.f32.mrb[0].mxu0
    %3107 = vmatprep.mubr.f32.mxu0 0.0
    %3108 = vmatmul.mubr.f32.gmra.mrb[0].mxu0 %v173
    %v3109 = vpop.f32.mrb[0].mxu0
    %v3110 = vadd.f32 0.0, %v3109
    %v3111 = vpop.f32.mrb[0].mxu0
    %3112 = vmatprep.mubr.f32.mxu0 0.0
    %3113 = vmatmul.mubr.f32.gmra.mrb[0].mxu0 %v176
    %v3114 = vpop.f32.mrb[0].mxu0
    %v3115 = vadd.f32 0.0, %v3114
    %v3116 = vpop.f32.mrb[0].mxu0
    %3117 = vmatprep.mubr.f32.mxu0 0.0
    %3118 = vmatmul.mubr.f32.gmra.mrb[0].mxu0 %v179
    %v3119 = vpop.f32.mrb[0].mxu0
    %v3120 = vadd.f32 0.0, %v3119
    %v3121 = vpop.f32.mrb[0].mxu0
    %3122 = vmatprep.mubr.f32.mxu0 0.0
    %3123 = vmatmul.mubr.f32.gmra.mrb[0].mxu0 %v182
    %v3124 = vpop.f32.mrb[0].mxu0
    %v3125 = vadd.f32 0.0, %v3124
    %v3126 = vpop.f32.mrb[0].mxu0
    %3127 = vmatprep.mubr.f32.mxu0 0.0
    %3128 = vmatmul.mubr.f32.gmra.mrb[0].mxu0 %v185
    %v3129 = vpop.f32.mrb[0].mxu0
    %v3130 = vadd.f32 0.0, %v3129
    %v3131 = vpop.f32.mrb[0].mxu0
    %3132 = vmatprep.mubr.f32.mxu0 0.0
    %3133 = vmatmul.mubr.f32.gmra.mrb[0].mxu0 %v188
    %v3134 = vpop.f32.mrb[0].mxu0
    %v3135 = vadd.f32 0.0, %v3134
    %v3136 = vpop.f32.mrb[0].mxu0
    %3137 = vmatprep.mubr.f32.mxu0 0.0
    %3138 = vmatmul.mubr.f32.gmra.mrb[0].mxu0 %v191
    %v3139 = vpop.f32.mrb[0].mxu0
    %v3140 = vadd.f32 0.0, %v3139
    %v3141 = vpop.f32.mrb[0].mxu0
    %3142 = vmatprep.mubr.f32.mxu0 0.0
    %3143 = vmatmul.mubr.f32.gmra.mrb[0].mxu0 %v194
    %v3144 = vpop.f32.mrb[0].mxu0
    %v3145 = vadd.f32 0.0, %v3144
    %v3146 = vpop.f32.mrb[0].mxu0
    %3147 = vmatprep.mubr.f32.mxu0 0.0
    %3148 = vmatmul.mubr.f32.gmra.mrb[0].mxu0 %v197
    %v3149 = vpop.f32.mrb[0].mxu0
    %v3150 = vadd.f32 0.0, %v3149
    %v3151 = vpop.f32.mrb[0].mxu0
    %3152 = vmatprep.mubr.f32.mxu0 0.0
    %3153 = vmatmul.mubr.f32.gmra.mrb[0].mxu0 %v200
    %v3154 = vpop.f32.mrb[0].mxu0
    %v3155 = vadd.f32 0.0, %v3154
    %v3156 = vpop.f32.mrb[0].mxu0
    %3157 = vmatprep.mubr.f32.mxu0 0.0
    %3158 = vmatmul.mubr.f32.gmra.mrb[0].mxu0 %v203
    %v3159 = vpop.f32.mrb[0].mxu0
    %v3160 = vadd.f32 0.0, %v3159
    %v3161 = vpop.f32.mrb[0].mxu0
    %3162 = vmatprep.mubr.f32.mxu0 0.0
    %3163 = vmatmul.mubr.f32.gmra.mrb[0].mxu0 %v206
    %v3164 = vpop.f32.mrb[0].mxu0
    %v3165 = vadd.f32 0.0, %v3164
    %v3166 = vpop.f32.mrb[0].mxu0
    %3167 = vmatprep.mubr.f32.mxu0 0.0
    %3168 = vmatmul.mubr.f32.gmra.mrb[0].mxu0 %v209
    %v3169 = vpop.f32.mrb[0].mxu0
    %v3170 = vadd.f32 0.0, %v3169
    %v3171 = vpop.f32.mrb[0].mxu0
    %3172 = vmatprep.mubr.f32.mxu0 0.0
    %3173 = vmatmul.mubr.f32.gmra.mrb[0].mxu0 %v212
    %v3174 = vpop.f32.mrb[0].mxu0
    %v3175 = vadd.f32 0.0, %v3174
    %v3176 = vpop.f32.mrb[0].mxu0
    %3177 = vmatprep.mubr.f32.mxu0 0.0
    %3178 = vmatmul.mubr.f32.gmra.mrb[0].mxu0 %v215
    %v3179 = vpop.f32.mrb[0].mxu0
    %v3180 = vadd.f32 0.0, %v3179
    %v3181 = vpop.f32.mrb[0].mxu0
    %3182 = vmatprep.mubr.f32.mxu0 0.0
    %3183 = vmatmul.mubr.f32.gmra.mrb[0].mxu0 %v218
    %v3184 = vpop.f32.mrb[0].mxu0
    %v3185 = vadd.f32 0.0, %v3184
    %v3186 = vpop.f32.mrb[0].mxu0
    %3187 = vmatprep.mubr.f32.mxu0 0.0
    %3188 = vmatmul.mubr.f32.gmra.mrb[0].mxu0 %v221
    %v3189 = vpop.f32.mrb[0].mxu0
    %v3190 = vadd.f32 0.0, %v3189
    %v3191 = vpop.f32.mrb[0].mxu0
    %3192 = vmatprep.mubr.f32.mxu0 0.0
    %3193 = vmatmul.mubr.f32.gmra.mrb[0].mxu0 %v224
    %v3194 = vpop.f32.mrb[0].mxu0
    %v3195 = vadd.f32 0.0, %v3194
    %v3196 = vpop.f32.mrb[0].mxu0
    %3197 = vmatprep.mubr.f32.mxu0 0.0
    %3198 = vmatmul.mubr.f32.gmra.mrb[0].mxu0 %v227
    %v3199 = vpop.f32.mrb[0].mxu0
    %v3200 = vadd.f32 0.0, %v3199
    %v3201 = vpop.f32.mrb[0].mxu0
    %3202 = vmatprep.mubr.f32.mxu0 0.0
    %3203 = vmatmul.mubr.f32.gmra.mrb[0].mxu0 %v230
    %v3204 = vpop.f32.mrb[0].mxu0
    %v3205 = vadd.f32 0.0, %v3204
    %v3206 = vpop.f32.mrb[0].mxu0
    %3207 = vmatprep.mubr.f32.mxu0 0.0
    %3208 = vmatmul.mubr.f32.gmra.mrb[0].mxu0 %v233
    %v3209 = vpop.f32.mrb[0].mxu0
    %v3210 = vadd.f32 0.0, %v3209
    %v3211 = vpop.f32.mrb[0].mxu0
    %3212 = vmatprep.mubr.f32.mxu0 0.0
    %3213 = vmatmul.mubr.f32.gmra.mrb[0].mxu0 %v236
    %v3214 = vpop.f32.mrb[0].mxu0
    %v3215 = vadd.f32 0.0, %v3214
    %v3216 = vpop.f32.mrb[0].mxu0
    %3217 = vmatprep.mubr.f32.mxu0 0.0
    %3218 = vmatmul.mubr.f32.gmra.mrb[0].mxu0 %v239
    %v3219 = vpop.f32.mrb[0].mxu0
    %v3220 = vadd.f32 0.0, %v3219
    %v3221 = vpop.f32.mrb[0].mxu0
    %3222 = vmatprep.mubr.f32.mxu0 0.0
    %3223 = vmatmul.mubr.f32.gmra.mrb[0].mxu0 %v242
    %v3224 = vpop.f32.mrb[0].mxu0
    %v3225 = vadd.f32 0.0, %v3224
    %v3226 = vpop.f32.mrb[0].mxu0
    %3227 = vmatprep.mubr.f32.mxu0 0.0
    %3228 = vmatmul.mubr.f32.gmra.mrb[0].mxu0 %v245
    %v3229 = vpop.f32.mrb[0].mxu0
    %v3230 = vadd.f32 0.0, %v3229
    %v3231 = vpop.f32.mrb[0].mxu0
    %3232 = vmatprep.mubr.f32.mxu0 0.0
    %3233 = vmatmul.mubr.f32.gmra.mrb[0].mxu0 %v248
    %v3234 = vpop.f32.mrb[0].mxu0
    %v3235 = vadd.f32 0.0, %v3234
    %v3236 = vpop.f32.mrb[0].mxu0
    %3237 = vdwg.mxu0
    %3238 = vmatprep.subr.mxu0 0.0
    %3239 = vmatpush1.msra.mxu0 %v2993
    %3240 = vmatprep.subr.mxu0 0.0
    %3241 = vmatpush1.msra.mxu0 %v2994
    %3242 = vmatprep.subr.mxu0 0.0
    %3243 = vmatpush1.msra.mxu0 %v2995
    %3244 = vmatprep.subr.mxu0 0.0
    %3245 = vmatpush1.msra.mxu0 %v2996
    %3246 = vmatprep.subr.mxu0 0.0
    %3247 = vmatpush1.msra.mxu0 %v2997
    %3248 = vmatprep.subr.mxu0 0.0
    %3249 = vmatpush1.msra.mxu0 %v2998
    %3250 = vmatprep.subr.mxu0 0.0
    %3251 = vmatpush1.msra.mxu0 %v2999
    %3252 = vmatprep.subr.mxu0 0.0
    %3253 = vmatpush1.msra.mxu0 %v3000
    %3254 = vmatprep.subr.mxu0 0.0
    %3255 = vmatpush1.msra.mxu0 %v3001
    %3256 = vmatprep.subr.mxu0 0.0
    %3257 = vmatpush1.msra.mxu0 %v3002
    %3258 = vmatprep.subr.mxu0 0.0
    %3259 = vmatpush1.msra.mxu0 %v3003
    %3260 = vmatprep.subr.mxu0 0.0
    %3261 = vmatpush1.msra.mxu0 %v3004
    %3262 = vmatprep.subr.mxu0 0.0
    %3263 = vmatpush1.msra.mxu0 %v3005
    %3264 = vmatprep.subr.mxu0 0.0
    %3265 = vmatpush1.msra.mxu0 %v3006
    %3266 = vmatprep.subr.mxu0 0.0
    %3267 = vmatpush1.msra.mxu0 %v3007
    %3268 = vmatprep.subr.mxu0 0.0
    %3269 = vmatpush1.msra.mxu0 %v3008
    %3270 = vmatprep.subr.mxu0 0.0
    %3271 = vmatpush1.msra.mxu0 0.0
    %3272 = vmatprep.subr.mxu0 0.0
    %3273 = vmatpush1.msra.mxu0 0.0
    %3274 = vmatprep.subr.mxu0 0.0
    %3275 = vmatpush1.msra.mxu0 0.0
    %3276 = vmatprep.subr.mxu0 0.0
    %3277 = vmatpush1.msra.mxu0 0.0
    %3278 = vmatprep.subr.mxu0 0.0
    %3279 = vmatpush1.msra.mxu0 0.0
    %3280 = vmatprep.subr.mxu0 0.0
    %3281 = vmatpush1.msra.mxu0 0.0
    %3282 = vmatprep.subr.mxu0 0.0
    %3283 = vmatpush1.msra.mxu0 0.0
    %3284 = vmatprep.subr.mxu0 0.0
    %3285 = vmatpush1.msra.mxu0 0.0
    %3286 = vmatprep.subr.mxu0 0.0
    %3287 = vmatpush1.msra.mxu0 0.0
    %3288 = vmatprep.subr.mxu0 0.0
    %3289 = vmatpush1.msra.mxu0 0.0
    %3290 = vmatprep.subr.mxu0 0.0
    %3291 = vmatpush1.msra.mxu0 0.0
    %3292 = vmatprep.subr.mxu0 0.0
    %3293 = vmatpush1.msra.mxu0 0.0
    %3294 = vmatprep.subr.mxu0 0.0
    %3295 = vmatpush1.msra.mxu0 0.0
    %3296 = vmatprep.subr.mxu0 0.0
    %3297 = vmatpush1.msra.mxu0 0.0
    %3298 = vmatprep.subr.mxu0 0.0
    %3299 = vmatpush1.msra.mxu0 0.0
    %3300 = vmatprep.subr.mxu0 0.0
    %3301 = vmatpush1.msra.mxu0 0.0
    %3302 = vmatprep.mubr.f32.mxu0 0.0
    %3303 = vmatmul.mubr.f32.gmra.mrb[0].mxu0 %v2835
    %v3304 = vpop.f32.mrb[0].mxu0
    %v3305 = vadd.f32 %v3080, %v3304
    %v3306 = vpop.f32.mrb[0].mxu0
    %3307 = vmatprep.mubr.f32.mxu0 0.0
    %3308 = vmatmul.mubr.f32.gmra.mrb[0].mxu0 %v2840
    %v3309 = vpop.f32.mrb[0].mxu0
    %v3310 = vadd.f32 %v3085, %v3309
    %v3311 = vpop.f32.mrb[0].mxu0
    %3312 = vmatprep.mubr.f32.mxu0 0.0
    %3313 = vmatmul.mubr.f32.gmra.mrb[0].mxu0 %v2845
    %v3314 = vpop.f32.mrb[0].mxu0
    %v3315 = vadd.f32 %v3090, %v3314
    %v3316 = vpop.f32.mrb[0].mxu0
    %3317 = vmatprep.mubr.f32.mxu0 0.0
    %3318 = vmatmul.mubr.f32.gmra.mrb[0].mxu0 %v2850
    %v3319 = vpop.f32.mrb[0].mxu0
    %v3320 = vadd.f32 %v3095, %v3319
    %v3321 = vpop.f32.mrb[0].mxu0
    %3322 = vmatprep.mubr.f32.mxu0 0.0
    %3323 = vmatmul.mubr.f32.gmra.mrb[0].mxu0 %v2855
    %v3324 = vpop.f32.mrb[0].mxu0
    %v3325 = vadd.f32 %v3100, %v3324
    %v3326 = vpop.f32.mrb[0].mxu0
    %3327 = vmatprep.mubr.f32.mxu0 0.0
    %3328 = vmatmul.mubr.f32.gmra.mrb[0].mxu0 %v2860
    %v3329 = vpop.f32.mrb[0].mxu0
    %v3330 = vadd.f32 %v3105, %v3329
    %v3331 = vpop.f32.mrb[0].mxu0
    %3332 = vmatprep.mubr.f32.mxu0 0.0
    %3333 = vmatmul.mubr.f32.gmra.mrb[0].mxu0 %v2865
    %v3334 = vpop.f32.mrb[0].mxu0
    %v3335 = vadd.f32 %v3110, %v3334
    %v3336 = vpop.f32.mrb[0].mxu0
    %3337 = vmatprep.mubr.f32.mxu0 0.0
    %3338 = vmatmul.mubr.f32.gmra.mrb[0].mxu0 %v2870
    %v3339 = vpop.f32.mrb[0].mxu0
    %v3340 = vadd.f32 %v3115, %v3339
    %v3341 = vpop.f32.mrb[0].mxu0
    %3342 = vmatprep.mubr.f32.mxu0 0.0
    %3343 = vmatmul.mubr.f32.gmra.mrb[0].mxu0 %v2875
    %v3344 = vpop.f32.mrb[0].mxu0
    %v3345 = vadd.f32 %v3120, %v3344
    %v3346 = vpop.f32.mrb[0].mxu0
    %3347 = vmatprep.mubr.f32.mxu0 0.0
    %3348 = vmatmul.mubr.f32.gmra.mrb[0].mxu0 %v2880
    %v3349 = vpop.f32.mrb[0].mxu0
    %v3350 = vadd.f32 %v3125, %v3349
    %v3351 = vpop.f32.mrb[0].mxu0
    %3352 = vmatprep.mubr.f32.mxu0 0.0
    %3353 = vmatmul.mubr.f32.gmra.mrb[0].mxu0 %v2885
    %v3354 = vpop.f32.mrb[0].mxu0
    %v3355 = vadd.f32 %v3130, %v3354
    %v3356 = vpop.f32.mrb[0].mxu0
    %3357 = vmatprep.mubr.f32.mxu0 0.0
    %3358 = vmatmul.mubr.f32.gmra.mrb[0].mxu0 %v2890
    %v3359 = vpop.f32.mrb[0].mxu0
    %v3360 = vadd.f32 %v3135, %v3359
    %v3361 = vpop.f32.mrb[0].mxu0
    %3362 = vmatprep.mubr.f32.mxu0 0.0
    %3363 = vmatmul.mubr.f32.gmra.mrb[0].mxu0 %v2895
    %v3364 = vpop.f32.mrb[0].mxu0
    %v3365 = vadd.f32 %v3140, %v3364
    %v3366 = vpop.f32.mrb[0].mxu0
    %3367 = vmatprep.mubr.f32.mxu0 0.0
    %3368 = vmatmul.mubr.f32.gmra.mrb[0].mxu0 %v2900
    %v3369 = vpop.f32.mrb[0].mxu0
    %v3370 = vadd.f32 %v3145, %v3369
    %v3371 = vpop.f32.mrb[0].mxu0
    %3372 = vmatprep.mubr.f32.mxu0 0.0
    %3373 = vmatmul.mubr.f32.gmra.mrb[0].mxu0 %v2905
    %v3374 = vpop.f32.mrb[0].mxu0
    %v3375 = vadd.f32 %v3150, %v3374
    %v3376 = vpop.f32.mrb[0].mxu0
    %3377 = vmatprep.mubr.f32.mxu0 0.0
    %3378 = vmatmul.mubr.f32.gmra.mrb[0].mxu0 %v2910
    %v3379 = vpop.f32.mrb[0].mxu0
    %v3380 = vadd.f32 %v3155, %v3379
    %v3381 = vpop.f32.mrb[0].mxu0
    %3382 = vmatprep.mubr.f32.mxu0 0.0
    %3383 = vmatmul.mubr.f32.gmra.mrb[0].mxu0 %v2915
    %v3384 = vpop.f32.mrb[0].mxu0
    %v3385 = vadd.f32 %v3160, %v3384
    %v3386 = vpop.f32.mrb[0].mxu0
    %3387 = vmatprep.mubr.f32.mxu0 0.0
    %3388 = vmatmul.mubr.f32.gmra.mrb[0].mxu0 %v2920
    %v3389 = vpop.f32.mrb[0].mxu0
    %v3390 = vadd.f32 %v3165, %v3389
    %v3391 = vpop.f32.mrb[0].mxu0
    %3392 = vmatprep.mubr.f32.mxu0 0.0
    %3393 = vmatmul.mubr.f32.gmra.mrb[0].mxu0 %v2925
    %v3394 = vpop.f32.mrb[0].mxu0
    %v3395 = vadd.f32 %v3170, %v3394
    %v3396 = vpop.f32.mrb[0].mxu0
    %3397 = vmatprep.mubr.f32.mxu0 0.0
    %3398 = vmatmul.mubr.f32.gmra.mrb[0].mxu0 %v2930
    %v3399 = vpop.f32.mrb[0].mxu0
    %v3400 = vadd.f32 %v3175, %v3399
    %v3401 = vpop.f32.mrb[0].mxu0
    %3402 = vmatprep.mubr.f32.mxu0 0.0
    %3403 = vmatmul.mubr.f32.gmra.mrb[0].mxu0 %v2935
    %v3404 = vpop.f32.mrb[0].mxu0
    %v3405 = vadd.f32 %v3180, %v3404
    %v3406 = vpop.f32.mrb[0].mxu0
    %3407 = vmatprep.mubr.f32.mxu0 0.0
    %3408 = vmatmul.mubr.f32.gmra.mrb[0].mxu0 %v2940
    %v3409 = vpop.f32.mrb[0].mxu0
    %v3410 = vadd.f32 %v3185, %v3409
    %v3411 = vpop.f32.mrb[0].mxu0
    %3412 = vmatprep.mubr.f32.mxu0 0.0
    %3413 = vmatmul.mubr.f32.gmra.mrb[0].mxu0 %v2945
    %v3414 = vpop.f32.mrb[0].mxu0
    %v3415 = vadd.f32 %v3190, %v3414
    %v3416 = vpop.f32.mrb[0].mxu0
    %3417 = vmatprep.mubr.f32.mxu0 0.0
    %3418 = vmatmul.mubr.f32.gmra.mrb[0].mxu0 %v2950
    %v3419 = vpop.f32.mrb[0].mxu0
    %v3420 = vadd.f32 %v3195, %v3419
    %v3421 = vpop.f32.mrb[0].mxu0
    %3422 = vmatprep.mubr.f32.mxu0 0.0
    %3423 = vmatmul.mubr.f32.gmra.mrb[0].mxu0 %v2955
    %v3424 = vpop.f32.mrb[0].mxu0
    %v3425 = vadd.f32 %v3200, %v3424
    %v3426 = vpop.f32.mrb[0].mxu0
    %3427 = vmatprep.mubr.f32.mxu0 0.0
    %3428 = vmatmul.mubr.f32.gmra.mrb[0].mxu0 %v2960
    %v3429 = vpop.f32.mrb[0].mxu0
    %v3430 = vadd.f32 %v3205, %v3429
    %v3431 = vpop.f32.mrb[0].mxu0
    %3432 = vmatprep.mubr.f32.mxu0 0.0
    %3433 = vmatmul.mubr.f32.gmra.mrb[0].mxu0 %v2965
    %v3434 = vpop.f32.mrb[0].mxu0
    %v3435 = vadd.f32 %v3210, %v3434
    %v3436 = vpop.f32.mrb[0].mxu0
    %3437 = vmatprep.mubr.f32.mxu0 0.0
    %3438 = vmatmul.mubr.f32.gmra.mrb[0].mxu0 %v2970
    %v3439 = vpop.f32.mrb[0].mxu0
    %v3440 = vadd.f32 %v3215, %v3439
    %v3441 = vpop.f32.mrb[0].mxu0
    %3442 = vmatprep.mubr.f32.mxu0 0.0
    %3443 = vmatmul.mubr.f32.gmra.mrb[0].mxu0 %v2975
    %v3444 = vpop.f32.mrb[0].mxu0
    %v3445 = vadd.f32 %v3220, %v3444
    %v3446 = vpop.f32.mrb[0].mxu0
    %3447 = vmatprep.mubr.f32.mxu0 0.0
    %3448 = vmatmul.mubr.f32.gmra.mrb[0].mxu0 %v2980
    %v3449 = vpop.f32.mrb[0].mxu0
    %v3450 = vadd.f32 %v3225, %v3449
    %v3451 = vpop.f32.mrb[0].mxu0
    %3452 = vmatprep.mubr.f32.mxu0 0.0
    %3453 = vmatmul.mubr.f32.gmra.mrb[0].mxu0 %v2985
    %v3454 = vpop.f32.mrb[0].mxu0
    %v3455 = vadd.f32 %v3230, %v3454
    %v3456 = vpop.f32.mrb[0].mxu0
    %3457 = vmatprep.mubr.f32.mxu0 0.0
    %3458 = vmatmul.mubr.f32.gmra.mrb[0].mxu0 %v2990
    %v3459 = vpop.f32.mrb[0].mxu0
    %v3460 = vadd.f32 %v3235, %v3459
    %v3461 = vpop.f32.mrb[0].mxu0
    %3462 = vdwg.mxu0
    %v3463 = vld [vmem:[%s9] sm:$0x1]
    %v3465 = vlaneseq
    %v3466 = vshrl.u32 %v3465, 7
    %v3467 = vsub.s32 0, %v3466
    %v3468 = vrot.slane %v3463, %v3467
    %v3470 = vadd.f32 %v3305, %v3468
    %v3471 = vadd.f32 %v3310, %v3468
    %v3472 = vadd.f32 %v3315, %v3468
    %v3473 = vadd.f32 %v3320, %v3468
    %v3474 = vadd.f32 %v3325, %v3468
    %v3475 = vadd.f32 %v3330, %v3468
    %v3476 = vadd.f32 %v3335, %v3468
    %v3477 = vadd.f32 %v3340, %v3468
    %v3478 = vadd.f32 %v3345, %v3468
    %v3479 = vadd.f32 %v3350, %v3468
    %v3480 = vadd.f32 %v3355, %v3468
    %v3481 = vadd.f32 %v3360, %v3468
    %v3482 = vadd.f32 %v3365, %v3468
    %v3483 = vadd.f32 %v3370, %v3468
    %v3484 = vadd.f32 %v3375, %v3468
    %v3485 = vadd.f32 %v3380, %v3468
    %v3486 = vadd.f32 %v3385, %v3468
    %v3487 = vadd.f32 %v3390, %v3468
    %v3488 = vadd.f32 %v3395, %v3468
    %v3489 = vadd.f32 %v3400, %v3468
    %v3490 = vadd.f32 %v3405, %v3468
    %v3491 = vadd.f32 %v3410, %v3468
    %v3492 = vadd.f32 %v3415, %v3468
    %v3493 = vadd.f32 %v3420, %v3468
    %v3494 = vadd.f32 %v3425, %v3468
    %v3495 = vadd.f32 %v3430, %v3468
    %v3496 = vadd.f32 %v3435, %v3468
    %v3497 = vadd.f32 %v3440, %v3468
    %v3498 = vadd.f32 %v3445, %v3468
    %v3499 = vadd.f32 %v3450, %v3468
    %v3500 = vadd.f32 %v3455, %v3468
    %v3501 = vadd.f32 %v3460, %v3468
    %v3502 = vmax.f32 %v3470, 0.0
    %v3503 = vmax.f32 %v3471, 0.0
    %v3504 = vmax.f32 %v3472, 0.0
    %v3505 = vmax.f32 %v3473, 0.0
    %v3506 = vmax.f32 %v3474, 0.0
    %v3507 = vmax.f32 %v3475, 0.0
    %v3508 = vmax.f32 %v3476, 0.0
    %v3509 = vmax.f32 %v3477, 0.0
    %v3510 = vmax.f32 %v3478, 0.0
    %v3511 = vmax.f32 %v3479, 0.0
    %v3512 = vmax.f32 %v3480, 0.0
    %v3513 = vmax.f32 %v3481, 0.0
    %v3514 = vmax.f32 %v3482, 0.0
    %v3515 = vmax.f32 %v3483, 0.0
    %v3516 = vmax.f32 %v3484, 0.0
    %v3517 = vmax.f32 %v3485, 0.0
    %v3518 = vmax.f32 %v3486, 0.0
    %v3519 = vmax.f32 %v3487, 0.0
    %v3520 = vmax.f32 %v3488, 0.0
    %v3521 = vmax.f32 %v3489, 0.0
    %v3522 = vmax.f32 %v3490, 0.0
    %v3523 = vmax.f32 %v3491, 0.0
    %v3524 = vmax.f32 %v3492, 0.0
    %v3525 = vmax.f32 %v3493, 0.0
    %v3526 = vmax.f32 %v3494, 0.0
    %v3527 = vmax.f32 %v3495, 0.0
    %v3528 = vmax.f32 %v3496, 0.0
    %v3529 = vmax.f32 %v3497, 0.0
    %v3530 = vmax.f32 %v3498, 0.0
    %v3531 = vmax.f32 %v3499, 0.0
    %v3532 = vmax.f32 %v3500, 0.0
    %v3533 = vmax.f32 %v3501, 0.0
    %v3534 = vld [vmem:[%s11] sm:$0x1]
    %v3536 = vlaneseq
    %v3537 = vshrl.u32 %v3536, 7
    %v3538 = vsub.s32 0, %v3537
    %v3539 = vrot.slane %v3534, %v3538
    %v3541 = vmul.f32 %v2713, %v3539
    %v3542 = vmul.f32 %v2714, %v3539
    %v3543 = vmul.f32 %v2715, %v3539
    %v3544 = vmul.f32 %v2716, %v3539
    %v3545 = vmul.f32 %v2717, %v3539
    %v3546 = vmul.f32 %v2718, %v3539
    %v3547 = vmul.f32 %v2719, %v3539
    %v3548 = vmul.f32 %v2720, %v3539
    %v3549 = vmul.f32 %v2721, %v3539
    %v3550 = vmul.f32 %v2722, %v3539
    %v3551 = vmul.f32 %v2723, %v3539
    %v3552 = vmul.f32 %v2724, %v3539
    %v3553 = vmul.f32 %v2725, %v3539
    %v3554 = vmul.f32 %v2726, %v3539
    %v3555 = vmul.f32 %v2727, %v3539
    %v3556 = vmul.f32 %v2728, %v3539
    %v3557 = vmul.f32 %v2729, %v3539
    %v3558 = vmul.f32 %v2730, %v3539
    %v3559 = vmul.f32 %v2731, %v3539
    %v3560 = vmul.f32 %v2732, %v3539
    %v3561 = vmul.f32 %v2733, %v3539
    %v3562 = vmul.f32 %v2734, %v3539
    %v3563 = vmul.f32 %v2735, %v3539
    %v3564 = vmul.f32 %v2736, %v3539
    %v3565 = vmul.f32 %v2737, %v3539
    %v3566 = vmul.f32 %v2738, %v3539
    %v3567 = vmul.f32 %v2739, %v3539
    %v3568 = vmul.f32 %v2740, %v3539
    %v3569 = vmul.f32 %v2741, %v3539
    %v3570 = vmul.f32 %v2742, %v3539
    %v3571 = vmul.f32 %v2743, %v3539
    %v3572 = vmul.f32 %v2744, %v3539
    %3573 = vadd.xlane.f32.xlu0 %v3541
    %v3574 = vpop.xlane.xlu0 %3573
    %3575 = vadd.xlane.f32.xlu0 %v3542
    %v3576 = vpop.xlane.xlu0 %3575
    %3577 = vadd.xlane.f32.xlu0 %v3543
    %v3578 = vpop.xlane.xlu0 %3577
    %3579 = vadd.xlane.f32.xlu0 %v3544
    %v3580 = vpop.xlane.xlu0 %3579
    %3581 = vadd.xlane.f32.xlu0 %v3545
    %v3582 = vpop.xlane.xlu0 %3581
    %3583 = vadd.xlane.f32.xlu0 %v3546
    %v3584 = vpop.xlane.xlu0 %3583
    %3585 = vadd.xlane.f32.xlu0 %v3547
    %v3586 = vpop.xlane.xlu0 %3585
    %3587 = vadd.xlane.f32.xlu0 %v3548
    %v3588 = vpop.xlane.xlu0 %3587
    %3589 = vadd.xlane.f32.xlu0 %v3549
    %v3590 = vpop.xlane.xlu0 %3589
    %3591 = vadd.xlane.f32.xlu0 %v3550
    %v3592 = vpop.xlane.xlu0 %3591
    %3593 = vadd.xlane.f32.xlu0 %v3551
    %v3594 = vpop.xlane.xlu0 %3593
    %3595 = vadd.xlane.f32.xlu0 %v3552
    %v3596 = vpop.xlane.xlu0 %3595
    %3597 = vadd.xlane.f32.xlu0 %v3553
    %v3598 = vpop.xlane.xlu0 %3597
    %3599 = vadd.xlane.f32.xlu0 %v3554
    %v3600 = vpop.xlane.xlu0 %3599
    %3601 = vadd.xlane.f32.xlu0 %v3555
    %v3602 = vpop.xlane.xlu0 %3601
    %3603 = vadd.xlane.f32.xlu0 %v3556
    %v3604 = vpop.xlane.xlu0 %3603
    %3605 = vadd.xlane.f32.xlu0 %v3557
    %v3606 = vpop.xlane.xlu0 %3605
    %3607 = vadd.xlane.f32.xlu0 %v3558
    %v3608 = vpop.xlane.xlu0 %3607
    %3609 = vadd.xlane.f32.xlu0 %v3559
    %v3610 = vpop.xlane.xlu0 %3609
    %3611 = vadd.xlane.f32.xlu0 %v3560
    %v3612 = vpop.xlane.xlu0 %3611
    %3613 = vadd.xlane.f32.xlu0 %v3561
    %v3614 = vpop.xlane.xlu0 %3613
    %3615 = vadd.xlane.f32.xlu0 %v3562
    %v3616 = vpop.xlane.xlu0 %3615
    %3617 = vadd.xlane.f32.xlu0 %v3563
    %v3618 = vpop.xlane.xlu0 %3617
    %3619 = vadd.xlane.f32.xlu0 %v3564
    %v3620 = vpop.xlane.xlu0 %3619
    %3621 = vadd.xlane.f32.xlu0 %v3565
    %v3622 = vpop.xlane.xlu0 %3621
    %3623 = vadd.xlane.f32.xlu0 %v3566
    %v3624 = vpop.xlane.xlu0 %3623
    %3625 = vadd.xlane.f32.xlu0 %v3567
    %v3626 = vpop.xlane.xlu0 %3625
    %3627 = vadd.xlane.f32.xlu0 %v3568
    %v3628 = vpop.xlane.xlu0 %3627
    %3629 = vadd.xlane.f32.xlu0 %v3569
    %v3630 = vpop.xlane.xlu0 %3629
    %3631 = vadd.xlane.f32.xlu0 %v3570
    %v3632 = vpop.xlane.xlu0 %3631
    %3633 = vadd.xlane.f32.xlu0 %v3571
    %v3634 = vpop.xlane.xlu0 %3633
    %3635 = vadd.xlane.f32.xlu0 %v3572
    %v3636 = vpop.xlane.xlu0 %3635
    %v3637 = vlaneseq
    %v3638 = vand.u32 %v3637, 127
    %v3639 = vld [vmem:[#allocation10] sm:$0xff]
    %v3640 = vld [vmem:[#allocation10 + $0x8] sm:$0xff]
    %v3641 = vld [vmem:[#allocation10 + $0x10] sm:$0xff]
    %v3642 = vld [vmem:[#allocation10 + $0x18] sm:$0xff]
    %v3643 = vld [vmem:[#allocation10 + $0x20] sm:$0xff]
    %v3644 = vld [vmem:[#allocation10 + $0x28] sm:$0xff]
    %v3645 = vld [vmem:[#allocation10 + $0x30] sm:$0xff]
    %v3646 = vld [vmem:[#allocation10 + $0x38] sm:$0xff]
    %v3647 = vld [vmem:[#allocation10 + $0x40] sm:$0xff]
    %v3648 = vld [vmem:[#allocation10 + $0x48] sm:$0xff]
    %v3649 = vld [vmem:[#allocation10 + $0x50] sm:$0xff]
    %v3650 = vld [vmem:[#allocation10 + $0x58] sm:$0xff]
    %v3651 = vld [vmem:[#allocation10 + $0x60] sm:$0xff]
    %v3652 = vld [vmem:[#allocation10 + $0x68] sm:$0xff]
    %v3653 = vld [vmem:[#allocation10 + $0x70] sm:$0xff]
    %v3654 = vld [vmem:[#allocation10 + $0x78] sm:$0xff]
    %vm3655 = vcmp.eq.s32.totalorder %v3638, 3
    %v3656 = vsel %vm3655, %v3574, 0.0
    %v3657 = vsel %vm3655, %v3576, 0.0
    %v3658 = vsel %vm3655, %v3578, 0.0
    %v3659 = vsel %vm3655, %v3580, 0.0
    %v3660 = vsel %vm3655, %v3582, 0.0
    %v3661 = vsel %vm3655, %v3584, 0.0
    %v3662 = vsel %vm3655, %v3586, 0.0
    %v3663 = vsel %vm3655, %v3588, 0.0
    %v3664 = vsel %vm3655, %v3590, 0.0
    %v3665 = vsel %vm3655, %v3592, 0.0
    %v3666 = vsel %vm3655, %v3594, 0.0
    %v3667 = vsel %vm3655, %v3596, 0.0
    %v3668 = vsel %vm3655, %v3598, 0.0
    %v3669 = vsel %vm3655, %v3600, 0.0
    %v3670 = vsel %vm3655, %v3602, 0.0
    %v3671 = vsel %vm3655, %v3604, 0.0
    %v3672 = vsel %vm3655, %v3606, 0.0
    %v3673 = vsel %vm3655, %v3608, 0.0
    %v3674 = vsel %vm3655, %v3610, 0.0
    %v3675 = vsel %vm3655, %v3612, 0.0
    %v3676 = vsel %vm3655, %v3614, 0.0
    %v3677 = vsel %vm3655, %v3616, 0.0
    %v3678 = vsel %vm3655, %v3618, 0.0
    %v3679 = vsel %vm3655, %v3620, 0.0
    %v3680 = vsel %vm3655, %v3622, 0.0
    %v3681 = vsel %vm3655, %v3624, 0.0
    %v3682 = vsel %vm3655, %v3626, 0.0
    %v3683 = vsel %vm3655, %v3628, 0.0
    %v3684 = vsel %vm3655, %v3630, 0.0
    %v3685 = vsel %vm3655, %v3632, 0.0
    %v3686 = vsel %vm3655, %v3634, 0.0
    %v3687 = vsel %vm3655, %v3636, 0.0
    %3688 = vmatprep.subr.mxu0 0.0
    %3689 = vmatpush1.msra.mxu0 %v3639
    %3690 = vmatprep.subr.mxu0 0.0
    %3691 = vmatpush1.msra.mxu0 %v3640
    %3692 = vmatprep.subr.mxu0 0.0
    %3693 = vmatpush1.msra.mxu0 %v3641
    %3694 = vmatprep.subr.mxu0 0.0
    %3695 = vmatpush1.msra.mxu0 %v3642
    %3696 = vmatprep.subr.mxu0 0.0
    %3697 = vmatpush1.msra.mxu0 %v3643
    %3698 = vmatprep.subr.mxu0 0.0
    %3699 = vmatpush1.msra.mxu0 %v3644
    %3700 = vmatprep.subr.mxu0 0.0
    %3701 = vmatpush1.msra.mxu0 %v3645
    %3702 = vmatprep.subr.mxu0 0.0
    %3703 = vmatpush1.msra.mxu0 %v3646
    %3704 = vmatprep.subr.mxu0 0.0
    %3705 = vmatpush1.msra.mxu0 %v3647
    %3706 = vmatprep.subr.mxu0 0.0
    %3707 = vmatpush1.msra.mxu0 %v3648
    %3708 = vmatprep.subr.mxu0 0.0
    %3709 = vmatpush1.msra.mxu0 %v3649
    %3710 = vmatprep.subr.mxu0 0.0
    %3711 = vmatpush1.msra.mxu0 %v3650
    %3712 = vmatprep.subr.mxu0 0.0
    %3713 = vmatpush1.msra.mxu0 %v3651
    %3714 = vmatprep.subr.mxu0 0.0
    %3715 = vmatpush1.msra.mxu0 %v3652
    %3716 = vmatprep.subr.mxu0 0.0
    %3717 = vmatpush1.msra.mxu0 %v3653
    %3718 = vmatprep.subr.mxu0 0.0
    %3719 = vmatpush1.msra.mxu0 %v3654
    %3720 = vmatprep.subr.mxu0 0.0
    %3721 = vmatpush1.msra.mxu0 0.0
    %3722 = vmatprep.subr.mxu0 0.0
    %3723 = vmatpush1.msra.mxu0 0.0
    %3724 = vmatprep.subr.mxu0 0.0
    %3725 = vmatpush1.msra.mxu0 0.0
    %3726 = vmatprep.subr.mxu0 0.0
    %3727 = vmatpush1.msra.mxu0 0.0
    %3728 = vmatprep.subr.mxu0 0.0
    %3729 = vmatpush1.msra.mxu0 0.0
    %3730 = vmatprep.subr.mxu0 0.0
    %3731 = vmatpush1.msra.mxu0 0.0
    %3732 = vmatprep.subr.mxu0 0.0
    %3733 = vmatpush1.msra.mxu0 0.0
    %3734 = vmatprep.subr.mxu0 0.0
    %3735 = vmatpush1.msra.mxu0 0.0
    %3736 = vmatprep.subr.mxu0 0.0
    %3737 = vmatpush1.msra.mxu0 0.0
    %3738 = vmatprep.subr.mxu0 0.0
    %3739 = vmatpush1.msra.mxu0 0.0
    %3740 = vmatprep.subr.mxu0 0.0
    %3741 = vmatpush1.msra.mxu0 0.0
    %3742 = vmatprep.subr.mxu0 0.0
    %3743 = vmatpush1.msra.mxu0 0.0
    %3744 = vmatprep.subr.mxu0 0.0
    %3745 = vmatpush1.msra.mxu0 0.0
    %3746 = vmatprep.subr.mxu0 0.0
    %3747 = vmatpush1.msra.mxu0 0.0
    %3748 = vmatprep.subr.mxu0 0.0
    %3749 = vmatpush1.msra.mxu0 0.0
    %3750 = vmatprep.subr.mxu0 0.0
    %3751 = vmatpush1.msra.mxu0 0.0
    %3752 = vmatprep.mubr.f32.mxu0 0.0
    %3753 = vmatmul.mubr.f32.gmra.mrb[0].mxu0 %v3502
    %v3754 = vpop.f32.mrb[0].mxu0
    %v3755 = vadd.f32 %v3656, %v3754
    %v3756 = vpop.f32.mrb[0].mxu0
    %3757 = vmatprep.mubr.f32.mxu0 0.0
    %3758 = vmatmul.mubr.f32.gmra.mrb[0].mxu0 %v3503
    %v3759 = vpop.f32.mrb[0].mxu0
    %v3760 = vadd.f32 %v3657, %v3759
    %v3761 = vpop.f32.mrb[0].mxu0
    %3762 = vmatprep.mubr.f32.mxu0 0.0
    %3763 = vmatmul.mubr.f32.gmra.mrb[0].mxu0 %v3504
    %v3764 = vpop.f32.mrb[0].mxu0
    %v3765 = vadd.f32 %v3658, %v3764
    %v3766 = vpop.f32.mrb[0].mxu0
    %3767 = vmatprep.mubr.f32.mxu0 0.0
    %3768 = vmatmul.mubr.f32.gmra.mrb[0].mxu0 %v3505
    %v3769 = vpop.f32.mrb[0].mxu0
    %v3770 = vadd.f32 %v3659, %v3769
    %v3771 = vpop.f32.mrb[0].mxu0
    %3772 = vmatprep.mubr.f32.mxu0 0.0
    %3773 = vmatmul.mubr.f32.gmra.mrb[0].mxu0 %v3506
    %v3774 = vpop.f32.mrb[0].mxu0
    %v3775 = vadd.f32 %v3660, %v3774
    %v3776 = vpop.f32.mrb[0].mxu0
    %3777 = vmatprep.mubr.f32.mxu0 0.0
    %3778 = vmatmul.mubr.f32.gmra.mrb[0].mxu0 %v3507
    %v3779 = vpop.f32.mrb[0].mxu0
    %v3780 = vadd.f32 %v3661, %v3779
    %v3781 = vpop.f32.mrb[0].mxu0
    %3782 = vmatprep.mubr.f32.mxu0 0.0
    %3783 = vmatmul.mubr.f32.gmra.mrb[0].mxu0 %v3508
    %v3784 = vpop.f32.mrb[0].mxu0
    %v3785 = vadd.f32 %v3662, %v3784
    %v3786 = vpop.f32.mrb[0].mxu0
    %3787 = vmatprep.mubr.f32.mxu0 0.0
    %3788 = vmatmul.mubr.f32.gmra.mrb[0].mxu0 %v3509
    %v3789 = vpop.f32.mrb[0].mxu0
    %v3790 = vadd.f32 %v3663, %v3789
    %v3791 = vpop.f32.mrb[0].mxu0
    %3792 = vmatprep.mubr.f32.mxu0 0.0
    %3793 = vmatmul.mubr.f32.gmra.mrb[0].mxu0 %v3510
    %v3794 = vpop.f32.mrb[0].mxu0
    %v3795 = vadd.f32 %v3664, %v3794
    %v3796 = vpop.f32.mrb[0].mxu0
    %3797 = vmatprep.mubr.f32.mxu0 0.0
    %3798 = vmatmul.mubr.f32.gmra.mrb[0].mxu0 %v3511
    %v3799 = vpop.f32.mrb[0].mxu0
    %v3800 = vadd.f32 %v3665, %v3799
    %v3801 = vpop.f32.mrb[0].mxu0
    %3802 = vmatprep.mubr.f32.mxu0 0.0
    %3803 = vmatmul.mubr.f32.gmra.mrb[0].mxu0 %v3512
    %v3804 = vpop.f32.mrb[0].mxu0
    %v3805 = vadd.f32 %v3666, %v3804
    %v3806 = vpop.f32.mrb[0].mxu0
    %3807 = vmatprep.mubr.f32.mxu0 0.0
    %3808 = vmatmul.mubr.f32.gmra.mrb[0].mxu0 %v3513
    %v3809 = vpop.f32.mrb[0].mxu0
    %v3810 = vadd.f32 %v3667, %v3809
    %v3811 = vpop.f32.mrb[0].mxu0
    %3812 = vmatprep.mubr.f32.mxu0 0.0
    %3813 = vmatmul.mubr.f32.gmra.mrb[0].mxu0 %v3514
    %v3814 = vpop.f32.mrb[0].mxu0
    %v3815 = vadd.f32 %v3668, %v3814
    %v3816 = vpop.f32.mrb[0].mxu0
    %3817 = vmatprep.mubr.f32.mxu0 0.0
    %3818 = vmatmul.mubr.f32.gmra.mrb[0].mxu0 %v3515
    %v3819 = vpop.f32.mrb[0].mxu0
    %v3820 = vadd.f32 %v3669, %v3819
    %v3821 = vpop.f32.mrb[0].mxu0
    %3822 = vmatprep.mubr.f32.mxu0 0.0
    %3823 = vmatmul.mubr.f32.gmra.mrb[0].mxu0 %v3516
    %v3824 = vpop.f32.mrb[0].mxu0
    %v3825 = vadd.f32 %v3670, %v3824
    %v3826 = vpop.f32.mrb[0].mxu0
    %3827 = vmatprep.mubr.f32.mxu0 0.0
    %3828 = vmatmul.mubr.f32.gmra.mrb[0].mxu0 %v3517
    %v3829 = vpop.f32.mrb[0].mxu0
    %v3830 = vadd.f32 %v3671, %v3829
    %v3831 = vpop.f32.mrb[0].mxu0
    %3832 = vmatprep.mubr.f32.mxu0 0.0
    %3833 = vmatmul.mubr.f32.gmra.mrb[0].mxu0 %v3518
    %v3834 = vpop.f32.mrb[0].mxu0
    %v3835 = vadd.f32 %v3672, %v3834
    %v3836 = vpop.f32.mrb[0].mxu0
    %3837 = vmatprep.mubr.f32.mxu0 0.0
    %3838 = vmatmul.mubr.f32.gmra.mrb[0].mxu0 %v3519
    %v3839 = vpop.f32.mrb[0].mxu0
    %v3840 = vadd.f32 %v3673, %v3839
    %v3841 = vpop.f32.mrb[0].mxu0
    %3842 = vmatprep.mubr.f32.mxu0 0.0
    %3843 = vmatmul.mubr.f32.gmra.mrb[0].mxu0 %v3520
    %v3844 = vpop.f32.mrb[0].mxu0
    %v3845 = vadd.f32 %v3674, %v3844
    %v3846 = vpop.f32.mrb[0].mxu0
    %3847 = vmatprep.mubr.f32.mxu0 0.0
    %3848 = vmatmul.mubr.f32.gmra.mrb[0].mxu0 %v3521
    %v3849 = vpop.f32.mrb[0].mxu0
    %v3850 = vadd.f32 %v3675, %v3849
    %v3851 = vpop.f32.mrb[0].mxu0
    %3852 = vmatprep.mubr.f32.mxu0 0.0
    %3853 = vmatmul.mubr.f32.gmra.mrb[0].mxu0 %v3522
    %v3854 = vpop.f32.mrb[0].mxu0
    %v3855 = vadd.f32 %v3676, %v3854
    %v3856 = vpop.f32.mrb[0].mxu0
    %3857 = vmatprep.mubr.f32.mxu0 0.0
    %3858 = vmatmul.mubr.f32.gmra.mrb[0].mxu0 %v3523
    %v3859 = vpop.f32.mrb[0].mxu0
    %v3860 = vadd.f32 %v3677, %v3859
    %v3861 = vpop.f32.mrb[0].mxu0
    %3862 = vmatprep.mubr.f32.mxu0 0.0
    %3863 = vmatmul.mubr.f32.gmra.mrb[0].mxu0 %v3524
    %v3864 = vpop.f32.mrb[0].mxu0
    %v3865 = vadd.f32 %v3678, %v3864
    %v3866 = vpop.f32.mrb[0].mxu0
    %3867 = vmatprep.mubr.f32.mxu0 0.0
    %3868 = vmatmul.mubr.f32.gmra.mrb[0].mxu0 %v3525
    %v3869 = vpop.f32.mrb[0].mxu0
    %v3870 = vadd.f32 %v3679, %v3869
    %v3871 = vpop.f32.mrb[0].mxu0
    %3872 = vmatprep.mubr.f32.mxu0 0.0
    %3873 = vmatmul.mubr.f32.gmra.mrb[0].mxu0 %v3526
    %v3874 = vpop.f32.mrb[0].mxu0
    %v3875 = vadd.f32 %v3680, %v3874
    %v3876 = vpop.f32.mrb[0].mxu0
    %3877 = vmatprep.mubr.f32.mxu0 0.0
    %3878 = vmatmul.mubr.f32.gmra.mrb[0].mxu0 %v3527
    %v3879 = vpop.f32.mrb[0].mxu0
    %v3880 = vadd.f32 %v3681, %v3879
    %v3881 = vpop.f32.mrb[0].mxu0
    %3882 = vmatprep.mubr.f32.mxu0 0.0
    %3883 = vmatmul.mubr.f32.gmra.mrb[0].mxu0 %v3528
    %v3884 = vpop.f32.mrb[0].mxu0
    %v3885 = vadd.f32 %v3682, %v3884
    %v3886 = vpop.f32.mrb[0].mxu0
    %3887 = vmatprep.mubr.f32.mxu0 0.0
    %3888 = vmatmul.mubr.f32.gmra.mrb[0].mxu0 %v3529
    %v3889 = vpop.f32.mrb[0].mxu0
    %v3890 = vadd.f32 %v3683, %v3889
    %v3891 = vpop.f32.mrb[0].mxu0
    %3892 = vmatprep.mubr.f32.mxu0 0.0
    %3893 = vmatmul.mubr.f32.gmra.mrb[0].mxu0 %v3530
    %v3894 = vpop.f32.mrb[0].mxu0
    %v3895 = vadd.f32 %v3684, %v3894
    %v3896 = vpop.f32.mrb[0].mxu0
    %3897 = vmatprep.mubr.f32.mxu0 0.0
    %3898 = vmatmul.mubr.f32.gmra.mrb[0].mxu0 %v3531
    %v3899 = vpop.f32.mrb[0].mxu0
    %v3900 = vadd.f32 %v3685, %v3899
    %v3901 = vpop.f32.mrb[0].mxu0
    %3902 = vmatprep.mubr.f32.mxu0 0.0
    %3903 = vmatmul.mubr.f32.gmra.mrb[0].mxu0 %v3532
    %v3904 = vpop.f32.mrb[0].mxu0
    %v3905 = vadd.f32 %v3686, %v3904
    %v3906 = vpop.f32.mrb[0].mxu0
    %3907 = vmatprep.mubr.f32.mxu0 0.0
    %3908 = vmatmul.mubr.f32.gmra.mrb[0].mxu0 %v3533
    %v3909 = vpop.f32.mrb[0].mxu0
    %v3910 = vadd.f32 %v3687, %v3909
    %v3911 = vpop.f32.mrb[0].mxu0
    %3912 = vdwg.mxu0
    %v3913 = vld [vmem:[%s12] sm:$0x1]
    %v3915 = vlaneseq
    %v3916 = vshrl.u32 %v3915, 7
    %v3917 = vsub.s32 0, %v3916
    %v3918 = vrot.slane %v3913, %v3917
    %v3920 = vadd.f32 %v3755, %v3918
    %v3921 = vadd.f32 %v3760, %v3918
    %v3922 = vadd.f32 %v3765, %v3918
    %v3923 = vadd.f32 %v3770, %v3918
    %v3924 = vadd.f32 %v3775, %v3918
    %v3925 = vadd.f32 %v3780, %v3918
    %v3926 = vadd.f32 %v3785, %v3918
    %v3927 = vadd.f32 %v3790, %v3918
    %v3928 = vadd.f32 %v3795, %v3918
    %v3929 = vadd.f32 %v3800, %v3918
    %v3930 = vadd.f32 %v3805, %v3918
    %v3931 = vadd.f32 %v3810, %v3918
    %v3932 = vadd.f32 %v3815, %v3918
    %v3933 = vadd.f32 %v3820, %v3918
    %v3934 = vadd.f32 %v3825, %v3918
    %v3935 = vadd.f32 %v3830, %v3918
    %v3936 = vadd.f32 %v3835, %v3918
    %v3937 = vadd.f32 %v3840, %v3918
    %v3938 = vadd.f32 %v3845, %v3918
    %v3939 = vadd.f32 %v3850, %v3918
    %v3940 = vadd.f32 %v3855, %v3918
    %v3941 = vadd.f32 %v3860, %v3918
    %v3942 = vadd.f32 %v3865, %v3918
    %v3943 = vadd.f32 %v3870, %v3918
    %v3944 = vadd.f32 %v3875, %v3918
    %v3945 = vadd.f32 %v3880, %v3918
    %v3946 = vadd.f32 %v3885, %v3918
    %v3947 = vadd.f32 %v3890, %v3918
    %v3948 = vadd.f32 %v3895, %v3918
    %v3949 = vadd.f32 %v3900, %v3918
    %v3950 = vadd.f32 %v3905, %v3918
    %v3951 = vadd.f32 %v3910, %v3918
    %3952 = vst [vmem:[#allocation11] sm:$0xff] %v3920
    %3953 = vst [vmem:[#allocation11 + $0x8] sm:$0xff] %v3921
    %3954 = vst [vmem:[#allocation11 + $0x10] sm:$0xff] %v3922
    %3955 = vst [vmem:[#allocation11 + $0x18] sm:$0xff] %v3923
    %3956 = vst [vmem:[#allocation11 + $0x20] sm:$0xff] %v3924
    %3957 = vst [vmem:[#allocation11 + $0x28] sm:$0xff] %v3925
    %3958 = vst [vmem:[#allocation11 + $0x30] sm:$0xff] %v3926
    %3959 = vst [vmem:[#allocation11 + $0x38] sm:$0xff] %v3927
    %3960 = vst [vmem:[#allocation11 + $0x40] sm:$0xff] %v3928
    %3961 = vst [vmem:[#allocation11 + $0x48] sm:$0xff] %v3929
    %3962 = vst [vmem:[#allocation11 + $0x50] sm:$0xff] %v3930
    %3963 = vst [vmem:[#allocation11 + $0x58] sm:$0xff] %v3931
    %3964 = vst [vmem:[#allocation11 + $0x60] sm:$0xff] %v3932
    %3965 = vst [vmem:[#allocation11 + $0x68] sm:$0xff] %v3933
    %3966 = vst [vmem:[#allocation11 + $0x70] sm:$0xff] %v3934
    %3967 = vst [vmem:[#allocation11 + $0x78] sm:$0xff] %v3935
    %3968 = vst [vmem:[#allocation11 + $0x80] sm:$0xff] %v3936
    %3969 = vst [vmem:[#allocation11 + $0x88] sm:$0xff] %v3937
    %3970 = vst [vmem:[#allocation11 + $0x90] sm:$0xff] %v3938
    %3971 = vst [vmem:[#allocation11 + $0x98] sm:$0xff] %v3939
    %3972 = vst [vmem:[#allocation11 + $0xa0] sm:$0xff] %v3940
    %3973 = vst [vmem:[#allocation11 + $0xa8] sm:$0xff] %v3941
    %3974 = vst [vmem:[#allocation11 + $0xb0] sm:$0xff] %v3942
    %3975 = vst [vmem:[#allocation11 + $0xb8] sm:$0xff] %v3943
    %3976 = vst [vmem:[#allocation11 + $0xc0] sm:$0xff] %v3944
    %3977 = vst [vmem:[#allocation11 + $0xc8] sm:$0xff] %v3945
    %3978 = vst [vmem:[#allocation11 + $0xd0] sm:$0xff] %v3946
    %3979 = vst [vmem:[#allocation11 + $0xd8] sm:$0xff] %v3947
    %3980 = vst [vmem:[#allocation11 + $0xe0] sm:$0xff] %v3948
    %3981 = vst [vmem:[#allocation11 + $0xe8] sm:$0xff] %v3949
    %3982 = vst [vmem:[#allocation11 + $0xf0] sm:$0xff] %v3950
    %3983 = vst [vmem:[#allocation11 + $0xf8] sm:$0xff] %v3951
    // Predicated region
    $region74: #{tpu_custom_call.1} parent=1 // pred_check
      _
    $region75: #{tpu_custom_call.1} parent=1 // pred_check_branch
      %3985 = sbr.rel (0) target = $region77
    $region76: #{tpu_custom_call.1} parent=1 // pred_region
      %s3987 = ssub.s32 4096, 4096
      %3988 = vsyncadd [#allocation4], %s3987
      %s3989 = sshll.u32 [#allocation11], 4
      %s3990 = int_to_ptr.vmem [resolvable:$true] %s3989
      %3995 = dma.vmem_to_hbm [thread:$0]  %s3990, 4096, %s13, [#allocation4], 128, 128, 8
    $region77: #{tpu_custom_call.1} parent=1 // pred_fallthru
      _
    // Predicated region
    $region78: #{tpu_custom_call.1} parent=1 // pred_check
      _
    $region79: #{tpu_custom_call.1} parent=1 // pred_check_branch
      %3997 = sbr.rel (0) target = $region81
    $region80: #{tpu_custom_call.1} parent=1 // pred_region
      %3998 = dma.done [#allocation4], 4096
    $region81: #{tpu_custom_call.1} parent=1 // pred_fallthru
      _
    %3999 = vsyncpa [#allocation3], 1
    %4000 = vsyncpa [#allocation6], 1
    %4001 = vsyncpa [#allocation9], 1
    %4002 = vsyncpa [#allocation4], 1

// kernel: tpu_custom_call.1
$region0: #{tpu_custom_call.1}
  #allocation0 [shape = 'u32[]', space=smem, size = 0x4, offset = 0x4, fixed_abs, tag = 'smem constant byte address 0x4 - core index']
  #allocation1 [shape = 'u32[144,128]{1,0:T(1,128)}', space=vmem, size = 0x12000, scoped, tag = 'internal scratch']
  %s0 = inlined_call_operand.hbm [shape: f32[256,128], index: 0, kind: input, shape index: {}]
  %s1 = inlined_call_operand.hbm [shape: f32[128,128], index: 1, kind: input, shape index: {}]
  %s2 = inlined_call_operand.hbm [shape: f32[7,128,128], index: 2, kind: input, shape index: {}]
  %s3 = inlined_call_operand.vmem [shape: f32[8,1,128], index: 3, kind: input, shape index: {}]
  %s4 = inlined_call_operand.hbm [shape: f32[128,128], index: 4, kind: input, shape index: {}]
  %s5 = inlined_call_operand.hbm [shape: f32[128,128], index: 5, kind: input, shape index: {}]
  %s6 = inlined_call_operand.vmem [shape: f32[1,128], index: 6, kind: input, shape index: {}]
  %s7 = inlined_call_operand.hbm [shape: f32[128,128], index: 7, kind: input, shape index: {}]
  %s8 = inlined_call_operand.hbm [shape: f32[128,128], index: 8, kind: input, shape index: {}]
  %s9 = inlined_call_operand.vmem [shape: f32[1,128], index: 9, kind: input, shape index: {}]
  %s10 = inlined_call_operand.hbm [shape: f32[128,128], index: 10, kind: input, shape index: {}]
  %s11 = inlined_call_operand.vmem [shape: f32[1,128], index: 11, kind: input, shape index: {}]
  %s12 = inlined_call_operand.vmem [shape: f32[1,128], index: 12, kind: input, shape index: {}]
  %s13 = inlined_call_operand.hbm [shape: f32[256,128], index: 13, kind: output, shape index: {}]
  %s14 = sld [smem:[#allocation0]]
  $region94: #{tpu_custom_call.1} parent=0
    _
  %s16 = ssub.s32 1, %s14
  %s17 = scalar_select 0, %s16, %s14
  $region1: #{tpu_custom_call.1} parent=0
    #allocation2 [shape = 'u8[131072]{0}', space=vmem, size = 0x20000, scoped, tag = 'input window, operand 0, single buffered']
    #allocation3 [shape = 's32[1]{0}', space=sflag, size = 0x4, scoped, tag = 'scoped memory for tpu_custom_call.1']
    #allocation4 [shape = 's32[1]{0}', space=sflag, size = 0x4, scoped, tag = 'scoped memory for tpu_custom_call.1']
    #allocation5 [shape = 'u8[65536]{0}', space=vmem, size = 0x10000, scoped, tag = 'input window, operand 1, single buffered']
    #allocation6 [shape = 's32[1]{0}', space=sflag, size = 0x4, scoped, tag = 'scoped memory for tpu_custom_call.1']
    #allocation7 [shape = 'u8[458752]{0}', space=vmem, size = 0x70000, scoped, tag = 'input window, operand 2, single buffered']
    #allocation8 [shape = 'u8[65536]{0}', space=vmem, size = 0x10000, scoped, tag = 'input window, operand 4, single buffered']
    #allocation9 [shape = 's32[1]{0}', space=sflag, size = 0x4, scoped, tag = 'scoped memory for tpu_custom_call.1']
    #allocation10 [shape = 'u8[65536]{0}', space=vmem, size = 0x10000, scoped, tag = 'input window, operand 5, single buffered']
    #allocation11 [shape = 'u8[65536]{0}', space=vmem, size = 0x10000, scoped, tag = 'input window, operand 7, single buffered']
    #allocation12 [shape = 's32[1]{0}', space=sflag, size = 0x4, scoped, tag = 'scoped memory for tpu_custom_call.1']
    #allocation13 [shape = 'u8[65536]{0}', space=vmem, size = 0x10000, scoped, tag = 'input window, operand 8, single buffered']
    #allocation14 [shape = 'u8[65536]{0}', space=vmem, size = 0x10000, scoped, tag = 'input window, operand 10, single buffered']
    #allocation15 [shape = 's32[1]{0}', space=sflag, size = 0x4, scoped, tag = 'scoped memory for tpu_custom_call.1']
    #allocation16 [shape = 'u8[131072]{0}', space=vmem, size = 0x20000, scoped, tag = 'output window, operand 0, single buffered']
    %18 = vsyncpa [#allocation3], 0
    %19 = vsyncpa [#allocation6], 0
    %20 = vsyncpa [#allocation9], 0
    %21 = vsyncpa [#allocation12], 0
    %22 = vsyncpa [#allocation15], 0
    %23 = vsyncpa [#allocation4], 0
    // Predicated region
    $region2: #{tpu_custom_call.1} parent=1 // pred_check
      _
    $region3: #{tpu_custom_call.1} parent=1 // pred_check_branch
      %25 = sbr.rel (0) target = $region5
    $region4: #{tpu_custom_call.1} parent=1 // pred_region
      %s27 = ssub.s32 4096, 4096
      %28 = vsyncadd [#allocation3], %s27
      %s29 = sshll.u32 [#allocation2], 4
      %s30 = int_to_ptr.vmem [resolvable:$true] %s29
      %35 = dma.hbm_to_vmem [thread:$0]  %s0, 4096, %s30, [#allocation3], 128, 128, 8
    $region5: #{tpu_custom_call.1} parent=1 // pred_fallthru
      _
    // Predicated region
    $region6: #{tpu_custom_call.1} parent=1 // pred_check
      _
    $region7: #{tpu_custom_call.1} parent=1 // pred_check_branch
      %37 = sbr.rel (0) target = $region9
    $region8: #{tpu_custom_call.1} parent=1 // pred_region
      %s39 = ssub.s32 2048, 2048
      %40 = vsyncadd [#allocation6], %s39
      %s41 = sshll.u32 [#allocation5], 4
      %s42 = int_to_ptr.vmem [resolvable:$true] %s41
      %47 = dma.hbm_to_vmem [thread:$0]  %s1, 2048, %s42, [#allocation6], 128, 128, 8
    $region9: #{tpu_custom_call.1} parent=1 // pred_fallthru
      _
    // Predicated region
    $region10: #{tpu_custom_call.1} parent=1 // pred_check
      _
    $region11: #{tpu_custom_call.1} parent=1 // pred_check_branch
      %49 = sbr.rel (0) target = $region13
    $region12: #{tpu_custom_call.1} parent=1 // pred_region
      %s51 = ssub.s32 14336, 14336
      %52 = vsyncadd [#allocation6], %s51
      %s53 = sshll.u32 [#allocation7], 4
      %s54 = int_to_ptr.vmem [resolvable:$true] %s53
      %59 = dma.hbm_to_vmem [thread:$0]  %s2, 14336, %s54, [#allocation6], 128, 128, 8
    $region13: #{tpu_custom_call.1} parent=1 // pred_fallthru
      _
    // Predicated region
    $region14: #{tpu_custom_call.1} parent=1 // pred_check
      _
    $region15: #{tpu_custom_call.1} parent=1 // pred_check_branch
      %61 = sbr.rel (0) target = $region17
    $region16: #{tpu_custom_call.1} parent=1 // pred_region
      _
    $region17: #{tpu_custom_call.1} parent=1 // pred_fallthru
      _
    // Predicated region
    $region18: #{tpu_custom_call.1} parent=1 // pred_check
      _
    $region19: #{tpu_custom_call.1} parent=1 // pred_check_branch
      %63 = sbr.rel (0) target = $region21
    $region20: #{tpu_custom_call.1} parent=1 // pred_region
      %s65 = ssub.s32 2048, 2048
      %66 = vsyncadd [#allocation9], %s65
      %s67 = sshll.u32 [#allocation8], 4
      %s68 = int_to_ptr.vmem [resolvable:$true] %s67
      %73 = dma.hbm_to_vmem [thread:$0]  %s4, 2048, %s68, [#allocation9], 128, 128, 8
    $region21: #{tpu_custom_call.1} parent=1 // pred_fallthru
      _
    // Predicated region
    $region22: #{tpu_custom_call.1} parent=1 // pred_check
      _
    $region23: #{tpu_custom_call.1} parent=1 // pred_check_branch
      %75 = sbr.rel (0) target = $region25
    $region24: #{tpu_custom_call.1} parent=1 // pred_region
      %s77 = ssub.s32 2048, 2048
      %78 = vsyncadd [#allocation9], %s77
      %s79 = sshll.u32 [#allocation10], 4
      %s80 = int_to_ptr.vmem [resolvable:$true] %s79
      %85 = dma.hbm_to_vmem [thread:$0]  %s5, 2048, %s80, [#allocation9], 128, 128, 8
    $region25: #{tpu_custom_call.1} parent=1 // pred_fallthru
      _
    // Predicated region
    $region26: #{tpu_custom_call.1} parent=1 // pred_check
      _
    $region27: #{tpu_custom_call.1} parent=1 // pred_check_branch
      %87 = sbr.rel (0) target = $region29
    $region28: #{tpu_custom_call.1} parent=1 // pred_region
      _
    $region29: #{tpu_custom_call.1} parent=1 // pred_fallthru
      _
    // Predicated region
    $region30: #{tpu_custom_call.1} parent=1 // pred_check
      _
    $region31: #{tpu_custom_call.1} parent=1 // pred_check_branch
      %89 = sbr.rel (0) target = $region33
    $region32: #{tpu_custom_call.1} parent=1 // pred_region
      %s91 = ssub.s32 2048, 2048
      %92 = vsyncadd [#allocation12], %s91
      %s93 = sshll.u32 [#allocation11], 4
      %s94 = int_to_ptr.vmem [resolvable:$true] %s93
      %99 = dma.hbm_to_vmem [thread:$0]  %s7, 2048, %s94, [#allocation12], 128, 128, 8
    $region33: #{tpu_custom_call.1} parent=1 // pred_fallthru
      _
    // Predicated region
    $region34: #{tpu_custom_call.1} parent=1 // pred_check
      _
    $region35: #{tpu_custom_call.1} parent=1 // pred_check_branch
      %101 = sbr.rel (0) target = $region37
    $region36: #{tpu_custom_call.1} parent=1 // pred_region
      %s103 = ssub.s32 2048, 2048
      %104 = vsyncadd [#allocation12], %s103
      %s105 = sshll.u32 [#allocation13], 4
      %s106 = int_to_ptr.vmem [resolvable:$true] %s105
      %111 = dma.hbm_to_vmem [thread:$0]  %s8, 2048, %s106, [#allocation12], 128, 128, 8
    $region37: #{tpu_custom_call.1} parent=1 // pred_fallthru
      _
    // Predicated region
    $region38: #{tpu_custom_call.1} parent=1 // pred_check
      _
    $region39: #{tpu_custom_call.1} parent=1 // pred_check_branch
      %113 = sbr.rel (0) target = $region41
    $region40: #{tpu_custom_call.1} parent=1 // pred_region
      _
    $region41: #{tpu_custom_call.1} parent=1 // pred_fallthru
      _
    // Predicated region
    $region42: #{tpu_custom_call.1} parent=1 // pred_check
      _
    $region43: #{tpu_custom_call.1} parent=1 // pred_check_branch
      %115 = sbr.rel (0) target = $region45
    $region44: #{tpu_custom_call.1} parent=1 // pred_region
      %s117 = ssub.s32 2048, 2048
      %118 = vsyncadd [#allocation15], %s117
      %s119 = sshll.u32 [#allocation14], 4
      %s120 = int_to_ptr.vmem [resolvable:$true] %s119
      %125 = dma.hbm_to_vmem [thread:$0]  %s10, 2048, %s120, [#allocation15], 128, 128, 8
    $region45: #{tpu_custom_call.1} parent=1 // pred_fallthru
      _
    // Predicated region
    $region46: #{tpu_custom_call.1} parent=1 // pred_check
      _
    $region47: #{tpu_custom_call.1} parent=1 // pred_check_branch
      %127 = sbr.rel (0) target = $region49
    $region48: #{tpu_custom_call.1} parent=1 // pred_region
      _
    $region49: #{tpu_custom_call.1} parent=1 // pred_fallthru
      _
    // Predicated region
    $region50: #{tpu_custom_call.1} parent=1 // pred_check
      _
    $region51: #{tpu_custom_call.1} parent=1 // pred_check_branch
      %129 = sbr.rel (0) target = $region53
    $region52: #{tpu_custom_call.1} parent=1 // pred_region
      _
    $region53: #{tpu_custom_call.1} parent=1 // pred_fallthru
      _
    // Predicated region
    $region54: #{tpu_custom_call.1} parent=1 // pred_check
      _
    $region55: #{tpu_custom_call.1} parent=1 // pred_check_branch
      %131 = sbr.rel (0) target = $region57
    $region56: #{tpu_custom_call.1} parent=1 // pred_region
      %132 = dma.done [#allocation3], 4096
    $region57: #{tpu_custom_call.1} parent=1 // pred_fallthru
      _
    // Predicated region
    $region58: #{tpu_custom_call.1} parent=1 // pred_check
      _
    $region59: #{tpu_custom_call.1} parent=1 // pred_check_branch
      %134 = sbr.rel (0) target = $region61
    $region60: #{tpu_custom_call.1} parent=1 // pred_region
      %135 = dma.done [#allocation6], 2048
    $region61: #{tpu_custom_call.1} parent=1 // pred_fallthru
      _
    // Predicated region
    $region62: #{tpu_custom_call.1} parent=1 // pred_check
      _
    $region63: #{tpu_custom_call.1} parent=1 // pred_check_branch
      %137 = sbr.rel (0) target = $region65
    $region64: #{tpu_custom_call.1} parent=1 // pred_region
      %138 = dma.done [#allocation6], 14336
    $region65: #{tpu_custom_call.1} parent=1 // pred_fallthru
      _
    // Predicated region
    $region66: #{tpu_custom_call.1} parent=1 // pred_check
      _
    $region67: #{tpu_custom_call.1} parent=1 // pred_check_branch
      %140 = sbr.rel (0) target = $region69
    $region68: #{tpu_custom_call.1} parent=1 // pred_region
      %141 = dma.done [#allocation9], 2048
    $region69: #{tpu_custom_call.1} parent=1 // pred_fallthru
      _
    // Predicated region
    $region70: #{tpu_custom_call.1} parent=1 // pred_check
      _
    $region71: #{tpu_custom_call.1} parent=1 // pred_check_branch
      %143 = sbr.rel (0) target = $region73
    $region72: #{tpu_custom_call.1} parent=1 // pred_region
      %144 = dma.done [#allocation9], 2048
    $region73: #{tpu_custom_call.1} parent=1 // pred_fallthru
      _
    // Predicated region
    $region74: #{tpu_custom_call.1} parent=1 // pred_check
      _
    $region75: #{tpu_custom_call.1} parent=1 // pred_check_branch
      %146 = sbr.rel (0) target = $region77
    $region76: #{tpu_custom_call.1} parent=1 // pred_region
      %147 = dma.done [#allocation12], 2048
    $region77: #{tpu_custom_call.1} parent=1 // pred_fallthru
      _
    // Predicated region
    $region78: #{tpu_custom_call.1} parent=1 // pred_check
      _
    $region79: #{tpu_custom_call.1} parent=1 // pred_check_branch
      %149 = sbr.rel (0) target = $region81
    $region80: #{tpu_custom_call.1} parent=1 // pred_region
      %150 = dma.done [#allocation12], 2048
    $region81: #{tpu_custom_call.1} parent=1 // pred_fallthru
      _
    // Predicated region
    $region82: #{tpu_custom_call.1} parent=1 // pred_check
      _
    $region83: #{tpu_custom_call.1} parent=1 // pred_check_branch
      %152 = sbr.rel (0) target = $region85
    $region84: #{tpu_custom_call.1} parent=1 // pred_region
      %153 = dma.done [#allocation15], 2048
    $region85: #{tpu_custom_call.1} parent=1 // pred_fallthru
      _
    %v154 = vld [vmem:[#allocation2] sm:$0xff]
    %v155 = vld [vmem:[#allocation2 + $0x8] sm:$0xff]
    %v156 = vld [vmem:[#allocation2 + $0x10] sm:$0xff]
    %v157 = vld [vmem:[#allocation2 + $0x18] sm:$0xff]
    %v158 = vld [vmem:[#allocation2 + $0x20] sm:$0xff]
    %v159 = vld [vmem:[#allocation2 + $0x28] sm:$0xff]
    %v160 = vld [vmem:[#allocation2 + $0x30] sm:$0xff]
    %v161 = vld [vmem:[#allocation2 + $0x38] sm:$0xff]
    %v162 = vld [vmem:[#allocation2 + $0x40] sm:$0xff]
    %v163 = vld [vmem:[#allocation2 + $0x48] sm:$0xff]
    %v164 = vld [vmem:[#allocation2 + $0x50] sm:$0xff]
    %v165 = vld [vmem:[#allocation2 + $0x58] sm:$0xff]
    %v166 = vld [vmem:[#allocation2 + $0x60] sm:$0xff]
    %v167 = vld [vmem:[#allocation2 + $0x68] sm:$0xff]
    %v168 = vld [vmem:[#allocation2 + $0x70] sm:$0xff]
    %v169 = vld [vmem:[#allocation2 + $0x78] sm:$0xff]
    %v170 = vld [vmem:[#allocation2 + $0x80] sm:$0xff]
    %v171 = vld [vmem:[#allocation2 + $0x88] sm:$0xff]
    %v172 = vld [vmem:[#allocation2 + $0x90] sm:$0xff]
    %v173 = vld [vmem:[#allocation2 + $0x98] sm:$0xff]
    %v174 = vld [vmem:[#allocation2 + $0xa0] sm:$0xff]
    %v175 = vld [vmem:[#allocation2 + $0xa8] sm:$0xff]
    %v176 = vld [vmem:[#allocation2 + $0xb0] sm:$0xff]
    %v177 = vld [vmem:[#allocation2 + $0xb8] sm:$0xff]
    %v178 = vld [vmem:[#allocation2 + $0xc0] sm:$0xff]
    %v179 = vld [vmem:[#allocation2 + $0xc8] sm:$0xff]
    %v180 = vld [vmem:[#allocation2 + $0xd0] sm:$0xff]
    %v181 = vld [vmem:[#allocation2 + $0xd8] sm:$0xff]
    %v182 = vld [vmem:[#allocation2 + $0xe0] sm:$0xff]
    %v183 = vld [vmem:[#allocation2 + $0xe8] sm:$0xff]
    %v184 = vld [vmem:[#allocation2 + $0xf0] sm:$0xff]
    %v185 = vld [vmem:[#allocation2 + $0xf8] sm:$0xff]
    %v186 = vld [vmem:[#allocation5] sm:$0xff]
    %v187 = vld [vmem:[#allocation5 + $0x8] sm:$0xff]
    %v188 = vld [vmem:[#allocation5 + $0x10] sm:$0xff]
    %v189 = vld [vmem:[#allocation5 + $0x18] sm:$0xff]
    %v190 = vld [vmem:[#allocation5 + $0x20] sm:$0xff]
    %v191 = vld [vmem:[#allocation5 + $0x28] sm:$0xff]
    %v192 = vld [vmem:[#allocation5 + $0x30] sm:$0xff]
    %v193 = vld [vmem:[#allocation5 + $0x38] sm:$0xff]
    %v194 = vld [vmem:[#allocation5 + $0x40] sm:$0xff]
    %v195 = vld [vmem:[#allocation5 + $0x48] sm:$0xff]
    %v196 = vld [vmem:[#allocation5 + $0x50] sm:$0xff]
    %v197 = vld [vmem:[#allocation5 + $0x58] sm:$0xff]
    %v198 = vld [vmem:[#allocation5 + $0x60] sm:$0xff]
    %v199 = vld [vmem:[#allocation5 + $0x68] sm:$0xff]
    %v200 = vld [vmem:[#allocation5 + $0x70] sm:$0xff]
    %v201 = vld [vmem:[#allocation5 + $0x78] sm:$0xff]
    %v202 = vld [vmem:[%s3] sm:$0x1]
    %v204 = vlaneseq
    %v205 = vshrl.u32 %v204, 7
    %v206 = vsub.s32 0, %v205
    %v207 = vrot.slane %v202, %v206
    %209 = vmatprep.subr.mxu0 0.0
    %210 = vmatpush1.msra.mxu0 %v186
    %211 = vmatprep.subr.mxu0 0.0
    %212 = vmatpush1.msra.mxu0 %v187
    %213 = vmatprep.subr.mxu0 0.0
    %214 = vmatpush1.msra.mxu0 %v188
    %215 = vmatprep.subr.mxu0 0.0
    %216 = vmatpush1.msra.mxu0 %v189
    %217 = vmatprep.subr.mxu0 0.0
    %218 = vmatpush1.msra.mxu0 %v190
    %219 = vmatprep.subr.mxu0 0.0
    %220 = vmatpush1.msra.mxu0 %v191
    %221 = vmatprep.subr.mxu0 0.0
    %222 = vmatpush1.msra.mxu0 %v192
    %223 = vmatprep.subr.mxu0 0.0
    %224 = vmatpush1.msra.mxu0 %v193
    %225 = vmatprep.subr.mxu0 0.0
    %226 = vmatpush1.msra.mxu0 %v194
    %227 = vmatprep.subr.mxu0 0.0
    %228 = vmatpush1.msra.mxu0 %v195
    %229 = vmatprep.subr.mxu0 0.0
    %230 = vmatpush1.msra.mxu0 %v196
    %231 = vmatprep.subr.mxu0 0.0
    %232 = vmatpush1.msra.mxu0 %v197
    %233 = vmatprep.subr.mxu0 0.0
    %234 = vmatpush1.msra.mxu0 %v198
    %235 = vmatprep.subr.mxu0 0.0
    %236 = vmatpush1.msra.mxu0 %v199
    %237 = vmatprep.subr.mxu0 0.0
    %238 = vmatpush1.msra.mxu0 %v200
    %239 = vmatprep.subr.mxu0 0.0
    %240 = vmatpush1.msra.mxu0 %v201
    %241 = vmatprep.subr.mxu0 0.0
    %242 = vmatpush1.msra.mxu0 0.0
    %243 = vmatprep.subr.mxu0 0.0
    %244 = vmatpush1.msra.mxu0 0.0
    %245 = vmatprep.subr.mxu0 0.0
    %246 = vmatpush1.msra.mxu0 0.0
    %247 = vmatprep.subr.mxu0 0.0
    %248 = vmatpush1.msra.mxu0 0.0
    %249 = vmatprep.subr.mxu0 0.0
    %250 = vmatpush1.msra.mxu0 0.0
    %251 = vmatprep.subr.mxu0 0.0
    %252 = vmatpush1.msra.mxu0 0.0
    %253 = vmatprep.subr.mxu0 0.0
    %254 = vmatpush1.msra.mxu0 0.0
    %255 = vmatprep.subr.mxu0 0.0
    %256 = vmatpush1.msra.mxu0 0.0
    %257 = vmatprep.subr.mxu0 0.0
    %258 = vmatpush1.msra.mxu0 0.0
    %259 = vmatprep.subr.mxu0 0.0
    %260 = vmatpush1.msra.mxu0 0.0
    %261 = vmatprep.subr.mxu0 0.0
    %262 = vmatpush1.msra.mxu0 0.0
    %263 = vmatprep.subr.mxu0 0.0
    %264 = vmatpush1.msra.mxu0 0.0
    %265 = vmatprep.subr.mxu0 0.0
    %266 = vmatpush1.msra.mxu0 0.0
    %267 = vmatprep.subr.mxu0 0.0
    %268 = vmatpush1.msra.mxu0 0.0
    %269 = vmatprep.subr.mxu0 0.0
    %270 = vmatpush1.msra.mxu0 0.0
    %271 = vmatprep.subr.mxu0 0.0
    %272 = vmatpush1.msra.mxu0 0.0
    %273 = vmatprep.mubr.f32.mxu0 0.0
    %274 = vmatmul.mubr.f32.gmra.mrb[0].mxu0 %v154
    %v275 = vpop.f32.mrb[0].mxu0
    %v276 = vadd.f32 %v207, %v275
    %v277 = vpop.f32.mrb[0].mxu0
    %278 = vmatprep.mubr.f32.mxu0 0.0
    %279 = vmatmul.mubr.f32.gmra.mrb[0].mxu0 %v155
    %v280 = vpop.f32.mrb[0].mxu0
    %v281 = vadd.f32 %v207, %v280
    %v282 = vpop.f32.mrb[0].mxu0
    %283 = vmatprep.mubr.f32.mxu0 0.0
    %284 = vmatmul.mubr.f32.gmra.mrb[0].mxu0 %v156
    %v285 = vpop.f32.mrb[0].mxu0
    %v286 = vadd.f32 %v207, %v285
    %v287 = vpop.f32.mrb[0].mxu0
    %288 = vmatprep.mubr.f32.mxu0 0.0
    %289 = vmatmul.mubr.f32.gmra.mrb[0].mxu0 %v157
    %v290 = vpop.f32.mrb[0].mxu0
    %v291 = vadd.f32 %v207, %v290
    %v292 = vpop.f32.mrb[0].mxu0
    %293 = vmatprep.mubr.f32.mxu0 0.0
    %294 = vmatmul.mubr.f32.gmra.mrb[0].mxu0 %v158
    %v295 = vpop.f32.mrb[0].mxu0
    %v296 = vadd.f32 %v207, %v295
    %v297 = vpop.f32.mrb[0].mxu0
    %298 = vmatprep.mubr.f32.mxu0 0.0
    %299 = vmatmul.mubr.f32.gmra.mrb[0].mxu0 %v159
    %v300 = vpop.f32.mrb[0].mxu0
    %v301 = vadd.f32 %v207, %v300
    %v302 = vpop.f32.mrb[0].mxu0
    %303 = vmatprep.mubr.f32.mxu0 0.0
    %304 = vmatmul.mubr.f32.gmra.mrb[0].mxu0 %v160
    %v305 = vpop.f32.mrb[0].mxu0
    %v306 = vadd.f32 %v207, %v305
    %v307 = vpop.f32.mrb[0].mxu0
    %308 = vmatprep.mubr.f32.mxu0 0.0
    %309 = vmatmul.mubr.f32.gmra.mrb[0].mxu0 %v161
    %v310 = vpop.f32.mrb[0].mxu0
    %v311 = vadd.f32 %v207, %v310
    %v312 = vpop.f32.mrb[0].mxu0
    %313 = vmatprep.mubr.f32.mxu0 0.0
    %314 = vmatmul.mubr.f32.gmra.mrb[0].mxu0 %v162
    %v315 = vpop.f32.mrb[0].mxu0
    %v316 = vadd.f32 %v207, %v315
    %v317 = vpop.f32.mrb[0].mxu0
    %318 = vmatprep.mubr.f32.mxu0 0.0
    %319 = vmatmul.mubr.f32.gmra.mrb[0].mxu0 %v163
    %v320 = vpop.f32.mrb[0].mxu0
    %v321 = vadd.f32 %v207, %v320
    %v322 = vpop.f32.mrb[0].mxu0
    %323 = vmatprep.mubr.f32.mxu0 0.0
    %324 = vmatmul.mubr.f32.gmra.mrb[0].mxu0 %v164
    %v325 = vpop.f32.mrb[0].mxu0
    %v326 = vadd.f32 %v207, %v325
    %v327 = vpop.f32.mrb[0].mxu0
    %328 = vmatprep.mubr.f32.mxu0 0.0
    %329 = vmatmul.mubr.f32.gmra.mrb[0].mxu0 %v165
    %v330 = vpop.f32.mrb[0].mxu0
    %v331 = vadd.f32 %v207, %v330
    %v332 = vpop.f32.mrb[0].mxu0
    %333 = vmatprep.mubr.f32.mxu0 0.0
    %334 = vmatmul.mubr.f32.gmra.mrb[0].mxu0 %v166
    %v335 = vpop.f32.mrb[0].mxu0
    %v336 = vadd.f32 %v207, %v335
    %v337 = vpop.f32.mrb[0].mxu0
    %338 = vmatprep.mubr.f32.mxu0 0.0
    %339 = vmatmul.mubr.f32.gmra.mrb[0].mxu0 %v167
    %v340 = vpop.f32.mrb[0].mxu0
    %v341 = vadd.f32 %v207, %v340
    %v342 = vpop.f32.mrb[0].mxu0
    %343 = vmatprep.mubr.f32.mxu0 0.0
    %344 = vmatmul.mubr.f32.gmra.mrb[0].mxu0 %v168
    %v345 = vpop.f32.mrb[0].mxu0
    %v346 = vadd.f32 %v207, %v345
    %v347 = vpop.f32.mrb[0].mxu0
    %348 = vmatprep.mubr.f32.mxu0 0.0
    %349 = vmatmul.mubr.f32.gmra.mrb[0].mxu0 %v169
    %v350 = vpop.f32.mrb[0].mxu0
    %v351 = vadd.f32 %v207, %v350
    %v352 = vpop.f32.mrb[0].mxu0
    %353 = vmatprep.mubr.f32.mxu0 0.0
    %354 = vmatmul.mubr.f32.gmra.mrb[0].mxu0 %v170
    %v355 = vpop.f32.mrb[0].mxu0
    %v356 = vadd.f32 %v207, %v355
    %v357 = vpop.f32.mrb[0].mxu0
    %358 = vmatprep.mubr.f32.mxu0 0.0
    %359 = vmatmul.mubr.f32.gmra.mrb[0].mxu0 %v171
    %v360 = vpop.f32.mrb[0].mxu0
    %v361 = vadd.f32 %v207, %v360
    %v362 = vpop.f32.mrb[0].mxu0
    %363 = vmatprep.mubr.f32.mxu0 0.0
    %364 = vmatmul.mubr.f32.gmra.mrb[0].mxu0 %v172
    %v365 = vpop.f32.mrb[0].mxu0
    %v366 = vadd.f32 %v207, %v365
    %v367 = vpop.f32.mrb[0].mxu0
    %368 = vmatprep.mubr.f32.mxu0 0.0
    %369 = vmatmul.mubr.f32.gmra.mrb[0].mxu0 %v173
    %v370 = vpop.f32.mrb[0].mxu0
    %v371 = vadd.f32 %v207, %v370
    %v372 = vpop.f32.mrb[0].mxu0
    %373 = vmatprep.mubr.f32.mxu0 0.0
    %374 = vmatmul.mubr.f32.gmra.mrb[0].mxu0 %v174
    %v375 = vpop.f32.mrb[0].mxu0
    %v376 = vadd.f32 %v207, %v375
    %v377 = vpop.f32.mrb[0].mxu0
    %378 = vmatprep.mubr.f32.mxu0 0.0
    %379 = vmatmul.mubr.f32.gmra.mrb[0].mxu0 %v175
    %v380 = vpop.f32.mrb[0].mxu0
    %v381 = vadd.f32 %v207, %v380
    %v382 = vpop.f32.mrb[0].mxu0
    %383 = vmatprep.mubr.f32.mxu0 0.0
    %384 = vmatmul.mubr.f32.gmra.mrb[0].mxu0 %v176
    %v385 = vpop.f32.mrb[0].mxu0
    %v386 = vadd.f32 %v207, %v385
    %v387 = vpop.f32.mrb[0].mxu0
    %388 = vmatprep.mubr.f32.mxu0 0.0
    %389 = vmatmul.mubr.f32.gmra.mrb[0].mxu0 %v177
    %v390 = vpop.f32.mrb[0].mxu0
    %v391 = vadd.f32 %v207, %v390
    %v392 = vpop.f32.mrb[0].mxu0
    %393 = vmatprep.mubr.f32.mxu0 0.0
    %394 = vmatmul.mubr.f32.gmra.mrb[0].mxu0 %v178
    %v395 = vpop.f32.mrb[0].mxu0
    %v396 = vadd.f32 %v207, %v395
    %v397 = vpop.f32.mrb[0].mxu0
    %398 = vmatprep.mubr.f32.mxu0 0.0
    %399 = vmatmul.mubr.f32.gmra.mrb[0].mxu0 %v179
    %v400 = vpop.f32.mrb[0].mxu0
    %v401 = vadd.f32 %v207, %v400
    %v402 = vpop.f32.mrb[0].mxu0
    %403 = vmatprep.mubr.f32.mxu0 0.0
    %404 = vmatmul.mubr.f32.gmra.mrb[0].mxu0 %v180
    %v405 = vpop.f32.mrb[0].mxu0
    %v406 = vadd.f32 %v207, %v405
    %v407 = vpop.f32.mrb[0].mxu0
    %408 = vmatprep.mubr.f32.mxu0 0.0
    %409 = vmatmul.mubr.f32.gmra.mrb[0].mxu0 %v181
    %v410 = vpop.f32.mrb[0].mxu0
    %v411 = vadd.f32 %v207, %v410
    %v412 = vpop.f32.mrb[0].mxu0
    %413 = vmatprep.mubr.f32.mxu0 0.0
    %414 = vmatmul.mubr.f32.gmra.mrb[0].mxu0 %v182
    %v415 = vpop.f32.mrb[0].mxu0
    %v416 = vadd.f32 %v207, %v415
    %v417 = vpop.f32.mrb[0].mxu0
    %418 = vmatprep.mubr.f32.mxu0 0.0
    %419 = vmatmul.mubr.f32.gmra.mrb[0].mxu0 %v183
    %v420 = vpop.f32.mrb[0].mxu0
    %v421 = vadd.f32 %v207, %v420
    %v422 = vpop.f32.mrb[0].mxu0
    %423 = vmatprep.mubr.f32.mxu0 0.0
    %424 = vmatmul.mubr.f32.gmra.mrb[0].mxu0 %v184
    %v425 = vpop.f32.mrb[0].mxu0
    %v426 = vadd.f32 %v207, %v425
    %v427 = vpop.f32.mrb[0].mxu0
    %428 = vmatprep.mubr.f32.mxu0 0.0
    %429 = vmatmul.mubr.f32.gmra.mrb[0].mxu0 %v185
    %v430 = vpop.f32.mrb[0].mxu0
    %v431 = vadd.f32 %v207, %v430
    %v432 = vpop.f32.mrb[0].mxu0
    %433 = vdwg.mxu0
    %v434 = vmax.f32 %v276, 0.0
    %v435 = vmax.f32 %v281, 0.0
    %v436 = vmax.f32 %v286, 0.0
    %v437 = vmax.f32 %v291, 0.0
    %v438 = vmax.f32 %v296, 0.0
    %v439 = vmax.f32 %v301, 0.0
    %v440 = vmax.f32 %v306, 0.0
    %v441 = vmax.f32 %v311, 0.0
    %v442 = vmax.f32 %v316, 0.0
    %v443 = vmax.f32 %v321, 0.0
    %v444 = vmax.f32 %v326, 0.0
    %v445 = vmax.f32 %v331, 0.0
    %v446 = vmax.f32 %v336, 0.0
    %v447 = vmax.f32 %v341, 0.0
    %v448 = vmax.f32 %v346, 0.0
    %v449 = vmax.f32 %v351, 0.0
    %v450 = vmax.f32 %v356, 0.0
    %v451 = vmax.f32 %v361, 0.0
    %v452 = vmax.f32 %v366, 0.0
    %v453 = vmax.f32 %v371, 0.0
    %v454 = vmax.f32 %v376, 0.0
    %v455 = vmax.f32 %v381, 0.0
    %v456 = vmax.f32 %v386, 0.0
    %v457 = vmax.f32 %v391, 0.0
    %v458 = vmax.f32 %v396, 0.0
    %v459 = vmax.f32 %v401, 0.0
    %v460 = vmax.f32 %v406, 0.0
    %v461 = vmax.f32 %v411, 0.0
    %v462 = vmax.f32 %v416, 0.0
    %v463 = vmax.f32 %v421, 0.0
    %v464 = vmax.f32 %v426, 0.0
    %v465 = vmax.f32 %v431, 0.0
    %v466 = vld [vmem:[#allocation7] sm:$0xff]
    %v467 = vld [vmem:[#allocation7 + $0x8] sm:$0xff]
    %v468 = vld [vmem:[#allocation7 + $0x10] sm:$0xff]
    %v469 = vld [vmem:[#allocation7 + $0x18] sm:$0xff]
    %v470 = vld [vmem:[#allocation7 + $0x20] sm:$0xff]
    %v471 = vld [vmem:[#allocation7 + $0x28] sm:$0xff]
    %v472 = vld [vmem:[#allocation7 + $0x30] sm:$0xff]
    %v473 = vld [vmem:[#allocation7 + $0x38] sm:$0xff]
    %v474 = vld [vmem:[#allocation7 + $0x40] sm:$0xff]
    %v475 = vld [vmem:[#allocation7 + $0x48] sm:$0xff]
    %v476 = vld [vmem:[#allocation7 + $0x50] sm:$0xff]
    %v477 = vld [vmem:[#allocation7 + $0x58] sm:$0xff]
    %v478 = vld [vmem:[#allocation7 + $0x60] sm:$0xff]
    %v479 = vld [vmem:[#allocation7 + $0x68] sm:$0xff]
    %v480 = vld [vmem:[#allocation7 + $0x70] sm:$0xff]
    %v481 = vld [vmem:[#allocation7 + $0x78] sm:$0xff]
    %s482 = scalar_lea.vmem %s3, 1
    %v483 = vld [vmem:[%s482] sm:$0x1]
    %v485 = vlaneseq
    %v486 = vshrl.u32 %v485, 7
    %v487 = vsub.s32 0, %v486
    %v488 = vrot.slane %v483, %v487
    %490 = vmatprep.subr.mxu0 0.0
    %491 = vmatpush1.msra.mxu0 %v466
    %492 = vmatprep.subr.mxu0 0.0
    %493 = vmatpush1.msra.mxu0 %v467
    %494 = vmatprep.subr.mxu0 0.0
    %495 = vmatpush1.msra.mxu0 %v468
    %496 = vmatprep.subr.mxu0 0.0
    %497 = vmatpush1.msra.mxu0 %v469
    %498 = vmatprep.subr.mxu0 0.0
    %499 = vmatpush1.msra.mxu0 %v470
    %500 = vmatprep.subr.mxu0 0.0
    %501 = vmatpush1.msra.mxu0 %v471
    %502 = vmatprep.subr.mxu0 0.0
    %503 = vmatpush1.msra.mxu0 %v472
    %504 = vmatprep.subr.mxu0 0.0
    %505 = vmatpush1.msra.mxu0 %v473
    %506 = vmatprep.subr.mxu0 0.0
    %507 = vmatpush1.msra.mxu0 %v474
    %508 = vmatprep.subr.mxu0 0.0
    %509 = vmatpush1.msra.mxu0 %v475
    %510 = vmatprep.subr.mxu0 0.0
    %511 = vmatpush1.msra.mxu0 %v476
    %512 = vmatprep.subr.mxu0 0.0
    %513 = vmatpush1.msra.mxu0 %v477
    %514 = vmatprep.subr.mxu0 0.0
    %515 = vmatpush1.msra.mxu0 %v478
    %516 = vmatprep.subr.mxu0 0.0
    %517 = vmatpush1.msra.mxu0 %v479
    %518 = vmatprep.subr.mxu0 0.0
    %519 = vmatpush1.msra.mxu0 %v480
    %520 = vmatprep.subr.mxu0 0.0
    %521 = vmatpush1.msra.mxu0 %v481
    %522 = vmatprep.subr.mxu0 0.0
    %523 = vmatpush1.msra.mxu0 0.0
    %524 = vmatprep.subr.mxu0 0.0
    %525 = vmatpush1.msra.mxu0 0.0
    %526 = vmatprep.subr.mxu0 0.0
    %527 = vmatpush1.msra.mxu0 0.0
    %528 = vmatprep.subr.mxu0 0.0
    %529 = vmatpush1.msra.mxu0 0.0
    %530 = vmatprep.subr.mxu0 0.0
    %531 = vmatpush1.msra.mxu0 0.0
    %532 = vmatprep.subr.mxu0 0.0
    %533 = vmatpush1.msra.mxu0 0.0
    %534 = vmatprep.subr.mxu0 0.0
    %535 = vmatpush1.msra.mxu0 0.0
    %536 = vmatprep.subr.mxu0 0.0
    %537 = vmatpush1.msra.mxu0 0.0
    %538 = vmatprep.subr.mxu0 0.0
    %539 = vmatpush1.msra.mxu0 0.0
    %540 = vmatprep.subr.mxu0 0.0
    %541 = vmatpush1.msra.mxu0 0.0
    %542 = vmatprep.subr.mxu0 0.0
    %543 = vmatpush1.msra.mxu0 0.0
    %544 = vmatprep.subr.mxu0 0.0
    %545 = vmatpush1.msra.mxu0 0.0
    %546 = vmatprep.subr.mxu0 0.0
    %547 = vmatpush1.msra.mxu0 0.0
    %548 = vmatprep.subr.mxu0 0.0
    %549 = vmatpush1.msra.mxu0 0.0
    %550 = vmatprep.subr.mxu0 0.0
    %551 = vmatpush1.msra.mxu0 0.0
    %552 = vmatprep.subr.mxu0 0.0
    %553 = vmatpush1.msra.mxu0 0.0
    %554 = vmatprep.mubr.f32.mxu0 0.0
    %555 = vmatmul.mubr.f32.gmra.mrb[0].mxu0 %v434
    %v556 = vpop.f32.mrb[0].mxu0
    %v557 = vadd.f32 %v488, %v556
    %v558 = vpop.f32.mrb[0].mxu0
    %559 = vmatprep.mubr.f32.mxu0 0.0
    %560 = vmatmul.mubr.f32.gmra.mrb[0].mxu0 %v435
    %v561 = vpop.f32.mrb[0].mxu0
    %v562 = vadd.f32 %v488, %v561
    %v563 = vpop.f32.mrb[0].mxu0
    %564 = vmatprep.mubr.f32.mxu0 0.0
    %565 = vmatmul.mubr.f32.gmra.mrb[0].mxu0 %v436
    %v566 = vpop.f32.mrb[0].mxu0
    %v567 = vadd.f32 %v488, %v566
    %v568 = vpop.f32.mrb[0].mxu0
    %569 = vmatprep.mubr.f32.mxu0 0.0
    %570 = vmatmul.mubr.f32.gmra.mrb[0].mxu0 %v437
    %v571 = vpop.f32.mrb[0].mxu0
    %v572 = vadd.f32 %v488, %v571
    %v573 = vpop.f32.mrb[0].mxu0
    %574 = vmatprep.mubr.f32.mxu0 0.0
    %575 = vmatmul.mubr.f32.gmra.mrb[0].mxu0 %v438
    %v576 = vpop.f32.mrb[0].mxu0
    %v577 = vadd.f32 %v488, %v576
    %v578 = vpop.f32.mrb[0].mxu0
    %579 = vmatprep.mubr.f32.mxu0 0.0
    %580 = vmatmul.mubr.f32.gmra.mrb[0].mxu0 %v439
    %v581 = vpop.f32.mrb[0].mxu0
    %v582 = vadd.f32 %v488, %v581
    %v583 = vpop.f32.mrb[0].mxu0
    %584 = vmatprep.mubr.f32.mxu0 0.0
    %585 = vmatmul.mubr.f32.gmra.mrb[0].mxu0 %v440
    %v586 = vpop.f32.mrb[0].mxu0
    %v587 = vadd.f32 %v488, %v586
    %v588 = vpop.f32.mrb[0].mxu0
    %589 = vmatprep.mubr.f32.mxu0 0.0
    %590 = vmatmul.mubr.f32.gmra.mrb[0].mxu0 %v441
    %v591 = vpop.f32.mrb[0].mxu0
    %v592 = vadd.f32 %v488, %v591
    %v593 = vpop.f32.mrb[0].mxu0
    %594 = vmatprep.mubr.f32.mxu0 0.0
    %595 = vmatmul.mubr.f32.gmra.mrb[0].mxu0 %v442
    %v596 = vpop.f32.mrb[0].mxu0
    %v597 = vadd.f32 %v488, %v596
    %v598 = vpop.f32.mrb[0].mxu0
    %599 = vmatprep.mubr.f32.mxu0 0.0
    %600 = vmatmul.mubr.f32.gmra.mrb[0].mxu0 %v443
    %v601 = vpop.f32.mrb[0].mxu0
    %v602 = vadd.f32 %v488, %v601
    %v603 = vpop.f32.mrb[0].mxu0
    %604 = vmatprep.mubr.f32.mxu0 0.0
    %605 = vmatmul.mubr.f32.gmra.mrb[0].mxu0 %v444
    %v606 = vpop.f32.mrb[0].mxu0
    %v607 = vadd.f32 %v488, %v606
    %v608 = vpop.f32.mrb[0].mxu0
    %609 = vmatprep.mubr.f32.mxu0 0.0
    %610 = vmatmul.mubr.f32.gmra.mrb[0].mxu0 %v445
    %v611 = vpop.f32.mrb[0].mxu0
    %v612 = vadd.f32 %v488, %v611
    %v613 = vpop.f32.mrb[0].mxu0
    %614 = vmatprep.mubr.f32.mxu0 0.0
    %615 = vmatmul.mubr.f32.gmra.mrb[0].mxu0 %v446
    %v616 = vpop.f32.mrb[0].mxu0
    %v617 = vadd.f32 %v488, %v616
    %v618 = vpop.f32.mrb[0].mxu0
    %619 = vmatprep.mubr.f32.mxu0 0.0
    %620 = vmatmul.mubr.f32.gmra.mrb[0].mxu0 %v447
    %v621 = vpop.f32.mrb[0].mxu0
    %v622 = vadd.f32 %v488, %v621
    %v623 = vpop.f32.mrb[0].mxu0
    %624 = vmatprep.mubr.f32.mxu0 0.0
    %625 = vmatmul.mubr.f32.gmra.mrb[0].mxu0 %v448
    %v626 = vpop.f32.mrb[0].mxu0
    %v627 = vadd.f32 %v488, %v626
    %v628 = vpop.f32.mrb[0].mxu0
    %629 = vmatprep.mubr.f32.mxu0 0.0
    %630 = vmatmul.mubr.f32.gmra.mrb[0].mxu0 %v449
    %v631 = vpop.f32.mrb[0].mxu0
    %v632 = vadd.f32 %v488, %v631
    %v633 = vpop.f32.mrb[0].mxu0
    %634 = vmatprep.mubr.f32.mxu0 0.0
    %635 = vmatmul.mubr.f32.gmra.mrb[0].mxu0 %v450
    %v636 = vpop.f32.mrb[0].mxu0
    %v637 = vadd.f32 %v488, %v636
    %v638 = vpop.f32.mrb[0].mxu0
    %639 = vmatprep.mubr.f32.mxu0 0.0
    %640 = vmatmul.mubr.f32.gmra.mrb[0].mxu0 %v451
    %v641 = vpop.f32.mrb[0].mxu0
    %v642 = vadd.f32 %v488, %v641
    %v643 = vpop.f32.mrb[0].mxu0
    %644 = vmatprep.mubr.f32.mxu0 0.0
    %645 = vmatmul.mubr.f32.gmra.mrb[0].mxu0 %v452
    %v646 = vpop.f32.mrb[0].mxu0
    %v647 = vadd.f32 %v488, %v646
    %v648 = vpop.f32.mrb[0].mxu0
    %649 = vmatprep.mubr.f32.mxu0 0.0
    %650 = vmatmul.mubr.f32.gmra.mrb[0].mxu0 %v453
    %v651 = vpop.f32.mrb[0].mxu0
    %v652 = vadd.f32 %v488, %v651
    %v653 = vpop.f32.mrb[0].mxu0
    %654 = vmatprep.mubr.f32.mxu0 0.0
    %655 = vmatmul.mubr.f32.gmra.mrb[0].mxu0 %v454
    %v656 = vpop.f32.mrb[0].mxu0
    %v657 = vadd.f32 %v488, %v656
    %v658 = vpop.f32.mrb[0].mxu0
    %659 = vmatprep.mubr.f32.mxu0 0.0
    %660 = vmatmul.mubr.f32.gmra.mrb[0].mxu0 %v455
    %v661 = vpop.f32.mrb[0].mxu0
    %v662 = vadd.f32 %v488, %v661
    %v663 = vpop.f32.mrb[0].mxu0
    %664 = vmatprep.mubr.f32.mxu0 0.0
    %665 = vmatmul.mubr.f32.gmra.mrb[0].mxu0 %v456
    %v666 = vpop.f32.mrb[0].mxu0
    %v667 = vadd.f32 %v488, %v666
    %v668 = vpop.f32.mrb[0].mxu0
    %669 = vmatprep.mubr.f32.mxu0 0.0
    %670 = vmatmul.mubr.f32.gmra.mrb[0].mxu0 %v457
    %v671 = vpop.f32.mrb[0].mxu0
    %v672 = vadd.f32 %v488, %v671
    %v673 = vpop.f32.mrb[0].mxu0
    %674 = vmatprep.mubr.f32.mxu0 0.0
    %675 = vmatmul.mubr.f32.gmra.mrb[0].mxu0 %v458
    %v676 = vpop.f32.mrb[0].mxu0
    %v677 = vadd.f32 %v488, %v676
    %v678 = vpop.f32.mrb[0].mxu0
    %679 = vmatprep.mubr.f32.mxu0 0.0
    %680 = vmatmul.mubr.f32.gmra.mrb[0].mxu0 %v459
    %v681 = vpop.f32.mrb[0].mxu0
    %v682 = vadd.f32 %v488, %v681
    %v683 = vpop.f32.mrb[0].mxu0
    %684 = vmatprep.mubr.f32.mxu0 0.0
    %685 = vmatmul.mubr.f32.gmra.mrb[0].mxu0 %v460
    %v686 = vpop.f32.mrb[0].mxu0
    %v687 = vadd.f32 %v488, %v686
    %v688 = vpop.f32.mrb[0].mxu0
    %689 = vmatprep.mubr.f32.mxu0 0.0
    %690 = vmatmul.mubr.f32.gmra.mrb[0].mxu0 %v461
    %v691 = vpop.f32.mrb[0].mxu0
    %v692 = vadd.f32 %v488, %v691
    %v693 = vpop.f32.mrb[0].mxu0
    %694 = vmatprep.mubr.f32.mxu0 0.0
    %695 = vmatmul.mubr.f32.gmra.mrb[0].mxu0 %v462
    %v696 = vpop.f32.mrb[0].mxu0
    %v697 = vadd.f32 %v488, %v696
    %v698 = vpop.f32.mrb[0].mxu0
    %699 = vmatprep.mubr.f32.mxu0 0.0
    %700 = vmatmul.mubr.f32.gmra.mrb[0].mxu0 %v463
    %v701 = vpop.f32.mrb[0].mxu0
    %v702 = vadd.f32 %v488, %v701
    %v703 = vpop.f32.mrb[0].mxu0
    %704 = vmatprep.mubr.f32.mxu0 0.0
    %705 = vmatmul.mubr.f32.gmra.mrb[0].mxu0 %v464
    %v706 = vpop.f32.mrb[0].mxu0
    %v707 = vadd.f32 %v488, %v706
    %v708 = vpop.f32.mrb[0].mxu0
    %709 = vmatprep.mubr.f32.mxu0 0.0
    %710 = vmatmul.mubr.f32.gmra.mrb[0].mxu0 %v465
    %v711 = vpop.f32.mrb[0].mxu0
    %v712 = vadd.f32 %v488, %v711
    %v713 = vpop.f32.mrb[0].mxu0
    %714 = vdwg.mxu0
    %v715 = vmax.f32 %v557, 0.0
    %v716 = vmax.f32 %v562, 0.0
    %v717 = vmax.f32 %v567, 0.0
    %v718 = vmax.f32 %v572, 0.0
    %v719 = vmax.f32 %v577, 0.0
    %v720 = vmax.f32 %v582, 0.0
    %v721 = vmax.f32 %v587, 0.0
    %v722 = vmax.f32 %v592, 0.0
    %v723 = vmax.f32 %v597, 0.0
    %v724 = vmax.f32 %v602, 0.0
    %v725 = vmax.f32 %v607, 0.0
    %v726 = vmax.f32 %v612, 0.0
    %v727 = vmax.f32 %v617, 0.0
    %v728 = vmax.f32 %v622, 0.0
    %v729 = vmax.f32 %v627, 0.0
    %v730 = vmax.f32 %v632, 0.0
    %v731 = vmax.f32 %v637, 0.0
    %v732 = vmax.f32 %v642, 0.0
    %v733 = vmax.f32 %v647, 0.0
    %v734 = vmax.f32 %v652, 0.0
    %v735 = vmax.f32 %v657, 0.0
    %v736 = vmax.f32 %v662, 0.0
    %v737 = vmax.f32 %v667, 0.0
    %v738 = vmax.f32 %v672, 0.0
    %v739 = vmax.f32 %v677, 0.0
    %v740 = vmax.f32 %v682, 0.0
    %v741 = vmax.f32 %v687, 0.0
    %v742 = vmax.f32 %v692, 0.0
    %v743 = vmax.f32 %v697, 0.0
    %v744 = vmax.f32 %v702, 0.0
    %v745 = vmax.f32 %v707, 0.0
    %v746 = vmax.f32 %v712, 0.0
    %s747 = scalar_lea.vmem [#allocation7], 128
    %v748 = vld [vmem:[%s747] sm:$0xff]
    %v749 = vld [vmem:[%s747 + $0x8] sm:$0xff]
    %v750 = vld [vmem:[%s747 + $0x10] sm:$0xff]
    %v751 = vld [vmem:[%s747 + $0x18] sm:$0xff]
    %v752 = vld [vmem:[%s747 + $0x20] sm:$0xff]
    %v753 = vld [vmem:[%s747 + $0x28] sm:$0xff]
    %v754 = vld [vmem:[%s747 + $0x30] sm:$0xff]
    %v755 = vld [vmem:[%s747 + $0x38] sm:$0xff]
    %v756 = vld [vmem:[%s747 + $0x40] sm:$0xff]
    %v757 = vld [vmem:[%s747 + $0x48] sm:$0xff]
    %v758 = vld [vmem:[%s747 + $0x50] sm:$0xff]
    %v759 = vld [vmem:[%s747 + $0x58] sm:$0xff]
    %v760 = vld [vmem:[%s747 + $0x60] sm:$0xff]
    %v761 = vld [vmem:[%s747 + $0x68] sm:$0xff]
    %v762 = vld [vmem:[%s747 + $0x70] sm:$0xff]
    %v763 = vld [vmem:[%s747 + $0x78] sm:$0xff]
    %s764 = scalar_lea.vmem %s3, 2
    %v765 = vld [vmem:[%s764] sm:$0x1]
    %v767 = vlaneseq
    %v768 = vshrl.u32 %v767, 7
    %v769 = vsub.s32 0, %v768
    %v770 = vrot.slane %v765, %v769
    %772 = vmatprep.subr.mxu0 0.0
    %773 = vmatpush1.msra.mxu0 %v748
    %774 = vmatprep.subr.mxu0 0.0
    %775 = vmatpush1.msra.mxu0 %v749
    %776 = vmatprep.subr.mxu0 0.0
    %777 = vmatpush1.msra.mxu0 %v750
    %778 = vmatprep.subr.mxu0 0.0
    %779 = vmatpush1.msra.mxu0 %v751
    %780 = vmatprep.subr.mxu0 0.0
    %781 = vmatpush1.msra.mxu0 %v752
    %782 = vmatprep.subr.mxu0 0.0
    %783 = vmatpush1.msra.mxu0 %v753
    %784 = vmatprep.subr.mxu0 0.0
    %785 = vmatpush1.msra.mxu0 %v754
    %786 = vmatprep.subr.mxu0 0.0
    %787 = vmatpush1.msra.mxu0 %v755
    %788 = vmatprep.subr.mxu0 0.0
    %789 = vmatpush1.msra.mxu0 %v756
    %790 = vmatprep.subr.mxu0 0.0
    %791 = vmatpush1.msra.mxu0 %v757
    %792 = vmatprep.subr.mxu0 0.0
    %793 = vmatpush1.msra.mxu0 %v758
    %794 = vmatprep.subr.mxu0 0.0
    %795 = vmatpush1.msra.mxu0 %v759
    %796 = vmatprep.subr.mxu0 0.0
    %797 = vmatpush1.msra.mxu0 %v760
    %798 = vmatprep.subr.mxu0 0.0
    %799 = vmatpush1.msra.mxu0 %v761
    %800 = vmatprep.subr.mxu0 0.0
    %801 = vmatpush1.msra.mxu0 %v762
    %802 = vmatprep.subr.mxu0 0.0
    %803 = vmatpush1.msra.mxu0 %v763
    %804 = vmatprep.subr.mxu0 0.0
    %805 = vmatpush1.msra.mxu0 0.0
    %806 = vmatprep.subr.mxu0 0.0
    %807 = vmatpush1.msra.mxu0 0.0
    %808 = vmatprep.subr.mxu0 0.0
    %809 = vmatpush1.msra.mxu0 0.0
    %810 = vmatprep.subr.mxu0 0.0
    %811 = vmatpush1.msra.mxu0 0.0
    %812 = vmatprep.subr.mxu0 0.0
    %813 = vmatpush1.msra.mxu0 0.0
    %814 = vmatprep.subr.mxu0 0.0
    %815 = vmatpush1.msra.mxu0 0.0
    %816 = vmatprep.subr.mxu0 0.0
    %817 = vmatpush1.msra.mxu0 0.0
    %818 = vmatprep.subr.mxu0 0.0
    %819 = vmatpush1.msra.mxu0 0.0
    %820 = vmatprep.subr.mxu0 0.0
    %821 = vmatpush1.msra.mxu0 0.0
    %822 = vmatprep.subr.mxu0 0.0
    %823 = vmatpush1.msra.mxu0 0.0
    %824 = vmatprep.subr.mxu0 0.0
    %825 = vmatpush1.msra.mxu0 0.0
    %826 = vmatprep.subr.mxu0 0.0
    %827 = vmatpush1.msra.mxu0 0.0
    %828 = vmatprep.subr.mxu0 0.0
    %829 = vmatpush1.msra.mxu0 0.0
    %830 = vmatprep.subr.mxu0 0.0
    %831 = vmatpush1.msra.mxu0 0.0
    %832 = vmatprep.subr.mxu0 0.0
    %833 = vmatpush1.msra.mxu0 0.0
    %834 = vmatprep.subr.mxu0 0.0
    %835 = vmatpush1.msra.mxu0 0.0
    %836 = vmatprep.mubr.f32.mxu0 0.0
    %837 = vmatmul.mubr.f32.gmra.mrb[0].mxu0 %v715
    %v838 = vpop.f32.mrb[0].mxu0
    %v839 = vadd.f32 %v770, %v838
    %v840 = vpop.f32.mrb[0].mxu0
    %841 = vmatprep.mubr.f32.mxu0 0.0
    %842 = vmatmul.mubr.f32.gmra.mrb[0].mxu0 %v716
    %v843 = vpop.f32.mrb[0].mxu0
    %v844 = vadd.f32 %v770, %v843
    %v845 = vpop.f32.mrb[0].mxu0
    %846 = vmatprep.mubr.f32.mxu0 0.0
    %847 = vmatmul.mubr.f32.gmra.mrb[0].mxu0 %v717
    %v848 = vpop.f32.mrb[0].mxu0
    %v849 = vadd.f32 %v770, %v848
    %v850 = vpop.f32.mrb[0].mxu0
    %851 = vmatprep.mubr.f32.mxu0 0.0
    %852 = vmatmul.mubr.f32.gmra.mrb[0].mxu0 %v718
    %v853 = vpop.f32.mrb[0].mxu0
    %v854 = vadd.f32 %v770, %v853
    %v855 = vpop.f32.mrb[0].mxu0
    %856 = vmatprep.mubr.f32.mxu0 0.0
    %857 = vmatmul.mubr.f32.gmra.mrb[0].mxu0 %v719
    %v858 = vpop.f32.mrb[0].mxu0
    %v859 = vadd.f32 %v770, %v858
    %v860 = vpop.f32.mrb[0].mxu0
    %861 = vmatprep.mubr.f32.mxu0 0.0
    %862 = vmatmul.mubr.f32.gmra.mrb[0].mxu0 %v720
    %v863 = vpop.f32.mrb[0].mxu0
    %v864 = vadd.f32 %v770, %v863
    %v865 = vpop.f32.mrb[0].mxu0
    %866 = vmatprep.mubr.f32.mxu0 0.0
    %867 = vmatmul.mubr.f32.gmra.mrb[0].mxu0 %v721
    %v868 = vpop.f32.mrb[0].mxu0
    %v869 = vadd.f32 %v770, %v868
    %v870 = vpop.f32.mrb[0].mxu0
    %871 = vmatprep.mubr.f32.mxu0 0.0
    %872 = vmatmul.mubr.f32.gmra.mrb[0].mxu0 %v722
    %v873 = vpop.f32.mrb[0].mxu0
    %v874 = vadd.f32 %v770, %v873
    %v875 = vpop.f32.mrb[0].mxu0
    %876 = vmatprep.mubr.f32.mxu0 0.0
    %877 = vmatmul.mubr.f32.gmra.mrb[0].mxu0 %v723
    %v878 = vpop.f32.mrb[0].mxu0
    %v879 = vadd.f32 %v770, %v878
    %v880 = vpop.f32.mrb[0].mxu0
    %881 = vmatprep.mubr.f32.mxu0 0.0
    %882 = vmatmul.mubr.f32.gmra.mrb[0].mxu0 %v724
    %v883 = vpop.f32.mrb[0].mxu0
    %v884 = vadd.f32 %v770, %v883
    %v885 = vpop.f32.mrb[0].mxu0
    %886 = vmatprep.mubr.f32.mxu0 0.0
    %887 = vmatmul.mubr.f32.gmra.mrb[0].mxu0 %v725
    %v888 = vpop.f32.mrb[0].mxu0
    %v889 = vadd.f32 %v770, %v888
    %v890 = vpop.f32.mrb[0].mxu0
    %891 = vmatprep.mubr.f32.mxu0 0.0
    %892 = vmatmul.mubr.f32.gmra.mrb[0].mxu0 %v726
    %v893 = vpop.f32.mrb[0].mxu0
    %v894 = vadd.f32 %v770, %v893
    %v895 = vpop.f32.mrb[0].mxu0
    %896 = vmatprep.mubr.f32.mxu0 0.0
    %897 = vmatmul.mubr.f32.gmra.mrb[0].mxu0 %v727
    %v898 = vpop.f32.mrb[0].mxu0
    %v899 = vadd.f32 %v770, %v898
    %v900 = vpop.f32.mrb[0].mxu0
    %901 = vmatprep.mubr.f32.mxu0 0.0
    %902 = vmatmul.mubr.f32.gmra.mrb[0].mxu0 %v728
    %v903 = vpop.f32.mrb[0].mxu0
    %v904 = vadd.f32 %v770, %v903
    %v905 = vpop.f32.mrb[0].mxu0
    %906 = vmatprep.mubr.f32.mxu0 0.0
    %907 = vmatmul.mubr.f32.gmra.mrb[0].mxu0 %v729
    %v908 = vpop.f32.mrb[0].mxu0
    %v909 = vadd.f32 %v770, %v908
    %v910 = vpop.f32.mrb[0].mxu0
    %911 = vmatprep.mubr.f32.mxu0 0.0
    %912 = vmatmul.mubr.f32.gmra.mrb[0].mxu0 %v730
    %v913 = vpop.f32.mrb[0].mxu0
    %v914 = vadd.f32 %v770, %v913
    %v915 = vpop.f32.mrb[0].mxu0
    %916 = vmatprep.mubr.f32.mxu0 0.0
    %917 = vmatmul.mubr.f32.gmra.mrb[0].mxu0 %v731
    %v918 = vpop.f32.mrb[0].mxu0
    %v919 = vadd.f32 %v770, %v918
    %v920 = vpop.f32.mrb[0].mxu0
    %921 = vmatprep.mubr.f32.mxu0 0.0
    %922 = vmatmul.mubr.f32.gmra.mrb[0].mxu0 %v732
    %v923 = vpop.f32.mrb[0].mxu0
    %v924 = vadd.f32 %v770, %v923
    %v925 = vpop.f32.mrb[0].mxu0
    %926 = vmatprep.mubr.f32.mxu0 0.0
    %927 = vmatmul.mubr.f32.gmra.mrb[0].mxu0 %v733
    %v928 = vpop.f32.mrb[0].mxu0
    %v929 = vadd.f32 %v770, %v928
    %v930 = vpop.f32.mrb[0].mxu0
    %931 = vmatprep.mubr.f32.mxu0 0.0
    %932 = vmatmul.mubr.f32.gmra.mrb[0].mxu0 %v734
    %v933 = vpop.f32.mrb[0].mxu0
    %v934 = vadd.f32 %v770, %v933
    %v935 = vpop.f32.mrb[0].mxu0
    %936 = vmatprep.mubr.f32.mxu0 0.0
    %937 = vmatmul.mubr.f32.gmra.mrb[0].mxu0 %v735
    %v938 = vpop.f32.mrb[0].mxu0
    %v939 = vadd.f32 %v770, %v938
    %v940 = vpop.f32.mrb[0].mxu0
    %941 = vmatprep.mubr.f32.mxu0 0.0
    %942 = vmatmul.mubr.f32.gmra.mrb[0].mxu0 %v736
    %v943 = vpop.f32.mrb[0].mxu0
    %v944 = vadd.f32 %v770, %v943
    %v945 = vpop.f32.mrb[0].mxu0
    %946 = vmatprep.mubr.f32.mxu0 0.0
    %947 = vmatmul.mubr.f32.gmra.mrb[0].mxu0 %v737
    %v948 = vpop.f32.mrb[0].mxu0
    %v949 = vadd.f32 %v770, %v948
    %v950 = vpop.f32.mrb[0].mxu0
    %951 = vmatprep.mubr.f32.mxu0 0.0
    %952 = vmatmul.mubr.f32.gmra.mrb[0].mxu0 %v738
    %v953 = vpop.f32.mrb[0].mxu0
    %v954 = vadd.f32 %v770, %v953
    %v955 = vpop.f32.mrb[0].mxu0
    %956 = vmatprep.mubr.f32.mxu0 0.0
    %957 = vmatmul.mubr.f32.gmra.mrb[0].mxu0 %v739
    %v958 = vpop.f32.mrb[0].mxu0
    %v959 = vadd.f32 %v770, %v958
    %v960 = vpop.f32.mrb[0].mxu0
    %961 = vmatprep.mubr.f32.mxu0 0.0
    %962 = vmatmul.mubr.f32.gmra.mrb[0].mxu0 %v740
    %v963 = vpop.f32.mrb[0].mxu0
    %v964 = vadd.f32 %v770, %v963
    %v965 = vpop.f32.mrb[0].mxu0
    %966 = vmatprep.mubr.f32.mxu0 0.0
    %967 = vmatmul.mubr.f32.gmra.mrb[0].mxu0 %v741
    %v968 = vpop.f32.mrb[0].mxu0
    %v969 = vadd.f32 %v770, %v968
    %v970 = vpop.f32.mrb[0].mxu0
    %971 = vmatprep.mubr.f32.mxu0 0.0
    %972 = vmatmul.mubr.f32.gmra.mrb[0].mxu0 %v742
    %v973 = vpop.f32.mrb[0].mxu0
    %v974 = vadd.f32 %v770, %v973
    %v975 = vpop.f32.mrb[0].mxu0
    %976 = vmatprep.mubr.f32.mxu0 0.0
    %977 = vmatmul.mubr.f32.gmra.mrb[0].mxu0 %v743
    %v978 = vpop.f32.mrb[0].mxu0
    %v979 = vadd.f32 %v770, %v978
    %v980 = vpop.f32.mrb[0].mxu0
    %981 = vmatprep.mubr.f32.mxu0 0.0
    %982 = vmatmul.mubr.f32.gmra.mrb[0].mxu0 %v744
    %v983 = vpop.f32.mrb[0].mxu0
    %v984 = vadd.f32 %v770, %v983
    %v985 = vpop.f32.mrb[0].mxu0
    %986 = vmatprep.mubr.f32.mxu0 0.0
    %987 = vmatmul.mubr.f32.gmra.mrb[0].mxu0 %v745
    %v988 = vpop.f32.mrb[0].mxu0
    %v989 = vadd.f32 %v770, %v988
    %v990 = vpop.f32.mrb[0].mxu0
    %991 = vmatprep.mubr.f32.mxu0 0.0
    %992 = vmatmul.mubr.f32.gmra.mrb[0].mxu0 %v746
    %v993 = vpop.f32.mrb[0].mxu0
    %v994 = vadd.f32 %v770, %v993
    %v995 = vpop.f32.mrb[0].mxu0
    %996 = vdwg.mxu0
    %v997 = vmax.f32 %v839, 0.0
    %v998 = vmax.f32 %v844, 0.0
    %v999 = vmax.f32 %v849, 0.0
    %v1000 = vmax.f32 %v854, 0.0
    %v1001 = vmax.f32 %v859, 0.0
    %v1002 = vmax.f32 %v864, 0.0
    %v1003 = vmax.f32 %v869, 0.0
    %v1004 = vmax.f32 %v874, 0.0
    %v1005 = vmax.f32 %v879, 0.0
    %v1006 = vmax.f32 %v884, 0.0
    %v1007 = vmax.f32 %v889, 0.0
    %v1008 = vmax.f32 %v894, 0.0
    %v1009 = vmax.f32 %v899, 0.0
    %v1010 = vmax.f32 %v904, 0.0
    %v1011 = vmax.f32 %v909, 0.0
    %v1012 = vmax.f32 %v914, 0.0
    %v1013 = vmax.f32 %v919, 0.0
    %v1014 = vmax.f32 %v924, 0.0
    %v1015 = vmax.f32 %v929, 0.0
    %v1016 = vmax.f32 %v934, 0.0
    %v1017 = vmax.f32 %v939, 0.0
    %v1018 = vmax.f32 %v944, 0.0
    %v1019 = vmax.f32 %v949, 0.0
    %v1020 = vmax.f32 %v954, 0.0
    %v1021 = vmax.f32 %v959, 0.0
    %v1022 = vmax.f32 %v964, 0.0
    %v1023 = vmax.f32 %v969, 0.0
    %v1024 = vmax.f32 %v974, 0.0
    %v1025 = vmax.f32 %v979, 0.0
    %v1026 = vmax.f32 %v984, 0.0
    %v1027 = vmax.f32 %v989, 0.0
    %v1028 = vmax.f32 %v994, 0.0
    %s1029 = scalar_lea.vmem [#allocation7], 256
    %v1030 = vld [vmem:[%s1029] sm:$0xff]
    %v1031 = vld [vmem:[%s1029 + $0x8] sm:$0xff]
    %v1032 = vld [vmem:[%s1029 + $0x10] sm:$0xff]
    %v1033 = vld [vmem:[%s1029 + $0x18] sm:$0xff]
    %v1034 = vld [vmem:[%s1029 + $0x20] sm:$0xff]
    %v1035 = vld [vmem:[%s1029 + $0x28] sm:$0xff]
    %v1036 = vld [vmem:[%s1029 + $0x30] sm:$0xff]
    %v1037 = vld [vmem:[%s1029 + $0x38] sm:$0xff]
    %v1038 = vld [vmem:[%s1029 + $0x40] sm:$0xff]
    %v1039 = vld [vmem:[%s1029 + $0x48] sm:$0xff]
    %v1040 = vld [vmem:[%s1029 + $0x50] sm:$0xff]
    %v1041 = vld [vmem:[%s1029 + $0x58] sm:$0xff]
    %v1042 = vld [vmem:[%s1029 + $0x60] sm:$0xff]
    %v1043 = vld [vmem:[%s1029 + $0x68] sm:$0xff]
    %v1044 = vld [vmem:[%s1029 + $0x70] sm:$0xff]
    %v1045 = vld [vmem:[%s1029 + $0x78] sm:$0xff]
    %s1046 = scalar_lea.vmem %s3, 3
    %v1047 = vld [vmem:[%s1046] sm:$0x1]
    %v1049 = vlaneseq
    %v1050 = vshrl.u32 %v1049, 7
    %v1051 = vsub.s32 0, %v1050
    %v1052 = vrot.slane %v1047, %v1051
    %1054 = vmatprep.subr.mxu0 0.0
    %1055 = vmatpush1.msra.mxu0 %v1030
    %1056 = vmatprep.subr.mxu0 0.0
    %1057 = vmatpush1.msra.mxu0 %v1031
    %1058 = vmatprep.subr.mxu0 0.0
    %1059 = vmatpush1.msra.mxu0 %v1032
    %1060 = vmatprep.subr.mxu0 0.0
    %1061 = vmatpush1.msra.mxu0 %v1033
    %1062 = vmatprep.subr.mxu0 0.0
    %1063 = vmatpush1.msra.mxu0 %v1034
    %1064 = vmatprep.subr.mxu0 0.0
    %1065 = vmatpush1.msra.mxu0 %v1035
    %1066 = vmatprep.subr.mxu0 0.0
    %1067 = vmatpush1.msra.mxu0 %v1036
    %1068 = vmatprep.subr.mxu0 0.0
    %1069 = vmatpush1.msra.mxu0 %v1037
    %1070 = vmatprep.subr.mxu0 0.0
    %1071 = vmatpush1.msra.mxu0 %v1038
    %1072 = vmatprep.subr.mxu0 0.0
    %1073 = vmatpush1.msra.mxu0 %v1039
    %1074 = vmatprep.subr.mxu0 0.0
    %1075 = vmatpush1.msra.mxu0 %v1040
    %1076 = vmatprep.subr.mxu0 0.0
    %1077 = vmatpush1.msra.mxu0 %v1041
    %1078 = vmatprep.subr.mxu0 0.0
    %1079 = vmatpush1.msra.mxu0 %v1042
    %1080 = vmatprep.subr.mxu0 0.0
    %1081 = vmatpush1.msra.mxu0 %v1043
    %1082 = vmatprep.subr.mxu0 0.0
    %1083 = vmatpush1.msra.mxu0 %v1044
    %1084 = vmatprep.subr.mxu0 0.0
    %1085 = vmatpush1.msra.mxu0 %v1045
    %1086 = vmatprep.subr.mxu0 0.0
    %1087 = vmatpush1.msra.mxu0 0.0
    %1088 = vmatprep.subr.mxu0 0.0
    %1089 = vmatpush1.msra.mxu0 0.0
    %1090 = vmatprep.subr.mxu0 0.0
    %1091 = vmatpush1.msra.mxu0 0.0
    %1092 = vmatprep.subr.mxu0 0.0
    %1093 = vmatpush1.msra.mxu0 0.0
    %1094 = vmatprep.subr.mxu0 0.0
    %1095 = vmatpush1.msra.mxu0 0.0
    %1096 = vmatprep.subr.mxu0 0.0
    %1097 = vmatpush1.msra.mxu0 0.0
    %1098 = vmatprep.subr.mxu0 0.0
    %1099 = vmatpush1.msra.mxu0 0.0
    %1100 = vmatprep.subr.mxu0 0.0
    %1101 = vmatpush1.msra.mxu0 0.0
    %1102 = vmatprep.subr.mxu0 0.0
    %1103 = vmatpush1.msra.mxu0 0.0
    %1104 = vmatprep.subr.mxu0 0.0
    %1105 = vmatpush1.msra.mxu0 0.0
    %1106 = vmatprep.subr.mxu0 0.0
    %1107 = vmatpush1.msra.mxu0 0.0
    %1108 = vmatprep.subr.mxu0 0.0
    %1109 = vmatpush1.msra.mxu0 0.0
    %1110 = vmatprep.subr.mxu0 0.0
    %1111 = vmatpush1.msra.mxu0 0.0
    %1112 = vmatprep.subr.mxu0 0.0
    %1113 = vmatpush1.msra.mxu0 0.0
    %1114 = vmatprep.subr.mxu0 0.0
    %1115 = vmatpush1.msra.mxu0 0.0
    %1116 = vmatprep.subr.mxu0 0.0
    %1117 = vmatpush1.msra.mxu0 0.0
    %1118 = vmatprep.mubr.f32.mxu0 0.0
    %1119 = vmatmul.mubr.f32.gmra.mrb[0].mxu0 %v997
    %v1120 = vpop.f32.mrb[0].mxu0
    %v1121 = vadd.f32 %v1052, %v1120
    %v1122 = vpop.f32.mrb[0].mxu0
    %1123 = vmatprep.mubr.f32.mxu0 0.0
    %1124 = vmatmul.mubr.f32.gmra.mrb[0].mxu0 %v998
    %v1125 = vpop.f32.mrb[0].mxu0
    %v1126 = vadd.f32 %v1052, %v1125
    %v1127 = vpop.f32.mrb[0].mxu0
    %1128 = vmatprep.mubr.f32.mxu0 0.0
    %1129 = vmatmul.mubr.f32.gmra.mrb[0].mxu0 %v999
    %v1130 = vpop.f32.mrb[0].mxu0
    %v1131 = vadd.f32 %v1052, %v1130
    %v1132 = vpop.f32.mrb[0].mxu0
    %1133 = vmatprep.mubr.f32.mxu0 0.0
    %1134 = vmatmul.mubr.f32.gmra.mrb[0].mxu0 %v1000
    %v1135 = vpop.f32.mrb[0].mxu0
    %v1136 = vadd.f32 %v1052, %v1135
    %v1137 = vpop.f32.mrb[0].mxu0
    %1138 = vmatprep.mubr.f32.mxu0 0.0
    %1139 = vmatmul.mubr.f32.gmra.mrb[0].mxu0 %v1001
    %v1140 = vpop.f32.mrb[0].mxu0
    %v1141 = vadd.f32 %v1052, %v1140
    %v1142 = vpop.f32.mrb[0].mxu0
    %1143 = vmatprep.mubr.f32.mxu0 0.0
    %1144 = vmatmul.mubr.f32.gmra.mrb[0].mxu0 %v1002
    %v1145 = vpop.f32.mrb[0].mxu0
    %v1146 = vadd.f32 %v1052, %v1145
    %v1147 = vpop.f32.mrb[0].mxu0
    %1148 = vmatprep.mubr.f32.mxu0 0.0
    %1149 = vmatmul.mubr.f32.gmra.mrb[0].mxu0 %v1003
    %v1150 = vpop.f32.mrb[0].mxu0
    %v1151 = vadd.f32 %v1052, %v1150
    %v1152 = vpop.f32.mrb[0].mxu0
    %1153 = vmatprep.mubr.f32.mxu0 0.0
    %1154 = vmatmul.mubr.f32.gmra.mrb[0].mxu0 %v1004
    %v1155 = vpop.f32.mrb[0].mxu0
    %v1156 = vadd.f32 %v1052, %v1155
    %v1157 = vpop.f32.mrb[0].mxu0
    %1158 = vmatprep.mubr.f32.mxu0 0.0
    %1159 = vmatmul.mubr.f32.gmra.mrb[0].mxu0 %v1005
    %v1160 = vpop.f32.mrb[0].mxu0
    %v1161 = vadd.f32 %v1052, %v1160
    %v1162 = vpop.f32.mrb[0].mxu0
    %1163 = vmatprep.mubr.f32.mxu0 0.0
    %1164 = vmatmul.mubr.f32.gmra.mrb[0].mxu0 %v1006
    %v1165 = vpop.f32.mrb[0].mxu0
    %v1166 = vadd.f32 %v1052, %v1165
    %v1167 = vpop.f32.mrb[0].mxu0
    %1168 = vmatprep.mubr.f32.mxu0 0.0
    %1169 = vmatmul.mubr.f32.gmra.mrb[0].mxu0 %v1007
    %v1170 = vpop.f32.mrb[0].mxu0
    %v1171 = vadd.f32 %v1052, %v1170
    %v1172 = vpop.f32.mrb[0].mxu0
    %1173 = vmatprep.mubr.f32.mxu0 0.0
    %1174 = vmatmul.mubr.f32.gmra.mrb[0].mxu0 %v1008
    %v1175 = vpop.f32.mrb[0].mxu0
    %v1176 = vadd.f32 %v1052, %v1175
    %v1177 = vpop.f32.mrb[0].mxu0
    %1178 = vmatprep.mubr.f32.mxu0 0.0
    %1179 = vmatmul.mubr.f32.gmra.mrb[0].mxu0 %v1009
    %v1180 = vpop.f32.mrb[0].mxu0
    %v1181 = vadd.f32 %v1052, %v1180
    %v1182 = vpop.f32.mrb[0].mxu0
    %1183 = vmatprep.mubr.f32.mxu0 0.0
    %1184 = vmatmul.mubr.f32.gmra.mrb[0].mxu0 %v1010
    %v1185 = vpop.f32.mrb[0].mxu0
    %v1186 = vadd.f32 %v1052, %v1185
    %v1187 = vpop.f32.mrb[0].mxu0
    %1188 = vmatprep.mubr.f32.mxu0 0.0
    %1189 = vmatmul.mubr.f32.gmra.mrb[0].mxu0 %v1011
    %v1190 = vpop.f32.mrb[0].mxu0
    %v1191 = vadd.f32 %v1052, %v1190
    %v1192 = vpop.f32.mrb[0].mxu0
    %1193 = vmatprep.mubr.f32.mxu0 0.0
    %1194 = vmatmul.mubr.f32.gmra.mrb[0].mxu0 %v1012
    %v1195 = vpop.f32.mrb[0].mxu0
    %v1196 = vadd.f32 %v1052, %v1195
    %v1197 = vpop.f32.mrb[0].mxu0
    %1198 = vmatprep.mubr.f32.mxu0 0.0
    %1199 = vmatmul.mubr.f32.gmra.mrb[0].mxu0 %v1013
    %v1200 = vpop.f32.mrb[0].mxu0
    %v1201 = vadd.f32 %v1052, %v1200
    %v1202 = vpop.f32.mrb[0].mxu0
    %1203 = vmatprep.mubr.f32.mxu0 0.0
    %1204 = vmatmul.mubr.f32.gmra.mrb[0].mxu0 %v1014
    %v1205 = vpop.f32.mrb[0].mxu0
    %v1206 = vadd.f32 %v1052, %v1205
    %v1207 = vpop.f32.mrb[0].mxu0
    %1208 = vmatprep.mubr.f32.mxu0 0.0
    %1209 = vmatmul.mubr.f32.gmra.mrb[0].mxu0 %v1015
    %v1210 = vpop.f32.mrb[0].mxu0
    %v1211 = vadd.f32 %v1052, %v1210
    %v1212 = vpop.f32.mrb[0].mxu0
    %1213 = vmatprep.mubr.f32.mxu0 0.0
    %1214 = vmatmul.mubr.f32.gmra.mrb[0].mxu0 %v1016
    %v1215 = vpop.f32.mrb[0].mxu0
    %v1216 = vadd.f32 %v1052, %v1215
    %v1217 = vpop.f32.mrb[0].mxu0
    %1218 = vmatprep.mubr.f32.mxu0 0.0
    %1219 = vmatmul.mubr.f32.gmra.mrb[0].mxu0 %v1017
    %v1220 = vpop.f32.mrb[0].mxu0
    %v1221 = vadd.f32 %v1052, %v1220
    %v1222 = vpop.f32.mrb[0].mxu0
    %1223 = vmatprep.mubr.f32.mxu0 0.0
    %1224 = vmatmul.mubr.f32.gmra.mrb[0].mxu0 %v1018
    %v1225 = vpop.f32.mrb[0].mxu0
    %v1226 = vadd.f32 %v1052, %v1225
    %v1227 = vpop.f32.mrb[0].mxu0
    %1228 = vmatprep.mubr.f32.mxu0 0.0
    %1229 = vmatmul.mubr.f32.gmra.mrb[0].mxu0 %v1019
    %v1230 = vpop.f32.mrb[0].mxu0
    %v1231 = vadd.f32 %v1052, %v1230
    %v1232 = vpop.f32.mrb[0].mxu0
    %1233 = vmatprep.mubr.f32.mxu0 0.0
    %1234 = vmatmul.mubr.f32.gmra.mrb[0].mxu0 %v1020
    %v1235 = vpop.f32.mrb[0].mxu0
    %v1236 = vadd.f32 %v1052, %v1235
    %v1237 = vpop.f32.mrb[0].mxu0
    %1238 = vmatprep.mubr.f32.mxu0 0.0
    %1239 = vmatmul.mubr.f32.gmra.mrb[0].mxu0 %v1021
    %v1240 = vpop.f32.mrb[0].mxu0
    %v1241 = vadd.f32 %v1052, %v1240
    %v1242 = vpop.f32.mrb[0].mxu0
    %1243 = vmatprep.mubr.f32.mxu0 0.0
    %1244 = vmatmul.mubr.f32.gmra.mrb[0].mxu0 %v1022
    %v1245 = vpop.f32.mrb[0].mxu0
    %v1246 = vadd.f32 %v1052, %v1245
    %v1247 = vpop.f32.mrb[0].mxu0
    %1248 = vmatprep.mubr.f32.mxu0 0.0
    %1249 = vmatmul.mubr.f32.gmra.mrb[0].mxu0 %v1023
    %v1250 = vpop.f32.mrb[0].mxu0
    %v1251 = vadd.f32 %v1052, %v1250
    %v1252 = vpop.f32.mrb[0].mxu0
    %1253 = vmatprep.mubr.f32.mxu0 0.0
    %1254 = vmatmul.mubr.f32.gmra.mrb[0].mxu0 %v1024
    %v1255 = vpop.f32.mrb[0].mxu0
    %v1256 = vadd.f32 %v1052, %v1255
    %v1257 = vpop.f32.mrb[0].mxu0
    %1258 = vmatprep.mubr.f32.mxu0 0.0
    %1259 = vmatmul.mubr.f32.gmra.mrb[0].mxu0 %v1025
    %v1260 = vpop.f32.mrb[0].mxu0
    %v1261 = vadd.f32 %v1052, %v1260
    %v1262 = vpop.f32.mrb[0].mxu0
    %1263 = vmatprep.mubr.f32.mxu0 0.0
    %1264 = vmatmul.mubr.f32.gmra.mrb[0].mxu0 %v1026
    %v1265 = vpop.f32.mrb[0].mxu0
    %v1266 = vadd.f32 %v1052, %v1265
    %v1267 = vpop.f32.mrb[0].mxu0
    %1268 = vmatprep.mubr.f32.mxu0 0.0
    %1269 = vmatmul.mubr.f32.gmra.mrb[0].mxu0 %v1027
    %v1270 = vpop.f32.mrb[0].mxu0
    %v1271 = vadd.f32 %v1052, %v1270
    %v1272 = vpop.f32.mrb[0].mxu0
    %1273 = vmatprep.mubr.f32.mxu0 0.0
    %1274 = vmatmul.mubr.f32.gmra.mrb[0].mxu0 %v1028
    %v1275 = vpop.f32.mrb[0].mxu0
    %v1276 = vadd.f32 %v1052, %v1275
    %v1277 = vpop.f32.mrb[0].mxu0
    %1278 = vdwg.mxu0
    %v1279 = vmax.f32 %v1121, 0.0
    %v1280 = vmax.f32 %v1126, 0.0
    %v1281 = vmax.f32 %v1131, 0.0
    %v1282 = vmax.f32 %v1136, 0.0
    %v1283 = vmax.f32 %v1141, 0.0
    %v1284 = vmax.f32 %v1146, 0.0
    %v1285 = vmax.f32 %v1151, 0.0
    %v1286 = vmax.f32 %v1156, 0.0
    %v1287 = vmax.f32 %v1161, 0.0
    %v1288 = vmax.f32 %v1166, 0.0
    %v1289 = vmax.f32 %v1171, 0.0
    %v1290 = vmax.f32 %v1176, 0.0
    %v1291 = vmax.f32 %v1181, 0.0
    %v1292 = vmax.f32 %v1186, 0.0
    %v1293 = vmax.f32 %v1191, 0.0
    %v1294 = vmax.f32 %v1196, 0.0
    %v1295 = vmax.f32 %v1201, 0.0
    %v1296 = vmax.f32 %v1206, 0.0
    %v1297 = vmax.f32 %v1211, 0.0
    %v1298 = vmax.f32 %v1216, 0.0
    %v1299 = vmax.f32 %v1221, 0.0
    %v1300 = vmax.f32 %v1226, 0.0
    %v1301 = vmax.f32 %v1231, 0.0
    %v1302 = vmax.f32 %v1236, 0.0
    %v1303 = vmax.f32 %v1241, 0.0
    %v1304 = vmax.f32 %v1246, 0.0
    %v1305 = vmax.f32 %v1251, 0.0
    %v1306 = vmax.f32 %v1256, 0.0
    %v1307 = vmax.f32 %v1261, 0.0
    %v1308 = vmax.f32 %v1266, 0.0
    %v1309 = vmax.f32 %v1271, 0.0
    %v1310 = vmax.f32 %v1276, 0.0
    %s1311 = scalar_lea.vmem [#allocation7], 384
    %v1312 = vld [vmem:[%s1311] sm:$0xff]
    %v1313 = vld [vmem:[%s1311 + $0x8] sm:$0xff]
    %v1314 = vld [vmem:[%s1311 + $0x10] sm:$0xff]
    %v1315 = vld [vmem:[%s1311 + $0x18] sm:$0xff]
    %v1316 = vld [vmem:[%s1311 + $0x20] sm:$0xff]
    %v1317 = vld [vmem:[%s1311 + $0x28] sm:$0xff]
    %v1318 = vld [vmem:[%s1311 + $0x30] sm:$0xff]
    %v1319 = vld [vmem:[%s1311 + $0x38] sm:$0xff]
    %v1320 = vld [vmem:[%s1311 + $0x40] sm:$0xff]
    %v1321 = vld [vmem:[%s1311 + $0x48] sm:$0xff]
    %v1322 = vld [vmem:[%s1311 + $0x50] sm:$0xff]
    %v1323 = vld [vmem:[%s1311 + $0x58] sm:$0xff]
    %v1324 = vld [vmem:[%s1311 + $0x60] sm:$0xff]
    %v1325 = vld [vmem:[%s1311 + $0x68] sm:$0xff]
    %v1326 = vld [vmem:[%s1311 + $0x70] sm:$0xff]
    %v1327 = vld [vmem:[%s1311 + $0x78] sm:$0xff]
    %s1328 = scalar_lea.vmem %s3, 4
    %v1329 = vld [vmem:[%s1328] sm:$0x1]
    %v1331 = vlaneseq
    %v1332 = vshrl.u32 %v1331, 7
    %v1333 = vsub.s32 0, %v1332
    %v1334 = vrot.slane %v1329, %v1333
    %1336 = vmatprep.subr.mxu0 0.0
    %1337 = vmatpush1.msra.mxu0 %v1312
    %1338 = vmatprep.subr.mxu0 0.0
    %1339 = vmatpush1.msra.mxu0 %v1313
    %1340 = vmatprep.subr.mxu0 0.0
    %1341 = vmatpush1.msra.mxu0 %v1314
    %1342 = vmatprep.subr.mxu0 0.0
    %1343 = vmatpush1.msra.mxu0 %v1315
    %1344 = vmatprep.subr.mxu0 0.0
    %1345 = vmatpush1.msra.mxu0 %v1316
    %1346 = vmatprep.subr.mxu0 0.0
    %1347 = vmatpush1.msra.mxu0 %v1317
    %1348 = vmatprep.subr.mxu0 0.0
    %1349 = vmatpush1.msra.mxu0 %v1318
    %1350 = vmatprep.subr.mxu0 0.0
    %1351 = vmatpush1.msra.mxu0 %v1319
    %1352 = vmatprep.subr.mxu0 0.0
    %1353 = vmatpush1.msra.mxu0 %v1320
    %1354 = vmatprep.subr.mxu0 0.0
    %1355 = vmatpush1.msra.mxu0 %v1321
    %1356 = vmatprep.subr.mxu0 0.0
    %1357 = vmatpush1.msra.mxu0 %v1322
    %1358 = vmatprep.subr.mxu0 0.0
    %1359 = vmatpush1.msra.mxu0 %v1323
    %1360 = vmatprep.subr.mxu0 0.0
    %1361 = vmatpush1.msra.mxu0 %v1324
    %1362 = vmatprep.subr.mxu0 0.0
    %1363 = vmatpush1.msra.mxu0 %v1325
    %1364 = vmatprep.subr.mxu0 0.0
    %1365 = vmatpush1.msra.mxu0 %v1326
    %1366 = vmatprep.subr.mxu0 0.0
    %1367 = vmatpush1.msra.mxu0 %v1327
    %1368 = vmatprep.subr.mxu0 0.0
    %1369 = vmatpush1.msra.mxu0 0.0
    %1370 = vmatprep.subr.mxu0 0.0
    %1371 = vmatpush1.msra.mxu0 0.0
    %1372 = vmatprep.subr.mxu0 0.0
    %1373 = vmatpush1.msra.mxu0 0.0
    %1374 = vmatprep.subr.mxu0 0.0
    %1375 = vmatpush1.msra.mxu0 0.0
    %1376 = vmatprep.subr.mxu0 0.0
    %1377 = vmatpush1.msra.mxu0 0.0
    %1378 = vmatprep.subr.mxu0 0.0
    %1379 = vmatpush1.msra.mxu0 0.0
    %1380 = vmatprep.subr.mxu0 0.0
    %1381 = vmatpush1.msra.mxu0 0.0
    %1382 = vmatprep.subr.mxu0 0.0
    %1383 = vmatpush1.msra.mxu0 0.0
    %1384 = vmatprep.subr.mxu0 0.0
    %1385 = vmatpush1.msra.mxu0 0.0
    %1386 = vmatprep.subr.mxu0 0.0
    %1387 = vmatpush1.msra.mxu0 0.0
    %1388 = vmatprep.subr.mxu0 0.0
    %1389 = vmatpush1.msra.mxu0 0.0
    %1390 = vmatprep.subr.mxu0 0.0
    %1391 = vmatpush1.msra.mxu0 0.0
    %1392 = vmatprep.subr.mxu0 0.0
    %1393 = vmatpush1.msra.mxu0 0.0
    %1394 = vmatprep.subr.mxu0 0.0
    %1395 = vmatpush1.msra.mxu0 0.0
    %1396 = vmatprep.subr.mxu0 0.0
    %1397 = vmatpush1.msra.mxu0 0.0
    %1398 = vmatprep.subr.mxu0 0.0
    %1399 = vmatpush1.msra.mxu0 0.0
    %1400 = vmatprep.mubr.f32.mxu0 0.0
    %1401 = vmatmul.mubr.f32.gmra.mrb[0].mxu0 %v1279
    %v1402 = vpop.f32.mrb[0].mxu0
    %v1403 = vadd.f32 %v1334, %v1402
    %v1404 = vpop.f32.mrb[0].mxu0
    %1405 = vmatprep.mubr.f32.mxu0 0.0
    %1406 = vmatmul.mubr.f32.gmra.mrb[0].mxu0 %v1280
    %v1407 = vpop.f32.mrb[0].mxu0
    %v1408 = vadd.f32 %v1334, %v1407
    %v1409 = vpop.f32.mrb[0].mxu0
    %1410 = vmatprep.mubr.f32.mxu0 0.0
    %1411 = vmatmul.mubr.f32.gmra.mrb[0].mxu0 %v1281
    %v1412 = vpop.f32.mrb[0].mxu0
    %v1413 = vadd.f32 %v1334, %v1412
    %v1414 = vpop.f32.mrb[0].mxu0
    %1415 = vmatprep.mubr.f32.mxu0 0.0
    %1416 = vmatmul.mubr.f32.gmra.mrb[0].mxu0 %v1282
    %v1417 = vpop.f32.mrb[0].mxu0
    %v1418 = vadd.f32 %v1334, %v1417
    %v1419 = vpop.f32.mrb[0].mxu0
    %1420 = vmatprep.mubr.f32.mxu0 0.0
    %1421 = vmatmul.mubr.f32.gmra.mrb[0].mxu0 %v1283
    %v1422 = vpop.f32.mrb[0].mxu0
    %v1423 = vadd.f32 %v1334, %v1422
    %v1424 = vpop.f32.mrb[0].mxu0
    %1425 = vmatprep.mubr.f32.mxu0 0.0
    %1426 = vmatmul.mubr.f32.gmra.mrb[0].mxu0 %v1284
    %v1427 = vpop.f32.mrb[0].mxu0
    %v1428 = vadd.f32 %v1334, %v1427
    %v1429 = vpop.f32.mrb[0].mxu0
    %1430 = vmatprep.mubr.f32.mxu0 0.0
    %1431 = vmatmul.mubr.f32.gmra.mrb[0].mxu0 %v1285
    %v1432 = vpop.f32.mrb[0].mxu0
    %v1433 = vadd.f32 %v1334, %v1432
    %v1434 = vpop.f32.mrb[0].mxu0
    %1435 = vmatprep.mubr.f32.mxu0 0.0
    %1436 = vmatmul.mubr.f32.gmra.mrb[0].mxu0 %v1286
    %v1437 = vpop.f32.mrb[0].mxu0
    %v1438 = vadd.f32 %v1334, %v1437
    %v1439 = vpop.f32.mrb[0].mxu0
    %1440 = vmatprep.mubr.f32.mxu0 0.0
    %1441 = vmatmul.mubr.f32.gmra.mrb[0].mxu0 %v1287
    %v1442 = vpop.f32.mrb[0].mxu0
    %v1443 = vadd.f32 %v1334, %v1442
    %v1444 = vpop.f32.mrb[0].mxu0
    %1445 = vmatprep.mubr.f32.mxu0 0.0
    %1446 = vmatmul.mubr.f32.gmra.mrb[0].mxu0 %v1288
    %v1447 = vpop.f32.mrb[0].mxu0
    %v1448 = vadd.f32 %v1334, %v1447
    %v1449 = vpop.f32.mrb[0].mxu0
    %1450 = vmatprep.mubr.f32.mxu0 0.0
    %1451 = vmatmul.mubr.f32.gmra.mrb[0].mxu0 %v1289
    %v1452 = vpop.f32.mrb[0].mxu0
    %v1453 = vadd.f32 %v1334, %v1452
    %v1454 = vpop.f32.mrb[0].mxu0
    %1455 = vmatprep.mubr.f32.mxu0 0.0
    %1456 = vmatmul.mubr.f32.gmra.mrb[0].mxu0 %v1290
    %v1457 = vpop.f32.mrb[0].mxu0
    %v1458 = vadd.f32 %v1334, %v1457
    %v1459 = vpop.f32.mrb[0].mxu0
    %1460 = vmatprep.mubr.f32.mxu0 0.0
    %1461 = vmatmul.mubr.f32.gmra.mrb[0].mxu0 %v1291
    %v1462 = vpop.f32.mrb[0].mxu0
    %v1463 = vadd.f32 %v1334, %v1462
    %v1464 = vpop.f32.mrb[0].mxu0
    %1465 = vmatprep.mubr.f32.mxu0 0.0
    %1466 = vmatmul.mubr.f32.gmra.mrb[0].mxu0 %v1292
    %v1467 = vpop.f32.mrb[0].mxu0
    %v1468 = vadd.f32 %v1334, %v1467
    %v1469 = vpop.f32.mrb[0].mxu0
    %1470 = vmatprep.mubr.f32.mxu0 0.0
    %1471 = vmatmul.mubr.f32.gmra.mrb[0].mxu0 %v1293
    %v1472 = vpop.f32.mrb[0].mxu0
    %v1473 = vadd.f32 %v1334, %v1472
    %v1474 = vpop.f32.mrb[0].mxu0
    %1475 = vmatprep.mubr.f32.mxu0 0.0
    %1476 = vmatmul.mubr.f32.gmra.mrb[0].mxu0 %v1294
    %v1477 = vpop.f32.mrb[0].mxu0
    %v1478 = vadd.f32 %v1334, %v1477
    %v1479 = vpop.f32.mrb[0].mxu0
    %1480 = vmatprep.mubr.f32.mxu0 0.0
    %1481 = vmatmul.mubr.f32.gmra.mrb[0].mxu0 %v1295
    %v1482 = vpop.f32.mrb[0].mxu0
    %v1483 = vadd.f32 %v1334, %v1482
    %v1484 = vpop.f32.mrb[0].mxu0
    %1485 = vmatprep.mubr.f32.mxu0 0.0
    %1486 = vmatmul.mubr.f32.gmra.mrb[0].mxu0 %v1296
    %v1487 = vpop.f32.mrb[0].mxu0
    %v1488 = vadd.f32 %v1334, %v1487
    %v1489 = vpop.f32.mrb[0].mxu0
    %1490 = vmatprep.mubr.f32.mxu0 0.0
    %1491 = vmatmul.mubr.f32.gmra.mrb[0].mxu0 %v1297
    %v1492 = vpop.f32.mrb[0].mxu0
    %v1493 = vadd.f32 %v1334, %v1492
    %v1494 = vpop.f32.mrb[0].mxu0
    %1495 = vmatprep.mubr.f32.mxu0 0.0
    %1496 = vmatmul.mubr.f32.gmra.mrb[0].mxu0 %v1298
    %v1497 = vpop.f32.mrb[0].mxu0
    %v1498 = vadd.f32 %v1334, %v1497
    %v1499 = vpop.f32.mrb[0].mxu0
    %1500 = vmatprep.mubr.f32.mxu0 0.0
    %1501 = vmatmul.mubr.f32.gmra.mrb[0].mxu0 %v1299
    %v1502 = vpop.f32.mrb[0].mxu0
    %v1503 = vadd.f32 %v1334, %v1502
    %v1504 = vpop.f32.mrb[0].mxu0
    %1505 = vmatprep.mubr.f32.mxu0 0.0
    %1506 = vmatmul.mubr.f32.gmra.mrb[0].mxu0 %v1300
    %v1507 = vpop.f32.mrb[0].mxu0
    %v1508 = vadd.f32 %v1334, %v1507
    %v1509 = vpop.f32.mrb[0].mxu0
    %1510 = vmatprep.mubr.f32.mxu0 0.0
    %1511 = vmatmul.mubr.f32.gmra.mrb[0].mxu0 %v1301
    %v1512 = vpop.f32.mrb[0].mxu0
    %v1513 = vadd.f32 %v1334, %v1512
    %v1514 = vpop.f32.mrb[0].mxu0
    %1515 = vmatprep.mubr.f32.mxu0 0.0
    %1516 = vmatmul.mubr.f32.gmra.mrb[0].mxu0 %v1302
    %v1517 = vpop.f32.mrb[0].mxu0
    %v1518 = vadd.f32 %v1334, %v1517
    %v1519 = vpop.f32.mrb[0].mxu0
    %1520 = vmatprep.mubr.f32.mxu0 0.0
    %1521 = vmatmul.mubr.f32.gmra.mrb[0].mxu0 %v1303
    %v1522 = vpop.f32.mrb[0].mxu0
    %v1523 = vadd.f32 %v1334, %v1522
    %v1524 = vpop.f32.mrb[0].mxu0
    %1525 = vmatprep.mubr.f32.mxu0 0.0
    %1526 = vmatmul.mubr.f32.gmra.mrb[0].mxu0 %v1304
    %v1527 = vpop.f32.mrb[0].mxu0
    %v1528 = vadd.f32 %v1334, %v1527
    %v1529 = vpop.f32.mrb[0].mxu0
    %1530 = vmatprep.mubr.f32.mxu0 0.0
    %1531 = vmatmul.mubr.f32.gmra.mrb[0].mxu0 %v1305
    %v1532 = vpop.f32.mrb[0].mxu0
    %v1533 = vadd.f32 %v1334, %v1532
    %v1534 = vpop.f32.mrb[0].mxu0
    %1535 = vmatprep.mubr.f32.mxu0 0.0
    %1536 = vmatmul.mubr.f32.gmra.mrb[0].mxu0 %v1306
    %v1537 = vpop.f32.mrb[0].mxu0
    %v1538 = vadd.f32 %v1334, %v1537
    %v1539 = vpop.f32.mrb[0].mxu0
    %1540 = vmatprep.mubr.f32.mxu0 0.0
    %1541 = vmatmul.mubr.f32.gmra.mrb[0].mxu0 %v1307
    %v1542 = vpop.f32.mrb[0].mxu0
    %v1543 = vadd.f32 %v1334, %v1542
    %v1544 = vpop.f32.mrb[0].mxu0
    %1545 = vmatprep.mubr.f32.mxu0 0.0
    %1546 = vmatmul.mubr.f32.gmra.mrb[0].mxu0 %v1308
    %v1547 = vpop.f32.mrb[0].mxu0
    %v1548 = vadd.f32 %v1334, %v1547
    %v1549 = vpop.f32.mrb[0].mxu0
    %1550 = vmatprep.mubr.f32.mxu0 0.0
    %1551 = vmatmul.mubr.f32.gmra.mrb[0].mxu0 %v1309
    %v1552 = vpop.f32.mrb[0].mxu0
    %v1553 = vadd.f32 %v1334, %v1552
    %v1554 = vpop.f32.mrb[0].mxu0
    %1555 = vmatprep.mubr.f32.mxu0 0.0
    %1556 = vmatmul.mubr.f32.gmra.mrb[0].mxu0 %v1310
    %v1557 = vpop.f32.mrb[0].mxu0
    %v1558 = vadd.f32 %v1334, %v1557
    %v1559 = vpop.f32.mrb[0].mxu0
    %1560 = vdwg.mxu0
    %v1561 = vmax.f32 %v1403, 0.0
    %v1562 = vmax.f32 %v1408, 0.0
    %v1563 = vmax.f32 %v1413, 0.0
    %v1564 = vmax.f32 %v1418, 0.0
    %v1565 = vmax.f32 %v1423, 0.0
    %v1566 = vmax.f32 %v1428, 0.0
    %v1567 = vmax.f32 %v1433, 0.0
    %v1568 = vmax.f32 %v1438, 0.0
    %v1569 = vmax.f32 %v1443, 0.0
    %v1570 = vmax.f32 %v1448, 0.0
    %v1571 = vmax.f32 %v1453, 0.0
    %v1572 = vmax.f32 %v1458, 0.0
    %v1573 = vmax.f32 %v1463, 0.0
    %v1574 = vmax.f32 %v1468, 0.0
    %v1575 = vmax.f32 %v1473, 0.0
    %v1576 = vmax.f32 %v1478, 0.0
    %v1577 = vmax.f32 %v1483, 0.0
    %v1578 = vmax.f32 %v1488, 0.0
    %v1579 = vmax.f32 %v1493, 0.0
    %v1580 = vmax.f32 %v1498, 0.0
    %v1581 = vmax.f32 %v1503, 0.0
    %v1582 = vmax.f32 %v1508, 0.0
    %v1583 = vmax.f32 %v1513, 0.0
    %v1584 = vmax.f32 %v1518, 0.0
    %v1585 = vmax.f32 %v1523, 0.0
    %v1586 = vmax.f32 %v1528, 0.0
    %v1587 = vmax.f32 %v1533, 0.0
    %v1588 = vmax.f32 %v1538, 0.0
    %v1589 = vmax.f32 %v1543, 0.0
    %v1590 = vmax.f32 %v1548, 0.0
    %v1591 = vmax.f32 %v1553, 0.0
    %v1592 = vmax.f32 %v1558, 0.0
    %s1593 = scalar_lea.vmem [#allocation7], 512
    %v1594 = vld [vmem:[%s1593] sm:$0xff]
    %v1595 = vld [vmem:[%s1593 + $0x8] sm:$0xff]
    %v1596 = vld [vmem:[%s1593 + $0x10] sm:$0xff]
    %v1597 = vld [vmem:[%s1593 + $0x18] sm:$0xff]
    %v1598 = vld [vmem:[%s1593 + $0x20] sm:$0xff]
    %v1599 = vld [vmem:[%s1593 + $0x28] sm:$0xff]
    %v1600 = vld [vmem:[%s1593 + $0x30] sm:$0xff]
    %v1601 = vld [vmem:[%s1593 + $0x38] sm:$0xff]
    %v1602 = vld [vmem:[%s1593 + $0x40] sm:$0xff]
    %v1603 = vld [vmem:[%s1593 + $0x48] sm:$0xff]
    %v1604 = vld [vmem:[%s1593 + $0x50] sm:$0xff]
    %v1605 = vld [vmem:[%s1593 + $0x58] sm:$0xff]
    %v1606 = vld [vmem:[%s1593 + $0x60] sm:$0xff]
    %v1607 = vld [vmem:[%s1593 + $0x68] sm:$0xff]
    %v1608 = vld [vmem:[%s1593 + $0x70] sm:$0xff]
    %v1609 = vld [vmem:[%s1593 + $0x78] sm:$0xff]
    %v1610 = vld [vmem:[#allocation8] sm:$0xff]
    %v1611 = vld [vmem:[#allocation8 + $0x8] sm:$0xff]
    %v1612 = vld [vmem:[#allocation8 + $0x10] sm:$0xff]
    %v1613 = vld [vmem:[#allocation8 + $0x18] sm:$0xff]
    %v1614 = vld [vmem:[#allocation8 + $0x20] sm:$0xff]
    %v1615 = vld [vmem:[#allocation8 + $0x28] sm:$0xff]
    %v1616 = vld [vmem:[#allocation8 + $0x30] sm:$0xff]
    %v1617 = vld [vmem:[#allocation8 + $0x38] sm:$0xff]
    %v1618 = vld [vmem:[#allocation8 + $0x40] sm:$0xff]
    %v1619 = vld [vmem:[#allocation8 + $0x48] sm:$0xff]
    %v1620 = vld [vmem:[#allocation8 + $0x50] sm:$0xff]
    %v1621 = vld [vmem:[#allocation8 + $0x58] sm:$0xff]
    %v1622 = vld [vmem:[#allocation8 + $0x60] sm:$0xff]
    %v1623 = vld [vmem:[#allocation8 + $0x68] sm:$0xff]
    %v1624 = vld [vmem:[#allocation8 + $0x70] sm:$0xff]
    %v1625 = vld [vmem:[#allocation8 + $0x78] sm:$0xff]
    %1626 = vmatprep.subr.mxu0 0.0
    %1627 = vmatpush1.msra.mxu0 %v1610
    %1628 = vmatprep.subr.mxu0 0.0
    %1629 = vmatpush1.msra.mxu0 %v1611
    %1630 = vmatprep.subr.mxu0 0.0
    %1631 = vmatpush1.msra.mxu0 %v1612
    %1632 = vmatprep.subr.mxu0 0.0
    %1633 = vmatpush1.msra.mxu0 %v1613
    %1634 = vmatprep.subr.mxu0 0.0
    %1635 = vmatpush1.msra.mxu0 %v1614
    %1636 = vmatprep.subr.mxu0 0.0
    %1637 = vmatpush1.msra.mxu0 %v1615
    %1638 = vmatprep.subr.mxu0 0.0
    %1639 = vmatpush1.msra.mxu0 %v1616
    %1640 = vmatprep.subr.mxu0 0.0
    %1641 = vmatpush1.msra.mxu0 %v1617
    %1642 = vmatprep.subr.mxu0 0.0
    %1643 = vmatpush1.msra.mxu0 %v1618
    %1644 = vmatprep.subr.mxu0 0.0
    %1645 = vmatpush1.msra.mxu0 %v1619
    %1646 = vmatprep.subr.mxu0 0.0
    %1647 = vmatpush1.msra.mxu0 %v1620
    %1648 = vmatprep.subr.mxu0 0.0
    %1649 = vmatpush1.msra.mxu0 %v1621
    %1650 = vmatprep.subr.mxu0 0.0
    %1651 = vmatpush1.msra.mxu0 %v1622
    %1652 = vmatprep.subr.mxu0 0.0
    %1653 = vmatpush1.msra.mxu0 %v1623
    %1654 = vmatprep.subr.mxu0 0.0
    %1655 = vmatpush1.msra.mxu0 %v1624
    %1656 = vmatprep.subr.mxu0 0.0
    %1657 = vmatpush1.msra.mxu0 %v1625
    %1658 = vmatprep.subr.mxu0 0.0
    %1659 = vmatpush1.msra.mxu0 0.0
    %1660 = vmatprep.subr.mxu0 0.0
    %1661 = vmatpush1.msra.mxu0 0.0
    %1662 = vmatprep.subr.mxu0 0.0
    %1663 = vmatpush1.msra.mxu0 0.0
    %1664 = vmatprep.subr.mxu0 0.0
    %1665 = vmatpush1.msra.mxu0 0.0
    %1666 = vmatprep.subr.mxu0 0.0
    %1667 = vmatpush1.msra.mxu0 0.0
    %1668 = vmatprep.subr.mxu0 0.0
    %1669 = vmatpush1.msra.mxu0 0.0
    %1670 = vmatprep.subr.mxu0 0.0
    %1671 = vmatpush1.msra.mxu0 0.0
    %1672 = vmatprep.subr.mxu0 0.0
    %1673 = vmatpush1.msra.mxu0 0.0
    %1674 = vmatprep.subr.mxu0 0.0
    %1675 = vmatpush1.msra.mxu0 0.0
    %1676 = vmatprep.subr.mxu0 0.0
    %1677 = vmatpush1.msra.mxu0 0.0
    %1678 = vmatprep.subr.mxu0 0.0
    %1679 = vmatpush1.msra.mxu0 0.0
    %1680 = vmatprep.subr.mxu0 0.0
    %1681 = vmatpush1.msra.mxu0 0.0
    %1682 = vmatprep.subr.mxu0 0.0
    %1683 = vmatpush1.msra.mxu0 0.0
    %1684 = vmatprep.subr.mxu0 0.0
    %1685 = vmatpush1.msra.mxu0 0.0
    %1686 = vmatprep.subr.mxu0 0.0
    %1687 = vmatpush1.msra.mxu0 0.0
    %1688 = vmatprep.subr.mxu0 0.0
    %1689 = vmatpush1.msra.mxu0 0.0
    %1690 = vmatprep.mubr.f32.mxu0 0.0
    %1691 = vmatmul.mubr.f32.gmra.mrb[0].mxu0 %v154
    %v1692 = vpop.f32.mrb[0].mxu0
    %v1693 = vadd.f32 0.0, %v1692
    %v1694 = vpop.f32.mrb[0].mxu0
    %1695 = vmatprep.mubr.f32.mxu0 0.0
    %1696 = vmatmul.mubr.f32.gmra.mrb[0].mxu0 %v155
    %v1697 = vpop.f32.mrb[0].mxu0
    %v1698 = vadd.f32 0.0, %v1697
    %v1699 = vpop.f32.mrb[0].mxu0
    %1700 = vmatprep.mubr.f32.mxu0 0.0
    %1701 = vmatmul.mubr.f32.gmra.mrb[0].mxu0 %v156
    %v1702 = vpop.f32.mrb[0].mxu0
    %v1703 = vadd.f32 0.0, %v1702
    %v1704 = vpop.f32.mrb[0].mxu0
    %1705 = vmatprep.mubr.f32.mxu0 0.0
    %1706 = vmatmul.mubr.f32.gmra.mrb[0].mxu0 %v157
    %v1707 = vpop.f32.mrb[0].mxu0
    %v1708 = vadd.f32 0.0, %v1707
    %v1709 = vpop.f32.mrb[0].mxu0
    %1710 = vmatprep.mubr.f32.mxu0 0.0
    %1711 = vmatmul.mubr.f32.gmra.mrb[0].mxu0 %v158
    %v1712 = vpop.f32.mrb[0].mxu0
    %v1713 = vadd.f32 0.0, %v1712
    %v1714 = vpop.f32.mrb[0].mxu0
    %1715 = vmatprep.mubr.f32.mxu0 0.0
    %1716 = vmatmul.mubr.f32.gmra.mrb[0].mxu0 %v159
    %v1717 = vpop.f32.mrb[0].mxu0
    %v1718 = vadd.f32 0.0, %v1717
    %v1719 = vpop.f32.mrb[0].mxu0
    %1720 = vmatprep.mubr.f32.mxu0 0.0
    %1721 = vmatmul.mubr.f32.gmra.mrb[0].mxu0 %v160
    %v1722 = vpop.f32.mrb[0].mxu0
    %v1723 = vadd.f32 0.0, %v1722
    %v1724 = vpop.f32.mrb[0].mxu0
    %1725 = vmatprep.mubr.f32.mxu0 0.0
    %1726 = vmatmul.mubr.f32.gmra.mrb[0].mxu0 %v161
    %v1727 = vpop.f32.mrb[0].mxu0
    %v1728 = vadd.f32 0.0, %v1727
    %v1729 = vpop.f32.mrb[0].mxu0
    %1730 = vmatprep.mubr.f32.mxu0 0.0
    %1731 = vmatmul.mubr.f32.gmra.mrb[0].mxu0 %v162
    %v1732 = vpop.f32.mrb[0].mxu0
    %v1733 = vadd.f32 0.0, %v1732
    %v1734 = vpop.f32.mrb[0].mxu0
    %1735 = vmatprep.mubr.f32.mxu0 0.0
    %1736 = vmatmul.mubr.f32.gmra.mrb[0].mxu0 %v163
    %v1737 = vpop.f32.mrb[0].mxu0
    %v1738 = vadd.f32 0.0, %v1737
    %v1739 = vpop.f32.mrb[0].mxu0
    %1740 = vmatprep.mubr.f32.mxu0 0.0
    %1741 = vmatmul.mubr.f32.gmra.mrb[0].mxu0 %v164
    %v1742 = vpop.f32.mrb[0].mxu0
    %v1743 = vadd.f32 0.0, %v1742
    %v1744 = vpop.f32.mrb[0].mxu0
    %1745 = vmatprep.mubr.f32.mxu0 0.0
    %1746 = vmatmul.mubr.f32.gmra.mrb[0].mxu0 %v165
    %v1747 = vpop.f32.mrb[0].mxu0
    %v1748 = vadd.f32 0.0, %v1747
    %v1749 = vpop.f32.mrb[0].mxu0
    %1750 = vmatprep.mubr.f32.mxu0 0.0
    %1751 = vmatmul.mubr.f32.gmra.mrb[0].mxu0 %v166
    %v1752 = vpop.f32.mrb[0].mxu0
    %v1753 = vadd.f32 0.0, %v1752
    %v1754 = vpop.f32.mrb[0].mxu0
    %1755 = vmatprep.mubr.f32.mxu0 0.0
    %1756 = vmatmul.mubr.f32.gmra.mrb[0].mxu0 %v167
    %v1757 = vpop.f32.mrb[0].mxu0
    %v1758 = vadd.f32 0.0, %v1757
    %v1759 = vpop.f32.mrb[0].mxu0
    %1760 = vmatprep.mubr.f32.mxu0 0.0
    %1761 = vmatmul.mubr.f32.gmra.mrb[0].mxu0 %v168
    %v1762 = vpop.f32.mrb[0].mxu0
    %v1763 = vadd.f32 0.0, %v1762
    %v1764 = vpop.f32.mrb[0].mxu0
    %1765 = vmatprep.mubr.f32.mxu0 0.0
    %1766 = vmatmul.mubr.f32.gmra.mrb[0].mxu0 %v169
    %v1767 = vpop.f32.mrb[0].mxu0
    %v1768 = vadd.f32 0.0, %v1767
    %v1769 = vpop.f32.mrb[0].mxu0
    %1770 = vmatprep.mubr.f32.mxu0 0.0
    %1771 = vmatmul.mubr.f32.gmra.mrb[0].mxu0 %v170
    %v1772 = vpop.f32.mrb[0].mxu0
    %v1773 = vadd.f32 0.0, %v1772
    %v1774 = vpop.f32.mrb[0].mxu0
    %1775 = vmatprep.mubr.f32.mxu0 0.0
    %1776 = vmatmul.mubr.f32.gmra.mrb[0].mxu0 %v171
    %v1777 = vpop.f32.mrb[0].mxu0
    %v1778 = vadd.f32 0.0, %v1777
    %v1779 = vpop.f32.mrb[0].mxu0
    %1780 = vmatprep.mubr.f32.mxu0 0.0
    %1781 = vmatmul.mubr.f32.gmra.mrb[0].mxu0 %v172
    %v1782 = vpop.f32.mrb[0].mxu0
    %v1783 = vadd.f32 0.0, %v1782
    %v1784 = vpop.f32.mrb[0].mxu0
    %1785 = vmatprep.mubr.f32.mxu0 0.0
    %1786 = vmatmul.mubr.f32.gmra.mrb[0].mxu0 %v173
    %v1787 = vpop.f32.mrb[0].mxu0
    %v1788 = vadd.f32 0.0, %v1787
    %v1789 = vpop.f32.mrb[0].mxu0
    %1790 = vmatprep.mubr.f32.mxu0 0.0
    %1791 = vmatmul.mubr.f32.gmra.mrb[0].mxu0 %v174
    %v1792 = vpop.f32.mrb[0].mxu0
    %v1793 = vadd.f32 0.0, %v1792
    %v1794 = vpop.f32.mrb[0].mxu0
    %1795 = vmatprep.mubr.f32.mxu0 0.0
    %1796 = vmatmul.mubr.f32.gmra.mrb[0].mxu0 %v175
    %v1797 = vpop.f32.mrb[0].mxu0
    %v1798 = vadd.f32 0.0, %v1797
    %v1799 = vpop.f32.mrb[0].mxu0
    %1800 = vmatprep.mubr.f32.mxu0 0.0
    %1801 = vmatmul.mubr.f32.gmra.mrb[0].mxu0 %v176
    %v1802 = vpop.f32.mrb[0].mxu0
    %v1803 = vadd.f32 0.0, %v1802
    %v1804 = vpop.f32.mrb[0].mxu0
    %1805 = vmatprep.mubr.f32.mxu0 0.0
    %1806 = vmatmul.mubr.f32.gmra.mrb[0].mxu0 %v177
    %v1807 = vpop.f32.mrb[0].mxu0
    %v1808 = vadd.f32 0.0, %v1807
    %v1809 = vpop.f32.mrb[0].mxu0
    %1810 = vmatprep.mubr.f32.mxu0 0.0
    %1811 = vmatmul.mubr.f32.gmra.mrb[0].mxu0 %v178
    %v1812 = vpop.f32.mrb[0].mxu0
    %v1813 = vadd.f32 0.0, %v1812
    %v1814 = vpop.f32.mrb[0].mxu0
    %1815 = vmatprep.mubr.f32.mxu0 0.0
    %1816 = vmatmul.mubr.f32.gmra.mrb[0].mxu0 %v179
    %v1817 = vpop.f32.mrb[0].mxu0
    %v1818 = vadd.f32 0.0, %v1817
    %v1819 = vpop.f32.mrb[0].mxu0
    %1820 = vmatprep.mubr.f32.mxu0 0.0
    %1821 = vmatmul.mubr.f32.gmra.mrb[0].mxu0 %v180
    %v1822 = vpop.f32.mrb[0].mxu0
    %v1823 = vadd.f32 0.0, %v1822
    %v1824 = vpop.f32.mrb[0].mxu0
    %1825 = vmatprep.mubr.f32.mxu0 0.0
    %1826 = vmatmul.mubr.f32.gmra.mrb[0].mxu0 %v181
    %v1827 = vpop.f32.mrb[0].mxu0
    %v1828 = vadd.f32 0.0, %v1827
    %v1829 = vpop.f32.mrb[0].mxu0
    %1830 = vmatprep.mubr.f32.mxu0 0.0
    %1831 = vmatmul.mubr.f32.gmra.mrb[0].mxu0 %v182
    %v1832 = vpop.f32.mrb[0].mxu0
    %v1833 = vadd.f32 0.0, %v1832
    %v1834 = vpop.f32.mrb[0].mxu0
    %1835 = vmatprep.mubr.f32.mxu0 0.0
    %1836 = vmatmul.mubr.f32.gmra.mrb[0].mxu0 %v183
    %v1837 = vpop.f32.mrb[0].mxu0
    %v1838 = vadd.f32 0.0, %v1837
    %v1839 = vpop.f32.mrb[0].mxu0
    %1840 = vmatprep.mubr.f32.mxu0 0.0
    %1841 = vmatmul.mubr.f32.gmra.mrb[0].mxu0 %v184
    %v1842 = vpop.f32.mrb[0].mxu0
    %v1843 = vadd.f32 0.0, %v1842
    %v1844 = vpop.f32.mrb[0].mxu0
    %1845 = vmatprep.mubr.f32.mxu0 0.0
    %1846 = vmatmul.mubr.f32.gmra.mrb[0].mxu0 %v185
    %v1847 = vpop.f32.mrb[0].mxu0
    %v1848 = vadd.f32 0.0, %v1847
    %v1849 = vpop.f32.mrb[0].mxu0
    %1850 = vdwg.mxu0
    %1851 = vmatprep.subr.mxu0 0.0
    %1852 = vmatpush1.msra.mxu0 %v1594
    %1853 = vmatprep.subr.mxu0 0.0
    %1854 = vmatpush1.msra.mxu0 %v1595
    %1855 = vmatprep.subr.mxu0 0.0
    %1856 = vmatpush1.msra.mxu0 %v1596
    %1857 = vmatprep.subr.mxu0 0.0
    %1858 = vmatpush1.msra.mxu0 %v1597
    %1859 = vmatprep.subr.mxu0 0.0
    %1860 = vmatpush1.msra.mxu0 %v1598
    %1861 = vmatprep.subr.mxu0 0.0
    %1862 = vmatpush1.msra.mxu0 %v1599
    %1863 = vmatprep.subr.mxu0 0.0
    %1864 = vmatpush1.msra.mxu0 %v1600
    %1865 = vmatprep.subr.mxu0 0.0
    %1866 = vmatpush1.msra.mxu0 %v1601
    %1867 = vmatprep.subr.mxu0 0.0
    %1868 = vmatpush1.msra.mxu0 %v1602
    %1869 = vmatprep.subr.mxu0 0.0
    %1870 = vmatpush1.msra.mxu0 %v1603
    %1871 = vmatprep.subr.mxu0 0.0
    %1872 = vmatpush1.msra.mxu0 %v1604
    %1873 = vmatprep.subr.mxu0 0.0
    %1874 = vmatpush1.msra.mxu0 %v1605
    %1875 = vmatprep.subr.mxu0 0.0
    %1876 = vmatpush1.msra.mxu0 %v1606
    %1877 = vmatprep.subr.mxu0 0.0
    %1878 = vmatpush1.msra.mxu0 %v1607
    %1879 = vmatprep.subr.mxu0 0.0
    %1880 = vmatpush1.msra.mxu0 %v1608
    %1881 = vmatprep.subr.mxu0 0.0
    %1882 = vmatpush1.msra.mxu0 %v1609
    %1883 = vmatprep.subr.mxu0 0.0
    %1884 = vmatpush1.msra.mxu0 0.0
    %1885 = vmatprep.subr.mxu0 0.0
    %1886 = vmatpush1.msra.mxu0 0.0
    %1887 = vmatprep.subr.mxu0 0.0
    %1888 = vmatpush1.msra.mxu0 0.0
    %1889 = vmatprep.subr.mxu0 0.0
    %1890 = vmatpush1.msra.mxu0 0.0
    %1891 = vmatprep.subr.mxu0 0.0
    %1892 = vmatpush1.msra.mxu0 0.0
    %1893 = vmatprep.subr.mxu0 0.0
    %1894 = vmatpush1.msra.mxu0 0.0
    %1895 = vmatprep.subr.mxu0 0.0
    %1896 = vmatpush1.msra.mxu0 0.0
    %1897 = vmatprep.subr.mxu0 0.0
    %1898 = vmatpush1.msra.mxu0 0.0
    %1899 = vmatprep.subr.mxu0 0.0
    %1900 = vmatpush1.msra.mxu0 0.0
    %1901 = vmatprep.subr.mxu0 0.0
    %1902 = vmatpush1.msra.mxu0 0.0
    %1903 = vmatprep.subr.mxu0 0.0
    %1904 = vmatpush1.msra.mxu0 0.0
    %1905 = vmatprep.subr.mxu0 0.0
    %1906 = vmatpush1.msra.mxu0 0.0
    %1907 = vmatprep.subr.mxu0 0.0
    %1908 = vmatpush1.msra.mxu0 0.0
    %1909 = vmatprep.subr.mxu0 0.0
    %1910 = vmatpush1.msra.mxu0 0.0
    %1911 = vmatprep.subr.mxu0 0.0
    %1912 = vmatpush1.msra.mxu0 0.0
    %1913 = vmatprep.subr.mxu0 0.0
    %1914 = vmatpush1.msra.mxu0 0.0
    %1915 = vmatprep.mubr.f32.mxu0 0.0
    %1916 = vmatmul.mubr.f32.gmra.mrb[0].mxu0 %v1561
    %v1917 = vpop.f32.mrb[0].mxu0
    %v1918 = vadd.f32 %v1693, %v1917
    %v1919 = vpop.f32.mrb[0].mxu0
    %1920 = vmatprep.mubr.f32.mxu0 0.0
    %1921 = vmatmul.mubr.f32.gmra.mrb[0].mxu0 %v1562
    %v1922 = vpop.f32.mrb[0].mxu0
    %v1923 = vadd.f32 %v1698, %v1922
    %v1924 = vpop.f32.mrb[0].mxu0
    %1925 = vmatprep.mubr.f32.mxu0 0.0
    %1926 = vmatmul.mubr.f32.gmra.mrb[0].mxu0 %v1563
    %v1927 = vpop.f32.mrb[0].mxu0
    %v1928 = vadd.f32 %v1703, %v1927
    %v1929 = vpop.f32.mrb[0].mxu0
    %1930 = vmatprep.mubr.f32.mxu0 0.0
    %1931 = vmatmul.mubr.f32.gmra.mrb[0].mxu0 %v1564
    %v1932 = vpop.f32.mrb[0].mxu0
    %v1933 = vadd.f32 %v1708, %v1932
    %v1934 = vpop.f32.mrb[0].mxu0
    %1935 = vmatprep.mubr.f32.mxu0 0.0
    %1936 = vmatmul.mubr.f32.gmra.mrb[0].mxu0 %v1565
    %v1937 = vpop.f32.mrb[0].mxu0
    %v1938 = vadd.f32 %v1713, %v1937
    %v1939 = vpop.f32.mrb[0].mxu0
    %1940 = vmatprep.mubr.f32.mxu0 0.0
    %1941 = vmatmul.mubr.f32.gmra.mrb[0].mxu0 %v1566
    %v1942 = vpop.f32.mrb[0].mxu0
    %v1943 = vadd.f32 %v1718, %v1942
    %v1944 = vpop.f32.mrb[0].mxu0
    %1945 = vmatprep.mubr.f32.mxu0 0.0
    %1946 = vmatmul.mubr.f32.gmra.mrb[0].mxu0 %v1567
    %v1947 = vpop.f32.mrb[0].mxu0
    %v1948 = vadd.f32 %v1723, %v1947
    %v1949 = vpop.f32.mrb[0].mxu0
    %1950 = vmatprep.mubr.f32.mxu0 0.0
    %1951 = vmatmul.mubr.f32.gmra.mrb[0].mxu0 %v1568
    %v1952 = vpop.f32.mrb[0].mxu0
    %v1953 = vadd.f32 %v1728, %v1952
    %v1954 = vpop.f32.mrb[0].mxu0
    %1955 = vmatprep.mubr.f32.mxu0 0.0
    %1956 = vmatmul.mubr.f32.gmra.mrb[0].mxu0 %v1569
    %v1957 = vpop.f32.mrb[0].mxu0
    %v1958 = vadd.f32 %v1733, %v1957
    %v1959 = vpop.f32.mrb[0].mxu0
    %1960 = vmatprep.mubr.f32.mxu0 0.0
    %1961 = vmatmul.mubr.f32.gmra.mrb[0].mxu0 %v1570
    %v1962 = vpop.f32.mrb[0].mxu0
    %v1963 = vadd.f32 %v1738, %v1962
    %v1964 = vpop.f32.mrb[0].mxu0
    %1965 = vmatprep.mubr.f32.mxu0 0.0
    %1966 = vmatmul.mubr.f32.gmra.mrb[0].mxu0 %v1571
    %v1967 = vpop.f32.mrb[0].mxu0
    %v1968 = vadd.f32 %v1743, %v1967
    %v1969 = vpop.f32.mrb[0].mxu0
    %1970 = vmatprep.mubr.f32.mxu0 0.0
    %1971 = vmatmul.mubr.f32.gmra.mrb[0].mxu0 %v1572
    %v1972 = vpop.f32.mrb[0].mxu0
    %v1973 = vadd.f32 %v1748, %v1972
    %v1974 = vpop.f32.mrb[0].mxu0
    %1975 = vmatprep.mubr.f32.mxu0 0.0
    %1976 = vmatmul.mubr.f32.gmra.mrb[0].mxu0 %v1573
    %v1977 = vpop.f32.mrb[0].mxu0
    %v1978 = vadd.f32 %v1753, %v1977
    %v1979 = vpop.f32.mrb[0].mxu0
    %1980 = vmatprep.mubr.f32.mxu0 0.0
    %1981 = vmatmul.mubr.f32.gmra.mrb[0].mxu0 %v1574
    %v1982 = vpop.f32.mrb[0].mxu0
    %v1983 = vadd.f32 %v1758, %v1982
    %v1984 = vpop.f32.mrb[0].mxu0
    %1985 = vmatprep.mubr.f32.mxu0 0.0
    %1986 = vmatmul.mubr.f32.gmra.mrb[0].mxu0 %v1575
    %v1987 = vpop.f32.mrb[0].mxu0
    %v1988 = vadd.f32 %v1763, %v1987
    %v1989 = vpop.f32.mrb[0].mxu0
    %1990 = vmatprep.mubr.f32.mxu0 0.0
    %1991 = vmatmul.mubr.f32.gmra.mrb[0].mxu0 %v1576
    %v1992 = vpop.f32.mrb[0].mxu0
    %v1993 = vadd.f32 %v1768, %v1992
    %v1994 = vpop.f32.mrb[0].mxu0
    %1995 = vmatprep.mubr.f32.mxu0 0.0
    %1996 = vmatmul.mubr.f32.gmra.mrb[0].mxu0 %v1577
    %v1997 = vpop.f32.mrb[0].mxu0
    %v1998 = vadd.f32 %v1773, %v1997
    %v1999 = vpop.f32.mrb[0].mxu0
    %2000 = vmatprep.mubr.f32.mxu0 0.0
    %2001 = vmatmul.mubr.f32.gmra.mrb[0].mxu0 %v1578
    %v2002 = vpop.f32.mrb[0].mxu0
    %v2003 = vadd.f32 %v1778, %v2002
    %v2004 = vpop.f32.mrb[0].mxu0
    %2005 = vmatprep.mubr.f32.mxu0 0.0
    %2006 = vmatmul.mubr.f32.gmra.mrb[0].mxu0 %v1579
    %v2007 = vpop.f32.mrb[0].mxu0
    %v2008 = vadd.f32 %v1783, %v2007
    %v2009 = vpop.f32.mrb[0].mxu0
    %2010 = vmatprep.mubr.f32.mxu0 0.0
    %2011 = vmatmul.mubr.f32.gmra.mrb[0].mxu0 %v1580
    %v2012 = vpop.f32.mrb[0].mxu0
    %v2013 = vadd.f32 %v1788, %v2012
    %v2014 = vpop.f32.mrb[0].mxu0
    %2015 = vmatprep.mubr.f32.mxu0 0.0
    %2016 = vmatmul.mubr.f32.gmra.mrb[0].mxu0 %v1581
    %v2017 = vpop.f32.mrb[0].mxu0
    %v2018 = vadd.f32 %v1793, %v2017
    %v2019 = vpop.f32.mrb[0].mxu0
    %2020 = vmatprep.mubr.f32.mxu0 0.0
    %2021 = vmatmul.mubr.f32.gmra.mrb[0].mxu0 %v1582
    %v2022 = vpop.f32.mrb[0].mxu0
    %v2023 = vadd.f32 %v1798, %v2022
    %v2024 = vpop.f32.mrb[0].mxu0
    %2025 = vmatprep.mubr.f32.mxu0 0.0
    %2026 = vmatmul.mubr.f32.gmra.mrb[0].mxu0 %v1583
    %v2027 = vpop.f32.mrb[0].mxu0
    %v2028 = vadd.f32 %v1803, %v2027
    %v2029 = vpop.f32.mrb[0].mxu0
    %2030 = vmatprep.mubr.f32.mxu0 0.0
    %2031 = vmatmul.mubr.f32.gmra.mrb[0].mxu0 %v1584
    %v2032 = vpop.f32.mrb[0].mxu0
    %v2033 = vadd.f32 %v1808, %v2032
    %v2034 = vpop.f32.mrb[0].mxu0
    %2035 = vmatprep.mubr.f32.mxu0 0.0
    %2036 = vmatmul.mubr.f32.gmra.mrb[0].mxu0 %v1585
    %v2037 = vpop.f32.mrb[0].mxu0
    %v2038 = vadd.f32 %v1813, %v2037
    %v2039 = vpop.f32.mrb[0].mxu0
    %2040 = vmatprep.mubr.f32.mxu0 0.0
    %2041 = vmatmul.mubr.f32.gmra.mrb[0].mxu0 %v1586
    %v2042 = vpop.f32.mrb[0].mxu0
    %v2043 = vadd.f32 %v1818, %v2042
    %v2044 = vpop.f32.mrb[0].mxu0
    %2045 = vmatprep.mubr.f32.mxu0 0.0
    %2046 = vmatmul.mubr.f32.gmra.mrb[0].mxu0 %v1587
    %v2047 = vpop.f32.mrb[0].mxu0
    %v2048 = vadd.f32 %v1823, %v2047
    %v2049 = vpop.f32.mrb[0].mxu0
    %2050 = vmatprep.mubr.f32.mxu0 0.0
    %2051 = vmatmul.mubr.f32.gmra.mrb[0].mxu0 %v1588
    %v2052 = vpop.f32.mrb[0].mxu0
    %v2053 = vadd.f32 %v1828, %v2052
    %v2054 = vpop.f32.mrb[0].mxu0
    %2055 = vmatprep.mubr.f32.mxu0 0.0
    %2056 = vmatmul.mubr.f32.gmra.mrb[0].mxu0 %v1589
    %v2057 = vpop.f32.mrb[0].mxu0
    %v2058 = vadd.f32 %v1833, %v2057
    %v2059 = vpop.f32.mrb[0].mxu0
    %2060 = vmatprep.mubr.f32.mxu0 0.0
    %2061 = vmatmul.mubr.f32.gmra.mrb[0].mxu0 %v1590
    %v2062 = vpop.f32.mrb[0].mxu0
    %v2063 = vadd.f32 %v1838, %v2062
    %v2064 = vpop.f32.mrb[0].mxu0
    %2065 = vmatprep.mubr.f32.mxu0 0.0
    %2066 = vmatmul.mubr.f32.gmra.mrb[0].mxu0 %v1591
    %v2067 = vpop.f32.mrb[0].mxu0
    %v2068 = vadd.f32 %v1843, %v2067
    %v2069 = vpop.f32.mrb[0].mxu0
    %2070 = vmatprep.mubr.f32.mxu0 0.0
    %2071 = vmatmul.mubr.f32.gmra.mrb[0].mxu0 %v1592
    %v2072 = vpop.f32.mrb[0].mxu0
    %v2073 = vadd.f32 %v1848, %v2072
    %v2074 = vpop.f32.mrb[0].mxu0
    %2075 = vdwg.mxu0
    %s2076 = scalar_lea.vmem %s3, 5
    %v2077 = vld [vmem:[%s2076] sm:$0x1]
    %v2079 = vlaneseq
    %v2080 = vshrl.u32 %v2079, 7
    %v2081 = vsub.s32 0, %v2080
    %v2082 = vrot.slane %v2077, %v2081
    %v2084 = vadd.f32 %v1918, %v2082
    %v2085 = vadd.f32 %v1923, %v2082
    %v2086 = vadd.f32 %v1928, %v2082
    %v2087 = vadd.f32 %v1933, %v2082
    %v2088 = vadd.f32 %v1938, %v2082
    %v2089 = vadd.f32 %v1943, %v2082
    %v2090 = vadd.f32 %v1948, %v2082
    %v2091 = vadd.f32 %v1953, %v2082
    %v2092 = vadd.f32 %v1958, %v2082
    %v2093 = vadd.f32 %v1963, %v2082
    %v2094 = vadd.f32 %v1968, %v2082
    %v2095 = vadd.f32 %v1973, %v2082
    %v2096 = vadd.f32 %v1978, %v2082
    %v2097 = vadd.f32 %v1983, %v2082
    %v2098 = vadd.f32 %v1988, %v2082
    %v2099 = vadd.f32 %v1993, %v2082
    %v2100 = vadd.f32 %v1998, %v2082
    %v2101 = vadd.f32 %v2003, %v2082
    %v2102 = vadd.f32 %v2008, %v2082
    %v2103 = vadd.f32 %v2013, %v2082
    %v2104 = vadd.f32 %v2018, %v2082
    %v2105 = vadd.f32 %v2023, %v2082
    %v2106 = vadd.f32 %v2028, %v2082
    %v2107 = vadd.f32 %v2033, %v2082
    %v2108 = vadd.f32 %v2038, %v2082
    %v2109 = vadd.f32 %v2043, %v2082
    %v2110 = vadd.f32 %v2048, %v2082
    %v2111 = vadd.f32 %v2053, %v2082
    %v2112 = vadd.f32 %v2058, %v2082
    %v2113 = vadd.f32 %v2063, %v2082
    %v2114 = vadd.f32 %v2068, %v2082
    %v2115 = vadd.f32 %v2073, %v2082
    %v2116 = vmax.f32 %v2084, 0.0
    %v2117 = vmax.f32 %v2085, 0.0
    %v2118 = vmax.f32 %v2086, 0.0
    %v2119 = vmax.f32 %v2087, 0.0
    %v2120 = vmax.f32 %v2088, 0.0
    %v2121 = vmax.f32 %v2089, 0.0
    %v2122 = vmax.f32 %v2090, 0.0
    %v2123 = vmax.f32 %v2091, 0.0
    %v2124 = vmax.f32 %v2092, 0.0
    %v2125 = vmax.f32 %v2093, 0.0
    %v2126 = vmax.f32 %v2094, 0.0
    %v2127 = vmax.f32 %v2095, 0.0
    %v2128 = vmax.f32 %v2096, 0.0
    %v2129 = vmax.f32 %v2097, 0.0
    %v2130 = vmax.f32 %v2098, 0.0
    %v2131 = vmax.f32 %v2099, 0.0
    %v2132 = vmax.f32 %v2100, 0.0
    %v2133 = vmax.f32 %v2101, 0.0
    %v2134 = vmax.f32 %v2102, 0.0
    %v2135 = vmax.f32 %v2103, 0.0
    %v2136 = vmax.f32 %v2104, 0.0
    %v2137 = vmax.f32 %v2105, 0.0
    %v2138 = vmax.f32 %v2106, 0.0
    %v2139 = vmax.f32 %v2107, 0.0
    %v2140 = vmax.f32 %v2108, 0.0
    %v2141 = vmax.f32 %v2109, 0.0
    %v2142 = vmax.f32 %v2110, 0.0
    %v2143 = vmax.f32 %v2111, 0.0
    %v2144 = vmax.f32 %v2112, 0.0
    %v2145 = vmax.f32 %v2113, 0.0
    %v2146 = vmax.f32 %v2114, 0.0
    %v2147 = vmax.f32 %v2115, 0.0
    %s2148 = scalar_lea.vmem [#allocation7], 640
    %v2149 = vld [vmem:[%s2148] sm:$0xff]
    %v2150 = vld [vmem:[%s2148 + $0x8] sm:$0xff]
    %v2151 = vld [vmem:[%s2148 + $0x10] sm:$0xff]
    %v2152 = vld [vmem:[%s2148 + $0x18] sm:$0xff]
    %v2153 = vld [vmem:[%s2148 + $0x20] sm:$0xff]
    %v2154 = vld [vmem:[%s2148 + $0x28] sm:$0xff]
    %v2155 = vld [vmem:[%s2148 + $0x30] sm:$0xff]
    %v2156 = vld [vmem:[%s2148 + $0x38] sm:$0xff]
    %v2157 = vld [vmem:[%s2148 + $0x40] sm:$0xff]
    %v2158 = vld [vmem:[%s2148 + $0x48] sm:$0xff]
    %v2159 = vld [vmem:[%s2148 + $0x50] sm:$0xff]
    %v2160 = vld [vmem:[%s2148 + $0x58] sm:$0xff]
    %v2161 = vld [vmem:[%s2148 + $0x60] sm:$0xff]
    %v2162 = vld [vmem:[%s2148 + $0x68] sm:$0xff]
    %v2163 = vld [vmem:[%s2148 + $0x70] sm:$0xff]
    %v2164 = vld [vmem:[%s2148 + $0x78] sm:$0xff]
    %s2165 = scalar_lea.vmem %s3, 6
    %v2166 = vld [vmem:[%s2165] sm:$0x1]
    %v2168 = vlaneseq
    %v2169 = vshrl.u32 %v2168, 7
    %v2170 = vsub.s32 0, %v2169
    %v2171 = vrot.slane %v2166, %v2170
    %2173 = vmatprep.subr.mxu0 0.0
    %2174 = vmatpush1.msra.mxu0 %v2149
    %2175 = vmatprep.subr.mxu0 0.0
    %2176 = vmatpush1.msra.mxu0 %v2150
    %2177 = vmatprep.subr.mxu0 0.0
    %2178 = vmatpush1.msra.mxu0 %v2151
    %2179 = vmatprep.subr.mxu0 0.0
    %2180 = vmatpush1.msra.mxu0 %v2152
    %2181 = vmatprep.subr.mxu0 0.0
    %2182 = vmatpush1.msra.mxu0 %v2153
    %2183 = vmatprep.subr.mxu0 0.0
    %2184 = vmatpush1.msra.mxu0 %v2154
    %2185 = vmatprep.subr.mxu0 0.0
    %2186 = vmatpush1.msra.mxu0 %v2155
    %2187 = vmatprep.subr.mxu0 0.0
    %2188 = vmatpush1.msra.mxu0 %v2156
    %2189 = vmatprep.subr.mxu0 0.0
    %2190 = vmatpush1.msra.mxu0 %v2157
    %2191 = vmatprep.subr.mxu0 0.0
    %2192 = vmatpush1.msra.mxu0 %v2158
    %2193 = vmatprep.subr.mxu0 0.0
    %2194 = vmatpush1.msra.mxu0 %v2159
    %2195 = vmatprep.subr.mxu0 0.0
    %2196 = vmatpush1.msra.mxu0 %v2160
    %2197 = vmatprep.subr.mxu0 0.0
    %2198 = vmatpush1.msra.mxu0 %v2161
    %2199 = vmatprep.subr.mxu0 0.0
    %2200 = vmatpush1.msra.mxu0 %v2162
    %2201 = vmatprep.subr.mxu0 0.0
    %2202 = vmatpush1.msra.mxu0 %v2163
    %2203 = vmatprep.subr.mxu0 0.0
    %2204 = vmatpush1.msra.mxu0 %v2164
    %2205 = vmatprep.subr.mxu0 0.0
    %2206 = vmatpush1.msra.mxu0 0.0
    %2207 = vmatprep.subr.mxu0 0.0
    %2208 = vmatpush1.msra.mxu0 0.0
    %2209 = vmatprep.subr.mxu0 0.0
    %2210 = vmatpush1.msra.mxu0 0.0
    %2211 = vmatprep.subr.mxu0 0.0
    %2212 = vmatpush1.msra.mxu0 0.0
    %2213 = vmatprep.subr.mxu0 0.0
    %2214 = vmatpush1.msra.mxu0 0.0
    %2215 = vmatprep.subr.mxu0 0.0
    %2216 = vmatpush1.msra.mxu0 0.0
    %2217 = vmatprep.subr.mxu0 0.0
    %2218 = vmatpush1.msra.mxu0 0.0
    %2219 = vmatprep.subr.mxu0 0.0
    %2220 = vmatpush1.msra.mxu0 0.0
    %2221 = vmatprep.subr.mxu0 0.0
    %2222 = vmatpush1.msra.mxu0 0.0
    %2223 = vmatprep.subr.mxu0 0.0
    %2224 = vmatpush1.msra.mxu0 0.0
    %2225 = vmatprep.subr.mxu0 0.0
    %2226 = vmatpush1.msra.mxu0 0.0
    %2227 = vmatprep.subr.mxu0 0.0
    %2228 = vmatpush1.msra.mxu0 0.0
    %2229 = vmatprep.subr.mxu0 0.0
    %2230 = vmatpush1.msra.mxu0 0.0
    %2231 = vmatprep.subr.mxu0 0.0
    %2232 = vmatpush1.msra.mxu0 0.0
    %2233 = vmatprep.subr.mxu0 0.0
    %2234 = vmatpush1.msra.mxu0 0.0
    %2235 = vmatprep.subr.mxu0 0.0
    %2236 = vmatpush1.msra.mxu0 0.0
    %2237 = vmatprep.mubr.f32.mxu0 0.0
    %2238 = vmatmul.mubr.f32.gmra.mrb[0].mxu0 %v2116
    %v2239 = vpop.f32.mrb[0].mxu0
    %v2240 = vadd.f32 %v2171, %v2239
    %v2241 = vpop.f32.mrb[0].mxu0
    %2242 = vmatprep.mubr.f32.mxu0 0.0
    %2243 = vmatmul.mubr.f32.gmra.mrb[0].mxu0 %v2117
    %v2244 = vpop.f32.mrb[0].mxu0
    %v2245 = vadd.f32 %v2171, %v2244
    %v2246 = vpop.f32.mrb[0].mxu0
    %2247 = vmatprep.mubr.f32.mxu0 0.0
    %2248 = vmatmul.mubr.f32.gmra.mrb[0].mxu0 %v2118
    %v2249 = vpop.f32.mrb[0].mxu0
    %v2250 = vadd.f32 %v2171, %v2249
    %v2251 = vpop.f32.mrb[0].mxu0
    %2252 = vmatprep.mubr.f32.mxu0 0.0
    %2253 = vmatmul.mubr.f32.gmra.mrb[0].mxu0 %v2119
    %v2254 = vpop.f32.mrb[0].mxu0
    %v2255 = vadd.f32 %v2171, %v2254
    %v2256 = vpop.f32.mrb[0].mxu0
    %2257 = vmatprep.mubr.f32.mxu0 0.0
    %2258 = vmatmul.mubr.f32.gmra.mrb[0].mxu0 %v2120
    %v2259 = vpop.f32.mrb[0].mxu0
    %v2260 = vadd.f32 %v2171, %v2259
    %v2261 = vpop.f32.mrb[0].mxu0
    %2262 = vmatprep.mubr.f32.mxu0 0.0
    %2263 = vmatmul.mubr.f32.gmra.mrb[0].mxu0 %v2121
    %v2264 = vpop.f32.mrb[0].mxu0
    %v2265 = vadd.f32 %v2171, %v2264
    %v2266 = vpop.f32.mrb[0].mxu0
    %2267 = vmatprep.mubr.f32.mxu0 0.0
    %2268 = vmatmul.mubr.f32.gmra.mrb[0].mxu0 %v2122
    %v2269 = vpop.f32.mrb[0].mxu0
    %v2270 = vadd.f32 %v2171, %v2269
    %v2271 = vpop.f32.mrb[0].mxu0
    %2272 = vmatprep.mubr.f32.mxu0 0.0
    %2273 = vmatmul.mubr.f32.gmra.mrb[0].mxu0 %v2123
    %v2274 = vpop.f32.mrb[0].mxu0
    %v2275 = vadd.f32 %v2171, %v2274
    %v2276 = vpop.f32.mrb[0].mxu0
    %2277 = vmatprep.mubr.f32.mxu0 0.0
    %2278 = vmatmul.mubr.f32.gmra.mrb[0].mxu0 %v2124
    %v2279 = vpop.f32.mrb[0].mxu0
    %v2280 = vadd.f32 %v2171, %v2279
    %v2281 = vpop.f32.mrb[0].mxu0
    %2282 = vmatprep.mubr.f32.mxu0 0.0
    %2283 = vmatmul.mubr.f32.gmra.mrb[0].mxu0 %v2125
    %v2284 = vpop.f32.mrb[0].mxu0
    %v2285 = vadd.f32 %v2171, %v2284
    %v2286 = vpop.f32.mrb[0].mxu0
    %2287 = vmatprep.mubr.f32.mxu0 0.0
    %2288 = vmatmul.mubr.f32.gmra.mrb[0].mxu0 %v2126
    %v2289 = vpop.f32.mrb[0].mxu0
    %v2290 = vadd.f32 %v2171, %v2289
    %v2291 = vpop.f32.mrb[0].mxu0
    %2292 = vmatprep.mubr.f32.mxu0 0.0
    %2293 = vmatmul.mubr.f32.gmra.mrb[0].mxu0 %v2127
    %v2294 = vpop.f32.mrb[0].mxu0
    %v2295 = vadd.f32 %v2171, %v2294
    %v2296 = vpop.f32.mrb[0].mxu0
    %2297 = vmatprep.mubr.f32.mxu0 0.0
    %2298 = vmatmul.mubr.f32.gmra.mrb[0].mxu0 %v2128
    %v2299 = vpop.f32.mrb[0].mxu0
    %v2300 = vadd.f32 %v2171, %v2299
    %v2301 = vpop.f32.mrb[0].mxu0
    %2302 = vmatprep.mubr.f32.mxu0 0.0
    %2303 = vmatmul.mubr.f32.gmra.mrb[0].mxu0 %v2129
    %v2304 = vpop.f32.mrb[0].mxu0
    %v2305 = vadd.f32 %v2171, %v2304
    %v2306 = vpop.f32.mrb[0].mxu0
    %2307 = vmatprep.mubr.f32.mxu0 0.0
    %2308 = vmatmul.mubr.f32.gmra.mrb[0].mxu0 %v2130
    %v2309 = vpop.f32.mrb[0].mxu0
    %v2310 = vadd.f32 %v2171, %v2309
    %v2311 = vpop.f32.mrb[0].mxu0
    %2312 = vmatprep.mubr.f32.mxu0 0.0
    %2313 = vmatmul.mubr.f32.gmra.mrb[0].mxu0 %v2131
    %v2314 = vpop.f32.mrb[0].mxu0
    %v2315 = vadd.f32 %v2171, %v2314
    %v2316 = vpop.f32.mrb[0].mxu0
    %2317 = vmatprep.mubr.f32.mxu0 0.0
    %2318 = vmatmul.mubr.f32.gmra.mrb[0].mxu0 %v2132
    %v2319 = vpop.f32.mrb[0].mxu0
    %v2320 = vadd.f32 %v2171, %v2319
    %v2321 = vpop.f32.mrb[0].mxu0
    %2322 = vmatprep.mubr.f32.mxu0 0.0
    %2323 = vmatmul.mubr.f32.gmra.mrb[0].mxu0 %v2133
    %v2324 = vpop.f32.mrb[0].mxu0
    %v2325 = vadd.f32 %v2171, %v2324
    %v2326 = vpop.f32.mrb[0].mxu0
    %2327 = vmatprep.mubr.f32.mxu0 0.0
    %2328 = vmatmul.mubr.f32.gmra.mrb[0].mxu0 %v2134
    %v2329 = vpop.f32.mrb[0].mxu0
    %v2330 = vadd.f32 %v2171, %v2329
    %v2331 = vpop.f32.mrb[0].mxu0
    %2332 = vmatprep.mubr.f32.mxu0 0.0
    %2333 = vmatmul.mubr.f32.gmra.mrb[0].mxu0 %v2135
    %v2334 = vpop.f32.mrb[0].mxu0
    %v2335 = vadd.f32 %v2171, %v2334
    %v2336 = vpop.f32.mrb[0].mxu0
    %2337 = vmatprep.mubr.f32.mxu0 0.0
    %2338 = vmatmul.mubr.f32.gmra.mrb[0].mxu0 %v2136
    %v2339 = vpop.f32.mrb[0].mxu0
    %v2340 = vadd.f32 %v2171, %v2339
    %v2341 = vpop.f32.mrb[0].mxu0
    %2342 = vmatprep.mubr.f32.mxu0 0.0
    %2343 = vmatmul.mubr.f32.gmra.mrb[0].mxu0 %v2137
    %v2344 = vpop.f32.mrb[0].mxu0
    %v2345 = vadd.f32 %v2171, %v2344
    %v2346 = vpop.f32.mrb[0].mxu0
    %2347 = vmatprep.mubr.f32.mxu0 0.0
    %2348 = vmatmul.mubr.f32.gmra.mrb[0].mxu0 %v2138
    %v2349 = vpop.f32.mrb[0].mxu0
    %v2350 = vadd.f32 %v2171, %v2349
    %v2351 = vpop.f32.mrb[0].mxu0
    %2352 = vmatprep.mubr.f32.mxu0 0.0
    %2353 = vmatmul.mubr.f32.gmra.mrb[0].mxu0 %v2139
    %v2354 = vpop.f32.mrb[0].mxu0
    %v2355 = vadd.f32 %v2171, %v2354
    %v2356 = vpop.f32.mrb[0].mxu0
    %2357 = vmatprep.mubr.f32.mxu0 0.0
    %2358 = vmatmul.mubr.f32.gmra.mrb[0].mxu0 %v2140
    %v2359 = vpop.f32.mrb[0].mxu0
    %v2360 = vadd.f32 %v2171, %v2359
    %v2361 = vpop.f32.mrb[0].mxu0
    %2362 = vmatprep.mubr.f32.mxu0 0.0
    %2363 = vmatmul.mubr.f32.gmra.mrb[0].mxu0 %v2141
    %v2364 = vpop.f32.mrb[0].mxu0
    %v2365 = vadd.f32 %v2171, %v2364
    %v2366 = vpop.f32.mrb[0].mxu0
    %2367 = vmatprep.mubr.f32.mxu0 0.0
    %2368 = vmatmul.mubr.f32.gmra.mrb[0].mxu0 %v2142
    %v2369 = vpop.f32.mrb[0].mxu0
    %v2370 = vadd.f32 %v2171, %v2369
    %v2371 = vpop.f32.mrb[0].mxu0
    %2372 = vmatprep.mubr.f32.mxu0 0.0
    %2373 = vmatmul.mubr.f32.gmra.mrb[0].mxu0 %v2143
    %v2374 = vpop.f32.mrb[0].mxu0
    %v2375 = vadd.f32 %v2171, %v2374
    %v2376 = vpop.f32.mrb[0].mxu0
    %2377 = vmatprep.mubr.f32.mxu0 0.0
    %2378 = vmatmul.mubr.f32.gmra.mrb[0].mxu0 %v2144
    %v2379 = vpop.f32.mrb[0].mxu0
    %v2380 = vadd.f32 %v2171, %v2379
    %v2381 = vpop.f32.mrb[0].mxu0
    %2382 = vmatprep.mubr.f32.mxu0 0.0
    %2383 = vmatmul.mubr.f32.gmra.mrb[0].mxu0 %v2145
    %v2384 = vpop.f32.mrb[0].mxu0
    %v2385 = vadd.f32 %v2171, %v2384
    %v2386 = vpop.f32.mrb[0].mxu0
    %2387 = vmatprep.mubr.f32.mxu0 0.0
    %2388 = vmatmul.mubr.f32.gmra.mrb[0].mxu0 %v2146
    %v2389 = vpop.f32.mrb[0].mxu0
    %v2390 = vadd.f32 %v2171, %v2389
    %v2391 = vpop.f32.mrb[0].mxu0
    %2392 = vmatprep.mubr.f32.mxu0 0.0
    %2393 = vmatmul.mubr.f32.gmra.mrb[0].mxu0 %v2147
    %v2394 = vpop.f32.mrb[0].mxu0
    %v2395 = vadd.f32 %v2171, %v2394
    %v2396 = vpop.f32.mrb[0].mxu0
    %2397 = vdwg.mxu0
    %v2398 = vmax.f32 %v2240, 0.0
    %v2399 = vmax.f32 %v2245, 0.0
    %v2400 = vmax.f32 %v2250, 0.0
    %v2401 = vmax.f32 %v2255, 0.0
    %v2402 = vmax.f32 %v2260, 0.0
    %v2403 = vmax.f32 %v2265, 0.0
    %v2404 = vmax.f32 %v2270, 0.0
    %v2405 = vmax.f32 %v2275, 0.0
    %v2406 = vmax.f32 %v2280, 0.0
    %v2407 = vmax.f32 %v2285, 0.0
    %v2408 = vmax.f32 %v2290, 0.0
    %v2409 = vmax.f32 %v2295, 0.0
    %v2410 = vmax.f32 %v2300, 0.0
    %v2411 = vmax.f32 %v2305, 0.0
    %v2412 = vmax.f32 %v2310, 0.0
    %v2413 = vmax.f32 %v2315, 0.0
    %v2414 = vmax.f32 %v2320, 0.0
    %v2415 = vmax.f32 %v2325, 0.0
    %v2416 = vmax.f32 %v2330, 0.0
    %v2417 = vmax.f32 %v2335, 0.0
    %v2418 = vmax.f32 %v2340, 0.0
    %v2419 = vmax.f32 %v2345, 0.0
    %v2420 = vmax.f32 %v2350, 0.0
    %v2421 = vmax.f32 %v2355, 0.0
    %v2422 = vmax.f32 %v2360, 0.0
    %v2423 = vmax.f32 %v2365, 0.0
    %v2424 = vmax.f32 %v2370, 0.0
    %v2425 = vmax.f32 %v2375, 0.0
    %v2426 = vmax.f32 %v2380, 0.0
    %v2427 = vmax.f32 %v2385, 0.0
    %v2428 = vmax.f32 %v2390, 0.0
    %v2429 = vmax.f32 %v2395, 0.0
    %s2430 = scalar_lea.vmem [#allocation7], 768
    %v2431 = vld [vmem:[%s2430] sm:$0xff]
    %v2432 = vld [vmem:[%s2430 + $0x8] sm:$0xff]
    %v2433 = vld [vmem:[%s2430 + $0x10] sm:$0xff]
    %v2434 = vld [vmem:[%s2430 + $0x18] sm:$0xff]
    %v2435 = vld [vmem:[%s2430 + $0x20] sm:$0xff]
    %v2436 = vld [vmem:[%s2430 + $0x28] sm:$0xff]
    %v2437 = vld [vmem:[%s2430 + $0x30] sm:$0xff]
    %v2438 = vld [vmem:[%s2430 + $0x38] sm:$0xff]
    %v2439 = vld [vmem:[%s2430 + $0x40] sm:$0xff]
    %v2440 = vld [vmem:[%s2430 + $0x48] sm:$0xff]
    %v2441 = vld [vmem:[%s2430 + $0x50] sm:$0xff]
    %v2442 = vld [vmem:[%s2430 + $0x58] sm:$0xff]
    %v2443 = vld [vmem:[%s2430 + $0x60] sm:$0xff]
    %v2444 = vld [vmem:[%s2430 + $0x68] sm:$0xff]
    %v2445 = vld [vmem:[%s2430 + $0x70] sm:$0xff]
    %v2446 = vld [vmem:[%s2430 + $0x78] sm:$0xff]
    %s2447 = scalar_lea.vmem %s3, 7
    %v2448 = vld [vmem:[%s2447] sm:$0x1]
    %v2450 = vlaneseq
    %v2451 = vshrl.u32 %v2450, 7
    %v2452 = vsub.s32 0, %v2451
    %v2453 = vrot.slane %v2448, %v2452
    %2455 = vmatprep.subr.mxu0 0.0
    %2456 = vmatpush1.msra.mxu0 %v2431
    %2457 = vmatprep.subr.mxu0 0.0
    %2458 = vmatpush1.msra.mxu0 %v2432
    %2459 = vmatprep.subr.mxu0 0.0
    %2460 = vmatpush1.msra.mxu0 %v2433
    %2461 = vmatprep.subr.mxu0 0.0
    %2462 = vmatpush1.msra.mxu0 %v2434
    %2463 = vmatprep.subr.mxu0 0.0
    %2464 = vmatpush1.msra.mxu0 %v2435
    %2465 = vmatprep.subr.mxu0 0.0
    %2466 = vmatpush1.msra.mxu0 %v2436
    %2467 = vmatprep.subr.mxu0 0.0
    %2468 = vmatpush1.msra.mxu0 %v2437
    %2469 = vmatprep.subr.mxu0 0.0
    %2470 = vmatpush1.msra.mxu0 %v2438
    %2471 = vmatprep.subr.mxu0 0.0
    %2472 = vmatpush1.msra.mxu0 %v2439
    %2473 = vmatprep.subr.mxu0 0.0
    %2474 = vmatpush1.msra.mxu0 %v2440
    %2475 = vmatprep.subr.mxu0 0.0
    %2476 = vmatpush1.msra.mxu0 %v2441
    %2477 = vmatprep.subr.mxu0 0.0
    %2478 = vmatpush1.msra.mxu0 %v2442
    %2479 = vmatprep.subr.mxu0 0.0
    %2480 = vmatpush1.msra.mxu0 %v2443
    %2481 = vmatprep.subr.mxu0 0.0
    %2482 = vmatpush1.msra.mxu0 %v2444
    %2483 = vmatprep.subr.mxu0 0.0
    %2484 = vmatpush1.msra.mxu0 %v2445
    %2485 = vmatprep.subr.mxu0 0.0
    %2486 = vmatpush1.msra.mxu0 %v2446
    %2487 = vmatprep.subr.mxu0 0.0
    %2488 = vmatpush1.msra.mxu0 0.0
    %2489 = vmatprep.subr.mxu0 0.0
    %2490 = vmatpush1.msra.mxu0 0.0
    %2491 = vmatprep.subr.mxu0 0.0
    %2492 = vmatpush1.msra.mxu0 0.0
    %2493 = vmatprep.subr.mxu0 0.0
    %2494 = vmatpush1.msra.mxu0 0.0
    %2495 = vmatprep.subr.mxu0 0.0
    %2496 = vmatpush1.msra.mxu0 0.0
    %2497 = vmatprep.subr.mxu0 0.0
    %2498 = vmatpush1.msra.mxu0 0.0
    %2499 = vmatprep.subr.mxu0 0.0
    %2500 = vmatpush1.msra.mxu0 0.0
    %2501 = vmatprep.subr.mxu0 0.0
    %2502 = vmatpush1.msra.mxu0 0.0
    %2503 = vmatprep.subr.mxu0 0.0
    %2504 = vmatpush1.msra.mxu0 0.0
    %2505 = vmatprep.subr.mxu0 0.0
    %2506 = vmatpush1.msra.mxu0 0.0
    %2507 = vmatprep.subr.mxu0 0.0
    %2508 = vmatpush1.msra.mxu0 0.0
    %2509 = vmatprep.subr.mxu0 0.0
    %2510 = vmatpush1.msra.mxu0 0.0
    %2511 = vmatprep.subr.mxu0 0.0
    %2512 = vmatpush1.msra.mxu0 0.0
    %2513 = vmatprep.subr.mxu0 0.0
    %2514 = vmatpush1.msra.mxu0 0.0
    %2515 = vmatprep.subr.mxu0 0.0
    %2516 = vmatpush1.msra.mxu0 0.0
    %2517 = vmatprep.subr.mxu0 0.0
    %2518 = vmatpush1.msra.mxu0 0.0
    %2519 = vmatprep.mubr.f32.mxu0 0.0
    %2520 = vmatmul.mubr.f32.gmra.mrb[0].mxu0 %v2398
    %v2521 = vpop.f32.mrb[0].mxu0
    %v2522 = vadd.f32 %v2453, %v2521
    %v2523 = vpop.f32.mrb[0].mxu0
    %2524 = vmatprep.mubr.f32.mxu0 0.0
    %2525 = vmatmul.mubr.f32.gmra.mrb[0].mxu0 %v2399
    %v2526 = vpop.f32.mrb[0].mxu0
    %v2527 = vadd.f32 %v2453, %v2526
    %v2528 = vpop.f32.mrb[0].mxu0
    %2529 = vmatprep.mubr.f32.mxu0 0.0
    %2530 = vmatmul.mubr.f32.gmra.mrb[0].mxu0 %v2400
    %v2531 = vpop.f32.mrb[0].mxu0
    %v2532 = vadd.f32 %v2453, %v2531
    %v2533 = vpop.f32.mrb[0].mxu0
    %2534 = vmatprep.mubr.f32.mxu0 0.0
    %2535 = vmatmul.mubr.f32.gmra.mrb[0].mxu0 %v2401
    %v2536 = vpop.f32.mrb[0].mxu0
    %v2537 = vadd.f32 %v2453, %v2536
    %v2538 = vpop.f32.mrb[0].mxu0
    %2539 = vmatprep.mubr.f32.mxu0 0.0
    %2540 = vmatmul.mubr.f32.gmra.mrb[0].mxu0 %v2402
    %v2541 = vpop.f32.mrb[0].mxu0
    %v2542 = vadd.f32 %v2453, %v2541
    %v2543 = vpop.f32.mrb[0].mxu0
    %2544 = vmatprep.mubr.f32.mxu0 0.0
    %2545 = vmatmul.mubr.f32.gmra.mrb[0].mxu0 %v2403
    %v2546 = vpop.f32.mrb[0].mxu0
    %v2547 = vadd.f32 %v2453, %v2546
    %v2548 = vpop.f32.mrb[0].mxu0
    %2549 = vmatprep.mubr.f32.mxu0 0.0
    %2550 = vmatmul.mubr.f32.gmra.mrb[0].mxu0 %v2404
    %v2551 = vpop.f32.mrb[0].mxu0
    %v2552 = vadd.f32 %v2453, %v2551
    %v2553 = vpop.f32.mrb[0].mxu0
    %2554 = vmatprep.mubr.f32.mxu0 0.0
    %2555 = vmatmul.mubr.f32.gmra.mrb[0].mxu0 %v2405
    %v2556 = vpop.f32.mrb[0].mxu0
    %v2557 = vadd.f32 %v2453, %v2556
    %v2558 = vpop.f32.mrb[0].mxu0
    %2559 = vmatprep.mubr.f32.mxu0 0.0
    %2560 = vmatmul.mubr.f32.gmra.mrb[0].mxu0 %v2406
    %v2561 = vpop.f32.mrb[0].mxu0
    %v2562 = vadd.f32 %v2453, %v2561
    %v2563 = vpop.f32.mrb[0].mxu0
    %2564 = vmatprep.mubr.f32.mxu0 0.0
    %2565 = vmatmul.mubr.f32.gmra.mrb[0].mxu0 %v2407
    %v2566 = vpop.f32.mrb[0].mxu0
    %v2567 = vadd.f32 %v2453, %v2566
    %v2568 = vpop.f32.mrb[0].mxu0
    %2569 = vmatprep.mubr.f32.mxu0 0.0
    %2570 = vmatmul.mubr.f32.gmra.mrb[0].mxu0 %v2408
    %v2571 = vpop.f32.mrb[0].mxu0
    %v2572 = vadd.f32 %v2453, %v2571
    %v2573 = vpop.f32.mrb[0].mxu0
    %2574 = vmatprep.mubr.f32.mxu0 0.0
    %2575 = vmatmul.mubr.f32.gmra.mrb[0].mxu0 %v2409
    %v2576 = vpop.f32.mrb[0].mxu0
    %v2577 = vadd.f32 %v2453, %v2576
    %v2578 = vpop.f32.mrb[0].mxu0
    %2579 = vmatprep.mubr.f32.mxu0 0.0
    %2580 = vmatmul.mubr.f32.gmra.mrb[0].mxu0 %v2410
    %v2581 = vpop.f32.mrb[0].mxu0
    %v2582 = vadd.f32 %v2453, %v2581
    %v2583 = vpop.f32.mrb[0].mxu0
    %2584 = vmatprep.mubr.f32.mxu0 0.0
    %2585 = vmatmul.mubr.f32.gmra.mrb[0].mxu0 %v2411
    %v2586 = vpop.f32.mrb[0].mxu0
    %v2587 = vadd.f32 %v2453, %v2586
    %v2588 = vpop.f32.mrb[0].mxu0
    %2589 = vmatprep.mubr.f32.mxu0 0.0
    %2590 = vmatmul.mubr.f32.gmra.mrb[0].mxu0 %v2412
    %v2591 = vpop.f32.mrb[0].mxu0
    %v2592 = vadd.f32 %v2453, %v2591
    %v2593 = vpop.f32.mrb[0].mxu0
    %2594 = vmatprep.mubr.f32.mxu0 0.0
    %2595 = vmatmul.mubr.f32.gmra.mrb[0].mxu0 %v2413
    %v2596 = vpop.f32.mrb[0].mxu0
    %v2597 = vadd.f32 %v2453, %v2596
    %v2598 = vpop.f32.mrb[0].mxu0
    %2599 = vmatprep.mubr.f32.mxu0 0.0
    %2600 = vmatmul.mubr.f32.gmra.mrb[0].mxu0 %v2414
    %v2601 = vpop.f32.mrb[0].mxu0
    %v2602 = vadd.f32 %v2453, %v2601
    %v2603 = vpop.f32.mrb[0].mxu0
    %2604 = vmatprep.mubr.f32.mxu0 0.0
    %2605 = vmatmul.mubr.f32.gmra.mrb[0].mxu0 %v2415
    %v2606 = vpop.f32.mrb[0].mxu0
    %v2607 = vadd.f32 %v2453, %v2606
    %v2608 = vpop.f32.mrb[0].mxu0
    %2609 = vmatprep.mubr.f32.mxu0 0.0
    %2610 = vmatmul.mubr.f32.gmra.mrb[0].mxu0 %v2416
    %v2611 = vpop.f32.mrb[0].mxu0
    %v2612 = vadd.f32 %v2453, %v2611
    %v2613 = vpop.f32.mrb[0].mxu0
    %2614 = vmatprep.mubr.f32.mxu0 0.0
    %2615 = vmatmul.mubr.f32.gmra.mrb[0].mxu0 %v2417
    %v2616 = vpop.f32.mrb[0].mxu0
    %v2617 = vadd.f32 %v2453, %v2616
    %v2618 = vpop.f32.mrb[0].mxu0
    %2619 = vmatprep.mubr.f32.mxu0 0.0
    %2620 = vmatmul.mubr.f32.gmra.mrb[0].mxu0 %v2418
    %v2621 = vpop.f32.mrb[0].mxu0
    %v2622 = vadd.f32 %v2453, %v2621
    %v2623 = vpop.f32.mrb[0].mxu0
    %2624 = vmatprep.mubr.f32.mxu0 0.0
    %2625 = vmatmul.mubr.f32.gmra.mrb[0].mxu0 %v2419
    %v2626 = vpop.f32.mrb[0].mxu0
    %v2627 = vadd.f32 %v2453, %v2626
    %v2628 = vpop.f32.mrb[0].mxu0
    %2629 = vmatprep.mubr.f32.mxu0 0.0
    %2630 = vmatmul.mubr.f32.gmra.mrb[0].mxu0 %v2420
    %v2631 = vpop.f32.mrb[0].mxu0
    %v2632 = vadd.f32 %v2453, %v2631
    %v2633 = vpop.f32.mrb[0].mxu0
    %2634 = vmatprep.mubr.f32.mxu0 0.0
    %2635 = vmatmul.mubr.f32.gmra.mrb[0].mxu0 %v2421
    %v2636 = vpop.f32.mrb[0].mxu0
    %v2637 = vadd.f32 %v2453, %v2636
    %v2638 = vpop.f32.mrb[0].mxu0
    %2639 = vmatprep.mubr.f32.mxu0 0.0
    %2640 = vmatmul.mubr.f32.gmra.mrb[0].mxu0 %v2422
    %v2641 = vpop.f32.mrb[0].mxu0
    %v2642 = vadd.f32 %v2453, %v2641
    %v2643 = vpop.f32.mrb[0].mxu0
    %2644 = vmatprep.mubr.f32.mxu0 0.0
    %2645 = vmatmul.mubr.f32.gmra.mrb[0].mxu0 %v2423
    %v2646 = vpop.f32.mrb[0].mxu0
    %v2647 = vadd.f32 %v2453, %v2646
    %v2648 = vpop.f32.mrb[0].mxu0
    %2649 = vmatprep.mubr.f32.mxu0 0.0
    %2650 = vmatmul.mubr.f32.gmra.mrb[0].mxu0 %v2424
    %v2651 = vpop.f32.mrb[0].mxu0
    %v2652 = vadd.f32 %v2453, %v2651
    %v2653 = vpop.f32.mrb[0].mxu0
    %2654 = vmatprep.mubr.f32.mxu0 0.0
    %2655 = vmatmul.mubr.f32.gmra.mrb[0].mxu0 %v2425
    %v2656 = vpop.f32.mrb[0].mxu0
    %v2657 = vadd.f32 %v2453, %v2656
    %v2658 = vpop.f32.mrb[0].mxu0
    %2659 = vmatprep.mubr.f32.mxu0 0.0
    %2660 = vmatmul.mubr.f32.gmra.mrb[0].mxu0 %v2426
    %v2661 = vpop.f32.mrb[0].mxu0
    %v2662 = vadd.f32 %v2453, %v2661
    %v2663 = vpop.f32.mrb[0].mxu0
    %2664 = vmatprep.mubr.f32.mxu0 0.0
    %2665 = vmatmul.mubr.f32.gmra.mrb[0].mxu0 %v2427
    %v2666 = vpop.f32.mrb[0].mxu0
    %v2667 = vadd.f32 %v2453, %v2666
    %v2668 = vpop.f32.mrb[0].mxu0
    %2669 = vmatprep.mubr.f32.mxu0 0.0
    %2670 = vmatmul.mubr.f32.gmra.mrb[0].mxu0 %v2428
    %v2671 = vpop.f32.mrb[0].mxu0
    %v2672 = vadd.f32 %v2453, %v2671
    %v2673 = vpop.f32.mrb[0].mxu0
    %2674 = vmatprep.mubr.f32.mxu0 0.0
    %2675 = vmatmul.mubr.f32.gmra.mrb[0].mxu0 %v2429
    %v2676 = vpop.f32.mrb[0].mxu0
    %v2677 = vadd.f32 %v2453, %v2676
    %v2678 = vpop.f32.mrb[0].mxu0
    %2679 = vdwg.mxu0
    %v2680 = vmax.f32 %v2522, 0.0
    %v2681 = vmax.f32 %v2527, 0.0
    %v2682 = vmax.f32 %v2532, 0.0
    %v2683 = vmax.f32 %v2537, 0.0
    %v2684 = vmax.f32 %v2542, 0.0
    %v2685 = vmax.f32 %v2547, 0.0
    %v2686 = vmax.f32 %v2552, 0.0
    %v2687 = vmax.f32 %v2557, 0.0
    %v2688 = vmax.f32 %v2562, 0.0
    %v2689 = vmax.f32 %v2567, 0.0
    %v2690 = vmax.f32 %v2572, 0.0
    %v2691 = vmax.f32 %v2577, 0.0
    %v2692 = vmax.f32 %v2582, 0.0
    %v2693 = vmax.f32 %v2587, 0.0
    %v2694 = vmax.f32 %v2592, 0.0
    %v2695 = vmax.f32 %v2597, 0.0
    %v2696 = vmax.f32 %v2602, 0.0
    %v2697 = vmax.f32 %v2607, 0.0
    %v2698 = vmax.f32 %v2612, 0.0
    %v2699 = vmax.f32 %v2617, 0.0
    %v2700 = vmax.f32 %v2622, 0.0
    %v2701 = vmax.f32 %v2627, 0.0
    %v2702 = vmax.f32 %v2632, 0.0
    %v2703 = vmax.f32 %v2637, 0.0
    %v2704 = vmax.f32 %v2642, 0.0
    %v2705 = vmax.f32 %v2647, 0.0
    %v2706 = vmax.f32 %v2652, 0.0
    %v2707 = vmax.f32 %v2657, 0.0
    %v2708 = vmax.f32 %v2662, 0.0
    %v2709 = vmax.f32 %v2667, 0.0
    %v2710 = vmax.f32 %v2672, 0.0
    %v2711 = vmax.f32 %v2677, 0.0
    %v2712 = vld [vmem:[#allocation10] sm:$0xff]
    %v2713 = vld [vmem:[#allocation10 + $0x8] sm:$0xff]
    %v2714 = vld [vmem:[#allocation10 + $0x10] sm:$0xff]
    %v2715 = vld [vmem:[#allocation10 + $0x18] sm:$0xff]
    %v2716 = vld [vmem:[#allocation10 + $0x20] sm:$0xff]
    %v2717 = vld [vmem:[#allocation10 + $0x28] sm:$0xff]
    %v2718 = vld [vmem:[#allocation10 + $0x30] sm:$0xff]
    %v2719 = vld [vmem:[#allocation10 + $0x38] sm:$0xff]
    %v2720 = vld [vmem:[#allocation10 + $0x40] sm:$0xff]
    %v2721 = vld [vmem:[#allocation10 + $0x48] sm:$0xff]
    %v2722 = vld [vmem:[#allocation10 + $0x50] sm:$0xff]
    %v2723 = vld [vmem:[#allocation10 + $0x58] sm:$0xff]
    %v2724 = vld [vmem:[#allocation10 + $0x60] sm:$0xff]
    %v2725 = vld [vmem:[#allocation10 + $0x68] sm:$0xff]
    %v2726 = vld [vmem:[#allocation10 + $0x70] sm:$0xff]
    %v2727 = vld [vmem:[#allocation10 + $0x78] sm:$0xff]
    %v2728 = vld [vmem:[%s6] sm:$0x1]
    %v2730 = vlaneseq
    %v2731 = vshrl.u32 %v2730, 7
    %v2732 = vsub.s32 0, %v2731
    %v2733 = vrot.slane %v2728, %v2732
    %2735 = vmatprep.subr.mxu0 0.0
    %2736 = vmatpush1.msra.mxu0 %v2712
    %2737 = vmatprep.subr.mxu0 0.0
    %2738 = vmatpush1.msra.mxu0 %v2713
    %2739 = vmatprep.subr.mxu0 0.0
    %2740 = vmatpush1.msra.mxu0 %v2714
    %2741 = vmatprep.subr.mxu0 0.0
    %2742 = vmatpush1.msra.mxu0 %v2715
    %2743 = vmatprep.subr.mxu0 0.0
    %2744 = vmatpush1.msra.mxu0 %v2716
    %2745 = vmatprep.subr.mxu0 0.0
    %2746 = vmatpush1.msra.mxu0 %v2717
    %2747 = vmatprep.subr.mxu0 0.0
    %2748 = vmatpush1.msra.mxu0 %v2718
    %2749 = vmatprep.subr.mxu0 0.0
    %2750 = vmatpush1.msra.mxu0 %v2719
    %2751 = vmatprep.subr.mxu0 0.0
    %2752 = vmatpush1.msra.mxu0 %v2720
    %2753 = vmatprep.subr.mxu0 0.0
    %2754 = vmatpush1.msra.mxu0 %v2721
    %2755 = vmatprep.subr.mxu0 0.0
    %2756 = vmatpush1.msra.mxu0 %v2722
    %2757 = vmatprep.subr.mxu0 0.0
    %2758 = vmatpush1.msra.mxu0 %v2723
    %2759 = vmatprep.subr.mxu0 0.0
    %2760 = vmatpush1.msra.mxu0 %v2724
    %2761 = vmatprep.subr.mxu0 0.0
    %2762 = vmatpush1.msra.mxu0 %v2725
    %2763 = vmatprep.subr.mxu0 0.0
    %2764 = vmatpush1.msra.mxu0 %v2726
    %2765 = vmatprep.subr.mxu0 0.0
    %2766 = vmatpush1.msra.mxu0 %v2727
    %2767 = vmatprep.subr.mxu0 0.0
    %2768 = vmatpush1.msra.mxu0 0.0
    %2769 = vmatprep.subr.mxu0 0.0
    %2770 = vmatpush1.msra.mxu0 0.0
    %2771 = vmatprep.subr.mxu0 0.0
    %2772 = vmatpush1.msra.mxu0 0.0
    %2773 = vmatprep.subr.mxu0 0.0
    %2774 = vmatpush1.msra.mxu0 0.0
    %2775 = vmatprep.subr.mxu0 0.0
    %2776 = vmatpush1.msra.mxu0 0.0
    %2777 = vmatprep.subr.mxu0 0.0
    %2778 = vmatpush1.msra.mxu0 0.0
    %2779 = vmatprep.subr.mxu0 0.0
    %2780 = vmatpush1.msra.mxu0 0.0
    %2781 = vmatprep.subr.mxu0 0.0
    %2782 = vmatpush1.msra.mxu0 0.0
    %2783 = vmatprep.subr.mxu0 0.0
    %2784 = vmatpush1.msra.mxu0 0.0
    %2785 = vmatprep.subr.mxu0 0.0
    %2786 = vmatpush1.msra.mxu0 0.0
    %2787 = vmatprep.subr.mxu0 0.0
    %2788 = vmatpush1.msra.mxu0 0.0
    %2789 = vmatprep.subr.mxu0 0.0
    %2790 = vmatpush1.msra.mxu0 0.0
    %2791 = vmatprep.subr.mxu0 0.0
    %2792 = vmatpush1.msra.mxu0 0.0
    %2793 = vmatprep.subr.mxu0 0.0
    %2794 = vmatpush1.msra.mxu0 0.0
    %2795 = vmatprep.subr.mxu0 0.0
    %2796 = vmatpush1.msra.mxu0 0.0
    %2797 = vmatprep.subr.mxu0 0.0
    %2798 = vmatpush1.msra.mxu0 0.0
    %2799 = vmatprep.mubr.f32.mxu0 0.0
    %2800 = vmatmul.mubr.f32.gmra.mrb[0].mxu0 %v2680
    %v2801 = vpop.f32.mrb[0].mxu0
    %v2802 = vadd.f32 %v2733, %v2801
    %v2803 = vpop.f32.mrb[0].mxu0
    %2804 = vmatprep.mubr.f32.mxu0 0.0
    %2805 = vmatmul.mubr.f32.gmra.mrb[0].mxu0 %v2681
    %v2806 = vpop.f32.mrb[0].mxu0
    %v2807 = vadd.f32 %v2733, %v2806
    %v2808 = vpop.f32.mrb[0].mxu0
    %2809 = vmatprep.mubr.f32.mxu0 0.0
    %2810 = vmatmul.mubr.f32.gmra.mrb[0].mxu0 %v2682
    %v2811 = vpop.f32.mrb[0].mxu0
    %v2812 = vadd.f32 %v2733, %v2811
    %v2813 = vpop.f32.mrb[0].mxu0
    %2814 = vmatprep.mubr.f32.mxu0 0.0
    %2815 = vmatmul.mubr.f32.gmra.mrb[0].mxu0 %v2683
    %v2816 = vpop.f32.mrb[0].mxu0
    %v2817 = vadd.f32 %v2733, %v2816
    %v2818 = vpop.f32.mrb[0].mxu0
    %2819 = vmatprep.mubr.f32.mxu0 0.0
    %2820 = vmatmul.mubr.f32.gmra.mrb[0].mxu0 %v2684
    %v2821 = vpop.f32.mrb[0].mxu0
    %v2822 = vadd.f32 %v2733, %v2821
    %v2823 = vpop.f32.mrb[0].mxu0
    %2824 = vmatprep.mubr.f32.mxu0 0.0
    %2825 = vmatmul.mubr.f32.gmra.mrb[0].mxu0 %v2685
    %v2826 = vpop.f32.mrb[0].mxu0
    %v2827 = vadd.f32 %v2733, %v2826
    %v2828 = vpop.f32.mrb[0].mxu0
    %2829 = vmatprep.mubr.f32.mxu0 0.0
    %2830 = vmatmul.mubr.f32.gmra.mrb[0].mxu0 %v2686
    %v2831 = vpop.f32.mrb[0].mxu0
    %v2832 = vadd.f32 %v2733, %v2831
    %v2833 = vpop.f32.mrb[0].mxu0
    %2834 = vmatprep.mubr.f32.mxu0 0.0
    %2835 = vmatmul.mubr.f32.gmra.mrb[0].mxu0 %v2687
    %v2836 = vpop.f32.mrb[0].mxu0
    %v2837 = vadd.f32 %v2733, %v2836
    %v2838 = vpop.f32.mrb[0].mxu0
    %2839 = vmatprep.mubr.f32.mxu0 0.0
    %2840 = vmatmul.mubr.f32.gmra.mrb[0].mxu0 %v2688
    %v2841 = vpop.f32.mrb[0].mxu0
    %v2842 = vadd.f32 %v2733, %v2841
    %v2843 = vpop.f32.mrb[0].mxu0
    %2844 = vmatprep.mubr.f32.mxu0 0.0
    %2845 = vmatmul.mubr.f32.gmra.mrb[0].mxu0 %v2689
    %v2846 = vpop.f32.mrb[0].mxu0
    %v2847 = vadd.f32 %v2733, %v2846
    %v2848 = vpop.f32.mrb[0].mxu0
    %2849 = vmatprep.mubr.f32.mxu0 0.0
    %2850 = vmatmul.mubr.f32.gmra.mrb[0].mxu0 %v2690
    %v2851 = vpop.f32.mrb[0].mxu0
    %v2852 = vadd.f32 %v2733, %v2851
    %v2853 = vpop.f32.mrb[0].mxu0
    %2854 = vmatprep.mubr.f32.mxu0 0.0
    %2855 = vmatmul.mubr.f32.gmra.mrb[0].mxu0 %v2691
    %v2856 = vpop.f32.mrb[0].mxu0
    %v2857 = vadd.f32 %v2733, %v2856
    %v2858 = vpop.f32.mrb[0].mxu0
    %2859 = vmatprep.mubr.f32.mxu0 0.0
    %2860 = vmatmul.mubr.f32.gmra.mrb[0].mxu0 %v2692
    %v2861 = vpop.f32.mrb[0].mxu0
    %v2862 = vadd.f32 %v2733, %v2861
    %v2863 = vpop.f32.mrb[0].mxu0
    %2864 = vmatprep.mubr.f32.mxu0 0.0
    %2865 = vmatmul.mubr.f32.gmra.mrb[0].mxu0 %v2693
    %v2866 = vpop.f32.mrb[0].mxu0
    %v2867 = vadd.f32 %v2733, %v2866
    %v2868 = vpop.f32.mrb[0].mxu0
    %2869 = vmatprep.mubr.f32.mxu0 0.0
    %2870 = vmatmul.mubr.f32.gmra.mrb[0].mxu0 %v2694
    %v2871 = vpop.f32.mrb[0].mxu0
    %v2872 = vadd.f32 %v2733, %v2871
    %v2873 = vpop.f32.mrb[0].mxu0
    %2874 = vmatprep.mubr.f32.mxu0 0.0
    %2875 = vmatmul.mubr.f32.gmra.mrb[0].mxu0 %v2695
    %v2876 = vpop.f32.mrb[0].mxu0
    %v2877 = vadd.f32 %v2733, %v2876
    %v2878 = vpop.f32.mrb[0].mxu0
    %2879 = vmatprep.mubr.f32.mxu0 0.0
    %2880 = vmatmul.mubr.f32.gmra.mrb[0].mxu0 %v2696
    %v2881 = vpop.f32.mrb[0].mxu0
    %v2882 = vadd.f32 %v2733, %v2881
    %v2883 = vpop.f32.mrb[0].mxu0
    %2884 = vmatprep.mubr.f32.mxu0 0.0
    %2885 = vmatmul.mubr.f32.gmra.mrb[0].mxu0 %v2697
    %v2886 = vpop.f32.mrb[0].mxu0
    %v2887 = vadd.f32 %v2733, %v2886
    %v2888 = vpop.f32.mrb[0].mxu0
    %2889 = vmatprep.mubr.f32.mxu0 0.0
    %2890 = vmatmul.mubr.f32.gmra.mrb[0].mxu0 %v2698
    %v2891 = vpop.f32.mrb[0].mxu0
    %v2892 = vadd.f32 %v2733, %v2891
    %v2893 = vpop.f32.mrb[0].mxu0
    %2894 = vmatprep.mubr.f32.mxu0 0.0
    %2895 = vmatmul.mubr.f32.gmra.mrb[0].mxu0 %v2699
    %v2896 = vpop.f32.mrb[0].mxu0
    %v2897 = vadd.f32 %v2733, %v2896
    %v2898 = vpop.f32.mrb[0].mxu0
    %2899 = vmatprep.mubr.f32.mxu0 0.0
    %2900 = vmatmul.mubr.f32.gmra.mrb[0].mxu0 %v2700
    %v2901 = vpop.f32.mrb[0].mxu0
    %v2902 = vadd.f32 %v2733, %v2901
    %v2903 = vpop.f32.mrb[0].mxu0
    %2904 = vmatprep.mubr.f32.mxu0 0.0
    %2905 = vmatmul.mubr.f32.gmra.mrb[0].mxu0 %v2701
    %v2906 = vpop.f32.mrb[0].mxu0
    %v2907 = vadd.f32 %v2733, %v2906
    %v2908 = vpop.f32.mrb[0].mxu0
    %2909 = vmatprep.mubr.f32.mxu0 0.0
    %2910 = vmatmul.mubr.f32.gmra.mrb[0].mxu0 %v2702
    %v2911 = vpop.f32.mrb[0].mxu0
    %v2912 = vadd.f32 %v2733, %v2911
    %v2913 = vpop.f32.mrb[0].mxu0
    %2914 = vmatprep.mubr.f32.mxu0 0.0
    %2915 = vmatmul.mubr.f32.gmra.mrb[0].mxu0 %v2703
    %v2916 = vpop.f32.mrb[0].mxu0
    %v2917 = vadd.f32 %v2733, %v2916
    %v2918 = vpop.f32.mrb[0].mxu0
    %2919 = vmatprep.mubr.f32.mxu0 0.0
    %2920 = vmatmul.mubr.f32.gmra.mrb[0].mxu0 %v2704
    %v2921 = vpop.f32.mrb[0].mxu0
    %v2922 = vadd.f32 %v2733, %v2921
    %v2923 = vpop.f32.mrb[0].mxu0
    %2924 = vmatprep.mubr.f32.mxu0 0.0
    %2925 = vmatmul.mubr.f32.gmra.mrb[0].mxu0 %v2705
    %v2926 = vpop.f32.mrb[0].mxu0
    %v2927 = vadd.f32 %v2733, %v2926
    %v2928 = vpop.f32.mrb[0].mxu0
    %2929 = vmatprep.mubr.f32.mxu0 0.0
    %2930 = vmatmul.mubr.f32.gmra.mrb[0].mxu0 %v2706
    %v2931 = vpop.f32.mrb[0].mxu0
    %v2932 = vadd.f32 %v2733, %v2931
    %v2933 = vpop.f32.mrb[0].mxu0
    %2934 = vmatprep.mubr.f32.mxu0 0.0
    %2935 = vmatmul.mubr.f32.gmra.mrb[0].mxu0 %v2707
    %v2936 = vpop.f32.mrb[0].mxu0
    %v2937 = vadd.f32 %v2733, %v2936
    %v2938 = vpop.f32.mrb[0].mxu0
    %2939 = vmatprep.mubr.f32.mxu0 0.0
    %2940 = vmatmul.mubr.f32.gmra.mrb[0].mxu0 %v2708
    %v2941 = vpop.f32.mrb[0].mxu0
    %v2942 = vadd.f32 %v2733, %v2941
    %v2943 = vpop.f32.mrb[0].mxu0
    %2944 = vmatprep.mubr.f32.mxu0 0.0
    %2945 = vmatmul.mubr.f32.gmra.mrb[0].mxu0 %v2709
    %v2946 = vpop.f32.mrb[0].mxu0
    %v2947 = vadd.f32 %v2733, %v2946
    %v2948 = vpop.f32.mrb[0].mxu0
    %2949 = vmatprep.mubr.f32.mxu0 0.0
    %2950 = vmatmul.mubr.f32.gmra.mrb[0].mxu0 %v2710
    %v2951 = vpop.f32.mrb[0].mxu0
    %v2952 = vadd.f32 %v2733, %v2951
    %v2953 = vpop.f32.mrb[0].mxu0
    %2954 = vmatprep.mubr.f32.mxu0 0.0
    %2955 = vmatmul.mubr.f32.gmra.mrb[0].mxu0 %v2711
    %v2956 = vpop.f32.mrb[0].mxu0
    %v2957 = vadd.f32 %v2733, %v2956
    %v2958 = vpop.f32.mrb[0].mxu0
    %2959 = vdwg.mxu0
    %v2960 = vld [vmem:[#allocation11] sm:$0xff]
    %v2961 = vld [vmem:[#allocation11 + $0x8] sm:$0xff]
    %v2962 = vld [vmem:[#allocation11 + $0x10] sm:$0xff]
    %v2963 = vld [vmem:[#allocation11 + $0x18] sm:$0xff]
    %v2964 = vld [vmem:[#allocation11 + $0x20] sm:$0xff]
    %v2965 = vld [vmem:[#allocation11 + $0x28] sm:$0xff]
    %v2966 = vld [vmem:[#allocation11 + $0x30] sm:$0xff]
    %v2967 = vld [vmem:[#allocation11 + $0x38] sm:$0xff]
    %v2968 = vld [vmem:[#allocation11 + $0x40] sm:$0xff]
    %v2969 = vld [vmem:[#allocation11 + $0x48] sm:$0xff]
    %v2970 = vld [vmem:[#allocation11 + $0x50] sm:$0xff]
    %v2971 = vld [vmem:[#allocation11 + $0x58] sm:$0xff]
    %v2972 = vld [vmem:[#allocation11 + $0x60] sm:$0xff]
    %v2973 = vld [vmem:[#allocation11 + $0x68] sm:$0xff]
    %v2974 = vld [vmem:[#allocation11 + $0x70] sm:$0xff]
    %v2975 = vld [vmem:[#allocation11 + $0x78] sm:$0xff]
    %v2976 = vld [vmem:[#allocation13] sm:$0xff]
    %v2977 = vld [vmem:[#allocation13 + $0x8] sm:$0xff]
    %v2978 = vld [vmem:[#allocation13 + $0x10] sm:$0xff]
    %v2979 = vld [vmem:[#allocation13 + $0x18] sm:$0xff]
    %v2980 = vld [vmem:[#allocation13 + $0x20] sm:$0xff]
    %v2981 = vld [vmem:[#allocation13 + $0x28] sm:$0xff]
    %v2982 = vld [vmem:[#allocation13 + $0x30] sm:$0xff]
    %v2983 = vld [vmem:[#allocation13 + $0x38] sm:$0xff]
    %v2984 = vld [vmem:[#allocation13 + $0x40] sm:$0xff]
    %v2985 = vld [vmem:[#allocation13 + $0x48] sm:$0xff]
    %v2986 = vld [vmem:[#allocation13 + $0x50] sm:$0xff]
    %v2987 = vld [vmem:[#allocation13 + $0x58] sm:$0xff]
    %v2988 = vld [vmem:[#allocation13 + $0x60] sm:$0xff]
    %v2989 = vld [vmem:[#allocation13 + $0x68] sm:$0xff]
    %v2990 = vld [vmem:[#allocation13 + $0x70] sm:$0xff]
    %v2991 = vld [vmem:[#allocation13 + $0x78] sm:$0xff]
    %2992 = vmatprep.subr.mxu0 0.0
    %2993 = vmatpush1.msra.mxu0 %v2976
    %2994 = vmatprep.subr.mxu0 0.0
    %2995 = vmatpush1.msra.mxu0 %v2977
    %2996 = vmatprep.subr.mxu0 0.0
    %2997 = vmatpush1.msra.mxu0 %v2978
    %2998 = vmatprep.subr.mxu0 0.0
    %2999 = vmatpush1.msra.mxu0 %v2979
    %3000 = vmatprep.subr.mxu0 0.0
    %3001 = vmatpush1.msra.mxu0 %v2980
    %3002 = vmatprep.subr.mxu0 0.0
    %3003 = vmatpush1.msra.mxu0 %v2981
    %3004 = vmatprep.subr.mxu0 0.0
    %3005 = vmatpush1.msra.mxu0 %v2982
    %3006 = vmatprep.subr.mxu0 0.0
    %3007 = vmatpush1.msra.mxu0 %v2983
    %3008 = vmatprep.subr.mxu0 0.0
    %3009 = vmatpush1.msra.mxu0 %v2984
    %3010 = vmatprep.subr.mxu0 0.0
    %3011 = vmatpush1.msra.mxu0 %v2985
    %3012 = vmatprep.subr.mxu0 0.0
    %3013 = vmatpush1.msra.mxu0 %v2986
    %3014 = vmatprep.subr.mxu0 0.0
    %3015 = vmatpush1.msra.mxu0 %v2987
    %3016 = vmatprep.subr.mxu0 0.0
    %3017 = vmatpush1.msra.mxu0 %v2988
    %3018 = vmatprep.subr.mxu0 0.0
    %3019 = vmatpush1.msra.mxu0 %v2989
    %3020 = vmatprep.subr.mxu0 0.0
    %3021 = vmatpush1.msra.mxu0 %v2990
    %3022 = vmatprep.subr.mxu0 0.0
    %3023 = vmatpush1.msra.mxu0 %v2991
    %3024 = vmatprep.subr.mxu0 0.0
    %3025 = vmatpush1.msra.mxu0 0.0
    %3026 = vmatprep.subr.mxu0 0.0
    %3027 = vmatpush1.msra.mxu0 0.0
    %3028 = vmatprep.subr.mxu0 0.0
    %3029 = vmatpush1.msra.mxu0 0.0
    %3030 = vmatprep.subr.mxu0 0.0
    %3031 = vmatpush1.msra.mxu0 0.0
    %3032 = vmatprep.subr.mxu0 0.0
    %3033 = vmatpush1.msra.mxu0 0.0
    %3034 = vmatprep.subr.mxu0 0.0
    %3035 = vmatpush1.msra.mxu0 0.0
    %3036 = vmatprep.subr.mxu0 0.0
    %3037 = vmatpush1.msra.mxu0 0.0
    %3038 = vmatprep.subr.mxu0 0.0
    %3039 = vmatpush1.msra.mxu0 0.0
    %3040 = vmatprep.subr.mxu0 0.0
    %3041 = vmatpush1.msra.mxu0 0.0
    %3042 = vmatprep.subr.mxu0 0.0
    %3043 = vmatpush1.msra.mxu0 0.0
    %3044 = vmatprep.subr.mxu0 0.0
    %3045 = vmatpush1.msra.mxu0 0.0
    %3046 = vmatprep.subr.mxu0 0.0
    %3047 = vmatpush1.msra.mxu0 0.0
    %3048 = vmatprep.subr.mxu0 0.0
    %3049 = vmatpush1.msra.mxu0 0.0
    %3050 = vmatprep.subr.mxu0 0.0
    %3051 = vmatpush1.msra.mxu0 0.0
    %3052 = vmatprep.subr.mxu0 0.0
    %3053 = vmatpush1.msra.mxu0 0.0
    %3054 = vmatprep.subr.mxu0 0.0
    %3055 = vmatpush1.msra.mxu0 0.0
    %3056 = vmatprep.mubr.f32.mxu0 0.0
    %3057 = vmatmul.mubr.f32.gmra.mrb[0].mxu0 %v154
    %v3058 = vpop.f32.mrb[0].mxu0
    %v3059 = vadd.f32 0.0, %v3058
    %v3060 = vpop.f32.mrb[0].mxu0
    %3061 = vmatprep.mubr.f32.mxu0 0.0
    %3062 = vmatmul.mubr.f32.gmra.mrb[0].mxu0 %v155
    %v3063 = vpop.f32.mrb[0].mxu0
    %v3064 = vadd.f32 0.0, %v3063
    %v3065 = vpop.f32.mrb[0].mxu0
    %3066 = vmatprep.mubr.f32.mxu0 0.0
    %3067 = vmatmul.mubr.f32.gmra.mrb[0].mxu0 %v156
    %v3068 = vpop.f32.mrb[0].mxu0
    %v3069 = vadd.f32 0.0, %v3068
    %v3070 = vpop.f32.mrb[0].mxu0
    %3071 = vmatprep.mubr.f32.mxu0 0.0
    %3072 = vmatmul.mubr.f32.gmra.mrb[0].mxu0 %v157
    %v3073 = vpop.f32.mrb[0].mxu0
    %v3074 = vadd.f32 0.0, %v3073
    %v3075 = vpop.f32.mrb[0].mxu0
    %3076 = vmatprep.mubr.f32.mxu0 0.0
    %3077 = vmatmul.mubr.f32.gmra.mrb[0].mxu0 %v158
    %v3078 = vpop.f32.mrb[0].mxu0
    %v3079 = vadd.f32 0.0, %v3078
    %v3080 = vpop.f32.mrb[0].mxu0
    %3081 = vmatprep.mubr.f32.mxu0 0.0
    %3082 = vmatmul.mubr.f32.gmra.mrb[0].mxu0 %v159
    %v3083 = vpop.f32.mrb[0].mxu0
    %v3084 = vadd.f32 0.0, %v3083
    %v3085 = vpop.f32.mrb[0].mxu0
    %3086 = vmatprep.mubr.f32.mxu0 0.0
    %3087 = vmatmul.mubr.f32.gmra.mrb[0].mxu0 %v160
    %v3088 = vpop.f32.mrb[0].mxu0
    %v3089 = vadd.f32 0.0, %v3088
    %v3090 = vpop.f32.mrb[0].mxu0
    %3091 = vmatprep.mubr.f32.mxu0 0.0
    %3092 = vmatmul.mubr.f32.gmra.mrb[0].mxu0 %v161
    %v3093 = vpop.f32.mrb[0].mxu0
    %v3094 = vadd.f32 0.0, %v3093
    %v3095 = vpop.f32.mrb[0].mxu0
    %3096 = vmatprep.mubr.f32.mxu0 0.0
    %3097 = vmatmul.mubr.f32.gmra.mrb[0].mxu0 %v162
    %v3098 = vpop.f32.mrb[0].mxu0
    %v3099 = vadd.f32 0.0, %v3098
    %v3100 = vpop.f32.mrb[0].mxu0
    %3101 = vmatprep.mubr.f32.mxu0 0.0
    %3102 = vmatmul.mubr.f32.gmra.mrb[0].mxu0 %v163
    %v3103 = vpop.f32.mrb[0].mxu0
    %v3104 = vadd.f32 0.0, %v3103
    %v3105 = vpop.f32.mrb[0].mxu0
    %3106 = vmatprep.mubr.f32.mxu0 0.0
    %3107 = vmatmul.mubr.f32.gmra.mrb[0].mxu0 %v164
    %v3108 = vpop.f32.mrb[0].mxu0
    %v3109 = vadd.f32 0.0, %v3108
    %v3110 = vpop.f32.mrb[0].mxu0
    %3111 = vmatprep.mubr.f32.mxu0 0.0
    %3112 = vmatmul.mubr.f32.gmra.mrb[0].mxu0 %v165
    %v3113 = vpop.f32.mrb[0].mxu0
    %v3114 = vadd.f32 0.0, %v3113
    %v3115 = vpop.f32.mrb[0].mxu0
    %3116 = vmatprep.mubr.f32.mxu0 0.0
    %3117 = vmatmul.mubr.f32.gmra.mrb[0].mxu0 %v166
    %v3118 = vpop.f32.mrb[0].mxu0
    %v3119 = vadd.f32 0.0, %v3118
    %v3120 = vpop.f32.mrb[0].mxu0
    %3121 = vmatprep.mubr.f32.mxu0 0.0
    %3122 = vmatmul.mubr.f32.gmra.mrb[0].mxu0 %v167
    %v3123 = vpop.f32.mrb[0].mxu0
    %v3124 = vadd.f32 0.0, %v3123
    %v3125 = vpop.f32.mrb[0].mxu0
    %3126 = vmatprep.mubr.f32.mxu0 0.0
    %3127 = vmatmul.mubr.f32.gmra.mrb[0].mxu0 %v168
    %v3128 = vpop.f32.mrb[0].mxu0
    %v3129 = vadd.f32 0.0, %v3128
    %v3130 = vpop.f32.mrb[0].mxu0
    %3131 = vmatprep.mubr.f32.mxu0 0.0
    %3132 = vmatmul.mubr.f32.gmra.mrb[0].mxu0 %v169
    %v3133 = vpop.f32.mrb[0].mxu0
    %v3134 = vadd.f32 0.0, %v3133
    %v3135 = vpop.f32.mrb[0].mxu0
    %3136 = vmatprep.mubr.f32.mxu0 0.0
    %3137 = vmatmul.mubr.f32.gmra.mrb[0].mxu0 %v170
    %v3138 = vpop.f32.mrb[0].mxu0
    %v3139 = vadd.f32 0.0, %v3138
    %v3140 = vpop.f32.mrb[0].mxu0
    %3141 = vmatprep.mubr.f32.mxu0 0.0
    %3142 = vmatmul.mubr.f32.gmra.mrb[0].mxu0 %v171
    %v3143 = vpop.f32.mrb[0].mxu0
    %v3144 = vadd.f32 0.0, %v3143
    %v3145 = vpop.f32.mrb[0].mxu0
    %3146 = vmatprep.mubr.f32.mxu0 0.0
    %3147 = vmatmul.mubr.f32.gmra.mrb[0].mxu0 %v172
    %v3148 = vpop.f32.mrb[0].mxu0
    %v3149 = vadd.f32 0.0, %v3148
    %v3150 = vpop.f32.mrb[0].mxu0
    %3151 = vmatprep.mubr.f32.mxu0 0.0
    %3152 = vmatmul.mubr.f32.gmra.mrb[0].mxu0 %v173
    %v3153 = vpop.f32.mrb[0].mxu0
    %v3154 = vadd.f32 0.0, %v3153
    %v3155 = vpop.f32.mrb[0].mxu0
    %3156 = vmatprep.mubr.f32.mxu0 0.0
    %3157 = vmatmul.mubr.f32.gmra.mrb[0].mxu0 %v174
    %v3158 = vpop.f32.mrb[0].mxu0
    %v3159 = vadd.f32 0.0, %v3158
    %v3160 = vpop.f32.mrb[0].mxu0
    %3161 = vmatprep.mubr.f32.mxu0 0.0
    %3162 = vmatmul.mubr.f32.gmra.mrb[0].mxu0 %v175
    %v3163 = vpop.f32.mrb[0].mxu0
    %v3164 = vadd.f32 0.0, %v3163
    %v3165 = vpop.f32.mrb[0].mxu0
    %3166 = vmatprep.mubr.f32.mxu0 0.0
    %3167 = vmatmul.mubr.f32.gmra.mrb[0].mxu0 %v176
    %v3168 = vpop.f32.mrb[0].mxu0
    %v3169 = vadd.f32 0.0, %v3168
    %v3170 = vpop.f32.mrb[0].mxu0
    %3171 = vmatprep.mubr.f32.mxu0 0.0
    %3172 = vmatmul.mubr.f32.gmra.mrb[0].mxu0 %v177
    %v3173 = vpop.f32.mrb[0].mxu0
    %v3174 = vadd.f32 0.0, %v3173
    %v3175 = vpop.f32.mrb[0].mxu0
    %3176 = vmatprep.mubr.f32.mxu0 0.0
    %3177 = vmatmul.mubr.f32.gmra.mrb[0].mxu0 %v178
    %v3178 = vpop.f32.mrb[0].mxu0
    %v3179 = vadd.f32 0.0, %v3178
    %v3180 = vpop.f32.mrb[0].mxu0
    %3181 = vmatprep.mubr.f32.mxu0 0.0
    %3182 = vmatmul.mubr.f32.gmra.mrb[0].mxu0 %v179
    %v3183 = vpop.f32.mrb[0].mxu0
    %v3184 = vadd.f32 0.0, %v3183
    %v3185 = vpop.f32.mrb[0].mxu0
    %3186 = vmatprep.mubr.f32.mxu0 0.0
    %3187 = vmatmul.mubr.f32.gmra.mrb[0].mxu0 %v180
    %v3188 = vpop.f32.mrb[0].mxu0
    %v3189 = vadd.f32 0.0, %v3188
    %v3190 = vpop.f32.mrb[0].mxu0
    %3191 = vmatprep.mubr.f32.mxu0 0.0
    %3192 = vmatmul.mubr.f32.gmra.mrb[0].mxu0 %v181
    %v3193 = vpop.f32.mrb[0].mxu0
    %v3194 = vadd.f32 0.0, %v3193
    %v3195 = vpop.f32.mrb[0].mxu0
    %3196 = vmatprep.mubr.f32.mxu0 0.0
    %3197 = vmatmul.mubr.f32.gmra.mrb[0].mxu0 %v182
    %v3198 = vpop.f32.mrb[0].mxu0
    %v3199 = vadd.f32 0.0, %v3198
    %v3200 = vpop.f32.mrb[0].mxu0
    %3201 = vmatprep.mubr.f32.mxu0 0.0
    %3202 = vmatmul.mubr.f32.gmra.mrb[0].mxu0 %v183
    %v3203 = vpop.f32.mrb[0].mxu0
    %v3204 = vadd.f32 0.0, %v3203
    %v3205 = vpop.f32.mrb[0].mxu0
    %3206 = vmatprep.mubr.f32.mxu0 0.0
    %3207 = vmatmul.mubr.f32.gmra.mrb[0].mxu0 %v184
    %v3208 = vpop.f32.mrb[0].mxu0
    %v3209 = vadd.f32 0.0, %v3208
    %v3210 = vpop.f32.mrb[0].mxu0
    %3211 = vmatprep.mubr.f32.mxu0 0.0
    %3212 = vmatmul.mubr.f32.gmra.mrb[0].mxu0 %v185
    %v3213 = vpop.f32.mrb[0].mxu0
    %v3214 = vadd.f32 0.0, %v3213
    %v3215 = vpop.f32.mrb[0].mxu0
    %3216 = vdwg.mxu0
    %3217 = vmatprep.subr.mxu0 0.0
    %3218 = vmatpush1.msra.mxu0 %v2960
    %3219 = vmatprep.subr.mxu0 0.0
    %3220 = vmatpush1.msra.mxu0 %v2961
    %3221 = vmatprep.subr.mxu0 0.0
    %3222 = vmatpush1.msra.mxu0 %v2962
    %3223 = vmatprep.subr.mxu0 0.0
    %3224 = vmatpush1.msra.mxu0 %v2963
    %3225 = vmatprep.subr.mxu0 0.0
    %3226 = vmatpush1.msra.mxu0 %v2964
    %3227 = vmatprep.subr.mxu0 0.0
    %3228 = vmatpush1.msra.mxu0 %v2965
    %3229 = vmatprep.subr.mxu0 0.0
    %3230 = vmatpush1.msra.mxu0 %v2966
    %3231 = vmatprep.subr.mxu0 0.0
    %3232 = vmatpush1.msra.mxu0 %v2967
    %3233 = vmatprep.subr.mxu0 0.0
    %3234 = vmatpush1.msra.mxu0 %v2968
    %3235 = vmatprep.subr.mxu0 0.0
    %3236 = vmatpush1.msra.mxu0 %v2969
    %3237 = vmatprep.subr.mxu0 0.0
    %3238 = vmatpush1.msra.mxu0 %v2970
    %3239 = vmatprep.subr.mxu0 0.0
    %3240 = vmatpush1.msra.mxu0 %v2971
    %3241 = vmatprep.subr.mxu0 0.0
    %3242 = vmatpush1.msra.mxu0 %v2972
    %3243 = vmatprep.subr.mxu0 0.0
    %3244 = vmatpush1.msra.mxu0 %v2973
    %3245 = vmatprep.subr.mxu0 0.0
    %3246 = vmatpush1.msra.mxu0 %v2974
    %3247 = vmatprep.subr.mxu0 0.0
    %3248 = vmatpush1.msra.mxu0 %v2975
    %3249 = vmatprep.subr.mxu0 0.0
    %3250 = vmatpush1.msra.mxu0 0.0
    %3251 = vmatprep.subr.mxu0 0.0
    %3252 = vmatpush1.msra.mxu0 0.0
    %3253 = vmatprep.subr.mxu0 0.0
    %3254 = vmatpush1.msra.mxu0 0.0
    %3255 = vmatprep.subr.mxu0 0.0
    %3256 = vmatpush1.msra.mxu0 0.0
    %3257 = vmatprep.subr.mxu0 0.0
    %3258 = vmatpush1.msra.mxu0 0.0
    %3259 = vmatprep.subr.mxu0 0.0
    %3260 = vmatpush1.msra.mxu0 0.0
    %3261 = vmatprep.subr.mxu0 0.0
    %3262 = vmatpush1.msra.mxu0 0.0
    %3263 = vmatprep.subr.mxu0 0.0
    %3264 = vmatpush1.msra.mxu0 0.0
    %3265 = vmatprep.subr.mxu0 0.0
    %3266 = vmatpush1.msra.mxu0 0.0
    %3267 = vmatprep.subr.mxu0 0.0
    %3268 = vmatpush1.msra.mxu0 0.0
    %3269 = vmatprep.subr.mxu0 0.0
    %3270 = vmatpush1.msra.mxu0 0.0
    %3271 = vmatprep.subr.mxu0 0.0
    %3272 = vmatpush1.msra.mxu0 0.0
    %3273 = vmatprep.subr.mxu0 0.0
    %3274 = vmatpush1.msra.mxu0 0.0
    %3275 = vmatprep.subr.mxu0 0.0
    %3276 = vmatpush1.msra.mxu0 0.0
    %3277 = vmatprep.subr.mxu0 0.0
    %3278 = vmatpush1.msra.mxu0 0.0
    %3279 = vmatprep.subr.mxu0 0.0
    %3280 = vmatpush1.msra.mxu0 0.0
    %3281 = vmatprep.mubr.f32.mxu0 0.0
    %3282 = vmatmul.mubr.f32.gmra.mrb[0].mxu0 %v2802
    %v3283 = vpop.f32.mrb[0].mxu0
    %v3284 = vadd.f32 %v3059, %v3283
    %v3285 = vpop.f32.mrb[0].mxu0
    %3286 = vmatprep.mubr.f32.mxu0 0.0
    %3287 = vmatmul.mubr.f32.gmra.mrb[0].mxu0 %v2807
    %v3288 = vpop.f32.mrb[0].mxu0
    %v3289 = vadd.f32 %v3064, %v3288
    %v3290 = vpop.f32.mrb[0].mxu0
    %3291 = vmatprep.mubr.f32.mxu0 0.0
    %3292 = vmatmul.mubr.f32.gmra.mrb[0].mxu0 %v2812
    %v3293 = vpop.f32.mrb[0].mxu0
    %v3294 = vadd.f32 %v3069, %v3293
    %v3295 = vpop.f32.mrb[0].mxu0
    %3296 = vmatprep.mubr.f32.mxu0 0.0
    %3297 = vmatmul.mubr.f32.gmra.mrb[0].mxu0 %v2817
    %v3298 = vpop.f32.mrb[0].mxu0
    %v3299 = vadd.f32 %v3074, %v3298
    %v3300 = vpop.f32.mrb[0].mxu0
    %3301 = vmatprep.mubr.f32.mxu0 0.0
    %3302 = vmatmul.mubr.f32.gmra.mrb[0].mxu0 %v2822
    %v3303 = vpop.f32.mrb[0].mxu0
    %v3304 = vadd.f32 %v3079, %v3303
    %v3305 = vpop.f32.mrb[0].mxu0
    %3306 = vmatprep.mubr.f32.mxu0 0.0
    %3307 = vmatmul.mubr.f32.gmra.mrb[0].mxu0 %v2827
    %v3308 = vpop.f32.mrb[0].mxu0
    %v3309 = vadd.f32 %v3084, %v3308
    %v3310 = vpop.f32.mrb[0].mxu0
    %3311 = vmatprep.mubr.f32.mxu0 0.0
    %3312 = vmatmul.mubr.f32.gmra.mrb[0].mxu0 %v2832
    %v3313 = vpop.f32.mrb[0].mxu0
    %v3314 = vadd.f32 %v3089, %v3313
    %v3315 = vpop.f32.mrb[0].mxu0
    %3316 = vmatprep.mubr.f32.mxu0 0.0
    %3317 = vmatmul.mubr.f32.gmra.mrb[0].mxu0 %v2837
    %v3318 = vpop.f32.mrb[0].mxu0
    %v3319 = vadd.f32 %v3094, %v3318
    %v3320 = vpop.f32.mrb[0].mxu0
    %3321 = vmatprep.mubr.f32.mxu0 0.0
    %3322 = vmatmul.mubr.f32.gmra.mrb[0].mxu0 %v2842
    %v3323 = vpop.f32.mrb[0].mxu0
    %v3324 = vadd.f32 %v3099, %v3323
    %v3325 = vpop.f32.mrb[0].mxu0
    %3326 = vmatprep.mubr.f32.mxu0 0.0
    %3327 = vmatmul.mubr.f32.gmra.mrb[0].mxu0 %v2847
    %v3328 = vpop.f32.mrb[0].mxu0
    %v3329 = vadd.f32 %v3104, %v3328
    %v3330 = vpop.f32.mrb[0].mxu0
    %3331 = vmatprep.mubr.f32.mxu0 0.0
    %3332 = vmatmul.mubr.f32.gmra.mrb[0].mxu0 %v2852
    %v3333 = vpop.f32.mrb[0].mxu0
    %v3334 = vadd.f32 %v3109, %v3333
    %v3335 = vpop.f32.mrb[0].mxu0
    %3336 = vmatprep.mubr.f32.mxu0 0.0
    %3337 = vmatmul.mubr.f32.gmra.mrb[0].mxu0 %v2857
    %v3338 = vpop.f32.mrb[0].mxu0
    %v3339 = vadd.f32 %v3114, %v3338
    %v3340 = vpop.f32.mrb[0].mxu0
    %3341 = vmatprep.mubr.f32.mxu0 0.0
    %3342 = vmatmul.mubr.f32.gmra.mrb[0].mxu0 %v2862
    %v3343 = vpop.f32.mrb[0].mxu0
    %v3344 = vadd.f32 %v3119, %v3343
    %v3345 = vpop.f32.mrb[0].mxu0
    %3346 = vmatprep.mubr.f32.mxu0 0.0
    %3347 = vmatmul.mubr.f32.gmra.mrb[0].mxu0 %v2867
    %v3348 = vpop.f32.mrb[0].mxu0
    %v3349 = vadd.f32 %v3124, %v3348
    %v3350 = vpop.f32.mrb[0].mxu0
    %3351 = vmatprep.mubr.f32.mxu0 0.0
    %3352 = vmatmul.mubr.f32.gmra.mrb[0].mxu0 %v2872
    %v3353 = vpop.f32.mrb[0].mxu0
    %v3354 = vadd.f32 %v3129, %v3353
    %v3355 = vpop.f32.mrb[0].mxu0
    %3356 = vmatprep.mubr.f32.mxu0 0.0
    %3357 = vmatmul.mubr.f32.gmra.mrb[0].mxu0 %v2877
    %v3358 = vpop.f32.mrb[0].mxu0
    %v3359 = vadd.f32 %v3134, %v3358
    %v3360 = vpop.f32.mrb[0].mxu0
    %3361 = vmatprep.mubr.f32.mxu0 0.0
    %3362 = vmatmul.mubr.f32.gmra.mrb[0].mxu0 %v2882
    %v3363 = vpop.f32.mrb[0].mxu0
    %v3364 = vadd.f32 %v3139, %v3363
    %v3365 = vpop.f32.mrb[0].mxu0
    %3366 = vmatprep.mubr.f32.mxu0 0.0
    %3367 = vmatmul.mubr.f32.gmra.mrb[0].mxu0 %v2887
    %v3368 = vpop.f32.mrb[0].mxu0
    %v3369 = vadd.f32 %v3144, %v3368
    %v3370 = vpop.f32.mrb[0].mxu0
    %3371 = vmatprep.mubr.f32.mxu0 0.0
    %3372 = vmatmul.mubr.f32.gmra.mrb[0].mxu0 %v2892
    %v3373 = vpop.f32.mrb[0].mxu0
    %v3374 = vadd.f32 %v3149, %v3373
    %v3375 = vpop.f32.mrb[0].mxu0
    %3376 = vmatprep.mubr.f32.mxu0 0.0
    %3377 = vmatmul.mubr.f32.gmra.mrb[0].mxu0 %v2897
    %v3378 = vpop.f32.mrb[0].mxu0
    %v3379 = vadd.f32 %v3154, %v3378
    %v3380 = vpop.f32.mrb[0].mxu0
    %3381 = vmatprep.mubr.f32.mxu0 0.0
    %3382 = vmatmul.mubr.f32.gmra.mrb[0].mxu0 %v2902
    %v3383 = vpop.f32.mrb[0].mxu0
    %v3384 = vadd.f32 %v3159, %v3383
    %v3385 = vpop.f32.mrb[0].mxu0
    %3386 = vmatprep.mubr.f32.mxu0 0.0
    %3387 = vmatmul.mubr.f32.gmra.mrb[0].mxu0 %v2907
    %v3388 = vpop.f32.mrb[0].mxu0
    %v3389 = vadd.f32 %v3164, %v3388
    %v3390 = vpop.f32.mrb[0].mxu0
    %3391 = vmatprep.mubr.f32.mxu0 0.0
    %3392 = vmatmul.mubr.f32.gmra.mrb[0].mxu0 %v2912
    %v3393 = vpop.f32.mrb[0].mxu0
    %v3394 = vadd.f32 %v3169, %v3393
    %v3395 = vpop.f32.mrb[0].mxu0
    %3396 = vmatprep.mubr.f32.mxu0 0.0
    %3397 = vmatmul.mubr.f32.gmra.mrb[0].mxu0 %v2917
    %v3398 = vpop.f32.mrb[0].mxu0
    %v3399 = vadd.f32 %v3174, %v3398
    %v3400 = vpop.f32.mrb[0].mxu0
    %3401 = vmatprep.mubr.f32.mxu0 0.0
    %3402 = vmatmul.mubr.f32.gmra.mrb[0].mxu0 %v2922
    %v3403 = vpop.f32.mrb[0].mxu0
    %v3404 = vadd.f32 %v3179, %v3403
    %v3405 = vpop.f32.mrb[0].mxu0
    %3406 = vmatprep.mubr.f32.mxu0 0.0
    %3407 = vmatmul.mubr.f32.gmra.mrb[0].mxu0 %v2927
    %v3408 = vpop.f32.mrb[0].mxu0
    %v3409 = vadd.f32 %v3184, %v3408
    %v3410 = vpop.f32.mrb[0].mxu0
    %3411 = vmatprep.mubr.f32.mxu0 0.0
    %3412 = vmatmul.mubr.f32.gmra.mrb[0].mxu0 %v2932
    %v3413 = vpop.f32.mrb[0].mxu0
    %v3414 = vadd.f32 %v3189, %v3413
    %v3415 = vpop.f32.mrb[0].mxu0
    %3416 = vmatprep.mubr.f32.mxu0 0.0
    %3417 = vmatmul.mubr.f32.gmra.mrb[0].mxu0 %v2937
    %v3418 = vpop.f32.mrb[0].mxu0
    %v3419 = vadd.f32 %v3194, %v3418
    %v3420 = vpop.f32.mrb[0].mxu0
    %3421 = vmatprep.mubr.f32.mxu0 0.0
    %3422 = vmatmul.mubr.f32.gmra.mrb[0].mxu0 %v2942
    %v3423 = vpop.f32.mrb[0].mxu0
    %v3424 = vadd.f32 %v3199, %v3423
    %v3425 = vpop.f32.mrb[0].mxu0
    %3426 = vmatprep.mubr.f32.mxu0 0.0
    %3427 = vmatmul.mubr.f32.gmra.mrb[0].mxu0 %v2947
    %v3428 = vpop.f32.mrb[0].mxu0
    %v3429 = vadd.f32 %v3204, %v3428
    %v3430 = vpop.f32.mrb[0].mxu0
    %3431 = vmatprep.mubr.f32.mxu0 0.0
    %3432 = vmatmul.mubr.f32.gmra.mrb[0].mxu0 %v2952
    %v3433 = vpop.f32.mrb[0].mxu0
    %v3434 = vadd.f32 %v3209, %v3433
    %v3435 = vpop.f32.mrb[0].mxu0
    %3436 = vmatprep.mubr.f32.mxu0 0.0
    %3437 = vmatmul.mubr.f32.gmra.mrb[0].mxu0 %v2957
    %v3438 = vpop.f32.mrb[0].mxu0
    %v3439 = vadd.f32 %v3214, %v3438
    %v3440 = vpop.f32.mrb[0].mxu0
    %3441 = vdwg.mxu0
    %v3442 = vld [vmem:[%s9] sm:$0x1]
    %v3444 = vlaneseq
    %v3445 = vshrl.u32 %v3444, 7
    %v3446 = vsub.s32 0, %v3445
    %v3447 = vrot.slane %v3442, %v3446
    %v3449 = vadd.f32 %v3284, %v3447
    %v3450 = vadd.f32 %v3289, %v3447
    %v3451 = vadd.f32 %v3294, %v3447
    %v3452 = vadd.f32 %v3299, %v3447
    %v3453 = vadd.f32 %v3304, %v3447
    %v3454 = vadd.f32 %v3309, %v3447
    %v3455 = vadd.f32 %v3314, %v3447
    %v3456 = vadd.f32 %v3319, %v3447
    %v3457 = vadd.f32 %v3324, %v3447
    %v3458 = vadd.f32 %v3329, %v3447
    %v3459 = vadd.f32 %v3334, %v3447
    %v3460 = vadd.f32 %v3339, %v3447
    %v3461 = vadd.f32 %v3344, %v3447
    %v3462 = vadd.f32 %v3349, %v3447
    %v3463 = vadd.f32 %v3354, %v3447
    %v3464 = vadd.f32 %v3359, %v3447
    %v3465 = vadd.f32 %v3364, %v3447
    %v3466 = vadd.f32 %v3369, %v3447
    %v3467 = vadd.f32 %v3374, %v3447
    %v3468 = vadd.f32 %v3379, %v3447
    %v3469 = vadd.f32 %v3384, %v3447
    %v3470 = vadd.f32 %v3389, %v3447
    %v3471 = vadd.f32 %v3394, %v3447
    %v3472 = vadd.f32 %v3399, %v3447
    %v3473 = vadd.f32 %v3404, %v3447
    %v3474 = vadd.f32 %v3409, %v3447
    %v3475 = vadd.f32 %v3414, %v3447
    %v3476 = vadd.f32 %v3419, %v3447
    %v3477 = vadd.f32 %v3424, %v3447
    %v3478 = vadd.f32 %v3429, %v3447
    %v3479 = vadd.f32 %v3434, %v3447
    %v3480 = vadd.f32 %v3439, %v3447
    %v3481 = vmax.f32 %v3449, 0.0
    %v3482 = vmax.f32 %v3450, 0.0
    %v3483 = vmax.f32 %v3451, 0.0
    %v3484 = vmax.f32 %v3452, 0.0
    %v3485 = vmax.f32 %v3453, 0.0
    %v3486 = vmax.f32 %v3454, 0.0
    %v3487 = vmax.f32 %v3455, 0.0
    %v3488 = vmax.f32 %v3456, 0.0
    %v3489 = vmax.f32 %v3457, 0.0
    %v3490 = vmax.f32 %v3458, 0.0
    %v3491 = vmax.f32 %v3459, 0.0
    %v3492 = vmax.f32 %v3460, 0.0
    %v3493 = vmax.f32 %v3461, 0.0
    %v3494 = vmax.f32 %v3462, 0.0
    %v3495 = vmax.f32 %v3463, 0.0
    %v3496 = vmax.f32 %v3464, 0.0
    %v3497 = vmax.f32 %v3465, 0.0
    %v3498 = vmax.f32 %v3466, 0.0
    %v3499 = vmax.f32 %v3467, 0.0
    %v3500 = vmax.f32 %v3468, 0.0
    %v3501 = vmax.f32 %v3469, 0.0
    %v3502 = vmax.f32 %v3470, 0.0
    %v3503 = vmax.f32 %v3471, 0.0
    %v3504 = vmax.f32 %v3472, 0.0
    %v3505 = vmax.f32 %v3473, 0.0
    %v3506 = vmax.f32 %v3474, 0.0
    %v3507 = vmax.f32 %v3475, 0.0
    %v3508 = vmax.f32 %v3476, 0.0
    %v3509 = vmax.f32 %v3477, 0.0
    %v3510 = vmax.f32 %v3478, 0.0
    %v3511 = vmax.f32 %v3479, 0.0
    %v3512 = vmax.f32 %v3480, 0.0
    %v3513 = vld [vmem:[%s11] sm:$0x1]
    %v3515 = vlaneseq
    %v3516 = vshrl.u32 %v3515, 7
    %v3517 = vsub.s32 0, %v3516
    %v3518 = vrot.slane %v3513, %v3517
    %v3520 = vmul.f32 %v2680, %v3518
    %v3521 = vmul.f32 %v2681, %v3518
    %v3522 = vmul.f32 %v2682, %v3518
    %v3523 = vmul.f32 %v2683, %v3518
    %v3524 = vmul.f32 %v2684, %v3518
    %v3525 = vmul.f32 %v2685, %v3518
    %v3526 = vmul.f32 %v2686, %v3518
    %v3527 = vmul.f32 %v2687, %v3518
    %v3528 = vmul.f32 %v2688, %v3518
    %v3529 = vmul.f32 %v2689, %v3518
    %v3530 = vmul.f32 %v2690, %v3518
    %v3531 = vmul.f32 %v2691, %v3518
    %v3532 = vmul.f32 %v2692, %v3518
    %v3533 = vmul.f32 %v2693, %v3518
    %v3534 = vmul.f32 %v2694, %v3518
    %v3535 = vmul.f32 %v2695, %v3518
    %v3536 = vmul.f32 %v2696, %v3518
    %v3537 = vmul.f32 %v2697, %v3518
    %v3538 = vmul.f32 %v2698, %v3518
    %v3539 = vmul.f32 %v2699, %v3518
    %v3540 = vmul.f32 %v2700, %v3518
    %v3541 = vmul.f32 %v2701, %v3518
    %v3542 = vmul.f32 %v2702, %v3518
    %v3543 = vmul.f32 %v2703, %v3518
    %v3544 = vmul.f32 %v2704, %v3518
    %v3545 = vmul.f32 %v2705, %v3518
    %v3546 = vmul.f32 %v2706, %v3518
    %v3547 = vmul.f32 %v2707, %v3518
    %v3548 = vmul.f32 %v2708, %v3518
    %v3549 = vmul.f32 %v2709, %v3518
    %v3550 = vmul.f32 %v2710, %v3518
    %v3551 = vmul.f32 %v2711, %v3518
    %3552 = vadd.xlane.f32.xlu0 %v3520
    %v3553 = vpop.xlane.xlu0 %3552
    %3554 = vadd.xlane.f32.xlu0 %v3521
    %v3555 = vpop.xlane.xlu0 %3554
    %3556 = vadd.xlane.f32.xlu0 %v3522
    %v3557 = vpop.xlane.xlu0 %3556
    %3558 = vadd.xlane.f32.xlu0 %v3523
    %v3559 = vpop.xlane.xlu0 %3558
    %3560 = vadd.xlane.f32.xlu0 %v3524
    %v3561 = vpop.xlane.xlu0 %3560
    %3562 = vadd.xlane.f32.xlu0 %v3525
    %v3563 = vpop.xlane.xlu0 %3562
    %3564 = vadd.xlane.f32.xlu0 %v3526
    %v3565 = vpop.xlane.xlu0 %3564
    %3566 = vadd.xlane.f32.xlu0 %v3527
    %v3567 = vpop.xlane.xlu0 %3566
    %3568 = vadd.xlane.f32.xlu0 %v3528
    %v3569 = vpop.xlane.xlu0 %3568
    %3570 = vadd.xlane.f32.xlu0 %v3529
    %v3571 = vpop.xlane.xlu0 %3570
    %3572 = vadd.xlane.f32.xlu0 %v3530
    %v3573 = vpop.xlane.xlu0 %3572
    %3574 = vadd.xlane.f32.xlu0 %v3531
    %v3575 = vpop.xlane.xlu0 %3574
    %3576 = vadd.xlane.f32.xlu0 %v3532
    %v3577 = vpop.xlane.xlu0 %3576
    %3578 = vadd.xlane.f32.xlu0 %v3533
    %v3579 = vpop.xlane.xlu0 %3578
    %3580 = vadd.xlane.f32.xlu0 %v3534
    %v3581 = vpop.xlane.xlu0 %3580
    %3582 = vadd.xlane.f32.xlu0 %v3535
    %v3583 = vpop.xlane.xlu0 %3582
    %3584 = vadd.xlane.f32.xlu0 %v3536
    %v3585 = vpop.xlane.xlu0 %3584
    %3586 = vadd.xlane.f32.xlu0 %v3537
    %v3587 = vpop.xlane.xlu0 %3586
    %3588 = vadd.xlane.f32.xlu0 %v3538
    %v3589 = vpop.xlane.xlu0 %3588
    %3590 = vadd.xlane.f32.xlu0 %v3539
    %v3591 = vpop.xlane.xlu0 %3590
    %3592 = vadd.xlane.f32.xlu0 %v3540
    %v3593 = vpop.xlane.xlu0 %3592
    %3594 = vadd.xlane.f32.xlu0 %v3541
    %v3595 = vpop.xlane.xlu0 %3594
    %3596 = vadd.xlane.f32.xlu0 %v3542
    %v3597 = vpop.xlane.xlu0 %3596
    %3598 = vadd.xlane.f32.xlu0 %v3543
    %v3599 = vpop.xlane.xlu0 %3598
    %3600 = vadd.xlane.f32.xlu0 %v3544
    %v3601 = vpop.xlane.xlu0 %3600
    %3602 = vadd.xlane.f32.xlu0 %v3545
    %v3603 = vpop.xlane.xlu0 %3602
    %3604 = vadd.xlane.f32.xlu0 %v3546
    %v3605 = vpop.xlane.xlu0 %3604
    %3606 = vadd.xlane.f32.xlu0 %v3547
    %v3607 = vpop.xlane.xlu0 %3606
    %3608 = vadd.xlane.f32.xlu0 %v3548
    %v3609 = vpop.xlane.xlu0 %3608
    %3610 = vadd.xlane.f32.xlu0 %v3549
    %v3611 = vpop.xlane.xlu0 %3610
    %3612 = vadd.xlane.f32.xlu0 %v3550
    %v3613 = vpop.xlane.xlu0 %3612
    %3614 = vadd.xlane.f32.xlu0 %v3551
    %v3615 = vpop.xlane.xlu0 %3614
    %v3616 = vlaneseq
    %v3617 = vand.u32 %v3616, 127
    %v3618 = vld [vmem:[#allocation14] sm:$0xff]
    %v3619 = vld [vmem:[#allocation14 + $0x8] sm:$0xff]
    %v3620 = vld [vmem:[#allocation14 + $0x10] sm:$0xff]
    %v3621 = vld [vmem:[#allocation14 + $0x18] sm:$0xff]
    %v3622 = vld [vmem:[#allocation14 + $0x20] sm:$0xff]
    %v3623 = vld [vmem:[#allocation14 + $0x28] sm:$0xff]
    %v3624 = vld [vmem:[#allocation14 + $0x30] sm:$0xff]
    %v3625 = vld [vmem:[#allocation14 + $0x38] sm:$0xff]
    %v3626 = vld [vmem:[#allocation14 + $0x40] sm:$0xff]
    %v3627 = vld [vmem:[#allocation14 + $0x48] sm:$0xff]
    %v3628 = vld [vmem:[#allocation14 + $0x50] sm:$0xff]
    %v3629 = vld [vmem:[#allocation14 + $0x58] sm:$0xff]
    %v3630 = vld [vmem:[#allocation14 + $0x60] sm:$0xff]
    %v3631 = vld [vmem:[#allocation14 + $0x68] sm:$0xff]
    %v3632 = vld [vmem:[#allocation14 + $0x70] sm:$0xff]
    %v3633 = vld [vmem:[#allocation14 + $0x78] sm:$0xff]
    %vm3634 = vcmp.eq.s32.totalorder %v3617, 3
    %v3635 = vsel %vm3634, %v3553, 0.0
    %v3636 = vsel %vm3634, %v3555, 0.0
    %v3637 = vsel %vm3634, %v3557, 0.0
    %v3638 = vsel %vm3634, %v3559, 0.0
    %v3639 = vsel %vm3634, %v3561, 0.0
    %v3640 = vsel %vm3634, %v3563, 0.0
    %v3641 = vsel %vm3634, %v3565, 0.0
    %v3642 = vsel %vm3634, %v3567, 0.0
    %v3643 = vsel %vm3634, %v3569, 0.0
    %v3644 = vsel %vm3634, %v3571, 0.0
    %v3645 = vsel %vm3634, %v3573, 0.0
    %v3646 = vsel %vm3634, %v3575, 0.0
    %v3647 = vsel %vm3634, %v3577, 0.0
    %v3648 = vsel %vm3634, %v3579, 0.0
    %v3649 = vsel %vm3634, %v3581, 0.0
    %v3650 = vsel %vm3634, %v3583, 0.0
    %v3651 = vsel %vm3634, %v3585, 0.0
    %v3652 = vsel %vm3634, %v3587, 0.0
    %v3653 = vsel %vm3634, %v3589, 0.0
    %v3654 = vsel %vm3634, %v3591, 0.0
    %v3655 = vsel %vm3634, %v3593, 0.0
    %v3656 = vsel %vm3634, %v3595, 0.0
    %v3657 = vsel %vm3634, %v3597, 0.0
    %v3658 = vsel %vm3634, %v3599, 0.0
    %v3659 = vsel %vm3634, %v3601, 0.0
    %v3660 = vsel %vm3634, %v3603, 0.0
    %v3661 = vsel %vm3634, %v3605, 0.0
    %v3662 = vsel %vm3634, %v3607, 0.0
    %v3663 = vsel %vm3634, %v3609, 0.0
    %v3664 = vsel %vm3634, %v3611, 0.0
    %v3665 = vsel %vm3634, %v3613, 0.0
    %v3666 = vsel %vm3634, %v3615, 0.0
    %3667 = vmatprep.subr.mxu0 0.0
    %3668 = vmatpush1.msra.mxu0 %v3618
    %3669 = vmatprep.subr.mxu0 0.0
    %3670 = vmatpush1.msra.mxu0 %v3619
    %3671 = vmatprep.subr.mxu0 0.0
    %3672 = vmatpush1.msra.mxu0 %v3620
    %3673 = vmatprep.subr.mxu0 0.0
    %3674 = vmatpush1.msra.mxu0 %v3621
    %3675 = vmatprep.subr.mxu0 0.0
    %3676 = vmatpush1.msra.mxu0 %v3622
    %3677 = vmatprep.subr.mxu0 0.0
    %3678 = vmatpush1.msra.mxu0 %v3623
    %3679 = vmatprep.subr.mxu0 0.0
    %3680 = vmatpush1.msra.mxu0 %v3624
    %3681 = vmatprep.subr.mxu0 0.0
    %3682 = vmatpush1.msra.mxu0 %v3625
    %3683 = vmatprep.subr.mxu0 0.0
    %3684 = vmatpush1.msra.mxu0 %v3626
    %3685 = vmatprep.subr.mxu0 0.0
    %3686 = vmatpush1.msra.mxu0 %v3627
    %3687 = vmatprep.subr.mxu0 0.0
    %3688 = vmatpush1.msra.mxu0 %v3628
    %3689 = vmatprep.subr.mxu0 0.0
    %3690 = vmatpush1.msra.mxu0 %v3629
    %3691 = vmatprep.subr.mxu0 0.0
    %3692 = vmatpush1.msra.mxu0 %v3630
    %3693 = vmatprep.subr.mxu0 0.0
    %3694 = vmatpush1.msra.mxu0 %v3631
    %3695 = vmatprep.subr.mxu0 0.0
    %3696 = vmatpush1.msra.mxu0 %v3632
    %3697 = vmatprep.subr.mxu0 0.0
    %3698 = vmatpush1.msra.mxu0 %v3633
    %3699 = vmatprep.subr.mxu0 0.0
    %3700 = vmatpush1.msra.mxu0 0.0
    %3701 = vmatprep.subr.mxu0 0.0
    %3702 = vmatpush1.msra.mxu0 0.0
    %3703 = vmatprep.subr.mxu0 0.0
    %3704 = vmatpush1.msra.mxu0 0.0
    %3705 = vmatprep.subr.mxu0 0.0
    %3706 = vmatpush1.msra.mxu0 0.0
    %3707 = vmatprep.subr.mxu0 0.0
    %3708 = vmatpush1.msra.mxu0 0.0
    %3709 = vmatprep.subr.mxu0 0.0
    %3710 = vmatpush1.msra.mxu0 0.0
    %3711 = vmatprep.subr.mxu0 0.0
    %3712 = vmatpush1.msra.mxu0 0.0
    %3713 = vmatprep.subr.mxu0 0.0
    %3714 = vmatpush1.msra.mxu0 0.0
    %3715 = vmatprep.subr.mxu0 0.0
    %3716 = vmatpush1.msra.mxu0 0.0
    %3717 = vmatprep.subr.mxu0 0.0
    %3718 = vmatpush1.msra.mxu0 0.0
    %3719 = vmatprep.subr.mxu0 0.0
    %3720 = vmatpush1.msra.mxu0 0.0
    %3721 = vmatprep.subr.mxu0 0.0
    %3722 = vmatpush1.msra.mxu0 0.0
    %3723 = vmatprep.subr.mxu0 0.0
    %3724 = vmatpush1.msra.mxu0 0.0
    %3725 = vmatprep.subr.mxu0 0.0
    %3726 = vmatpush1.msra.mxu0 0.0
    %3727 = vmatprep.subr.mxu0 0.0
    %3728 = vmatpush1.msra.mxu0 0.0
    %3729 = vmatprep.subr.mxu0 0.0
    %3730 = vmatpush1.msra.mxu0 0.0
    %3731 = vmatprep.mubr.f32.mxu0 0.0
    %3732 = vmatmul.mubr.f32.gmra.mrb[0].mxu0 %v3481
    %v3733 = vpop.f32.mrb[0].mxu0
    %v3734 = vadd.f32 %v3635, %v3733
    %v3735 = vpop.f32.mrb[0].mxu0
    %3736 = vmatprep.mubr.f32.mxu0 0.0
    %3737 = vmatmul.mubr.f32.gmra.mrb[0].mxu0 %v3482
    %v3738 = vpop.f32.mrb[0].mxu0
    %v3739 = vadd.f32 %v3636, %v3738
    %v3740 = vpop.f32.mrb[0].mxu0
    %3741 = vmatprep.mubr.f32.mxu0 0.0
    %3742 = vmatmul.mubr.f32.gmra.mrb[0].mxu0 %v3483
    %v3743 = vpop.f32.mrb[0].mxu0
    %v3744 = vadd.f32 %v3637, %v3743
    %v3745 = vpop.f32.mrb[0].mxu0
    %3746 = vmatprep.mubr.f32.mxu0 0.0
    %3747 = vmatmul.mubr.f32.gmra.mrb[0].mxu0 %v3484
    %v3748 = vpop.f32.mrb[0].mxu0
    %v3749 = vadd.f32 %v3638, %v3748
    %v3750 = vpop.f32.mrb[0].mxu0
    %3751 = vmatprep.mubr.f32.mxu0 0.0
    %3752 = vmatmul.mubr.f32.gmra.mrb[0].mxu0 %v3485
    %v3753 = vpop.f32.mrb[0].mxu0
    %v3754 = vadd.f32 %v3639, %v3753
    %v3755 = vpop.f32.mrb[0].mxu0
    %3756 = vmatprep.mubr.f32.mxu0 0.0
    %3757 = vmatmul.mubr.f32.gmra.mrb[0].mxu0 %v3486
    %v3758 = vpop.f32.mrb[0].mxu0
    %v3759 = vadd.f32 %v3640, %v3758
    %v3760 = vpop.f32.mrb[0].mxu0
    %3761 = vmatprep.mubr.f32.mxu0 0.0
    %3762 = vmatmul.mubr.f32.gmra.mrb[0].mxu0 %v3487
    %v3763 = vpop.f32.mrb[0].mxu0
    %v3764 = vadd.f32 %v3641, %v3763
    %v3765 = vpop.f32.mrb[0].mxu0
    %3766 = vmatprep.mubr.f32.mxu0 0.0
    %3767 = vmatmul.mubr.f32.gmra.mrb[0].mxu0 %v3488
    %v3768 = vpop.f32.mrb[0].mxu0
    %v3769 = vadd.f32 %v3642, %v3768
    %v3770 = vpop.f32.mrb[0].mxu0
    %3771 = vmatprep.mubr.f32.mxu0 0.0
    %3772 = vmatmul.mubr.f32.gmra.mrb[0].mxu0 %v3489
    %v3773 = vpop.f32.mrb[0].mxu0
    %v3774 = vadd.f32 %v3643, %v3773
    %v3775 = vpop.f32.mrb[0].mxu0
    %3776 = vmatprep.mubr.f32.mxu0 0.0
    %3777 = vmatmul.mubr.f32.gmra.mrb[0].mxu0 %v3490
    %v3778 = vpop.f32.mrb[0].mxu0
    %v3779 = vadd.f32 %v3644, %v3778
    %v3780 = vpop.f32.mrb[0].mxu0
    %3781 = vmatprep.mubr.f32.mxu0 0.0
    %3782 = vmatmul.mubr.f32.gmra.mrb[0].mxu0 %v3491
    %v3783 = vpop.f32.mrb[0].mxu0
    %v3784 = vadd.f32 %v3645, %v3783
    %v3785 = vpop.f32.mrb[0].mxu0
    %3786 = vmatprep.mubr.f32.mxu0 0.0
    %3787 = vmatmul.mubr.f32.gmra.mrb[0].mxu0 %v3492
    %v3788 = vpop.f32.mrb[0].mxu0
    %v3789 = vadd.f32 %v3646, %v3788
    %v3790 = vpop.f32.mrb[0].mxu0
    %3791 = vmatprep.mubr.f32.mxu0 0.0
    %3792 = vmatmul.mubr.f32.gmra.mrb[0].mxu0 %v3493
    %v3793 = vpop.f32.mrb[0].mxu0
    %v3794 = vadd.f32 %v3647, %v3793
    %v3795 = vpop.f32.mrb[0].mxu0
    %3796 = vmatprep.mubr.f32.mxu0 0.0
    %3797 = vmatmul.mubr.f32.gmra.mrb[0].mxu0 %v3494
    %v3798 = vpop.f32.mrb[0].mxu0
    %v3799 = vadd.f32 %v3648, %v3798
    %v3800 = vpop.f32.mrb[0].mxu0
    %3801 = vmatprep.mubr.f32.mxu0 0.0
    %3802 = vmatmul.mubr.f32.gmra.mrb[0].mxu0 %v3495
    %v3803 = vpop.f32.mrb[0].mxu0
    %v3804 = vadd.f32 %v3649, %v3803
    %v3805 = vpop.f32.mrb[0].mxu0
    %3806 = vmatprep.mubr.f32.mxu0 0.0
    %3807 = vmatmul.mubr.f32.gmra.mrb[0].mxu0 %v3496
    %v3808 = vpop.f32.mrb[0].mxu0
    %v3809 = vadd.f32 %v3650, %v3808
    %v3810 = vpop.f32.mrb[0].mxu0
    %3811 = vmatprep.mubr.f32.mxu0 0.0
    %3812 = vmatmul.mubr.f32.gmra.mrb[0].mxu0 %v3497
    %v3813 = vpop.f32.mrb[0].mxu0
    %v3814 = vadd.f32 %v3651, %v3813
    %v3815 = vpop.f32.mrb[0].mxu0
    %3816 = vmatprep.mubr.f32.mxu0 0.0
    %3817 = vmatmul.mubr.f32.gmra.mrb[0].mxu0 %v3498
    %v3818 = vpop.f32.mrb[0].mxu0
    %v3819 = vadd.f32 %v3652, %v3818
    %v3820 = vpop.f32.mrb[0].mxu0
    %3821 = vmatprep.mubr.f32.mxu0 0.0
    %3822 = vmatmul.mubr.f32.gmra.mrb[0].mxu0 %v3499
    %v3823 = vpop.f32.mrb[0].mxu0
    %v3824 = vadd.f32 %v3653, %v3823
    %v3825 = vpop.f32.mrb[0].mxu0
    %3826 = vmatprep.mubr.f32.mxu0 0.0
    %3827 = vmatmul.mubr.f32.gmra.mrb[0].mxu0 %v3500
    %v3828 = vpop.f32.mrb[0].mxu0
    %v3829 = vadd.f32 %v3654, %v3828
    %v3830 = vpop.f32.mrb[0].mxu0
    %3831 = vmatprep.mubr.f32.mxu0 0.0
    %3832 = vmatmul.mubr.f32.gmra.mrb[0].mxu0 %v3501
    %v3833 = vpop.f32.mrb[0].mxu0
    %v3834 = vadd.f32 %v3655, %v3833
    %v3835 = vpop.f32.mrb[0].mxu0
    %3836 = vmatprep.mubr.f32.mxu0 0.0
    %3837 = vmatmul.mubr.f32.gmra.mrb[0].mxu0 %v3502
    %v3838 = vpop.f32.mrb[0].mxu0
    %v3839 = vadd.f32 %v3656, %v3838
    %v3840 = vpop.f32.mrb[0].mxu0
    %3841 = vmatprep.mubr.f32.mxu0 0.0
    %3842 = vmatmul.mubr.f32.gmra.mrb[0].mxu0 %v3503
    %v3843 = vpop.f32.mrb[0].mxu0
    %v3844 = vadd.f32 %v3657, %v3843
    %v3845 = vpop.f32.mrb[0].mxu0
    %3846 = vmatprep.mubr.f32.mxu0 0.0
    %3847 = vmatmul.mubr.f32.gmra.mrb[0].mxu0 %v3504
    %v3848 = vpop.f32.mrb[0].mxu0
    %v3849 = vadd.f32 %v3658, %v3848
    %v3850 = vpop.f32.mrb[0].mxu0
    %3851 = vmatprep.mubr.f32.mxu0 0.0
    %3852 = vmatmul.mubr.f32.gmra.mrb[0].mxu0 %v3505
    %v3853 = vpop.f32.mrb[0].mxu0
    %v3854 = vadd.f32 %v3659, %v3853
    %v3855 = vpop.f32.mrb[0].mxu0
    %3856 = vmatprep.mubr.f32.mxu0 0.0
    %3857 = vmatmul.mubr.f32.gmra.mrb[0].mxu0 %v3506
    %v3858 = vpop.f32.mrb[0].mxu0
    %v3859 = vadd.f32 %v3660, %v3858
    %v3860 = vpop.f32.mrb[0].mxu0
    %3861 = vmatprep.mubr.f32.mxu0 0.0
    %3862 = vmatmul.mubr.f32.gmra.mrb[0].mxu0 %v3507
    %v3863 = vpop.f32.mrb[0].mxu0
    %v3864 = vadd.f32 %v3661, %v3863
    %v3865 = vpop.f32.mrb[0].mxu0
    %3866 = vmatprep.mubr.f32.mxu0 0.0
    %3867 = vmatmul.mubr.f32.gmra.mrb[0].mxu0 %v3508
    %v3868 = vpop.f32.mrb[0].mxu0
    %v3869 = vadd.f32 %v3662, %v3868
    %v3870 = vpop.f32.mrb[0].mxu0
    %3871 = vmatprep.mubr.f32.mxu0 0.0
    %3872 = vmatmul.mubr.f32.gmra.mrb[0].mxu0 %v3509
    %v3873 = vpop.f32.mrb[0].mxu0
    %v3874 = vadd.f32 %v3663, %v3873
    %v3875 = vpop.f32.mrb[0].mxu0
    %3876 = vmatprep.mubr.f32.mxu0 0.0
    %3877 = vmatmul.mubr.f32.gmra.mrb[0].mxu0 %v3510
    %v3878 = vpop.f32.mrb[0].mxu0
    %v3879 = vadd.f32 %v3664, %v3878
    %v3880 = vpop.f32.mrb[0].mxu0
    %3881 = vmatprep.mubr.f32.mxu0 0.0
    %3882 = vmatmul.mubr.f32.gmra.mrb[0].mxu0 %v3511
    %v3883 = vpop.f32.mrb[0].mxu0
    %v3884 = vadd.f32 %v3665, %v3883
    %v3885 = vpop.f32.mrb[0].mxu0
    %3886 = vmatprep.mubr.f32.mxu0 0.0
    %3887 = vmatmul.mubr.f32.gmra.mrb[0].mxu0 %v3512
    %v3888 = vpop.f32.mrb[0].mxu0
    %v3889 = vadd.f32 %v3666, %v3888
    %v3890 = vpop.f32.mrb[0].mxu0
    %3891 = vdwg.mxu0
    %v3892 = vld [vmem:[%s12] sm:$0x1]
    %v3894 = vlaneseq
    %v3895 = vshrl.u32 %v3894, 7
    %v3896 = vsub.s32 0, %v3895
    %v3897 = vrot.slane %v3892, %v3896
    %v3899 = vadd.f32 %v3734, %v3897
    %v3900 = vadd.f32 %v3739, %v3897
    %v3901 = vadd.f32 %v3744, %v3897
    %v3902 = vadd.f32 %v3749, %v3897
    %v3903 = vadd.f32 %v3754, %v3897
    %v3904 = vadd.f32 %v3759, %v3897
    %v3905 = vadd.f32 %v3764, %v3897
    %v3906 = vadd.f32 %v3769, %v3897
    %v3907 = vadd.f32 %v3774, %v3897
    %v3908 = vadd.f32 %v3779, %v3897
    %v3909 = vadd.f32 %v3784, %v3897
    %v3910 = vadd.f32 %v3789, %v3897
    %v3911 = vadd.f32 %v3794, %v3897
    %v3912 = vadd.f32 %v3799, %v3897
    %v3913 = vadd.f32 %v3804, %v3897
    %v3914 = vadd.f32 %v3809, %v3897
    %v3915 = vadd.f32 %v3814, %v3897
    %v3916 = vadd.f32 %v3819, %v3897
    %v3917 = vadd.f32 %v3824, %v3897
    %v3918 = vadd.f32 %v3829, %v3897
    %v3919 = vadd.f32 %v3834, %v3897
    %v3920 = vadd.f32 %v3839, %v3897
    %v3921 = vadd.f32 %v3844, %v3897
    %v3922 = vadd.f32 %v3849, %v3897
    %v3923 = vadd.f32 %v3854, %v3897
    %v3924 = vadd.f32 %v3859, %v3897
    %v3925 = vadd.f32 %v3864, %v3897
    %v3926 = vadd.f32 %v3869, %v3897
    %v3927 = vadd.f32 %v3874, %v3897
    %v3928 = vadd.f32 %v3879, %v3897
    %v3929 = vadd.f32 %v3884, %v3897
    %v3930 = vadd.f32 %v3889, %v3897
    %3931 = vst [vmem:[#allocation16] sm:$0xff] %v3899
    %3932 = vst [vmem:[#allocation16 + $0x8] sm:$0xff] %v3900
    %3933 = vst [vmem:[#allocation16 + $0x10] sm:$0xff] %v3901
    %3934 = vst [vmem:[#allocation16 + $0x18] sm:$0xff] %v3902
    %3935 = vst [vmem:[#allocation16 + $0x20] sm:$0xff] %v3903
    %3936 = vst [vmem:[#allocation16 + $0x28] sm:$0xff] %v3904
    %3937 = vst [vmem:[#allocation16 + $0x30] sm:$0xff] %v3905
    %3938 = vst [vmem:[#allocation16 + $0x38] sm:$0xff] %v3906
    %3939 = vst [vmem:[#allocation16 + $0x40] sm:$0xff] %v3907
    %3940 = vst [vmem:[#allocation16 + $0x48] sm:$0xff] %v3908
    %3941 = vst [vmem:[#allocation16 + $0x50] sm:$0xff] %v3909
    %3942 = vst [vmem:[#allocation16 + $0x58] sm:$0xff] %v3910
    %3943 = vst [vmem:[#allocation16 + $0x60] sm:$0xff] %v3911
    %3944 = vst [vmem:[#allocation16 + $0x68] sm:$0xff] %v3912
    %3945 = vst [vmem:[#allocation16 + $0x70] sm:$0xff] %v3913
    %3946 = vst [vmem:[#allocation16 + $0x78] sm:$0xff] %v3914
    %3947 = vst [vmem:[#allocation16 + $0x80] sm:$0xff] %v3915
    %3948 = vst [vmem:[#allocation16 + $0x88] sm:$0xff] %v3916
    %3949 = vst [vmem:[#allocation16 + $0x90] sm:$0xff] %v3917
    %3950 = vst [vmem:[#allocation16 + $0x98] sm:$0xff] %v3918
    %3951 = vst [vmem:[#allocation16 + $0xa0] sm:$0xff] %v3919
    %3952 = vst [vmem:[#allocation16 + $0xa8] sm:$0xff] %v3920
    %3953 = vst [vmem:[#allocation16 + $0xb0] sm:$0xff] %v3921
    %3954 = vst [vmem:[#allocation16 + $0xb8] sm:$0xff] %v3922
    %3955 = vst [vmem:[#allocation16 + $0xc0] sm:$0xff] %v3923
    %3956 = vst [vmem:[#allocation16 + $0xc8] sm:$0xff] %v3924
    %3957 = vst [vmem:[#allocation16 + $0xd0] sm:$0xff] %v3925
    %3958 = vst [vmem:[#allocation16 + $0xd8] sm:$0xff] %v3926
    %3959 = vst [vmem:[#allocation16 + $0xe0] sm:$0xff] %v3927
    %3960 = vst [vmem:[#allocation16 + $0xe8] sm:$0xff] %v3928
    %3961 = vst [vmem:[#allocation16 + $0xf0] sm:$0xff] %v3929
    %3962 = vst [vmem:[#allocation16 + $0xf8] sm:$0xff] %v3930
    // Predicated region
    $region86: #{tpu_custom_call.1} parent=1 // pred_check
      _
    $region87: #{tpu_custom_call.1} parent=1 // pred_check_branch
      %3964 = sbr.rel (0) target = $region89
    $region88: #{tpu_custom_call.1} parent=1 // pred_region
      %s3966 = ssub.s32 4096, 4096
      %3967 = vsyncadd [#allocation4], %s3966
      %s3968 = sshll.u32 [#allocation16], 4
      %s3969 = int_to_ptr.vmem [resolvable:$true] %s3968
      %3974 = dma.vmem_to_hbm [thread:$0]  %s3969, 4096, %s13, [#allocation4], 128, 128, 8
    $region89: #{tpu_custom_call.1} parent=1 // pred_fallthru
      _
    // Predicated region
    $region90: #{tpu_custom_call.1} parent=1 // pred_check
      _
    $region91: #{tpu_custom_call.1} parent=1 // pred_check_branch
      %3976 = sbr.rel (0) target = $region93
    $region92: #{tpu_custom_call.1} parent=1 // pred_region
      %3977 = dma.done [#allocation4], 4096
    $region93: #{tpu_custom_call.1} parent=1 // pred_fallthru
      _
    %3978 = vsyncpa [#allocation3], 1
    %3979 = vsyncpa [#allocation6], 1
    %3980 = vsyncpa [#allocation9], 1
    %3981 = vsyncpa [#allocation12], 1
    %3982 = vsyncpa [#allocation15], 1
    %3983 = vsyncpa [#allocation4], 1

</llo_original>
